<compile_context>
chip_gen: v7x
topology: tpu7x:2x2x1
jax: 0.10.0
libtpu: 0.0.40
codegen_flags: <defaults>
</compile_context>

<pallas_src>
import jax
import jax.numpy as jnp
import numpy as np
from jax.experimental import pallas as pl
from jax.experimental.pallas import tpu as pltpu

# ----- model / bot settings (small synthetic sizes consistent with the module) -
BATCH = 2
MAX_UNITS = 2                      # bot_settings.max_units
AR_CH = 4                          # settings.autoregressive_embedding_channels
SKIP_CH = 4                        # settings.map_skip_channels
H, W = 8, 8                        # map_skip_dims[-2:]
IN_CH = AR_CH + SKIP_CH
C1, C2, C3, C4 = 64, 32, 16, 1     # conv1 / conv2 / deconv1 / deconv2 out channels
RES_X, RES_Y = 4 * H + 6, 4 * W + 6  # location_action_space_resolution (38 x 38)

GRID = 10                          # per-unit zero-extended spatial grid (10 x 10)
S = GRID * GRID + 4                # 104 = 10*10 + 4 dead slots  (8-aligned)
R = MAX_UNITS * S                  # rows processed per grid step (one batch elem)
PAD = 16                           # zero rows added on both ends for tap shifts
NCLS = 16                          # 4x4 stride-4 output parity classes


# --------------------------- fused kernel --------------------------------------
def _location_head_kernel(x_ref, m8_ref, m9_ref, mv_ref,
                          w1_ref, b1_ref, w2_ref, b2_ref,
                          wd1_ref, bd1_ref, wd2_ref, bd2_ref, out_ref):
    def pad_rows(x):
        z = jnp.zeros((PAD, x.shape[1]), jnp.float32)
        return jnp.concatenate([z, x, z], axis=0)

    def shifted(xpad, s):
        # result[q] = x[q - s] (zero beyond the array ends); s may be negative.
        return xpad[PAD - s:PAD - s + R, :]

    m8 = m8_ref[...]                         # (R, 1)  valid 8x8 interior
    m9 = m9_ref[...]                         # (R, 1)  valid 9x9 interior

    # ---- conv1 (1x1) + ReLU: one matmul over the pre-concatenated input -------
    a1 = jnp.dot(x_ref[0], w1_ref[...], preferred_element_type=jnp.float32)
    a1 = jnp.maximum(a1 + b1_ref[...], 0.0) * m8                 # (R, 64)

    # ---- conv2 (3x3, pad 1) + ReLU: 9 shifted-row taps accumulated on the MXU -
    a1p = pad_rows(a1)
    a2 = jnp.dot(a1, w2_ref[4], preferred_element_type=jnp.float32)   # center tap
    for dy in (-1, 0, 1):
        for dx in (-1, 0, 1):
            if dy == 0 and dx == 0:
                continue
            t = 3 * (dy + 1) + (dx + 1)
            a2 = a2 + jnp.dot(shifted(a1p, -(GRID * dy + dx)), w2_ref[t],
                              preferred_element_type=jnp.float32)
    a2 = jnp.maximum(a2 + b2_ref[...], 0.0) * m8                 # (R, 32)

    # ---- deconv1 (k4, s2, 32->16) + ReLU: 4 taps, 4 output parities in N=64 ---
    a2p = pad_rows(a2)
    y = jnp.dot(a2, wd1_ref[0], preferred_element_type=jnp.float32)
    y = y + jnp.dot(shifted(a2p, 1), wd1_ref[1], preferred_element_type=jnp.float32)
    y = y + jnp.dot(shifted(a2p, GRID), wd1_ref[2], preferred_element_type=jnp.float32)
    y = y + jnp.dot(shifted(a2p, GRID + 1), wd1_ref[3], preferred_element_type=jnp.float32)
    y = jnp.maximum(y + bd1_ref[...], 0.0) * m9                  # (R, 64)

    # ---- deconv2 (k4, s2, 16->1): 4 taps, 16 stride-4 parity classes in N=16 --
    yp = pad_rows(y)
    z = jnp.dot(y, wd2_ref[0], preferred_element_type=jnp.float32)
    z = z + jnp.dot(shifted(yp, 1), wd2_ref[1], preferred_element_type=jnp.float32)
    z = z + jnp.dot(shifted(yp, GRID), wd2_ref[2], preferred_element_type=jnp.float32)
    z = z + jnp.dot(shifted(yp, GRID + 1), wd2_ref[3], preferred_element_type=jnp.float32)
    z = z + bd2_ref[...]                                         # (R, 16) logits

    # ---- masked softmax per (batch, unit) over the full 38x38 location map ----
    mv = mv_ref[...]                                             # (R, 16) validity
    zm = jnp.where(mv > 0.0, z, -1e30).reshape(MAX_UNITS, S, NCLS)
    m = jnp.max(jnp.max(zm, axis=2, keepdims=True), axis=1, keepdims=True)
    e = jnp.exp(zm - m) * mv.reshape(MAX_UNITS, S, NCLS)
    denom = jnp.sum(jnp.sum(e, axis=2, keepdims=True), axis=1, keepdims=True)
    out_ref[0] = e * (1.0 / denom)


# --------------------------- wrapper --------------------------------------------
def location_head_forward(ar_embedding, map_skip, kernel_params):
    """ar_embedding: (B, MAX_UNITS, AR_CH*H*W); map_skip: (B, SKIP_CH, H, W) NCHW.
    Returns (B, MAX_UNITS, RES_X*RES_Y) softmax probabilities."""
    (w1, b1, w2p, b2, wd1p, bd1p, wd2p, bd2, m8, m9, mv) = kernel_params
    b = ar_embedding.shape[0]

    # NHWC, concat [ar | map_skip] per unit, zero-extend to the padded 10x10
    # grid, flatten to (B, MU*S, IN_CH) so conv1 is one channels-last matmul.
    ar = ar_embedding.reshape(b, MAX_UNITS, AR_CH, H, W).astype(jnp.float32)
    ar = jnp.transpose(ar, (0, 1, 3, 4, 2))                         # (B,MU,H,W,AR)
    ms = jnp.transpose(map_skip.astype(jnp.float32), (0, 2, 3, 1))  # (B,H,W,SKIP)
    ms = jnp.broadcast_to(ms[:, None], (b, MAX_UNITS, H, W, SKIP_CH))
    x = jnp.concatenate([ar, ms], axis=-1)                          # (B,MU,H,W,8)
    x = jnp.pad(x, ((0, 0), (0, 0), (0, GRID - H), (0, GRID - W), (0, 0)))
    x = x.reshape(b, MAX_UNITS, GRID * GRID, IN_CH)
    x = jnp.pad(x, ((0, 0), (0, 0), (0, S - GRID * GRID), (0, 0)))
    x = x.reshape(b, MAX_UNITS * S, IN_CH)                          # (B, R, 8)

    def full_spec(shape):
        n = len(shape)
        return pl.BlockSpec(shape, lambda i: (0,) * n)

    out = pl.pallas_call(
        _location_head_kernel,
        grid=(b,),
        in_specs=[
            pl.BlockSpec((1, MAX_UNITS * S, IN_CH), lambda i: (i, 0, 0)),
            full_spec(m8.shape), full_spec(m9.shape), full_spec(mv.shape),
            full_spec(w1.shape), full_spec(b1.shape),
            full_spec(w2p.shape), full_spec(b2.shape),
            full_spec(wd1p.shape), full_spec(bd1p.shape),
            full_spec(wd2p.shape), full_spec(bd2.shape),
        ],
        out_specs=pl.BlockSpec((1, MAX_UNITS, S, NCLS), lambda i: (i, 0, 0, 0)),
        out_shape=jax.ShapeDtypeStruct((b, MAX_UNITS, S, NCLS), jnp.float32),
        compiler_params=pltpu.CompilerParams(dimension_semantics=("parallel",)),
    )(x, m8, m9, mv, w1, b1, w2p, b2, wd1p, bd1p, wd2p, bd2)

    # tiny depth-to-space of the 16 stride-4 parity classes + crop to 38x38.
    p = out[:, :, :GRID * GRID, :].reshape(b, MAX_UNITS, GRID, GRID, 2, 2, 2, 2)
    p = jnp.transpose(p, (0, 1, 2, 4, 6, 3, 5, 7))
    p = p.reshape(b, MAX_UNITS, 4 * GRID, 4 * GRID)[:, :, :RES_X, :RES_Y]
    return p.reshape(b, MAX_UNITS, RES_X * RES_Y)


# --------------------------- parameters ----------------------------------------
def init_params(key, scale=0.1):
    """Deterministic init; shapes match the PyTorch layers (torch conventions)."""
    ks = jax.random.split(key, 8)
    w1_t = jax.random.normal(ks[0], (C1, IN_CH, 1, 1), jnp.float32) * scale  # Conv2d
    b1_t = jax.random.normal(ks[1], (C1,), jnp.float32) * scale
    w2_t = jax.random.normal(ks[2], (C2, C1, 3, 3), jnp.float32) * scale     # Conv2d
    b2_t = jax.random.normal(ks[3], (C2,), jnp.float32) * scale
    wd1_t = jax.random.normal(ks[4], (C2, C3, 4, 4), jnp.float32) * scale    # ConvT (in,out,kh,kw)
    bd1_t = jax.random.normal(ks[5], (C3,), jnp.float32) * scale
    wd2_t = jax.random.normal(ks[6], (C3, C4, 4, 4), jnp.float32) * scale    # ConvT
    bd2_t = jax.random.normal(ks[7], (C4,), jnp.float32) * scale
    return (w1_t, b1_t, w2_t, b2_t, wd1_t, bd1_t, wd2_t, bd2_t)


def to_kernel_params(tp):
    """Repack torch-convention weights + precompute validity masks for the kernel."""
    w1_t, b1_t, w2_t, b2_t, wd1_t, bd1_t, wd2_t, bd2_t = [np.asarray(a, np.float32)
                                                          for a in tp]
    # conv1: channels-last matmul weight over the concatenated [ar | map_skip] input.
    w1 = np.transpose(w1_t[:, :, 0, 0], (1, 0))                  # (8, 64)
    b1 = b1_t.reshape(1, C1)
    # conv2: one (64, 32) weight per 3x3 tap, tap index t = 3*(dy+1)+(dx+1).
    w2p = np.transpose(w2_t, (2, 3, 1, 0)).reshape(9, C1, C2)
    b2 = b2_t.reshape(1, C2)
    # deconv1: 4 taps [(m,n),(m,n-1),(m-1,n),(m-1,n-1)]; columns = 16ch x 4 parities.
    wd1p = np.zeros((4, C2, 4 * C3), np.float32)
    for v, (dr, dc) in enumerate(((0, 0), (0, 2), (2, 0), (2, 2))):
        for py in range(2):
            for px in range(2):
                c0 = C3 * (2 * py + px)
                wd1p[v, :, c0:c0 + C3] = wd1_t[:, :, py + dr, px + dc]
    bd1p = np.tile(bd1_t.reshape(1, C3), (1, 4))                 # (1, 64)
    # deconv2: 4 taps on the deconv1 parity planes; columns = 16 stride-4 classes.
    wdt = wd2_t[:, 0, :, :]                                      # (16, 4, 4) [c,kr,kc]
    wd2p = np.zeros((4, 4 * C3, NCLS), np.float32)
    for ry in range(2):
        for rx in range(2):
            for qy in range(2):
                for qx in range(2):
                    cls = 8 * ry + 4 * rx + 2 * qy + qx
                    srcs = (
                        (0, 2 * ry + rx, qy, qx),
                        (1 if rx == 0 else 0, 2 * ry + (1 - rx), qy, qx + 2),
                        (2 if ry == 0 else 0, 2 * (1 - ry) + rx, qy + 2, qx),
                        ((2 if ry == 0 else 0) + (1 if rx == 0 else 0),
                         2 * (1 - ry) + (1 - rx), qy + 2, qx + 2),
                    )
                    for (v, p, kr, kc) in srcs:
                        wd2p[v, C3 * p:C3 * p + C3, cls] = wdt[:, kr, kc]
    bd2 = bd2_t.reshape(1, 1)
    # masks on the per-unit zero-extended 10x10 grid (+4 dead slots).
    m8 = np.zeros((R, 1), np.float32)
    m9 = np.zeros((R, 1), np.float32)
    mv = np.zeros((R, NCLS), np.float32)
    for u in range(MAX_UNITS):
        for i in range(GRID):
            for j in range(GRID):
                pos = u * S + GRID * i + j
                if i < H and j < W:
                    m8[pos, 0] = 1.0
                if i < H + 1 and j < W + 1:
                    m9[pos, 0] = 1.0
                for ry in range(2):
                    for rx in range(2):
                        for qy in range(2):
                            for qx in range(2):
                                cls = 8 * ry + 4 * rx + 2 * qy + qx
                                if 4 * i + 2 * ry + qy < RES_X and 4 * j + 2 * rx + qx < RES_Y:
                                    mv[pos, cls] = 1.0
    return tuple(jnp.asarray(a, jnp.float32) for a in
                 (w1, b1, w2p, b2, wd1p, bd1p, wd2p, bd2, m8, m9, mv))


# --------------------------- pure-JAX reference ---------------------------------
def reference_forward(ar_embedding, map_skip, tp):
    w1_t, b1_t, w2_t, b2_t, wd1_t, bd1_t, wd2_t, bd2_t = tp
    b = ar_embedding.shape[0]
    ar = ar_embedding.reshape(b, MAX_UNITS, AR_CH, H, W)
    ms = jnp.broadcast_to(map_skip[:, None], (b, MAX_UNITS, SKIP_CH, H, W))
    x = jnp.concatenate([ar, ms], axis=2).reshape(b * MAX_UNITS, IN_CH, H, W)
    dn = ("NCHW", "OIHW", "NCHW")
    x = jax.lax.conv_general_dilated(x, w1_t, (1, 1), "VALID", dimension_numbers=dn)
    x = jax.nn.relu(x + b1_t[None, :, None, None])
    x = jax.lax.conv_general_dilated(x, w2_t, (1, 1), ((1, 1), (1, 1)),
                                     dimension_numbers=dn)
    x = jax.nn.relu(x + b2_t[None, :, None, None])
    wd1_o = jnp.transpose(wd1_t, (1, 0, 2, 3))[:, :, ::-1, ::-1]
    x = jax.lax.conv_general_dilated(x, wd1_o, (1, 1), ((3, 3), (3, 3)),
                                     lhs_dilation=(2, 2), dimension_numbers=dn)
    x = jax.nn.relu(x + bd1_t[None, :, None, None])
    wd2_o = jnp.transpose(wd2_t, (1, 0, 2, 3))[:, :, ::-1, ::-1]
    x = jax.lax.conv_general_dilated(x, wd2_o, (1, 1), ((3, 3), (3, 3)),
                                     lhs_dilation=(2, 2), dimension_numbers=dn)
    x = x + bd2_t[None, :, None, None]
    x = x.reshape(b, MAX_UNITS, RES_X * RES_Y)
    return jax.nn.softmax(x, axis=-1)


if __name__ == "__main__":
    key = jax.random.PRNGKey(0)
    kp, ka, km = jax.random.split(key, 3)
    torch_params = init_params(kp)
    kernel_params = to_kernel_params(torch_params)

    ar_embedding = jax.random.normal(ka, (BATCH, MAX_UNITS, AR_CH * H * W), jnp.float32)
    map_skip = jax.random.normal(km, (BATCH, SKIP_CH, H, W), jnp.float32)

    fwd = jax.jit(location_head_forward)
    out = jax.block_until_ready(fwd(ar_embedding, map_skip, kernel_params))

    assert out.shape == (BATCH, MAX_UNITS, RES_X * RES_Y)
    np.testing.assert_allclose(np.asarray(jnp.sum(out, axis=-1)), 1.0, atol=1e-4)

    ref = reference_forward(ar_embedding, map_skip, torch_params)
    np.testing.assert_allclose(np.asarray(out), np.asarray(ref), atol=1e-5, rtol=1e-3)

    print("KERNEL_OK")
</pallas_src>

<mosaic_0001>
module attributes {stable_mosaic.version = 11 : i64} {
  func.func @_location_head_kernel(%arg0: i32, %arg1: memref<1x208x8xf32, #tpu.memory_space<vmem>>, %arg2: memref<208x1xf32, #tpu.memory_space<vmem>>, %arg3: memref<208x1xf32, #tpu.memory_space<vmem>>, %arg4: memref<208x16xf32, #tpu.memory_space<vmem>>, %arg5: memref<8x64xf32, #tpu.memory_space<vmem>>, %arg6: memref<1x64xf32, #tpu.memory_space<vmem>>, %arg7: memref<9x64x32xf32, #tpu.memory_space<vmem>>, %arg8: memref<1x32xf32, #tpu.memory_space<vmem>>, %arg9: memref<4x32x64xf32, #tpu.memory_space<vmem>>, %arg10: memref<1x64xf32, #tpu.memory_space<vmem>>, %arg11: memref<4x64x16xf32, #tpu.memory_space<vmem>>, %arg12: memref<1x1xf32, #tpu.memory_space<vmem>>, %arg13: memref<1x2x104x16xf32, #tpu.memory_space<vmem>>) attributes {dimension_semantics = [#tpu.dimension_semantics<parallel>], iteration_bounds = array<i64: 2>, scalar_prefetch = 0 : i64, scratch_operands = 0 : i64, tpu.core_type = #tpu.core_type<tc>, window_params = [{transform_indices = @transform_0, window_bounds = array<i64: 1, 208, 8>}, {pipeline_mode = #tpu.pipeline_mode<synchronous>, transform_indices = @transform_1, window_bounds = array<i64: 208, 1>}, {pipeline_mode = #tpu.pipeline_mode<synchronous>, transform_indices = @transform_2, window_bounds = array<i64: 208, 1>}, {pipeline_mode = #tpu.pipeline_mode<synchronous>, transform_indices = @transform_3, window_bounds = array<i64: 208, 16>}, {pipeline_mode = #tpu.pipeline_mode<synchronous>, transform_indices = @transform_4, window_bounds = array<i64: 8, 64>}, {pipeline_mode = #tpu.pipeline_mode<synchronous>, transform_indices = @transform_5, window_bounds = array<i64: 1, 64>}, {pipeline_mode = #tpu.pipeline_mode<synchronous>, transform_indices = @transform_6, window_bounds = array<i64: 9, 64, 32>}, {pipeline_mode = #tpu.pipeline_mode<synchronous>, transform_indices = @transform_7, window_bounds = array<i64: 1, 32>}, {pipeline_mode = #tpu.pipeline_mode<synchronous>, transform_indices = @transform_8, window_bounds = array<i64: 4, 32, 64>}, {pipeline_mode = #tpu.pipeline_mode<synchronous>, transform_indices = @transform_9, window_bounds = array<i64: 1, 64>}, {pipeline_mode = #tpu.pipeline_mode<synchronous>, transform_indices = @transform_10, window_bounds = array<i64: 4, 64, 16>}, {pipeline_mode = #tpu.pipeline_mode<synchronous>, transform_indices = @transform_11, window_bounds = array<i64: 1, 1>}, {transform_indices = @transform_12, window_bounds = array<i64: 1, 2, 104, 16>}]} {
    %c0 = arith.constant 0 : index
    %c0_0 = arith.constant 0 : index
    %0 = vector.load %arg2[%c0, %c0_0] : memref<208x1xf32, #tpu.memory_space<vmem>>, vector<208x1xf32>
    %c0_1 = arith.constant 0 : index
    %c0_2 = arith.constant 0 : index
    %1 = vector.load %arg3[%c0_1, %c0_2] : memref<208x1xf32, #tpu.memory_space<vmem>>, vector<208x1xf32>
    %c0_3 = arith.constant 0 : index
    %c0_4 = arith.constant 0 : index
    %c0_5 = arith.constant 0 : index
    %2 = vector.load %arg1[%c0_3, %c0_4, %c0_5] : memref<1x208x8xf32, #tpu.memory_space<vmem>>, vector<1x208x8xf32>
    %3 = vector.shape_cast %2 : vector<1x208x8xf32> to vector<208x8xf32>
    %c0_6 = arith.constant 0 : index
    %c0_7 = arith.constant 0 : index
    %4 = vector.load %arg5[%c0_6, %c0_7] : memref<8x64xf32, #tpu.memory_space<vmem>>, vector<8x64xf32>
    %cst = arith.constant dense<0.000000e+00> : vector<208x64xf32>
    %5 = tpu.matmul %3, %4, %cst {dimension_numbers = #tpu.dot_dimension_numbers<[1], [0], [0], [1], [0, 0, 1, 1], [], []>} : vector<208x8xf32>, vector<8x64xf32>, vector<208x64xf32> -> vector<208x64xf32>
    %c0_8 = arith.constant 0 : index
    %c0_9 = arith.constant 0 : index
    %6 = vector.load %arg6[%c0_8, %c0_9] : memref<1x64xf32, #tpu.memory_space<vmem>>, vector<1x64xf32>
    %7 = vector.broadcast %6 : vector<1x64xf32> to vector<208x64xf32>
    %8 = arith.addf %5, %7 : vector<208x64xf32>
    %cst_10 = arith.constant 0.000000e+00 : f32
    %9 = vector.broadcast %cst_10 : f32 to vector<208x64xf32>
    %10 = arith.maximumf %8, %9 : vector<208x64xf32>
    %11 = vector.broadcast %0 : vector<208x1xf32> to vector<208x64xf32>
    %12 = arith.mulf %10, %11 : vector<208x64xf32>
    %cst_11 = arith.constant 0.000000e+00 : f32
    %13 = vector.broadcast %cst_11 : f32 to vector<16x64xf32>
    %14 = tpu.concatenate %13, %12, %13 in 0 : vector<16x64xf32>, vector<208x64xf32>, vector<16x64xf32> -> vector<240x64xf32>
    %c4 = arith.constant 4 : index
    %c0_12 = arith.constant 0 : index
    %c0_13 = arith.constant 0 : index
    %15 = vector.load %arg7[%c4, %c0_12, %c0_13] : memref<9x64x32xf32, #tpu.memory_space<vmem>>, vector<1x64x32xf32>
    %16 = vector.shape_cast %15 : vector<1x64x32xf32> to vector<64x32xf32>
    %cst_14 = arith.constant dense<0.000000e+00> : vector<208x32xf32>
    %17 = tpu.matmul %12, %16, %cst_14 {dimension_numbers = #tpu.dot_dimension_numbers<[1], [0], [0], [1], [0, 0, 1, 1], [], []>} : vector<208x64xf32>, vector<64x32xf32>, vector<208x32xf32> -> vector<208x32xf32>
    %18 = vector.extract_strided_slice %14 {offsets = [5, 0], sizes = [208, 64], strides = [1, 1]} : vector<240x64xf32> to vector<208x64xf32>
    %c0_15 = arith.constant 0 : index
    %c0_16 = arith.constant 0 : index
    %c0_17 = arith.constant 0 : index
    %19 = vector.load %arg7[%c0_15, %c0_16, %c0_17] : memref<9x64x32xf32, #tpu.memory_space<vmem>>, vector<1x64x32xf32>
    %20 = vector.shape_cast %19 : vector<1x64x32xf32> to vector<64x32xf32>
    %cst_18 = arith.constant dense<0.000000e+00> : vector<208x32xf32>
    %21 = tpu.matmul %18, %20, %cst_18 {dimension_numbers = #tpu.dot_dimension_numbers<[1], [0], [0], [1], [0, 0, 1, 1], [], []>} : vector<208x64xf32>, vector<64x32xf32>, vector<208x32xf32> -> vector<208x32xf32>
    %22 = arith.addf %17, %21 : vector<208x32xf32>
    %23 = vector.extract_strided_slice %14 {offsets = [6, 0], sizes = [208, 64], strides = [1, 1]} : vector<240x64xf32> to vector<208x64xf32>
    %c1 = arith.constant 1 : index
    %c0_19 = arith.constant 0 : index
    %c0_20 = arith.constant 0 : index
    %24 = vector.load %arg7[%c1, %c0_19, %c0_20] : memref<9x64x32xf32, #tpu.memory_space<vmem>>, vector<1x64x32xf32>
    %25 = vector.shape_cast %24 : vector<1x64x32xf32> to vector<64x32xf32>
    %cst_21 = arith.constant dense<0.000000e+00> : vector<208x32xf32>
    %26 = tpu.matmul %23, %25, %cst_21 {dimension_numbers = #tpu.dot_dimension_numbers<[1], [0], [0], [1], [0, 0, 1, 1], [], []>} : vector<208x64xf32>, vector<64x32xf32>, vector<208x32xf32> -> vector<208x32xf32>
    %27 = arith.addf %22, %26 : vector<208x32xf32>
    %28 = vector.extract_strided_slice %14 {offsets = [7, 0], sizes = [208, 64], strides = [1, 1]} : vector<240x64xf32> to vector<208x64xf32>
    %c2 = arith.constant 2 : index
    %c0_22 = arith.constant 0 : index
    %c0_23 = arith.constant 0 : index
    %29 = vector.load %arg7[%c2, %c0_22, %c0_23] : memref<9x64x32xf32, #tpu.memory_space<vmem>>, vector<1x64x32xf32>
    %30 = vector.shape_cast %29 : vector<1x64x32xf32> to vector<64x32xf32>
    %cst_24 = arith.constant dense<0.000000e+00> : vector<208x32xf32>
    %31 = tpu.matmul %28, %30, %cst_24 {dimension_numbers = #tpu.dot_dimension_numbers<[1], [0], [0], [1], [0, 0, 1, 1], [], []>} : vector<208x64xf32>, vector<64x32xf32>, vector<208x32xf32> -> vector<208x32xf32>
    %32 = arith.addf %27, %31 : vector<208x32xf32>
    %33 = vector.extract_strided_slice %14 {offsets = [15, 0], sizes = [208, 64], strides = [1, 1]} : vector<240x64xf32> to vector<208x64xf32>
    %c3 = arith.constant 3 : index
    %c0_25 = arith.constant 0 : index
    %c0_26 = arith.constant 0 : index
    %34 = vector.load %arg7[%c3, %c0_25, %c0_26] : memref<9x64x32xf32, #tpu.memory_space<vmem>>, vector<1x64x32xf32>
    %35 = vector.shape_cast %34 : vector<1x64x32xf32> to vector<64x32xf32>
    %cst_27 = arith.constant dense<0.000000e+00> : vector<208x32xf32>
    %36 = tpu.matmul %33, %35, %cst_27 {dimension_numbers = #tpu.dot_dimension_numbers<[1], [0], [0], [1], [0, 0, 1, 1], [], []>} : vector<208x64xf32>, vector<64x32xf32>, vector<208x32xf32> -> vector<208x32xf32>
    %37 = arith.addf %32, %36 : vector<208x32xf32>
    %38 = vector.extract_strided_slice %14 {offsets = [17, 0], sizes = [208, 64], strides = [1, 1]} : vector<240x64xf32> to vector<208x64xf32>
    %c5 = arith.constant 5 : index
    %c0_28 = arith.constant 0 : index
    %c0_29 = arith.constant 0 : index
    %39 = vector.load %arg7[%c5, %c0_28, %c0_29] : memref<9x64x32xf32, #tpu.memory_space<vmem>>, vector<1x64x32xf32>
    %40 = vector.shape_cast %39 : vector<1x64x32xf32> to vector<64x32xf32>
    %cst_30 = arith.constant dense<0.000000e+00> : vector<208x32xf32>
    %41 = tpu.matmul %38, %40, %cst_30 {dimension_numbers = #tpu.dot_dimension_numbers<[1], [0], [0], [1], [0, 0, 1, 1], [], []>} : vector<208x64xf32>, vector<64x32xf32>, vector<208x32xf32> -> vector<208x32xf32>
    %42 = arith.addf %37, %41 : vector<208x32xf32>
    %43 = vector.extract_strided_slice %14 {offsets = [25, 0], sizes = [208, 64], strides = [1, 1]} : vector<240x64xf32> to vector<208x64xf32>
    %c6 = arith.constant 6 : index
    %c0_31 = arith.constant 0 : index
    %c0_32 = arith.constant 0 : index
    %44 = vector.load %arg7[%c6, %c0_31, %c0_32] : memref<9x64x32xf32, #tpu.memory_space<vmem>>, vector<1x64x32xf32>
    %45 = vector.shape_cast %44 : vector<1x64x32xf32> to vector<64x32xf32>
    %cst_33 = arith.constant dense<0.000000e+00> : vector<208x32xf32>
    %46 = tpu.matmul %43, %45, %cst_33 {dimension_numbers = #tpu.dot_dimension_numbers<[1], [0], [0], [1], [0, 0, 1, 1], [], []>} : vector<208x64xf32>, vector<64x32xf32>, vector<208x32xf32> -> vector<208x32xf32>
    %47 = arith.addf %42, %46 : vector<208x32xf32>
    %48 = vector.extract_strided_slice %14 {offsets = [26, 0], sizes = [208, 64], strides = [1, 1]} : vector<240x64xf32> to vector<208x64xf32>
    %c7 = arith.constant 7 : index
    %c0_34 = arith.constant 0 : index
    %c0_35 = arith.constant 0 : index
    %49 = vector.load %arg7[%c7, %c0_34, %c0_35] : memref<9x64x32xf32, #tpu.memory_space<vmem>>, vector<1x64x32xf32>
    %50 = vector.shape_cast %49 : vector<1x64x32xf32> to vector<64x32xf32>
    %cst_36 = arith.constant dense<0.000000e+00> : vector<208x32xf32>
    %51 = tpu.matmul %48, %50, %cst_36 {dimension_numbers = #tpu.dot_dimension_numbers<[1], [0], [0], [1], [0, 0, 1, 1], [], []>} : vector<208x64xf32>, vector<64x32xf32>, vector<208x32xf32> -> vector<208x32xf32>
    %52 = arith.addf %47, %51 : vector<208x32xf32>
    %53 = vector.extract_strided_slice %14 {offsets = [27, 0], sizes = [208, 64], strides = [1, 1]} : vector<240x64xf32> to vector<208x64xf32>
    %c8 = arith.constant 8 : index
    %c0_37 = arith.constant 0 : index
    %c0_38 = arith.constant 0 : index
    %54 = vector.load %arg7[%c8, %c0_37, %c0_38] : memref<9x64x32xf32, #tpu.memory_space<vmem>>, vector<1x64x32xf32>
    %55 = vector.shape_cast %54 : vector<1x64x32xf32> to vector<64x32xf32>
    %cst_39 = arith.constant dense<0.000000e+00> : vector<208x32xf32>
    %56 = tpu.matmul %53, %55, %cst_39 {dimension_numbers = #tpu.dot_dimension_numbers<[1], [0], [0], [1], [0, 0, 1, 1], [], []>} : vector<208x64xf32>, vector<64x32xf32>, vector<208x32xf32> -> vector<208x32xf32>
    %57 = arith.addf %52, %56 : vector<208x32xf32>
    %c0_40 = arith.constant 0 : index
    %c0_41 = arith.constant 0 : index
    %58 = vector.load %arg8[%c0_40, %c0_41] : memref<1x32xf32, #tpu.memory_space<vmem>>, vector<1x32xf32>
    %59 = vector.broadcast %58 : vector<1x32xf32> to vector<208x32xf32>
    %60 = arith.addf %57, %59 : vector<208x32xf32>
    %cst_42 = arith.constant 0.000000e+00 : f32
    %61 = vector.broadcast %cst_42 : f32 to vector<208x32xf32>
    %62 = arith.maximumf %60, %61 : vector<208x32xf32>
    %63 = vector.broadcast %0 : vector<208x1xf32> to vector<208x32xf32>
    %64 = arith.mulf %62, %63 : vector<208x32xf32>
    %cst_43 = arith.constant 0.000000e+00 : f32
    %65 = vector.broadcast %cst_43 : f32 to vector<16x32xf32>
    %66 = tpu.concatenate %65, %64, %65 in 0 : vector<16x32xf32>, vector<208x32xf32>, vector<16x32xf32> -> vector<240x32xf32>
    %c0_44 = arith.constant 0 : index
    %c0_45 = arith.constant 0 : index
    %c0_46 = arith.constant 0 : index
    %67 = vector.load %arg9[%c0_44, %c0_45, %c0_46] : memref<4x32x64xf32, #tpu.memory_space<vmem>>, vector<1x32x64xf32>
    %68 = vector.shape_cast %67 : vector<1x32x64xf32> to vector<32x64xf32>
    %cst_47 = arith.constant dense<0.000000e+00> : vector<208x64xf32>
    %69 = tpu.matmul %64, %68, %cst_47 {dimension_numbers = #tpu.dot_dimension_numbers<[1], [0], [0], [1], [0, 0, 1, 1], [], []>} : vector<208x32xf32>, vector<32x64xf32>, vector<208x64xf32> -> vector<208x64xf32>
    %70 = vector.extract_strided_slice %66 {offsets = [15, 0], sizes = [208, 32], strides = [1, 1]} : vector<240x32xf32> to vector<208x32xf32>
    %c1_48 = arith.constant 1 : index
    %c0_49 = arith.constant 0 : index
    %c0_50 = arith.constant 0 : index
    %71 = vector.load %arg9[%c1_48, %c0_49, %c0_50] : memref<4x32x64xf32, #tpu.memory_space<vmem>>, vector<1x32x64xf32>
    %72 = vector.shape_cast %71 : vector<1x32x64xf32> to vector<32x64xf32>
    %cst_51 = arith.constant dense<0.000000e+00> : vector<208x64xf32>
    %73 = tpu.matmul %70, %72, %cst_51 {dimension_numbers = #tpu.dot_dimension_numbers<[1], [0], [0], [1], [0, 0, 1, 1], [], []>} : vector<208x32xf32>, vector<32x64xf32>, vector<208x64xf32> -> vector<208x64xf32>
    %74 = arith.addf %69, %73 : vector<208x64xf32>
    %75 = vector.extract_strided_slice %66 {offsets = [6, 0], sizes = [208, 32], strides = [1, 1]} : vector<240x32xf32> to vector<208x32xf32>
    %c2_52 = arith.constant 2 : index
    %c0_53 = arith.constant 0 : index
    %c0_54 = arith.constant 0 : index
    %76 = vector.load %arg9[%c2_52, %c0_53, %c0_54] : memref<4x32x64xf32, #tpu.memory_space<vmem>>, vector<1x32x64xf32>
    %77 = vector.shape_cast %76 : vector<1x32x64xf32> to vector<32x64xf32>
    %cst_55 = arith.constant dense<0.000000e+00> : vector<208x64xf32>
    %78 = tpu.matmul %75, %77, %cst_55 {dimension_numbers = #tpu.dot_dimension_numbers<[1], [0], [0], [1], [0, 0, 1, 1], [], []>} : vector<208x32xf32>, vector<32x64xf32>, vector<208x64xf32> -> vector<208x64xf32>
    %79 = arith.addf %74, %78 : vector<208x64xf32>
    %80 = vector.extract_strided_slice %66 {offsets = [5, 0], sizes = [208, 32], strides = [1, 1]} : vector<240x32xf32> to vector<208x32xf32>
    %c3_56 = arith.constant 3 : index
    %c0_57 = arith.constant 0 : index
    %c0_58 = arith.constant 0 : index
    %81 = vector.load %arg9[%c3_56, %c0_57, %c0_58] : memref<4x32x64xf32, #tpu.memory_space<vmem>>, vector<1x32x64xf32>
    %82 = vector.shape_cast %81 : vector<1x32x64xf32> to vector<32x64xf32>
    %cst_59 = arith.constant dense<0.000000e+00> : vector<208x64xf32>
    %83 = tpu.matmul %80, %82, %cst_59 {dimension_numbers = #tpu.dot_dimension_numbers<[1], [0], [0], [1], [0, 0, 1, 1], [], []>} : vector<208x32xf32>, vector<32x64xf32>, vector<208x64xf32> -> vector<208x64xf32>
    %84 = arith.addf %79, %83 : vector<208x64xf32>
    %c0_60 = arith.constant 0 : index
    %c0_61 = arith.constant 0 : index
    %85 = vector.load %arg10[%c0_60, %c0_61] : memref<1x64xf32, #tpu.memory_space<vmem>>, vector<1x64xf32>
    %86 = vector.broadcast %85 : vector<1x64xf32> to vector<208x64xf32>
    %87 = arith.addf %84, %86 : vector<208x64xf32>
    %cst_62 = arith.constant 0.000000e+00 : f32
    %88 = vector.broadcast %cst_62 : f32 to vector<208x64xf32>
    %89 = arith.maximumf %87, %88 : vector<208x64xf32>
    %90 = vector.broadcast %1 : vector<208x1xf32> to vector<208x64xf32>
    %91 = arith.mulf %89, %90 : vector<208x64xf32>
    %cst_63 = arith.constant 0.000000e+00 : f32
    %92 = vector.broadcast %cst_63 : f32 to vector<16x64xf32>
    %93 = tpu.concatenate %92, %91, %92 in 0 : vector<16x64xf32>, vector<208x64xf32>, vector<16x64xf32> -> vector<240x64xf32>
    %c0_64 = arith.constant 0 : index
    %c0_65 = arith.constant 0 : index
    %c0_66 = arith.constant 0 : index
    %94 = vector.load %arg11[%c0_64, %c0_65, %c0_66] : memref<4x64x16xf32, #tpu.memory_space<vmem>>, vector<1x64x16xf32>
    %95 = vector.shape_cast %94 : vector<1x64x16xf32> to vector<64x16xf32>
    %cst_67 = arith.constant dense<0.000000e+00> : vector<208x16xf32>
    %96 = tpu.matmul %91, %95, %cst_67 {dimension_numbers = #tpu.dot_dimension_numbers<[1], [0], [0], [1], [0, 0, 1, 1], [], []>} : vector<208x64xf32>, vector<64x16xf32>, vector<208x16xf32> -> vector<208x16xf32>
    %97 = vector.extract_strided_slice %93 {offsets = [15, 0], sizes = [208, 64], strides = [1, 1]} : vector<240x64xf32> to vector<208x64xf32>
    %c1_68 = arith.constant 1 : index
    %c0_69 = arith.constant 0 : index
    %c0_70 = arith.constant 0 : index
    %98 = vector.load %arg11[%c1_68, %c0_69, %c0_70] : memref<4x64x16xf32, #tpu.memory_space<vmem>>, vector<1x64x16xf32>
    %99 = vector.shape_cast %98 : vector<1x64x16xf32> to vector<64x16xf32>
    %cst_71 = arith.constant dense<0.000000e+00> : vector<208x16xf32>
    %100 = tpu.matmul %97, %99, %cst_71 {dimension_numbers = #tpu.dot_dimension_numbers<[1], [0], [0], [1], [0, 0, 1, 1], [], []>} : vector<208x64xf32>, vector<64x16xf32>, vector<208x16xf32> -> vector<208x16xf32>
    %101 = arith.addf %96, %100 : vector<208x16xf32>
    %102 = vector.extract_strided_slice %93 {offsets = [6, 0], sizes = [208, 64], strides = [1, 1]} : vector<240x64xf32> to vector<208x64xf32>
    %c2_72 = arith.constant 2 : index
    %c0_73 = arith.constant 0 : index
    %c0_74 = arith.constant 0 : index
    %103 = vector.load %arg11[%c2_72, %c0_73, %c0_74] : memref<4x64x16xf32, #tpu.memory_space<vmem>>, vector<1x64x16xf32>
    %104 = vector.shape_cast %103 : vector<1x64x16xf32> to vector<64x16xf32>
    %cst_75 = arith.constant dense<0.000000e+00> : vector<208x16xf32>
    %105 = tpu.matmul %102, %104, %cst_75 {dimension_numbers = #tpu.dot_dimension_numbers<[1], [0], [0], [1], [0, 0, 1, 1], [], []>} : vector<208x64xf32>, vector<64x16xf32>, vector<208x16xf32> -> vector<208x16xf32>
    %106 = arith.addf %101, %105 : vector<208x16xf32>
    %107 = vector.extract_strided_slice %93 {offsets = [5, 0], sizes = [208, 64], strides = [1, 1]} : vector<240x64xf32> to vector<208x64xf32>
    %c3_76 = arith.constant 3 : index
    %c0_77 = arith.constant 0 : index
    %c0_78 = arith.constant 0 : index
    %108 = vector.load %arg11[%c3_76, %c0_77, %c0_78] : memref<4x64x16xf32, #tpu.memory_space<vmem>>, vector<1x64x16xf32>
    %109 = vector.shape_cast %108 : vector<1x64x16xf32> to vector<64x16xf32>
    %cst_79 = arith.constant dense<0.000000e+00> : vector<208x16xf32>
    %110 = tpu.matmul %107, %109, %cst_79 {dimension_numbers = #tpu.dot_dimension_numbers<[1], [0], [0], [1], [0, 0, 1, 1], [], []>} : vector<208x64xf32>, vector<64x16xf32>, vector<208x16xf32> -> vector<208x16xf32>
    %111 = arith.addf %106, %110 : vector<208x16xf32>
    %c0_80 = arith.constant 0 : index
    %c0_81 = arith.constant 0 : index
    %112 = vector.load %arg12[%c0_80, %c0_81] : memref<1x1xf32, #tpu.memory_space<vmem>>, vector<1x1xf32>
    %113 = vector.broadcast %112 : vector<1x1xf32> to vector<208x16xf32>
    %114 = arith.addf %111, %113 : vector<208x16xf32>
    %c0_82 = arith.constant 0 : index
    %c0_83 = arith.constant 0 : index
    %115 = vector.load %arg4[%c0_82, %c0_83] : memref<208x16xf32, #tpu.memory_space<vmem>>, vector<208x16xf32>
    %cst_84 = arith.constant 0.000000e+00 : f32
    %116 = vector.broadcast %cst_84 : f32 to vector<208x16xf32>
    %117 = arith.cmpf ogt, %115, %116 : vector<208x16xf32>
    %cst_85 = arith.constant -1.000000e+30 : f32
    %118 = vector.broadcast %cst_85 : f32 to vector<208x16xf32>
    %119 = arith.select %117, %114, %118 : vector<208x16xi1>, vector<208x16xf32>
    %120 = vector.shape_cast %119 : vector<208x16xf32> to vector<2x104x16xf32>
    %cst_86 = arith.constant dense<0xFF800000> : vector<2x104xf32>
    %121 = vector.multi_reduction <maximumf>, %120, %cst_86 [2] : vector<2x104x16xf32> to vector<2x104xf32>
    %122 = vector.shape_cast %121 : vector<2x104xf32> to vector<2x104x1xf32>
    %cst_87 = arith.constant dense<0xFF800000> : vector<2x1xf32>
    %123 = vector.multi_reduction <maximumf>, %122, %cst_87 [1] : vector<2x104x1xf32> to vector<2x1xf32>
    %124 = vector.shape_cast %123 : vector<2x1xf32> to vector<2x1x1xf32>
    %125 = vector.broadcast %124 : vector<2x1x1xf32> to vector<2x104x16xf32>
    %126 = arith.subf %120, %125 : vector<2x104x16xf32>
    %127 = math.exp %126 : vector<2x104x16xf32>
    %128 = vector.shape_cast %115 : vector<208x16xf32> to vector<2x104x16xf32>
    %129 = arith.mulf %127, %128 : vector<2x104x16xf32>
    %cst_88 = arith.constant dense<0.000000e+00> : vector<2x104xf32>
    %130 = vector.multi_reduction <add>, %129, %cst_88 [2] : vector<2x104x16xf32> to vector<2x104xf32>
    %131 = vector.shape_cast %130 : vector<2x104xf32> to vector<2x104x1xf32>
    %cst_89 = arith.constant dense<0.000000e+00> : vector<2x1xf32>
    %132 = vector.multi_reduction <add>, %131, %cst_89 [1] : vector<2x104x1xf32> to vector<2x1xf32>
    %133 = vector.shape_cast %132 : vector<2x1xf32> to vector<2x1x1xf32>
    %cst_90 = arith.constant 1.000000e+00 : f32
    %134 = vector.broadcast %cst_90 : f32 to vector<2x1x1xf32>
    %135 = arith.divf %134, %133 : vector<2x1x1xf32>
    %136 = vector.broadcast %135 : vector<2x1x1xf32> to vector<2x104x16xf32>
    %137 = arith.mulf %129, %136 : vector<2x104x16xf32>
    %c0_91 = arith.constant 0 : index
    %c0_92 = arith.constant 0 : index
    %c0_93 = arith.constant 0 : index
    %c0_94 = arith.constant 0 : index
    %138 = vector.load %arg13[%c0_91, %c0_92, %c0_93, %c0_94] : memref<1x2x104x16xf32, #tpu.memory_space<vmem>>, vector<1x2x104x16xf32>
    %139 = vector.shape_cast %138 : vector<1x2x104x16xf32> to vector<2x104x16xf32>
    %140 = vector.shape_cast %137 : vector<2x104x16xf32> to vector<1x2x104x16xf32>
    tpu.vector_store %arg13[%c0_91, %c0_92, %c0_93, %c0_94], %140 {strides = array<i32>} : memref<1x2x104x16xf32, #tpu.memory_space<vmem>>, vector<1x2x104x16xf32>,
    return
  }
  func.func @transform_0(%arg0: i32) -> (i32, i32, i32) {
    %c0_i32 = arith.constant 0 : i32
    %c0_i32_0 = arith.constant 0 : i32
    %c0_i32_1 = arith.constant 0 : i32
    return %arg0, %c0_i32, %c0_i32_0 : i32, i32, i32
  }
  func.func @transform_1(%arg0: i32) -> (i32, i32) {
    %c0_i32 = arith.constant 0 : i32
    %c0_i32_0 = arith.constant 0 : i32
    %c0_i32_1 = arith.constant 0 : i32
    return %c0_i32, %c0_i32_0 : i32, i32
  }
  func.func @transform_2(%arg0: i32) -> (i32, i32) {
    %c0_i32 = arith.constant 0 : i32
    %c0_i32_0 = arith.constant 0 : i32
    %c0_i32_1 = arith.constant 0 : i32
    return %c0_i32, %c0_i32_0 : i32, i32
  }
  func.func @transform_3(%arg0: i32) -> (i32, i32) {
    %c0_i32 = arith.constant 0 : i32
    %c0_i32_0 = arith.constant 0 : i32
    %c0_i32_1 = arith.constant 0 : i32
    return %c0_i32, %c0_i32_0 : i32, i32
  }
  func.func @transform_4(%arg0: i32) -> (i32, i32) {
    %c0_i32 = arith.constant 0 : i32
    %c0_i32_0 = arith.constant 0 : i32
    %c0_i32_1 = arith.constant 0 : i32
    return %c0_i32, %c0_i32_0 : i32, i32
  }
  func.func @transform_5(%arg0: i32) -> (i32, i32) {
    %c0_i32 = arith.constant 0 : i32
    %c0_i32_0 = arith.constant 0 : i32
    %c0_i32_1 = arith.constant 0 : i32
    return %c0_i32, %c0_i32_0 : i32, i32
  }
  func.func @transform_6(%arg0: i32) -> (i32, i32, i32) {
    %c0_i32 = arith.constant 0 : i32
    %c0_i32_0 = arith.constant 0 : i32
    %c0_i32_1 = arith.constant 0 : i32
    %c0_i32_2 = arith.constant 0 : i32
    return %c0_i32, %c0_i32_0, %c0_i32_1 : i32, i32, i32
  }
  func.func @transform_7(%arg0: i32) -> (i32, i32) {
    %c0_i32 = arith.constant 0 : i32
    %c0_i32_0 = arith.constant 0 : i32
    %c0_i32_1 = arith.constant 0 : i32
    return %c0_i32, %c0_i32_0 : i32, i32
  }
  func.func @transform_8(%arg0: i32) -> (i32, i32, i32) {
    %c0_i32 = arith.constant 0 : i32
    %c0_i32_0 = arith.constant 0 : i32
    %c0_i32_1 = arith.constant 0 : i32
    %c0_i32_2 = arith.constant 0 : i32
    return %c0_i32, %c0_i32_0, %c0_i32_1 : i32, i32, i32
  }
  func.func @transform_9(%arg0: i32) -> (i32, i32) {
    %c0_i32 = arith.constant 0 : i32
    %c0_i32_0 = arith.constant 0 : i32
    %c0_i32_1 = arith.constant 0 : i32
    return %c0_i32, %c0_i32_0 : i32, i32
  }
  func.func @transform_10(%arg0: i32) -> (i32, i32, i32) {
    %c0_i32 = arith.constant 0 : i32
    %c0_i32_0 = arith.constant 0 : i32
    %c0_i32_1 = arith.constant 0 : i32
    %c0_i32_2 = arith.constant 0 : i32
    return %c0_i32, %c0_i32_0, %c0_i32_1 : i32, i32, i32
  }
  func.func @transform_11(%arg0: i32) -> (i32, i32) {
    %c0_i32 = arith.constant 0 : i32
    %c0_i32_0 = arith.constant 0 : i32
    %c0_i32_1 = arith.constant 0 : i32
    return %c0_i32, %c0_i32_0 : i32, i32
  }
  func.func @transform_12(%arg0: i32) -> (i32, i32, i32, i32) {
    %c0_i32 = arith.constant 0 : i32
    %c0_i32_0 = arith.constant 0 : i32
    %c0_i32_1 = arith.constant 0 : i32
    %c0_i32_2 = arith.constant 0 : i32
    return %arg0, %c0_i32, %c0_i32_0, %c0_i32_1 : i32, i32, i32, i32
  }
}

</mosaic_0001>

<llo_original>
// kernel: location_head_forward.1
$region0: #{location_head_forward.1}
  #allocation0 [shape = 'u32[]', space=smem, size = 0x4, offset = 0x4, fixed_abs, tag = 'smem constant byte address 0x4 - core index']
  #allocation1 [shape = 'u32[144,128]{1,0:T(1,128)}', space=vmem, size = 0x12000, scoped, tag = 'internal scratch']
  #allocation2 [shape = 'f32[1,1]{1,0:T(1,128)S(1)}', space=vmem, size = 0x200, scoped, tag = 'scoped memory for location_head_forward.1']
  %s0 = inlined_call_operand.vmem [shape: f32[2,208,8], index: 0, kind: input, shape index: {}]
  %s1 = inlined_call_operand.vmem [shape: f32[208,1], index: 1, kind: input, shape index: {}]
  %s2 = inlined_call_operand.vmem [shape: f32[208,1], index: 2, kind: input, shape index: {}]
  %s3 = inlined_call_operand.vmem [shape: f32[208,16], index: 3, kind: input, shape index: {}]
  %s4 = inlined_call_operand.vmem [shape: f32[8,64], index: 4, kind: input, shape index: {}]
  %s5 = inlined_call_operand.vmem [shape: f32[1,64], index: 5, kind: input, shape index: {}]
  %s6 = inlined_call_operand.vmem [shape: f32[9,64,32], index: 6, kind: input, shape index: {}]
  %s7 = inlined_call_operand.vmem [shape: f32[1,32], index: 7, kind: input, shape index: {}]
  %s8 = inlined_call_operand.vmem [shape: f32[4,32,64], index: 8, kind: input, shape index: {}]
  %s9 = inlined_call_operand.vmem [shape: f32[1,64], index: 9, kind: input, shape index: {}]
  %s10 = inlined_call_operand.vmem [shape: f32[4,64,16], index: 10, kind: input, shape index: {}]
  %s11 = inlined_call_operand.<no memory space> [shape: f32[1,1], index: 11, kind: input, shape index: {}]
  %s12 = inlined_call_operand.vmem [shape: f32[2,2,104,16], index: 12, kind: output, shape index: {}]
  %s13 = sld [smem:[#allocation0]]
  $region81: #{location_head_forward.1} parent=0
    _
  %s15 = ssub.s32 1, %s13
  %s16 = scalar_select 0, %s15, %s13
  %v17 = vstv %s11
  %18 = vst [vmem:[#allocation2] sm:$0x1] %v17
  loop: start=0, step=1, limit=4
  $region2: #{location_head_forward.1} parent=0 // loop_pre_header
    _
  $region3: #{location_head_forward.1} parent=0 // loop_header
    %s20 = sphi 0, %s24
    %p21 = scmp.ge.s32.totalorder %s20, 4
    %s30 = sphi 0, %s32
    %s33 = sphi 0, %s30
    %s34 = sphi 0, %s33
    %s50 = sphi 0, %s34
    %s54 = sphi 0, %s54
    %s56 = sphi 0, %s54
    %s57 = sphi 0, %s56
    %s71 = sphi 0, %s57
    %s75 = sphi 0, %s75
    %s77 = sphi 0, %s75
    %s78 = sphi 0, %s77
    %s92 = sphi 0, %s78
    %s96 = sphi 0, %s96
    %s98 = sphi 0, %s96
    %s99 = sphi 0, %s98
    %s113 = sphi 0, %s99
    %s117 = sphi 0, %s117
    %s119 = sphi 0, %s117
    %s120 = sphi 0, %s119
    %s134 = sphi 0, %s120
    %s138 = sphi 0, %s138
    %s140 = sphi 0, %s138
    %s141 = sphi 0, %s140
    %s155 = sphi 0, %s141
    %s159 = sphi 0, %s159
    %s161 = sphi 0, %s159
    %s162 = sphi 0, %s161
    %s176 = sphi 0, %s162
    %s180 = sphi 0, %s180
    %s182 = sphi 0, %s180
    %s183 = sphi 0, %s182
    %s197 = sphi 0, %s183
    %s201 = sphi 0, %s201
    %s203 = sphi 0, %s201
    %s204 = sphi 0, %s203
    %s218 = sphi 0, %s204
    %s222 = sphi 0, %s222
    %s224 = sphi 0, %s222
    %s225 = sphi 0, %s224
    %s239 = sphi 0, %s225
    %s243 = sphi 0, %s243
    %s245 = sphi 0, %s243
    %s246 = sphi 0, %s245
    %s260 = sphi 0, %s246
    %s264 = sphi 0, %s264
    %s266 = sphi 0, %s264
    %s267 = sphi 0, %s266
    %s281 = sphi 0, %s267
    %s287 = sphi 0, %s289
    %s290 = sphi 0, %s287
    %s291 = sphi 0, %s290
    %s307 = sphi 0, %s291
  $region4: #{location_head_forward.1} parent=0 // loop_header_branch
    %23 = sbr.rel (%p21) target = $region8
  $region5: #{location_head_forward.1} parent=0 // loop_body
    %s25 = ssub.s32 %s20, 1
    %s26 = ssub.s32 %s20, 2
    %s27 = sadd.s32 %s20, 1
    %s28 = ssub.s32 %s20, %s27
    %p29 = scmp.eq.s32.totalorder %s28, 0
    %s31 = sadd.s32 %s30, 1
    %s32 = scalar_select %p29, %s30, %s31
    %p35 = pneg %p29
    %p36 = scmp.eq.s32.totalorder %s20, 1
    %p37 = por %p35, %p36
    %p38 = scmp.ne.s32.totalorder %s30, %s33
    %p39 = scmp.eq.s32.totalorder %s20, 0
    %p40 = por %p38, %p39
    %p41 = scmp.ne.s32.totalorder %s30, %s33
    %p42 = scmp.eq.s32.totalorder %s25, 1
    %p43 = por %p41, %p42
    %p44 = scmp.ne.s32.totalorder %s33, %s34
    %p45 = scmp.eq.s32.totalorder %s25, 0
    %p46 = por %p44, %p45
    %p47 = scmp.ne.s32.totalorder %s33, %s34
    %p48 = scmp.eq.s32.totalorder %s26, 1
    %p49 = por %p47, %p48
    %p51 = scmp.ne.s32.totalorder %s34, %s50
    %p52 = scmp.eq.s32.totalorder %s26, 0
    %p53 = por %p51, %p52
    %s55 = sadd.s32 %s54, 1
    %p58 = scmp.eq.s32.totalorder %s20, 1
    %p59 = scmp.ne.s32.totalorder %s54, %s56
    %p60 = scmp.eq.s32.totalorder %s20, 0
    %p61 = por %p59, %p60
    %p62 = scmp.ne.s32.totalorder %s54, %s56
    %p63 = scmp.eq.s32.totalorder %s25, 1
    %p64 = por %p62, %p63
    %p65 = scmp.ne.s32.totalorder %s56, %s57
    %p66 = scmp.eq.s32.totalorder %s25, 0
    %p67 = por %p65, %p66
    %p68 = scmp.ne.s32.totalorder %s56, %s57
    %p69 = scmp.eq.s32.totalorder %s26, 1
    %p70 = por %p68, %p69
    %p72 = scmp.ne.s32.totalorder %s57, %s71
    %p73 = scmp.eq.s32.totalorder %s26, 0
    %p74 = por %p72, %p73
    %s76 = sadd.s32 %s75, 1
    %p79 = scmp.eq.s32.totalorder %s20, 1
    %p80 = scmp.ne.s32.totalorder %s75, %s77
    %p81 = scmp.eq.s32.totalorder %s20, 0
    %p82 = por %p80, %p81
    %p83 = scmp.ne.s32.totalorder %s75, %s77
    %p84 = scmp.eq.s32.totalorder %s25, 1
    %p85 = por %p83, %p84
    %p86 = scmp.ne.s32.totalorder %s77, %s78
    %p87 = scmp.eq.s32.totalorder %s25, 0
    %p88 = por %p86, %p87
    %p89 = scmp.ne.s32.totalorder %s77, %s78
    %p90 = scmp.eq.s32.totalorder %s26, 1
    %p91 = por %p89, %p90
    %p93 = scmp.ne.s32.totalorder %s78, %s92
    %p94 = scmp.eq.s32.totalorder %s26, 0
    %p95 = por %p93, %p94
    %s97 = sadd.s32 %s96, 1
    %p100 = scmp.eq.s32.totalorder %s20, 1
    %p101 = scmp.ne.s32.totalorder %s96, %s98
    %p102 = scmp.eq.s32.totalorder %s20, 0
    %p103 = por %p101, %p102
    %p104 = scmp.ne.s32.totalorder %s96, %s98
    %p105 = scmp.eq.s32.totalorder %s25, 1
    %p106 = por %p104, %p105
    %p107 = scmp.ne.s32.totalorder %s98, %s99
    %p108 = scmp.eq.s32.totalorder %s25, 0
    %p109 = por %p107, %p108
    %p110 = scmp.ne.s32.totalorder %s98, %s99
    %p111 = scmp.eq.s32.totalorder %s26, 1
    %p112 = por %p110, %p111
    %p114 = scmp.ne.s32.totalorder %s99, %s113
    %p115 = scmp.eq.s32.totalorder %s26, 0
    %p116 = por %p114, %p115
    %s118 = sadd.s32 %s117, 1
    %p121 = scmp.eq.s32.totalorder %s20, 1
    %p122 = scmp.ne.s32.totalorder %s117, %s119
    %p123 = scmp.eq.s32.totalorder %s20, 0
    %p124 = por %p122, %p123
    %p125 = scmp.ne.s32.totalorder %s117, %s119
    %p126 = scmp.eq.s32.totalorder %s25, 1
    %p127 = por %p125, %p126
    %p128 = scmp.ne.s32.totalorder %s119, %s120
    %p129 = scmp.eq.s32.totalorder %s25, 0
    %p130 = por %p128, %p129
    %p131 = scmp.ne.s32.totalorder %s119, %s120
    %p132 = scmp.eq.s32.totalorder %s26, 1
    %p133 = por %p131, %p132
    %p135 = scmp.ne.s32.totalorder %s120, %s134
    %p136 = scmp.eq.s32.totalorder %s26, 0
    %p137 = por %p135, %p136
    %s139 = sadd.s32 %s138, 1
    %p142 = scmp.eq.s32.totalorder %s20, 1
    %p143 = scmp.ne.s32.totalorder %s138, %s140
    %p144 = scmp.eq.s32.totalorder %s20, 0
    %p145 = por %p143, %p144
    %p146 = scmp.ne.s32.totalorder %s138, %s140
    %p147 = scmp.eq.s32.totalorder %s25, 1
    %p148 = por %p146, %p147
    %p149 = scmp.ne.s32.totalorder %s140, %s141
    %p150 = scmp.eq.s32.totalorder %s25, 0
    %p151 = por %p149, %p150
    %p152 = scmp.ne.s32.totalorder %s140, %s141
    %p153 = scmp.eq.s32.totalorder %s26, 1
    %p154 = por %p152, %p153
    %p156 = scmp.ne.s32.totalorder %s141, %s155
    %p157 = scmp.eq.s32.totalorder %s26, 0
    %p158 = por %p156, %p157
    %s160 = sadd.s32 %s159, 1
    %p163 = scmp.eq.s32.totalorder %s20, 1
    %p164 = scmp.ne.s32.totalorder %s159, %s161
    %p165 = scmp.eq.s32.totalorder %s20, 0
    %p166 = por %p164, %p165
    %p167 = scmp.ne.s32.totalorder %s159, %s161
    %p168 = scmp.eq.s32.totalorder %s25, 1
    %p169 = por %p167, %p168
    %p170 = scmp.ne.s32.totalorder %s161, %s162
    %p171 = scmp.eq.s32.totalorder %s25, 0
    %p172 = por %p170, %p171
    %p173 = scmp.ne.s32.totalorder %s161, %s162
    %p174 = scmp.eq.s32.totalorder %s26, 1
    %p175 = por %p173, %p174
    %p177 = scmp.ne.s32.totalorder %s162, %s176
    %p178 = scmp.eq.s32.totalorder %s26, 0
    %p179 = por %p177, %p178
    %s181 = sadd.s32 %s180, 1
    %p184 = scmp.eq.s32.totalorder %s20, 1
    %p185 = scmp.ne.s32.totalorder %s180, %s182
    %p186 = scmp.eq.s32.totalorder %s20, 0
    %p187 = por %p185, %p186
    %p188 = scmp.ne.s32.totalorder %s180, %s182
    %p189 = scmp.eq.s32.totalorder %s25, 1
    %p190 = por %p188, %p189
    %p191 = scmp.ne.s32.totalorder %s182, %s183
    %p192 = scmp.eq.s32.totalorder %s25, 0
    %p193 = por %p191, %p192
    %p194 = scmp.ne.s32.totalorder %s182, %s183
    %p195 = scmp.eq.s32.totalorder %s26, 1
    %p196 = por %p194, %p195
    %p198 = scmp.ne.s32.totalorder %s183, %s197
    %p199 = scmp.eq.s32.totalorder %s26, 0
    %p200 = por %p198, %p199
    %s202 = sadd.s32 %s201, 1
    %p205 = scmp.eq.s32.totalorder %s20, 1
    %p206 = scmp.ne.s32.totalorder %s201, %s203
    %p207 = scmp.eq.s32.totalorder %s20, 0
    %p208 = por %p206, %p207
    %p209 = scmp.ne.s32.totalorder %s201, %s203
    %p210 = scmp.eq.s32.totalorder %s25, 1
    %p211 = por %p209, %p210
    %p212 = scmp.ne.s32.totalorder %s203, %s204
    %p213 = scmp.eq.s32.totalorder %s25, 0
    %p214 = por %p212, %p213
    %p215 = scmp.ne.s32.totalorder %s203, %s204
    %p216 = scmp.eq.s32.totalorder %s26, 1
    %p217 = por %p215, %p216
    %p219 = scmp.ne.s32.totalorder %s204, %s218
    %p220 = scmp.eq.s32.totalorder %s26, 0
    %p221 = por %p219, %p220
    %s223 = sadd.s32 %s222, 1
    %p226 = scmp.eq.s32.totalorder %s20, 1
    %p227 = scmp.ne.s32.totalorder %s222, %s224
    %p228 = scmp.eq.s32.totalorder %s20, 0
    %p229 = por %p227, %p228
    %p230 = scmp.ne.s32.totalorder %s222, %s224
    %p231 = scmp.eq.s32.totalorder %s25, 1
    %p232 = por %p230, %p231
    %p233 = scmp.ne.s32.totalorder %s224, %s225
    %p234 = scmp.eq.s32.totalorder %s25, 0
    %p235 = por %p233, %p234
    %p236 = scmp.ne.s32.totalorder %s224, %s225
    %p237 = scmp.eq.s32.totalorder %s26, 1
    %p238 = por %p236, %p237
    %p240 = scmp.ne.s32.totalorder %s225, %s239
    %p241 = scmp.eq.s32.totalorder %s26, 0
    %p242 = por %p240, %p241
    %s244 = sadd.s32 %s243, 1
    %p247 = scmp.eq.s32.totalorder %s20, 1
    %p248 = scmp.ne.s32.totalorder %s243, %s245
    %p249 = scmp.eq.s32.totalorder %s20, 0
    %p250 = por %p248, %p249
    %p251 = scmp.ne.s32.totalorder %s243, %s245
    %p252 = scmp.eq.s32.totalorder %s25, 1
    %p253 = por %p251, %p252
    %p254 = scmp.ne.s32.totalorder %s245, %s246
    %p255 = scmp.eq.s32.totalorder %s25, 0
    %p256 = por %p254, %p255
    %p257 = scmp.ne.s32.totalorder %s245, %s246
    %p258 = scmp.eq.s32.totalorder %s26, 1
    %p259 = por %p257, %p258
    %p261 = scmp.ne.s32.totalorder %s246, %s260
    %p262 = scmp.eq.s32.totalorder %s26, 0
    %p263 = por %p261, %p262
    %s265 = sadd.s32 %s264, 1
    %p268 = scmp.eq.s32.totalorder %s20, 1
    %p269 = scmp.ne.s32.totalorder %s264, %s266
    %p270 = scmp.eq.s32.totalorder %s20, 0
    %p271 = por %p269, %p270
    %p272 = scmp.ne.s32.totalorder %s264, %s266
    %p273 = scmp.eq.s32.totalorder %s25, 1
    %p274 = por %p272, %p273
    %p275 = scmp.ne.s32.totalorder %s266, %s267
    %p276 = scmp.eq.s32.totalorder %s25, 0
    %p277 = por %p275, %p276
    %p278 = scmp.ne.s32.totalorder %s266, %s267
    %p279 = scmp.eq.s32.totalorder %s26, 1
    %p280 = por %p278, %p279
    %p282 = scmp.ne.s32.totalorder %s267, %s281
    %p283 = scmp.eq.s32.totalorder %s26, 0
    %p284 = por %p282, %p283
    %s285 = ssub.s32 %s20, %s27
    %p286 = scmp.eq.s32.totalorder %s285, 0
    %s288 = sadd.s32 %s287, 1
    %s289 = scalar_select %p286, %s287, %s288
    %p292 = pneg %p286
    %p293 = scmp.eq.s32.totalorder %s20, 1
    %p294 = por %p292, %p293
    %p295 = scmp.ne.s32.totalorder %s287, %s290
    %p296 = scmp.eq.s32.totalorder %s20, 0
    %p297 = por %p295, %p296
    %p298 = scmp.ne.s32.totalorder %s287, %s290
    %p299 = scmp.eq.s32.totalorder %s25, 1
    %p300 = por %p298, %p299
    %p301 = scmp.ne.s32.totalorder %s290, %s291
    %p302 = scmp.eq.s32.totalorder %s25, 0
    %p303 = por %p301, %p302
    %p304 = scmp.ne.s32.totalorder %s290, %s291
    %p305 = scmp.eq.s32.totalorder %s26, 1
    %p306 = por %p304, %p305
    %p308 = scmp.ne.s32.totalorder %s291, %s307
    %p309 = scmp.eq.s32.totalorder %s26, 0
    %p310 = por %p308, %p309
    %p311 = scmp.le.s32.totalorder 1, %s20
    %p312 = scmp.lt.s32.totalorder %s20, 3
    %p313 = pnand %p311, %p312
    %p314 = pneg %p313
    // Predicated region
    $region9: #{location_head_forward.1} parent=5 // pred_check
      _
    $region10: #{location_head_forward.1} parent=5 // pred_check_branch
      %316 = sbr.rel (%p313) target = $region12
    $region11: #{location_head_forward.1} parent=5 // pred_region
      %s317 = ssub.s32 %s20, 1
      // Predicated region
      $region13: #{location_head_forward.1} parent=11 // pred_check
        %p318 = pneg %p67
      $region14: #{location_head_forward.1} parent=11 // pred_check_branch
        %320 = sbr.rel (%p318) target = $region16
      $region15: #{location_head_forward.1} parent=11 // pred_region
        _
      $region16: #{location_head_forward.1} parent=11 // pred_fallthru
        _
      // Predicated region
      $region17: #{location_head_forward.1} parent=11 // pred_check
        %p321 = pneg %p88
      $region18: #{location_head_forward.1} parent=11 // pred_check_branch
        %323 = sbr.rel (%p321) target = $region20
      $region19: #{location_head_forward.1} parent=11 // pred_region
        _
      $region20: #{location_head_forward.1} parent=11 // pred_fallthru
        _
      // Predicated region
      $region21: #{location_head_forward.1} parent=11 // pred_check
        %p324 = pneg %p109
      $region22: #{location_head_forward.1} parent=11 // pred_check_branch
        %326 = sbr.rel (%p324) target = $region24
      $region23: #{location_head_forward.1} parent=11 // pred_region
        _
      $region24: #{location_head_forward.1} parent=11 // pred_fallthru
        _
      // Predicated region
      $region25: #{location_head_forward.1} parent=11 // pred_check
        %p327 = pneg %p130
      $region26: #{location_head_forward.1} parent=11 // pred_check_branch
        %329 = sbr.rel (%p327) target = $region28
      $region27: #{location_head_forward.1} parent=11 // pred_region
        _
      $region28: #{location_head_forward.1} parent=11 // pred_fallthru
        _
      // Predicated region
      $region29: #{location_head_forward.1} parent=11 // pred_check
        %p330 = pneg %p151
      $region30: #{location_head_forward.1} parent=11 // pred_check_branch
        %332 = sbr.rel (%p330) target = $region32
      $region31: #{location_head_forward.1} parent=11 // pred_region
        _
      $region32: #{location_head_forward.1} parent=11 // pred_fallthru
        _
      // Predicated region
      $region33: #{location_head_forward.1} parent=11 // pred_check
        %p333 = pneg %p172
      $region34: #{location_head_forward.1} parent=11 // pred_check_branch
        %335 = sbr.rel (%p333) target = $region36
      $region35: #{location_head_forward.1} parent=11 // pred_region
        _
      $region36: #{location_head_forward.1} parent=11 // pred_fallthru
        _
      // Predicated region
      $region37: #{location_head_forward.1} parent=11 // pred_check
        %p336 = pneg %p193
      $region38: #{location_head_forward.1} parent=11 // pred_check_branch
        %338 = sbr.rel (%p336) target = $region40
      $region39: #{location_head_forward.1} parent=11 // pred_region
        _
      $region40: #{location_head_forward.1} parent=11 // pred_fallthru
        _
      // Predicated region
      $region41: #{location_head_forward.1} parent=11 // pred_check
        %p339 = pneg %p214
      $region42: #{location_head_forward.1} parent=11 // pred_check_branch
        %341 = sbr.rel (%p339) target = $region44
      $region43: #{location_head_forward.1} parent=11 // pred_region
        _
      $region44: #{location_head_forward.1} parent=11 // pred_fallthru
        _
      // Predicated region
      $region45: #{location_head_forward.1} parent=11 // pred_check
        %p342 = pneg %p235
      $region46: #{location_head_forward.1} parent=11 // pred_check_branch
        %344 = sbr.rel (%p342) target = $region48
      $region47: #{location_head_forward.1} parent=11 // pred_region
        _
      $region48: #{location_head_forward.1} parent=11 // pred_fallthru
        _
      // Predicated region
      $region49: #{location_head_forward.1} parent=11 // pred_check
        %p345 = pneg %p256
      $region50: #{location_head_forward.1} parent=11 // pred_check_branch
        %347 = sbr.rel (%p345) target = $region52
      $region51: #{location_head_forward.1} parent=11 // pred_region
        _
      $region52: #{location_head_forward.1} parent=11 // pred_fallthru
        _
      // Predicated region
      $region53: #{location_head_forward.1} parent=11 // pred_check
        %p348 = pneg %p277
      $region54: #{location_head_forward.1} parent=11 // pred_check_branch
        %350 = sbr.rel (%p348) target = $region56
      $region55: #{location_head_forward.1} parent=11 // pred_region
        _
      $region56: #{location_head_forward.1} parent=11 // pred_fallthru
        _
    $region12: #{location_head_forward.1} parent=5 // pred_fallthru
      _
    %p351 = scmp.lt.s32.totalorder %s20, 2
    // Predicated region
    $region57: #{location_head_forward.1} parent=5 // pred_check
      %p352 = pneg %p351
    $region58: #{location_head_forward.1} parent=5 // pred_check_branch
      %354 = sbr.rel (%p352) target = $region60
    $region59: #{location_head_forward.1} parent=5 // pred_region
      // Predicated region
      $region61: #{location_head_forward.1} parent=59 // pred_check
        %p355 = pneg %p40
      $region62: #{location_head_forward.1} parent=59 // pred_check_branch
        %357 = sbr.rel (%p355) target = $region64
      $region63: #{location_head_forward.1} parent=59 // pred_region
        %p358 = scmp.lt.s32.totalorder %s20, 1
        %s359 = scalar_select %p358, %s20, 1
        %s360 = smul.addr %s359, 26
        %s361 = smul.addr %s360, 8
        %s362 = scalar_lea.vmem %s0, %s361
      $region64: #{location_head_forward.1} parent=59 // pred_fallthru
        _
    $region60: #{location_head_forward.1} parent=5 // pred_fallthru
      _
    %p363 = scmp.le.s32.totalorder 1, %s20
    %p364 = scmp.lt.s32.totalorder %s20, 3
    %p365 = pnand %p363, %p364
    %p366 = pneg %p365
    // Predicated region
    $region65: #{location_head_forward.1} parent=5 // pred_check
      _
    $region66: #{location_head_forward.1} parent=5 // pred_check_branch
      %368 = sbr.rel (%p365) target = $region68
    $region67: #{location_head_forward.1} parent=5 // pred_region
      %s369 = ssub.s32 %s20, 1
      %p370 = scmp.lt.s32.totalorder %s25, 1
      %s371 = scalar_select %p370, %s25, 1
      %s372 = smul.addr %s371, 26
      %s373 = smul.addr %s372, 8
      %s374 = scalar_lea.vmem %s0, %s373
      %p375 = pneg %p46
      %p376 = pneg %p43
      %p377 = pneg %p67
      %p378 = pneg %p64
      %p379 = pneg %p88
      %p380 = pneg %p85
      %p381 = pneg %p109
      %p382 = pneg %p106
      %p383 = pneg %p130
      %p384 = pneg %p127
      %p385 = pneg %p151
      %p386 = pneg %p148
      %p387 = pneg %p172
      %p388 = pneg %p169
      %p389 = pneg %p193
      %p390 = pneg %p190
      %p391 = pneg %p214
      %p392 = pneg %p211
      %p393 = pneg %p235
      %p394 = pneg %p232
      %p395 = pneg %p256
      %p396 = pneg %p253
      %p397 = pneg %p277
      %p398 = pneg %p274
      %p399 = pneg %p303
      %p400 = pneg %p300
      %p401 = scmp.lt.s32.totalorder %s25, 1
      %s402 = scalar_select %p401, %s25, 1
      %s403 = smul.addr %s402, 26
      %s404 = smul.addr %s403, 8
      %s405 = scalar_lea.vmem %s12, %s404
      %p406 = scmp.lt.s32.totalorder %s25, 1
      %s407 = scalar_select %p406, %s25, 1
      %s408 = smul.addr %s407, 26
      %s409 = smul.addr %s408, 8
      %s410 = scalar_lea.vmem %s0, %s409
      %p411 = scmp.lt.s32.totalorder %s25, 1
      %s412 = scalar_select %p411, %s25, 1
      %s413 = smul.addr %s412, 26
      %s414 = smul.addr %s413, 8
      %s415 = scalar_lea.vmem %s12, %s414
      %v416 = vld [vmem:[%s1] sm:$0xff]
      %v417 = vld [vmem:[%s1 + $0x8] sm:$0xff]
      %v418 = vld [vmem:[%s1 + $0x10] sm:$0xff]
      %v419 = vld [vmem:[%s1 + $0x18] sm:$0xff]
      %v420 = vld [vmem:[%s1 + $0x20] sm:$0xff]
      %v421 = vld [vmem:[%s1 + $0x28] sm:$0xff]
      %v422 = vld [vmem:[%s1 + $0x30] sm:$0xff]
      %v423 = vld [vmem:[%s1 + $0x38] sm:$0xff]
      %v424 = vld [vmem:[%s1 + $0x40] sm:$0xff]
      %v425 = vld [vmem:[%s1 + $0x48] sm:$0xff]
      %v426 = vld [vmem:[%s1 + $0x50] sm:$0xff]
      %v427 = vld [vmem:[%s1 + $0x58] sm:$0xff]
      %v428 = vld [vmem:[%s1 + $0x60] sm:$0xff]
      %v429 = vld [vmem:[%s1 + $0x68] sm:$0xff]
      %v430 = vld [vmem:[%s1 + $0x70] sm:$0xff]
      %v431 = vld [vmem:[%s1 + $0x78] sm:$0xff]
      %v432 = vld [vmem:[%s1 + $0x80] sm:$0xff]
      %v433 = vld [vmem:[%s1 + $0x88] sm:$0xff]
      %v434 = vld [vmem:[%s1 + $0x90] sm:$0xff]
      %v435 = vld [vmem:[%s1 + $0x98] sm:$0xff]
      %v436 = vld [vmem:[%s1 + $0xa0] sm:$0xff]
      %v437 = vld [vmem:[%s1 + $0xa8] sm:$0xff]
      %v438 = vld [vmem:[%s1 + $0xb0] sm:$0xff]
      %v439 = vld [vmem:[%s1 + $0xb8] sm:$0xff]
      %v440 = vld [vmem:[%s1 + $0xc0] sm:$0xff]
      %v441 = vld [vmem:[%s1 + $0xc8] sm:$0xff]
      %v442 = vld [vmem:[%s2] sm:$0xff]
      %v443 = vld [vmem:[%s2 + $0x8] sm:$0xff]
      %v444 = vld [vmem:[%s2 + $0x10] sm:$0xff]
      %v445 = vld [vmem:[%s2 + $0x18] sm:$0xff]
      %v446 = vld [vmem:[%s2 + $0x20] sm:$0xff]
      %v447 = vld [vmem:[%s2 + $0x28] sm:$0xff]
      %v448 = vld [vmem:[%s2 + $0x30] sm:$0xff]
      %v449 = vld [vmem:[%s2 + $0x38] sm:$0xff]
      %v450 = vld [vmem:[%s2 + $0x40] sm:$0xff]
      %v451 = vld [vmem:[%s2 + $0x48] sm:$0xff]
      %v452 = vld [vmem:[%s2 + $0x50] sm:$0xff]
      %v453 = vld [vmem:[%s2 + $0x58] sm:$0xff]
      %v454 = vld [vmem:[%s2 + $0x60] sm:$0xff]
      %v455 = vld [vmem:[%s2 + $0x68] sm:$0xff]
      %v456 = vld [vmem:[%s2 + $0x70] sm:$0xff]
      %v457 = vld [vmem:[%s2 + $0x78] sm:$0xff]
      %v458 = vld [vmem:[%s2 + $0x80] sm:$0xff]
      %v459 = vld [vmem:[%s2 + $0x88] sm:$0xff]
      %v460 = vld [vmem:[%s2 + $0x90] sm:$0xff]
      %v461 = vld [vmem:[%s2 + $0x98] sm:$0xff]
      %v462 = vld [vmem:[%s2 + $0xa0] sm:$0xff]
      %v463 = vld [vmem:[%s2 + $0xa8] sm:$0xff]
      %v464 = vld [vmem:[%s2 + $0xb0] sm:$0xff]
      %v465 = vld [vmem:[%s2 + $0xb8] sm:$0xff]
      %v466 = vld [vmem:[%s2 + $0xc0] sm:$0xff]
      %v467 = vld [vmem:[%s2 + $0xc8] sm:$0xff]
      %v468 = vld [vmem:[%s410] sm:$0xff]
      %v469 = vld [vmem:[%s410 + $0x8] sm:$0xff]
      %v470 = vld [vmem:[%s410 + $0x10] sm:$0xff]
      %v471 = vld [vmem:[%s410 + $0x18] sm:$0xff]
      %v472 = vld [vmem:[%s410 + $0x20] sm:$0xff]
      %v473 = vld [vmem:[%s410 + $0x28] sm:$0xff]
      %v474 = vld [vmem:[%s410 + $0x30] sm:$0xff]
      %v475 = vld [vmem:[%s410 + $0x38] sm:$0xff]
      %v476 = vld [vmem:[%s410 + $0x40] sm:$0xff]
      %v477 = vld [vmem:[%s410 + $0x48] sm:$0xff]
      %v478 = vld [vmem:[%s410 + $0x50] sm:$0xff]
      %v479 = vld [vmem:[%s410 + $0x58] sm:$0xff]
      %v480 = vld [vmem:[%s410 + $0x60] sm:$0xff]
      %v481 = vld [vmem:[%s410 + $0x68] sm:$0xff]
      %v482 = vld [vmem:[%s410 + $0x70] sm:$0xff]
      %v483 = vld [vmem:[%s410 + $0x78] sm:$0xff]
      %v484 = vld [vmem:[%s410 + $0x80] sm:$0xff]
      %v485 = vld [vmem:[%s410 + $0x88] sm:$0xff]
      %v486 = vld [vmem:[%s410 + $0x90] sm:$0xff]
      %v487 = vld [vmem:[%s410 + $0x98] sm:$0xff]
      %v488 = vld [vmem:[%s410 + $0xa0] sm:$0xff]
      %v489 = vld [vmem:[%s410 + $0xa8] sm:$0xff]
      %v490 = vld [vmem:[%s410 + $0xb0] sm:$0xff]
      %v491 = vld [vmem:[%s410 + $0xb8] sm:$0xff]
      %v492 = vld [vmem:[%s410 + $0xc0] sm:$0xff]
      %v493 = vld [vmem:[%s410 + $0xc8] sm:$0xff]
      %v494 = vld [vmem:[%s4] sm:$0xff]
      %v495 = vld [vmem:[%s5] sm:$0x1]
      %v497 = vlaneseq
      %v498 = vshrl.u32 %v497, 7
      %v499 = vsub.s32 0, %v498
      %v500 = vrot.slane %v495, %v499
      %vm502 = vcmask 64512
      %v504 = vsel %vm502, %v468, 0
      %v507 = vsel %vm502, %v469, 0
      %v510 = vsel %vm502, %v470, 0
      %v513 = vsel %vm502, %v471, 0
      %v516 = vsel %vm502, %v472, 0
      %v519 = vsel %vm502, %v473, 0
      %v522 = vsel %vm502, %v474, 0
      %v525 = vsel %vm502, %v475, 0
      %v528 = vsel %vm502, %v476, 0
      %v531 = vsel %vm502, %v477, 0
      %v534 = vsel %vm502, %v478, 0
      %v537 = vsel %vm502, %v479, 0
      %v540 = vsel %vm502, %v480, 0
      %v543 = vsel %vm502, %v481, 0
      %v546 = vsel %vm502, %v482, 0
      %v549 = vsel %vm502, %v483, 0
      %v552 = vsel %vm502, %v484, 0
      %v555 = vsel %vm502, %v485, 0
      %v558 = vsel %vm502, %v486, 0
      %v561 = vsel %vm502, %v487, 0
      %v564 = vsel %vm502, %v488, 0
      %v567 = vsel %vm502, %v489, 0
      %v570 = vsel %vm502, %v490, 0
      %v573 = vsel %vm502, %v491, 0
      %v576 = vsel %vm502, %v492, 0
      %v579 = vsel %vm502, %v493, 0
      %581 = vmatprep.subr.mxu0 0.0
      %582 = vmatpush1.msra.mxu0 %v494
      %583 = vmatprep.subr.mxu0 0.0
      %584 = vmatpush1.msra.mxu0 0.0
      %585 = vmatprep.subr.mxu0 0.0
      %586 = vmatpush1.msra.mxu0 0.0
      %587 = vmatprep.subr.mxu0 0.0
      %588 = vmatpush1.msra.mxu0 0.0
      %589 = vmatprep.subr.mxu0 0.0
      %590 = vmatpush1.msra.mxu0 0.0
      %591 = vmatprep.subr.mxu0 0.0
      %592 = vmatpush1.msra.mxu0 0.0
      %593 = vmatprep.subr.mxu0 0.0
      %594 = vmatpush1.msra.mxu0 0.0
      %595 = vmatprep.subr.mxu0 0.0
      %596 = vmatpush1.msra.mxu0 0.0
      %597 = vmatprep.subr.mxu0 0.0
      %598 = vmatpush1.msra.mxu0 0.0
      %599 = vmatprep.subr.mxu0 0.0
      %600 = vmatpush1.msra.mxu0 0.0
      %601 = vmatprep.subr.mxu0 0.0
      %602 = vmatpush1.msra.mxu0 0.0
      %603 = vmatprep.subr.mxu0 0.0
      %604 = vmatpush1.msra.mxu0 0.0
      %605 = vmatprep.subr.mxu0 0.0
      %606 = vmatpush1.msra.mxu0 0.0
      %607 = vmatprep.subr.mxu0 0.0
      %608 = vmatpush1.msra.mxu0 0.0
      %609 = vmatprep.subr.mxu0 0.0
      %610 = vmatpush1.msra.mxu0 0.0
      %611 = vmatprep.subr.mxu0 0.0
      %612 = vmatpush1.msra.mxu0 0.0
      %613 = vmatprep.subr.mxu0 0.0
      %614 = vmatpush1.msra.mxu0 0.0
      %615 = vmatprep.subr.mxu0 0.0
      %616 = vmatpush1.msra.mxu0 0.0
      %617 = vmatprep.subr.mxu0 0.0
      %618 = vmatpush1.msra.mxu0 0.0
      %619 = vmatprep.subr.mxu0 0.0
      %620 = vmatpush1.msra.mxu0 0.0
      %621 = vmatprep.subr.mxu0 0.0
      %622 = vmatpush1.msra.mxu0 0.0
      %623 = vmatprep.subr.mxu0 0.0
      %624 = vmatpush1.msra.mxu0 0.0
      %625 = vmatprep.subr.mxu0 0.0
      %626 = vmatpush1.msra.mxu0 0.0
      %627 = vmatprep.subr.mxu0 0.0
      %628 = vmatpush1.msra.mxu0 0.0
      %629 = vmatprep.subr.mxu0 0.0
      %630 = vmatpush1.msra.mxu0 0.0
      %631 = vmatprep.subr.mxu0 0.0
      %632 = vmatpush1.msra.mxu0 0.0
      %633 = vmatprep.subr.mxu0 0.0
      %634 = vmatpush1.msra.mxu0 0.0
      %635 = vmatprep.subr.mxu0 0.0
      %636 = vmatpush1.msra.mxu0 0.0
      %637 = vmatprep.subr.mxu0 0.0
      %638 = vmatpush1.msra.mxu0 0.0
      %639 = vmatprep.subr.mxu0 0.0
      %640 = vmatpush1.msra.mxu0 0.0
      %641 = vmatprep.subr.mxu0 0.0
      %642 = vmatpush1.msra.mxu0 0.0
      %643 = vmatprep.subr.mxu0 0.0
      %644 = vmatpush1.msra.mxu0 0.0
      %645 = vmatprep.mubr.f32.mxu0 0.0
      %646 = vmatmul.mubr.f32.gmra.mrb[0].mxu0 %v504
      %v647 = vpop.f32.mrb[0].mxu0
      %v648 = vadd.f32 %v500, %v647
      %v649 = vpop.f32.mrb[0].mxu0
      %650 = vmatprep.mubr.f32.mxu0 0.0
      %651 = vmatmul.mubr.f32.gmra.mrb[0].mxu0 %v507
      %v652 = vpop.f32.mrb[0].mxu0
      %v653 = vadd.f32 %v500, %v652
      %v654 = vpop.f32.mrb[0].mxu0
      %655 = vmatprep.mubr.f32.mxu0 0.0
      %656 = vmatmul.mubr.f32.gmra.mrb[0].mxu0 %v510
      %v657 = vpop.f32.mrb[0].mxu0
      %v658 = vadd.f32 %v500, %v657
      %v659 = vpop.f32.mrb[0].mxu0
      %660 = vmatprep.mubr.f32.mxu0 0.0
      %661 = vmatmul.mubr.f32.gmra.mrb[0].mxu0 %v513
      %v662 = vpop.f32.mrb[0].mxu0
      %v663 = vadd.f32 %v500, %v662
      %v664 = vpop.f32.mrb[0].mxu0
      %665 = vmatprep.mubr.f32.mxu0 0.0
      %666 = vmatmul.mubr.f32.gmra.mrb[0].mxu0 %v516
      %v667 = vpop.f32.mrb[0].mxu0
      %v668 = vadd.f32 %v500, %v667
      %v669 = vpop.f32.mrb[0].mxu0
      %670 = vmatprep.mubr.f32.mxu0 0.0
      %671 = vmatmul.mubr.f32.gmra.mrb[0].mxu0 %v519
      %v672 = vpop.f32.mrb[0].mxu0
      %v673 = vadd.f32 %v500, %v672
      %v674 = vpop.f32.mrb[0].mxu0
      %675 = vmatprep.mubr.f32.mxu0 0.0
      %676 = vmatmul.mubr.f32.gmra.mrb[0].mxu0 %v522
      %v677 = vpop.f32.mrb[0].mxu0
      %v678 = vadd.f32 %v500, %v677
      %v679 = vpop.f32.mrb[0].mxu0
      %680 = vmatprep.mubr.f32.mxu0 0.0
      %681 = vmatmul.mubr.f32.gmra.mrb[0].mxu0 %v525
      %v682 = vpop.f32.mrb[0].mxu0
      %v683 = vadd.f32 %v500, %v682
      %v684 = vpop.f32.mrb[0].mxu0
      %685 = vmatprep.mubr.f32.mxu0 0.0
      %686 = vmatmul.mubr.f32.gmra.mrb[0].mxu0 %v528
      %v687 = vpop.f32.mrb[0].mxu0
      %v688 = vadd.f32 %v500, %v687
      %v689 = vpop.f32.mrb[0].mxu0
      %690 = vmatprep.mubr.f32.mxu0 0.0
      %691 = vmatmul.mubr.f32.gmra.mrb[0].mxu0 %v531
      %v692 = vpop.f32.mrb[0].mxu0
      %v693 = vadd.f32 %v500, %v692
      %v694 = vpop.f32.mrb[0].mxu0
      %695 = vmatprep.mubr.f32.mxu0 0.0
      %696 = vmatmul.mubr.f32.gmra.mrb[0].mxu0 %v534
      %v697 = vpop.f32.mrb[0].mxu0
      %v698 = vadd.f32 %v500, %v697
      %v699 = vpop.f32.mrb[0].mxu0
      %700 = vmatprep.mubr.f32.mxu0 0.0
      %701 = vmatmul.mubr.f32.gmra.mrb[0].mxu0 %v537
      %v702 = vpop.f32.mrb[0].mxu0
      %v703 = vadd.f32 %v500, %v702
      %v704 = vpop.f32.mrb[0].mxu0
      %705 = vmatprep.mubr.f32.mxu0 0.0
      %706 = vmatmul.mubr.f32.gmra.mrb[0].mxu0 %v540
      %v707 = vpop.f32.mrb[0].mxu0
      %v708 = vadd.f32 %v500, %v707
      %v709 = vpop.f32.mrb[0].mxu0
      %710 = vmatprep.mubr.f32.mxu0 0.0
      %711 = vmatmul.mubr.f32.gmra.mrb[0].mxu0 %v543
      %v712 = vpop.f32.mrb[0].mxu0
      %v713 = vadd.f32 %v500, %v712
      %v714 = vpop.f32.mrb[0].mxu0
      %715 = vmatprep.mubr.f32.mxu0 0.0
      %716 = vmatmul.mubr.f32.gmra.mrb[0].mxu0 %v546
      %v717 = vpop.f32.mrb[0].mxu0
      %v718 = vadd.f32 %v500, %v717
      %v719 = vpop.f32.mrb[0].mxu0
      %720 = vmatprep.mubr.f32.mxu0 0.0
      %721 = vmatmul.mubr.f32.gmra.mrb[0].mxu0 %v549
      %v722 = vpop.f32.mrb[0].mxu0
      %v723 = vadd.f32 %v500, %v722
      %v724 = vpop.f32.mrb[0].mxu0
      %725 = vmatprep.mubr.f32.mxu0 0.0
      %726 = vmatmul.mubr.f32.gmra.mrb[0].mxu0 %v552
      %v727 = vpop.f32.mrb[0].mxu0
      %v728 = vadd.f32 %v500, %v727
      %v729 = vpop.f32.mrb[0].mxu0
      %730 = vmatprep.mubr.f32.mxu0 0.0
      %731 = vmatmul.mubr.f32.gmra.mrb[0].mxu0 %v555
      %v732 = vpop.f32.mrb[0].mxu0
      %v733 = vadd.f32 %v500, %v732
      %v734 = vpop.f32.mrb[0].mxu0
      %735 = vmatprep.mubr.f32.mxu0 0.0
      %736 = vmatmul.mubr.f32.gmra.mrb[0].mxu0 %v558
      %v737 = vpop.f32.mrb[0].mxu0
      %v738 = vadd.f32 %v500, %v737
      %v739 = vpop.f32.mrb[0].mxu0
      %740 = vmatprep.mubr.f32.mxu0 0.0
      %741 = vmatmul.mubr.f32.gmra.mrb[0].mxu0 %v561
      %v742 = vpop.f32.mrb[0].mxu0
      %v743 = vadd.f32 %v500, %v742
      %v744 = vpop.f32.mrb[0].mxu0
      %745 = vmatprep.mubr.f32.mxu0 0.0
      %746 = vmatmul.mubr.f32.gmra.mrb[0].mxu0 %v564
      %v747 = vpop.f32.mrb[0].mxu0
      %v748 = vadd.f32 %v500, %v747
      %v749 = vpop.f32.mrb[0].mxu0
      %750 = vmatprep.mubr.f32.mxu0 0.0
      %751 = vmatmul.mubr.f32.gmra.mrb[0].mxu0 %v567
      %v752 = vpop.f32.mrb[0].mxu0
      %v753 = vadd.f32 %v500, %v752
      %v754 = vpop.f32.mrb[0].mxu0
      %755 = vmatprep.mubr.f32.mxu0 0.0
      %756 = vmatmul.mubr.f32.gmra.mrb[0].mxu0 %v570
      %v757 = vpop.f32.mrb[0].mxu0
      %v758 = vadd.f32 %v500, %v757
      %v759 = vpop.f32.mrb[0].mxu0
      %760 = vmatprep.mubr.f32.mxu0 0.0
      %761 = vmatmul.mubr.f32.gmra.mrb[0].mxu0 %v573
      %v762 = vpop.f32.mrb[0].mxu0
      %v763 = vadd.f32 %v500, %v762
      %v764 = vpop.f32.mrb[0].mxu0
      %765 = vmatprep.mubr.f32.mxu0 0.0
      %766 = vmatmul.mubr.f32.gmra.mrb[0].mxu0 %v576
      %v767 = vpop.f32.mrb[0].mxu0
      %v768 = vadd.f32 %v500, %v767
      %v769 = vpop.f32.mrb[0].mxu0
      %770 = vmatprep.mubr.f32.mxu0 0.0
      %771 = vmatmul.mubr.f32.gmra.mrb[0].mxu0 %v579
      %v772 = vpop.f32.mrb[0].mxu0
      %v773 = vadd.f32 %v500, %v772
      %v774 = vpop.f32.mrb[0].mxu0
      %775 = vdwg.mxu0
      %v776 = vmax.f32 %v648, 0.0
      %v777 = vmax.f32 %v653, 0.0
      %v778 = vmax.f32 %v658, 0.0
      %v779 = vmax.f32 %v663, 0.0
      %v780 = vmax.f32 %v668, 0.0
      %v781 = vmax.f32 %v673, 0.0
      %v782 = vmax.f32 %v678, 0.0
      %v783 = vmax.f32 %v683, 0.0
      %v784 = vmax.f32 %v688, 0.0
      %v785 = vmax.f32 %v693, 0.0
      %v786 = vmax.f32 %v698, 0.0
      %v787 = vmax.f32 %v703, 0.0
      %v788 = vmax.f32 %v708, 0.0
      %v789 = vmax.f32 %v713, 0.0
      %v790 = vmax.f32 %v718, 0.0
      %v791 = vmax.f32 %v723, 0.0
      %v792 = vmax.f32 %v728, 0.0
      %v793 = vmax.f32 %v733, 0.0
      %v794 = vmax.f32 %v738, 0.0
      %v795 = vmax.f32 %v743, 0.0
      %v796 = vmax.f32 %v748, 0.0
      %v797 = vmax.f32 %v753, 0.0
      %v798 = vmax.f32 %v758, 0.0
      %v799 = vmax.f32 %v763, 0.0
      %v800 = vmax.f32 %v768, 0.0
      %v801 = vmax.f32 %v773, 0.0
      %803 = vset.pattern.permute.xlu0 0
      %804 = vperm.xlu0 %803, %v416
      %v805 = vpop.permute.xlu0 %804
      %808 = vset.pattern.permute.xlu0 0
      %809 = vperm.xlu0 %808, %v417
      %v810 = vpop.permute.xlu0 %809
      %813 = vset.pattern.permute.xlu0 0
      %814 = vperm.xlu0 %813, %v418
      %v815 = vpop.permute.xlu0 %814
      %818 = vset.pattern.permute.xlu0 0
      %819 = vperm.xlu0 %818, %v419
      %v820 = vpop.permute.xlu0 %819
      %823 = vset.pattern.permute.xlu0 0
      %824 = vperm.xlu0 %823, %v420
      %v825 = vpop.permute.xlu0 %824
      %828 = vset.pattern.permute.xlu0 0
      %829 = vperm.xlu0 %828, %v421
      %v830 = vpop.permute.xlu0 %829
      %833 = vset.pattern.permute.xlu0 0
      %834 = vperm.xlu0 %833, %v422
      %v835 = vpop.permute.xlu0 %834
      %838 = vset.pattern.permute.xlu0 0
      %839 = vperm.xlu0 %838, %v423
      %v840 = vpop.permute.xlu0 %839
      %843 = vset.pattern.permute.xlu0 0
      %844 = vperm.xlu0 %843, %v424
      %v845 = vpop.permute.xlu0 %844
      %848 = vset.pattern.permute.xlu0 0
      %849 = vperm.xlu0 %848, %v425
      %v850 = vpop.permute.xlu0 %849
      %853 = vset.pattern.permute.xlu0 0
      %854 = vperm.xlu0 %853, %v426
      %v855 = vpop.permute.xlu0 %854
      %858 = vset.pattern.permute.xlu0 0
      %859 = vperm.xlu0 %858, %v427
      %v860 = vpop.permute.xlu0 %859
      %863 = vset.pattern.permute.xlu0 0
      %864 = vperm.xlu0 %863, %v428
      %v865 = vpop.permute.xlu0 %864
      %868 = vset.pattern.permute.xlu0 0
      %869 = vperm.xlu0 %868, %v429
      %v870 = vpop.permute.xlu0 %869
      %873 = vset.pattern.permute.xlu0 0
      %874 = vperm.xlu0 %873, %v430
      %v875 = vpop.permute.xlu0 %874
      %878 = vset.pattern.permute.xlu0 0
      %879 = vperm.xlu0 %878, %v431
      %v880 = vpop.permute.xlu0 %879
      %883 = vset.pattern.permute.xlu0 0
      %884 = vperm.xlu0 %883, %v432
      %v885 = vpop.permute.xlu0 %884
      %888 = vset.pattern.permute.xlu0 0
      %889 = vperm.xlu0 %888, %v433
      %v890 = vpop.permute.xlu0 %889
      %893 = vset.pattern.permute.xlu0 0
      %894 = vperm.xlu0 %893, %v434
      %v895 = vpop.permute.xlu0 %894
      %898 = vset.pattern.permute.xlu0 0
      %899 = vperm.xlu0 %898, %v435
      %v900 = vpop.permute.xlu0 %899
      %903 = vset.pattern.permute.xlu0 0
      %904 = vperm.xlu0 %903, %v436
      %v905 = vpop.permute.xlu0 %904
      %908 = vset.pattern.permute.xlu0 0
      %909 = vperm.xlu0 %908, %v437
      %v910 = vpop.permute.xlu0 %909
      %913 = vset.pattern.permute.xlu0 0
      %914 = vperm.xlu0 %913, %v438
      %v915 = vpop.permute.xlu0 %914
      %918 = vset.pattern.permute.xlu0 0
      %919 = vperm.xlu0 %918, %v439
      %v920 = vpop.permute.xlu0 %919
      %923 = vset.pattern.permute.xlu0 0
      %924 = vperm.xlu0 %923, %v440
      %v925 = vpop.permute.xlu0 %924
      %928 = vset.pattern.permute.xlu0 0
      %929 = vperm.xlu0 %928, %v441
      %v930 = vpop.permute.xlu0 %929
      %v932 = vmul.f32 %v776, %v805
      %v933 = vmul.f32 %v777, %v810
      %v934 = vmul.f32 %v778, %v815
      %v935 = vmul.f32 %v779, %v820
      %v936 = vmul.f32 %v780, %v825
      %v937 = vmul.f32 %v781, %v830
      %v938 = vmul.f32 %v782, %v835
      %v939 = vmul.f32 %v783, %v840
      %v940 = vmul.f32 %v784, %v845
      %v941 = vmul.f32 %v785, %v850
      %v942 = vmul.f32 %v786, %v855
      %v943 = vmul.f32 %v787, %v860
      %v944 = vmul.f32 %v788, %v865
      %v945 = vmul.f32 %v789, %v870
      %v946 = vmul.f32 %v790, %v875
      %v947 = vmul.f32 %v791, %v880
      %v948 = vmul.f32 %v792, %v885
      %v949 = vmul.f32 %v793, %v890
      %v950 = vmul.f32 %v794, %v895
      %v951 = vmul.f32 %v795, %v900
      %v952 = vmul.f32 %v796, %v905
      %v953 = vmul.f32 %v797, %v910
      %v954 = vmul.f32 %v798, %v915
      %v955 = vmul.f32 %v799, %v920
      %v956 = vmul.f32 %v800, %v925
      %v957 = vmul.f32 %v801, %v930
      %s958 = scalar_lea.vmem %s6, 256
      %v959 = vld [vmem:[%s958] sm:$0xff]
      %v960 = vld [vmem:[%s958 + $0x8] sm:$0xff]
      %v961 = vld [vmem:[%s958 + $0x10] sm:$0xff]
      %v962 = vld [vmem:[%s958 + $0x18] sm:$0xff]
      %v963 = vld [vmem:[%s958 + $0x20] sm:$0xff]
      %v964 = vld [vmem:[%s958 + $0x28] sm:$0xff]
      %v965 = vld [vmem:[%s958 + $0x30] sm:$0xff]
      %v966 = vld [vmem:[%s958 + $0x38] sm:$0xff]
      %v967 = vld [vmem:[%s6] sm:$0xff]
      %v968 = vld [vmem:[%s6 + $0x8] sm:$0xff]
      %v969 = vld [vmem:[%s6 + $0x10] sm:$0xff]
      %v970 = vld [vmem:[%s6 + $0x18] sm:$0xff]
      %v971 = vld [vmem:[%s6 + $0x20] sm:$0xff]
      %v972 = vld [vmem:[%s6 + $0x28] sm:$0xff]
      %v973 = vld [vmem:[%s6 + $0x30] sm:$0xff]
      %v974 = vld [vmem:[%s6 + $0x38] sm:$0xff]
      %vm1001 = vcmask 1042432
      %v1002 = vrot.slane 0.0, 5
      %v1003 = vsel %vm1001, %v1002, %v1002
      %v1004 = vrot.slane %v932, 5
      %v1005 = vsel %vm1001, %v1002, %v1004
      %v1006 = vrot.slane %v933, 5
      %v1007 = vsel %vm1001, %v1004, %v1006
      %v1008 = vrot.slane %v934, 5
      %v1009 = vsel %vm1001, %v1006, %v1008
      %v1010 = vrot.slane %v935, 5
      %v1011 = vsel %vm1001, %v1008, %v1010
      %v1012 = vrot.slane %v936, 5
      %v1013 = vsel %vm1001, %v1010, %v1012
      %v1014 = vrot.slane %v937, 5
      %v1015 = vsel %vm1001, %v1012, %v1014
      %v1016 = vrot.slane %v938, 5
      %v1017 = vsel %vm1001, %v1014, %v1016
      %v1018 = vrot.slane %v939, 5
      %v1019 = vsel %vm1001, %v1016, %v1018
      %v1020 = vrot.slane %v940, 5
      %v1021 = vsel %vm1001, %v1018, %v1020
      %v1022 = vrot.slane %v941, 5
      %v1023 = vsel %vm1001, %v1020, %v1022
      %v1024 = vrot.slane %v942, 5
      %v1025 = vsel %vm1001, %v1022, %v1024
      %v1026 = vrot.slane %v943, 5
      %v1027 = vsel %vm1001, %v1024, %v1026
      %v1028 = vrot.slane %v944, 5
      %v1029 = vsel %vm1001, %v1026, %v1028
      %v1030 = vrot.slane %v945, 5
      %v1031 = vsel %vm1001, %v1028, %v1030
      %v1032 = vrot.slane %v946, 5
      %v1033 = vsel %vm1001, %v1030, %v1032
      %v1034 = vrot.slane %v947, 5
      %v1035 = vsel %vm1001, %v1032, %v1034
      %v1036 = vrot.slane %v948, 5
      %v1037 = vsel %vm1001, %v1034, %v1036
      %v1038 = vrot.slane %v949, 5
      %v1039 = vsel %vm1001, %v1036, %v1038
      %v1040 = vrot.slane %v950, 5
      %v1041 = vsel %vm1001, %v1038, %v1040
      %v1042 = vrot.slane %v951, 5
      %v1043 = vsel %vm1001, %v1040, %v1042
      %v1044 = vrot.slane %v952, 5
      %v1045 = vsel %vm1001, %v1042, %v1044
      %v1046 = vrot.slane %v953, 5
      %v1047 = vsel %vm1001, %v1044, %v1046
      %v1048 = vrot.slane %v954, 5
      %v1049 = vsel %vm1001, %v1046, %v1048
      %v1050 = vrot.slane %v955, 5
      %v1051 = vsel %vm1001, %v1048, %v1050
      %v1052 = vrot.slane %v956, 5
      %v1053 = vsel %vm1001, %v1050, %v1052
      %vm1054 = vcmask 523264
      %v1055 = vsel %vm1054, %v1003, 0
      %v1057 = vsel %vm1054, %v1005, 0
      %v1059 = vsel %vm1054, %v1007, 0
      %v1061 = vsel %vm1054, %v1009, 0
      %v1063 = vsel %vm1054, %v1011, 0
      %v1065 = vsel %vm1054, %v1013, 0
      %v1067 = vsel %vm1054, %v1015, 0
      %v1069 = vsel %vm1054, %v1017, 0
      %v1071 = vsel %vm1054, %v1019, 0
      %v1073 = vsel %vm1054, %v1021, 0
      %v1075 = vsel %vm1054, %v1023, 0
      %v1077 = vsel %vm1054, %v1025, 0
      %v1079 = vsel %vm1054, %v1027, 0
      %v1081 = vsel %vm1054, %v1029, 0
      %v1083 = vsel %vm1054, %v1031, 0
      %v1085 = vsel %vm1054, %v1033, 0
      %v1087 = vsel %vm1054, %v1035, 0
      %v1089 = vsel %vm1054, %v1037, 0
      %v1091 = vsel %vm1054, %v1039, 0
      %v1093 = vsel %vm1054, %v1041, 0
      %v1095 = vsel %vm1054, %v1043, 0
      %v1097 = vsel %vm1054, %v1045, 0
      %v1099 = vsel %vm1054, %v1047, 0
      %v1101 = vsel %vm1054, %v1049, 0
      %v1103 = vsel %vm1054, %v1051, 0
      %v1105 = vsel %vm1054, %v1053, 0
      %1107 = vmatprep.subr.mxu0 0.0
      %1108 = vmatpush1.msra.mxu0 %v967
      %1109 = vmatprep.subr.mxu0 0.0
      %1110 = vmatpush1.msra.mxu0 %v968
      %1111 = vmatprep.subr.mxu0 0.0
      %1112 = vmatpush1.msra.mxu0 %v969
      %1113 = vmatprep.subr.mxu0 0.0
      %1114 = vmatpush1.msra.mxu0 %v970
      %1115 = vmatprep.subr.mxu0 0.0
      %1116 = vmatpush1.msra.mxu0 %v971
      %1117 = vmatprep.subr.mxu0 0.0
      %1118 = vmatpush1.msra.mxu0 %v972
      %1119 = vmatprep.subr.mxu0 0.0
      %1120 = vmatpush1.msra.mxu0 %v973
      %1121 = vmatprep.subr.mxu0 0.0
      %1122 = vmatpush1.msra.mxu0 %v974
      %1123 = vmatprep.subr.mxu0 0.0
      %1124 = vmatpush1.msra.mxu0 0.0
      %1125 = vmatprep.subr.mxu0 0.0
      %1126 = vmatpush1.msra.mxu0 0.0
      %1127 = vmatprep.subr.mxu0 0.0
      %1128 = vmatpush1.msra.mxu0 0.0
      %1129 = vmatprep.subr.mxu0 0.0
      %1130 = vmatpush1.msra.mxu0 0.0
      %1131 = vmatprep.subr.mxu0 0.0
      %1132 = vmatpush1.msra.mxu0 0.0
      %1133 = vmatprep.subr.mxu0 0.0
      %1134 = vmatpush1.msra.mxu0 0.0
      %1135 = vmatprep.subr.mxu0 0.0
      %1136 = vmatpush1.msra.mxu0 0.0
      %1137 = vmatprep.subr.mxu0 0.0
      %1138 = vmatpush1.msra.mxu0 0.0
      %1139 = vmatprep.subr.mxu0 0.0
      %1140 = vmatpush1.msra.mxu0 0.0
      %1141 = vmatprep.subr.mxu0 0.0
      %1142 = vmatpush1.msra.mxu0 0.0
      %1143 = vmatprep.subr.mxu0 0.0
      %1144 = vmatpush1.msra.mxu0 0.0
      %1145 = vmatprep.subr.mxu0 0.0
      %1146 = vmatpush1.msra.mxu0 0.0
      %1147 = vmatprep.subr.mxu0 0.0
      %1148 = vmatpush1.msra.mxu0 0.0
      %1149 = vmatprep.subr.mxu0 0.0
      %1150 = vmatpush1.msra.mxu0 0.0
      %1151 = vmatprep.subr.mxu0 0.0
      %1152 = vmatpush1.msra.mxu0 0.0
      %1153 = vmatprep.subr.mxu0 0.0
      %1154 = vmatpush1.msra.mxu0 0.0
      %1155 = vmatprep.subr.mxu0 0.0
      %1156 = vmatpush1.msra.mxu0 0.0
      %1157 = vmatprep.subr.mxu0 0.0
      %1158 = vmatpush1.msra.mxu0 0.0
      %1159 = vmatprep.subr.mxu0 0.0
      %1160 = vmatpush1.msra.mxu0 0.0
      %1161 = vmatprep.subr.mxu0 0.0
      %1162 = vmatpush1.msra.mxu0 0.0
      %1163 = vmatprep.subr.mxu0 0.0
      %1164 = vmatpush1.msra.mxu0 0.0
      %1165 = vmatprep.subr.mxu0 0.0
      %1166 = vmatpush1.msra.mxu0 0.0
      %1167 = vmatprep.subr.mxu0 0.0
      %1168 = vmatpush1.msra.mxu0 0.0
      %1169 = vmatprep.subr.mxu0 0.0
      %1170 = vmatpush1.msra.mxu0 0.0
      %1171 = vmatprep.mubr.f32.mxu0 0.0
      %1172 = vmatmul.mubr.f32.gmra.mrb[0].mxu0 %v1055
      %v1173 = vpop.f32.mrb[0].mxu0
      %v1174 = vadd.f32 0.0, %v1173
      %v1175 = vpop.f32.mrb[0].mxu0
      %1176 = vmatprep.mubr.f32.mxu0 0.0
      %1177 = vmatmul.mubr.f32.gmra.mrb[0].mxu0 %v1057
      %v1178 = vpop.f32.mrb[0].mxu0
      %v1179 = vadd.f32 0.0, %v1178
      %v1180 = vpop.f32.mrb[0].mxu0
      %1181 = vmatprep.mubr.f32.mxu0 0.0
      %1182 = vmatmul.mubr.f32.gmra.mrb[0].mxu0 %v1059
      %v1183 = vpop.f32.mrb[0].mxu0
      %v1184 = vadd.f32 0.0, %v1183
      %v1185 = vpop.f32.mrb[0].mxu0
      %1186 = vmatprep.mubr.f32.mxu0 0.0
      %1187 = vmatmul.mubr.f32.gmra.mrb[0].mxu0 %v1061
      %v1188 = vpop.f32.mrb[0].mxu0
      %v1189 = vadd.f32 0.0, %v1188
      %v1190 = vpop.f32.mrb[0].mxu0
      %1191 = vmatprep.mubr.f32.mxu0 0.0
      %1192 = vmatmul.mubr.f32.gmra.mrb[0].mxu0 %v1063
      %v1193 = vpop.f32.mrb[0].mxu0
      %v1194 = vadd.f32 0.0, %v1193
      %v1195 = vpop.f32.mrb[0].mxu0
      %1196 = vmatprep.mubr.f32.mxu0 0.0
      %1197 = vmatmul.mubr.f32.gmra.mrb[0].mxu0 %v1065
      %v1198 = vpop.f32.mrb[0].mxu0
      %v1199 = vadd.f32 0.0, %v1198
      %v1200 = vpop.f32.mrb[0].mxu0
      %1201 = vmatprep.mubr.f32.mxu0 0.0
      %1202 = vmatmul.mubr.f32.gmra.mrb[0].mxu0 %v1067
      %v1203 = vpop.f32.mrb[0].mxu0
      %v1204 = vadd.f32 0.0, %v1203
      %v1205 = vpop.f32.mrb[0].mxu0
      %1206 = vmatprep.mubr.f32.mxu0 0.0
      %1207 = vmatmul.mubr.f32.gmra.mrb[0].mxu0 %v1069
      %v1208 = vpop.f32.mrb[0].mxu0
      %v1209 = vadd.f32 0.0, %v1208
      %v1210 = vpop.f32.mrb[0].mxu0
      %1211 = vmatprep.mubr.f32.mxu0 0.0
      %1212 = vmatmul.mubr.f32.gmra.mrb[0].mxu0 %v1071
      %v1213 = vpop.f32.mrb[0].mxu0
      %v1214 = vadd.f32 0.0, %v1213
      %v1215 = vpop.f32.mrb[0].mxu0
      %1216 = vmatprep.mubr.f32.mxu0 0.0
      %1217 = vmatmul.mubr.f32.gmra.mrb[0].mxu0 %v1073
      %v1218 = vpop.f32.mrb[0].mxu0
      %v1219 = vadd.f32 0.0, %v1218
      %v1220 = vpop.f32.mrb[0].mxu0
      %1221 = vmatprep.mubr.f32.mxu0 0.0
      %1222 = vmatmul.mubr.f32.gmra.mrb[0].mxu0 %v1075
      %v1223 = vpop.f32.mrb[0].mxu0
      %v1224 = vadd.f32 0.0, %v1223
      %v1225 = vpop.f32.mrb[0].mxu0
      %1226 = vmatprep.mubr.f32.mxu0 0.0
      %1227 = vmatmul.mubr.f32.gmra.mrb[0].mxu0 %v1077
      %v1228 = vpop.f32.mrb[0].mxu0
      %v1229 = vadd.f32 0.0, %v1228
      %v1230 = vpop.f32.mrb[0].mxu0
      %1231 = vmatprep.mubr.f32.mxu0 0.0
      %1232 = vmatmul.mubr.f32.gmra.mrb[0].mxu0 %v1079
      %v1233 = vpop.f32.mrb[0].mxu0
      %v1234 = vadd.f32 0.0, %v1233
      %v1235 = vpop.f32.mrb[0].mxu0
      %1236 = vmatprep.mubr.f32.mxu0 0.0
      %1237 = vmatmul.mubr.f32.gmra.mrb[0].mxu0 %v1081
      %v1238 = vpop.f32.mrb[0].mxu0
      %v1239 = vadd.f32 0.0, %v1238
      %v1240 = vpop.f32.mrb[0].mxu0
      %1241 = vmatprep.mubr.f32.mxu0 0.0
      %1242 = vmatmul.mubr.f32.gmra.mrb[0].mxu0 %v1083
      %v1243 = vpop.f32.mrb[0].mxu0
      %v1244 = vadd.f32 0.0, %v1243
      %v1245 = vpop.f32.mrb[0].mxu0
      %1246 = vmatprep.mubr.f32.mxu0 0.0
      %1247 = vmatmul.mubr.f32.gmra.mrb[0].mxu0 %v1085
      %v1248 = vpop.f32.mrb[0].mxu0
      %v1249 = vadd.f32 0.0, %v1248
      %v1250 = vpop.f32.mrb[0].mxu0
      %1251 = vmatprep.mubr.f32.mxu0 0.0
      %1252 = vmatmul.mubr.f32.gmra.mrb[0].mxu0 %v1087
      %v1253 = vpop.f32.mrb[0].mxu0
      %v1254 = vadd.f32 0.0, %v1253
      %v1255 = vpop.f32.mrb[0].mxu0
      %1256 = vmatprep.mubr.f32.mxu0 0.0
      %1257 = vmatmul.mubr.f32.gmra.mrb[0].mxu0 %v1089
      %v1258 = vpop.f32.mrb[0].mxu0
      %v1259 = vadd.f32 0.0, %v1258
      %v1260 = vpop.f32.mrb[0].mxu0
      %1261 = vmatprep.mubr.f32.mxu0 0.0
      %1262 = vmatmul.mubr.f32.gmra.mrb[0].mxu0 %v1091
      %v1263 = vpop.f32.mrb[0].mxu0
      %v1264 = vadd.f32 0.0, %v1263
      %v1265 = vpop.f32.mrb[0].mxu0
      %1266 = vmatprep.mubr.f32.mxu0 0.0
      %1267 = vmatmul.mubr.f32.gmra.mrb[0].mxu0 %v1093
      %v1268 = vpop.f32.mrb[0].mxu0
      %v1269 = vadd.f32 0.0, %v1268
      %v1270 = vpop.f32.mrb[0].mxu0
      %1271 = vmatprep.mubr.f32.mxu0 0.0
      %1272 = vmatmul.mubr.f32.gmra.mrb[0].mxu0 %v1095
      %v1273 = vpop.f32.mrb[0].mxu0
      %v1274 = vadd.f32 0.0, %v1273
      %v1275 = vpop.f32.mrb[0].mxu0
      %1276 = vmatprep.mubr.f32.mxu0 0.0
      %1277 = vmatmul.mubr.f32.gmra.mrb[0].mxu0 %v1097
      %v1278 = vpop.f32.mrb[0].mxu0
      %v1279 = vadd.f32 0.0, %v1278
      %v1280 = vpop.f32.mrb[0].mxu0
      %1281 = vmatprep.mubr.f32.mxu0 0.0
      %1282 = vmatmul.mubr.f32.gmra.mrb[0].mxu0 %v1099
      %v1283 = vpop.f32.mrb[0].mxu0
      %v1284 = vadd.f32 0.0, %v1283
      %v1285 = vpop.f32.mrb[0].mxu0
      %1286 = vmatprep.mubr.f32.mxu0 0.0
      %1287 = vmatmul.mubr.f32.gmra.mrb[0].mxu0 %v1101
      %v1288 = vpop.f32.mrb[0].mxu0
      %v1289 = vadd.f32 0.0, %v1288
      %v1290 = vpop.f32.mrb[0].mxu0
      %1291 = vmatprep.mubr.f32.mxu0 0.0
      %1292 = vmatmul.mubr.f32.gmra.mrb[0].mxu0 %v1103
      %v1293 = vpop.f32.mrb[0].mxu0
      %v1294 = vadd.f32 0.0, %v1293
      %v1295 = vpop.f32.mrb[0].mxu0
      %1296 = vmatprep.mubr.f32.mxu0 0.0
      %1297 = vmatmul.mubr.f32.gmra.mrb[0].mxu0 %v1105
      %v1298 = vpop.f32.mrb[0].mxu0
      %v1299 = vadd.f32 0.0, %v1298
      %v1300 = vpop.f32.mrb[0].mxu0
      %1301 = vdwg.mxu0
      %v1302 = vsel %vm1054, %v932, 0
      %v1304 = vsel %vm1054, %v933, 0
      %v1306 = vsel %vm1054, %v934, 0
      %v1308 = vsel %vm1054, %v935, 0
      %v1310 = vsel %vm1054, %v936, 0
      %v1312 = vsel %vm1054, %v937, 0
      %v1314 = vsel %vm1054, %v938, 0
      %v1316 = vsel %vm1054, %v939, 0
      %v1318 = vsel %vm1054, %v940, 0
      %v1320 = vsel %vm1054, %v941, 0
      %v1322 = vsel %vm1054, %v942, 0
      %v1324 = vsel %vm1054, %v943, 0
      %v1326 = vsel %vm1054, %v944, 0
      %v1328 = vsel %vm1054, %v945, 0
      %v1330 = vsel %vm1054, %v946, 0
      %v1332 = vsel %vm1054, %v947, 0
      %v1334 = vsel %vm1054, %v948, 0
      %v1336 = vsel %vm1054, %v949, 0
      %v1338 = vsel %vm1054, %v950, 0
      %v1340 = vsel %vm1054, %v951, 0
      %v1342 = vsel %vm1054, %v952, 0
      %v1344 = vsel %vm1054, %v953, 0
      %v1346 = vsel %vm1054, %v954, 0
      %v1348 = vsel %vm1054, %v955, 0
      %v1350 = vsel %vm1054, %v956, 0
      %v1353 = vsel %vm1054, %v957, 0
      %1355 = vmatprep.subr.mxu0 0.0
      %1356 = vmatpush1.msra.mxu0 %v959
      %1357 = vmatprep.subr.mxu0 0.0
      %1358 = vmatpush1.msra.mxu0 %v960
      %1359 = vmatprep.subr.mxu0 0.0
      %1360 = vmatpush1.msra.mxu0 %v961
      %1361 = vmatprep.subr.mxu0 0.0
      %1362 = vmatpush1.msra.mxu0 %v962
      %1363 = vmatprep.subr.mxu0 0.0
      %1364 = vmatpush1.msra.mxu0 %v963
      %1365 = vmatprep.subr.mxu0 0.0
      %1366 = vmatpush1.msra.mxu0 %v964
      %1367 = vmatprep.subr.mxu0 0.0
      %1368 = vmatpush1.msra.mxu0 %v965
      %1369 = vmatprep.subr.mxu0 0.0
      %1370 = vmatpush1.msra.mxu0 %v966
      %1371 = vmatprep.subr.mxu0 0.0
      %1372 = vmatpush1.msra.mxu0 0.0
      %1373 = vmatprep.subr.mxu0 0.0
      %1374 = vmatpush1.msra.mxu0 0.0
      %1375 = vmatprep.subr.mxu0 0.0
      %1376 = vmatpush1.msra.mxu0 0.0
      %1377 = vmatprep.subr.mxu0 0.0
      %1378 = vmatpush1.msra.mxu0 0.0
      %1379 = vmatprep.subr.mxu0 0.0
      %1380 = vmatpush1.msra.mxu0 0.0
      %1381 = vmatprep.subr.mxu0 0.0
      %1382 = vmatpush1.msra.mxu0 0.0
      %1383 = vmatprep.subr.mxu0 0.0
      %1384 = vmatpush1.msra.mxu0 0.0
      %1385 = vmatprep.subr.mxu0 0.0
      %1386 = vmatpush1.msra.mxu0 0.0
      %1387 = vmatprep.subr.mxu0 0.0
      %1388 = vmatpush1.msra.mxu0 0.0
      %1389 = vmatprep.subr.mxu0 0.0
      %1390 = vmatpush1.msra.mxu0 0.0
      %1391 = vmatprep.subr.mxu0 0.0
      %1392 = vmatpush1.msra.mxu0 0.0
      %1393 = vmatprep.subr.mxu0 0.0
      %1394 = vmatpush1.msra.mxu0 0.0
      %1395 = vmatprep.subr.mxu0 0.0
      %1396 = vmatpush1.msra.mxu0 0.0
      %1397 = vmatprep.subr.mxu0 0.0
      %1398 = vmatpush1.msra.mxu0 0.0
      %1399 = vmatprep.subr.mxu0 0.0
      %1400 = vmatpush1.msra.mxu0 0.0
      %1401 = vmatprep.subr.mxu0 0.0
      %1402 = vmatpush1.msra.mxu0 0.0
      %1403 = vmatprep.subr.mxu0 0.0
      %1404 = vmatpush1.msra.mxu0 0.0
      %1405 = vmatprep.subr.mxu0 0.0
      %1406 = vmatpush1.msra.mxu0 0.0
      %1407 = vmatprep.subr.mxu0 0.0
      %1408 = vmatpush1.msra.mxu0 0.0
      %1409 = vmatprep.subr.mxu0 0.0
      %1410 = vmatpush1.msra.mxu0 0.0
      %1411 = vmatprep.subr.mxu0 0.0
      %1412 = vmatpush1.msra.mxu0 0.0
      %1413 = vmatprep.subr.mxu0 0.0
      %1414 = vmatpush1.msra.mxu0 0.0
      %1415 = vmatprep.subr.mxu0 0.0
      %1416 = vmatpush1.msra.mxu0 0.0
      %1417 = vmatprep.subr.mxu0 0.0
      %1418 = vmatpush1.msra.mxu0 0.0
      %1419 = vmatprep.mubr.f32.mxu0 0.0
      %1420 = vmatmul.mubr.f32.gmra.mrb[0].mxu0 %v1302
      %v1421 = vpop.f32.mrb[0].mxu0
      %v1422 = vadd.f32 %v1174, %v1421
      %v1423 = vpop.f32.mrb[0].mxu0
      %1424 = vmatprep.mubr.f32.mxu0 0.0
      %1425 = vmatmul.mubr.f32.gmra.mrb[0].mxu0 %v1304
      %v1426 = vpop.f32.mrb[0].mxu0
      %v1427 = vadd.f32 %v1179, %v1426
      %v1428 = vpop.f32.mrb[0].mxu0
      %1429 = vmatprep.mubr.f32.mxu0 0.0
      %1430 = vmatmul.mubr.f32.gmra.mrb[0].mxu0 %v1306
      %v1431 = vpop.f32.mrb[0].mxu0
      %v1432 = vadd.f32 %v1184, %v1431
      %v1433 = vpop.f32.mrb[0].mxu0
      %1434 = vmatprep.mubr.f32.mxu0 0.0
      %1435 = vmatmul.mubr.f32.gmra.mrb[0].mxu0 %v1308
      %v1436 = vpop.f32.mrb[0].mxu0
      %v1437 = vadd.f32 %v1189, %v1436
      %v1438 = vpop.f32.mrb[0].mxu0
      %1439 = vmatprep.mubr.f32.mxu0 0.0
      %1440 = vmatmul.mubr.f32.gmra.mrb[0].mxu0 %v1310
      %v1441 = vpop.f32.mrb[0].mxu0
      %v1442 = vadd.f32 %v1194, %v1441
      %v1443 = vpop.f32.mrb[0].mxu0
      %1444 = vmatprep.mubr.f32.mxu0 0.0
      %1445 = vmatmul.mubr.f32.gmra.mrb[0].mxu0 %v1312
      %v1446 = vpop.f32.mrb[0].mxu0
      %v1447 = vadd.f32 %v1199, %v1446
      %v1448 = vpop.f32.mrb[0].mxu0
      %1449 = vmatprep.mubr.f32.mxu0 0.0
      %1450 = vmatmul.mubr.f32.gmra.mrb[0].mxu0 %v1314
      %v1451 = vpop.f32.mrb[0].mxu0
      %v1452 = vadd.f32 %v1204, %v1451
      %v1453 = vpop.f32.mrb[0].mxu0
      %1454 = vmatprep.mubr.f32.mxu0 0.0
      %1455 = vmatmul.mubr.f32.gmra.mrb[0].mxu0 %v1316
      %v1456 = vpop.f32.mrb[0].mxu0
      %v1457 = vadd.f32 %v1209, %v1456
      %v1458 = vpop.f32.mrb[0].mxu0
      %1459 = vmatprep.mubr.f32.mxu0 0.0
      %1460 = vmatmul.mubr.f32.gmra.mrb[0].mxu0 %v1318
      %v1461 = vpop.f32.mrb[0].mxu0
      %v1462 = vadd.f32 %v1214, %v1461
      %v1463 = vpop.f32.mrb[0].mxu0
      %1464 = vmatprep.mubr.f32.mxu0 0.0
      %1465 = vmatmul.mubr.f32.gmra.mrb[0].mxu0 %v1320
      %v1466 = vpop.f32.mrb[0].mxu0
      %v1467 = vadd.f32 %v1219, %v1466
      %v1468 = vpop.f32.mrb[0].mxu0
      %1469 = vmatprep.mubr.f32.mxu0 0.0
      %1470 = vmatmul.mubr.f32.gmra.mrb[0].mxu0 %v1322
      %v1471 = vpop.f32.mrb[0].mxu0
      %v1472 = vadd.f32 %v1224, %v1471
      %v1473 = vpop.f32.mrb[0].mxu0
      %1474 = vmatprep.mubr.f32.mxu0 0.0
      %1475 = vmatmul.mubr.f32.gmra.mrb[0].mxu0 %v1324
      %v1476 = vpop.f32.mrb[0].mxu0
      %v1477 = vadd.f32 %v1229, %v1476
      %v1478 = vpop.f32.mrb[0].mxu0
      %1479 = vmatprep.mubr.f32.mxu0 0.0
      %1480 = vmatmul.mubr.f32.gmra.mrb[0].mxu0 %v1326
      %v1481 = vpop.f32.mrb[0].mxu0
      %v1482 = vadd.f32 %v1234, %v1481
      %v1483 = vpop.f32.mrb[0].mxu0
      %1484 = vmatprep.mubr.f32.mxu0 0.0
      %1485 = vmatmul.mubr.f32.gmra.mrb[0].mxu0 %v1328
      %v1486 = vpop.f32.mrb[0].mxu0
      %v1487 = vadd.f32 %v1239, %v1486
      %v1488 = vpop.f32.mrb[0].mxu0
      %1489 = vmatprep.mubr.f32.mxu0 0.0
      %1490 = vmatmul.mubr.f32.gmra.mrb[0].mxu0 %v1330
      %v1491 = vpop.f32.mrb[0].mxu0
      %v1492 = vadd.f32 %v1244, %v1491
      %v1493 = vpop.f32.mrb[0].mxu0
      %1494 = vmatprep.mubr.f32.mxu0 0.0
      %1495 = vmatmul.mubr.f32.gmra.mrb[0].mxu0 %v1332
      %v1496 = vpop.f32.mrb[0].mxu0
      %v1497 = vadd.f32 %v1249, %v1496
      %v1498 = vpop.f32.mrb[0].mxu0
      %1499 = vmatprep.mubr.f32.mxu0 0.0
      %1500 = vmatmul.mubr.f32.gmra.mrb[0].mxu0 %v1334
      %v1501 = vpop.f32.mrb[0].mxu0
      %v1502 = vadd.f32 %v1254, %v1501
      %v1503 = vpop.f32.mrb[0].mxu0
      %1504 = vmatprep.mubr.f32.mxu0 0.0
      %1505 = vmatmul.mubr.f32.gmra.mrb[0].mxu0 %v1336
      %v1506 = vpop.f32.mrb[0].mxu0
      %v1507 = vadd.f32 %v1259, %v1506
      %v1508 = vpop.f32.mrb[0].mxu0
      %1509 = vmatprep.mubr.f32.mxu0 0.0
      %1510 = vmatmul.mubr.f32.gmra.mrb[0].mxu0 %v1338
      %v1511 = vpop.f32.mrb[0].mxu0
      %v1512 = vadd.f32 %v1264, %v1511
      %v1513 = vpop.f32.mrb[0].mxu0
      %1514 = vmatprep.mubr.f32.mxu0 0.0
      %1515 = vmatmul.mubr.f32.gmra.mrb[0].mxu0 %v1340
      %v1516 = vpop.f32.mrb[0].mxu0
      %v1517 = vadd.f32 %v1269, %v1516
      %v1518 = vpop.f32.mrb[0].mxu0
      %1519 = vmatprep.mubr.f32.mxu0 0.0
      %1520 = vmatmul.mubr.f32.gmra.mrb[0].mxu0 %v1342
      %v1521 = vpop.f32.mrb[0].mxu0
      %v1522 = vadd.f32 %v1274, %v1521
      %v1523 = vpop.f32.mrb[0].mxu0
      %1524 = vmatprep.mubr.f32.mxu0 0.0
      %1525 = vmatmul.mubr.f32.gmra.mrb[0].mxu0 %v1344
      %v1526 = vpop.f32.mrb[0].mxu0
      %v1527 = vadd.f32 %v1279, %v1526
      %v1528 = vpop.f32.mrb[0].mxu0
      %1529 = vmatprep.mubr.f32.mxu0 0.0
      %1530 = vmatmul.mubr.f32.gmra.mrb[0].mxu0 %v1346
      %v1531 = vpop.f32.mrb[0].mxu0
      %v1532 = vadd.f32 %v1284, %v1531
      %v1533 = vpop.f32.mrb[0].mxu0
      %1534 = vmatprep.mubr.f32.mxu0 0.0
      %1535 = vmatmul.mubr.f32.gmra.mrb[0].mxu0 %v1348
      %v1536 = vpop.f32.mrb[0].mxu0
      %v1537 = vadd.f32 %v1289, %v1536
      %v1538 = vpop.f32.mrb[0].mxu0
      %1539 = vmatprep.mubr.f32.mxu0 0.0
      %1540 = vmatmul.mubr.f32.gmra.mrb[0].mxu0 %v1350
      %v1541 = vpop.f32.mrb[0].mxu0
      %v1542 = vadd.f32 %v1294, %v1541
      %v1543 = vpop.f32.mrb[0].mxu0
      %1544 = vmatprep.mubr.f32.mxu0 0.0
      %1545 = vmatmul.mubr.f32.gmra.mrb[0].mxu0 %v1353
      %v1546 = vpop.f32.mrb[0].mxu0
      %v1547 = vadd.f32 %v1299, %v1546
      %v1548 = vpop.f32.mrb[0].mxu0
      %1549 = vdwg.mxu0
      %s1550 = scalar_lea.vmem %s6, 64
      %v1551 = vld [vmem:[%s1550] sm:$0xff]
      %v1552 = vld [vmem:[%s1550 + $0x8] sm:$0xff]
      %v1553 = vld [vmem:[%s1550 + $0x10] sm:$0xff]
      %v1554 = vld [vmem:[%s1550 + $0x18] sm:$0xff]
      %v1555 = vld [vmem:[%s1550 + $0x20] sm:$0xff]
      %v1556 = vld [vmem:[%s1550 + $0x28] sm:$0xff]
      %v1557 = vld [vmem:[%s1550 + $0x30] sm:$0xff]
      %v1558 = vld [vmem:[%s1550 + $0x38] sm:$0xff]
      %vm1559 = vcmask 1041408
      %v1560 = vrot.slane 0.0, 6
      %v1561 = vsel %vm1559, %v1560, %v1560
      %v1562 = vrot.slane %v932, 6
      %v1563 = vsel %vm1559, %v1560, %v1562
      %v1564 = vrot.slane %v933, 6
      %v1565 = vsel %vm1559, %v1562, %v1564
      %v1566 = vrot.slane %v934, 6
      %v1567 = vsel %vm1559, %v1564, %v1566
      %v1568 = vrot.slane %v935, 6
      %v1569 = vsel %vm1559, %v1566, %v1568
      %v1570 = vrot.slane %v936, 6
      %v1571 = vsel %vm1559, %v1568, %v1570
      %v1572 = vrot.slane %v937, 6
      %v1573 = vsel %vm1559, %v1570, %v1572
      %v1574 = vrot.slane %v938, 6
      %v1575 = vsel %vm1559, %v1572, %v1574
      %v1576 = vrot.slane %v939, 6
      %v1577 = vsel %vm1559, %v1574, %v1576
      %v1578 = vrot.slane %v940, 6
      %v1579 = vsel %vm1559, %v1576, %v1578
      %v1580 = vrot.slane %v941, 6
      %v1581 = vsel %vm1559, %v1578, %v1580
      %v1582 = vrot.slane %v942, 6
      %v1583 = vsel %vm1559, %v1580, %v1582
      %v1584 = vrot.slane %v943, 6
      %v1585 = vsel %vm1559, %v1582, %v1584
      %v1586 = vrot.slane %v944, 6
      %v1587 = vsel %vm1559, %v1584, %v1586
      %v1588 = vrot.slane %v945, 6
      %v1589 = vsel %vm1559, %v1586, %v1588
      %v1590 = vrot.slane %v946, 6
      %v1591 = vsel %vm1559, %v1588, %v1590
      %v1592 = vrot.slane %v947, 6
      %v1593 = vsel %vm1559, %v1590, %v1592
      %v1594 = vrot.slane %v948, 6
      %v1595 = vsel %vm1559, %v1592, %v1594
      %v1596 = vrot.slane %v949, 6
      %v1597 = vsel %vm1559, %v1594, %v1596
      %v1598 = vrot.slane %v950, 6
      %v1599 = vsel %vm1559, %v1596, %v1598
      %v1600 = vrot.slane %v951, 6
      %v1601 = vsel %vm1559, %v1598, %v1600
      %v1602 = vrot.slane %v952, 6
      %v1603 = vsel %vm1559, %v1600, %v1602
      %v1604 = vrot.slane %v953, 6
      %v1605 = vsel %vm1559, %v1602, %v1604
      %v1606 = vrot.slane %v954, 6
      %v1607 = vsel %vm1559, %v1604, %v1606
      %v1608 = vrot.slane %v955, 6
      %v1609 = vsel %vm1559, %v1606, %v1608
      %v1610 = vrot.slane %v956, 6
      %v1611 = vsel %vm1559, %v1608, %v1610
      %v1612 = vsel %vm1054, %v1561, 0
      %v1614 = vsel %vm1054, %v1563, 0
      %v1616 = vsel %vm1054, %v1565, 0
      %v1618 = vsel %vm1054, %v1567, 0
      %v1620 = vsel %vm1054, %v1569, 0
      %v1622 = vsel %vm1054, %v1571, 0
      %v1624 = vsel %vm1054, %v1573, 0
      %v1626 = vsel %vm1054, %v1575, 0
      %v1628 = vsel %vm1054, %v1577, 0
      %v1630 = vsel %vm1054, %v1579, 0
      %v1632 = vsel %vm1054, %v1581, 0
      %v1634 = vsel %vm1054, %v1583, 0
      %v1636 = vsel %vm1054, %v1585, 0
      %v1638 = vsel %vm1054, %v1587, 0
      %v1640 = vsel %vm1054, %v1589, 0
      %v1642 = vsel %vm1054, %v1591, 0
      %v1644 = vsel %vm1054, %v1593, 0
      %v1646 = vsel %vm1054, %v1595, 0
      %v1648 = vsel %vm1054, %v1597, 0
      %v1650 = vsel %vm1054, %v1599, 0
      %v1652 = vsel %vm1054, %v1601, 0
      %v1654 = vsel %vm1054, %v1603, 0
      %v1656 = vsel %vm1054, %v1605, 0
      %v1658 = vsel %vm1054, %v1607, 0
      %v1660 = vsel %vm1054, %v1609, 0
      %v1662 = vsel %vm1054, %v1611, 0
      %1664 = vmatprep.subr.mxu0 0.0
      %1665 = vmatpush1.msra.mxu0 %v1551
      %1666 = vmatprep.subr.mxu0 0.0
      %1667 = vmatpush1.msra.mxu0 %v1552
      %1668 = vmatprep.subr.mxu0 0.0
      %1669 = vmatpush1.msra.mxu0 %v1553
      %1670 = vmatprep.subr.mxu0 0.0
      %1671 = vmatpush1.msra.mxu0 %v1554
      %1672 = vmatprep.subr.mxu0 0.0
      %1673 = vmatpush1.msra.mxu0 %v1555
      %1674 = vmatprep.subr.mxu0 0.0
      %1675 = vmatpush1.msra.mxu0 %v1556
      %1676 = vmatprep.subr.mxu0 0.0
      %1677 = vmatpush1.msra.mxu0 %v1557
      %1678 = vmatprep.subr.mxu0 0.0
      %1679 = vmatpush1.msra.mxu0 %v1558
      %1680 = vmatprep.subr.mxu0 0.0
      %1681 = vmatpush1.msra.mxu0 0.0
      %1682 = vmatprep.subr.mxu0 0.0
      %1683 = vmatpush1.msra.mxu0 0.0
      %1684 = vmatprep.subr.mxu0 0.0
      %1685 = vmatpush1.msra.mxu0 0.0
      %1686 = vmatprep.subr.mxu0 0.0
      %1687 = vmatpush1.msra.mxu0 0.0
      %1688 = vmatprep.subr.mxu0 0.0
      %1689 = vmatpush1.msra.mxu0 0.0
      %1690 = vmatprep.subr.mxu0 0.0
      %1691 = vmatpush1.msra.mxu0 0.0
      %1692 = vmatprep.subr.mxu0 0.0
      %1693 = vmatpush1.msra.mxu0 0.0
      %1694 = vmatprep.subr.mxu0 0.0
      %1695 = vmatpush1.msra.mxu0 0.0
      %1696 = vmatprep.subr.mxu0 0.0
      %1697 = vmatpush1.msra.mxu0 0.0
      %1698 = vmatprep.subr.mxu0 0.0
      %1699 = vmatpush1.msra.mxu0 0.0
      %1700 = vmatprep.subr.mxu0 0.0
      %1701 = vmatpush1.msra.mxu0 0.0
      %1702 = vmatprep.subr.mxu0 0.0
      %1703 = vmatpush1.msra.mxu0 0.0
      %1704 = vmatprep.subr.mxu0 0.0
      %1705 = vmatpush1.msra.mxu0 0.0
      %1706 = vmatprep.subr.mxu0 0.0
      %1707 = vmatpush1.msra.mxu0 0.0
      %1708 = vmatprep.subr.mxu0 0.0
      %1709 = vmatpush1.msra.mxu0 0.0
      %1710 = vmatprep.subr.mxu0 0.0
      %1711 = vmatpush1.msra.mxu0 0.0
      %1712 = vmatprep.subr.mxu0 0.0
      %1713 = vmatpush1.msra.mxu0 0.0
      %1714 = vmatprep.subr.mxu0 0.0
      %1715 = vmatpush1.msra.mxu0 0.0
      %1716 = vmatprep.subr.mxu0 0.0
      %1717 = vmatpush1.msra.mxu0 0.0
      %1718 = vmatprep.subr.mxu0 0.0
      %1719 = vmatpush1.msra.mxu0 0.0
      %1720 = vmatprep.subr.mxu0 0.0
      %1721 = vmatpush1.msra.mxu0 0.0
      %1722 = vmatprep.subr.mxu0 0.0
      %1723 = vmatpush1.msra.mxu0 0.0
      %1724 = vmatprep.subr.mxu0 0.0
      %1725 = vmatpush1.msra.mxu0 0.0
      %1726 = vmatprep.subr.mxu0 0.0
      %1727 = vmatpush1.msra.mxu0 0.0
      %1728 = vmatprep.mubr.f32.mxu0 0.0
      %1729 = vmatmul.mubr.f32.gmra.mrb[0].mxu0 %v1612
      %v1730 = vpop.f32.mrb[0].mxu0
      %v1731 = vadd.f32 0.0, %v1730
      %v1732 = vpop.f32.mrb[0].mxu0
      %1733 = vmatprep.mubr.f32.mxu0 0.0
      %1734 = vmatmul.mubr.f32.gmra.mrb[0].mxu0 %v1614
      %v1735 = vpop.f32.mrb[0].mxu0
      %v1736 = vadd.f32 0.0, %v1735
      %v1737 = vpop.f32.mrb[0].mxu0
      %1738 = vmatprep.mubr.f32.mxu0 0.0
      %1739 = vmatmul.mubr.f32.gmra.mrb[0].mxu0 %v1616
      %v1740 = vpop.f32.mrb[0].mxu0
      %v1741 = vadd.f32 0.0, %v1740
      %v1742 = vpop.f32.mrb[0].mxu0
      %1743 = vmatprep.mubr.f32.mxu0 0.0
      %1744 = vmatmul.mubr.f32.gmra.mrb[0].mxu0 %v1618
      %v1745 = vpop.f32.mrb[0].mxu0
      %v1746 = vadd.f32 0.0, %v1745
      %v1747 = vpop.f32.mrb[0].mxu0
      %1748 = vmatprep.mubr.f32.mxu0 0.0
      %1749 = vmatmul.mubr.f32.gmra.mrb[0].mxu0 %v1620
      %v1750 = vpop.f32.mrb[0].mxu0
      %v1751 = vadd.f32 0.0, %v1750
      %v1752 = vpop.f32.mrb[0].mxu0
      %1753 = vmatprep.mubr.f32.mxu0 0.0
      %1754 = vmatmul.mubr.f32.gmra.mrb[0].mxu0 %v1622
      %v1755 = vpop.f32.mrb[0].mxu0
      %v1756 = vadd.f32 0.0, %v1755
      %v1757 = vpop.f32.mrb[0].mxu0
      %1758 = vmatprep.mubr.f32.mxu0 0.0
      %1759 = vmatmul.mubr.f32.gmra.mrb[0].mxu0 %v1624
      %v1760 = vpop.f32.mrb[0].mxu0
      %v1761 = vadd.f32 0.0, %v1760
      %v1762 = vpop.f32.mrb[0].mxu0
      %1763 = vmatprep.mubr.f32.mxu0 0.0
      %1764 = vmatmul.mubr.f32.gmra.mrb[0].mxu0 %v1626
      %v1765 = vpop.f32.mrb[0].mxu0
      %v1766 = vadd.f32 0.0, %v1765
      %v1767 = vpop.f32.mrb[0].mxu0
      %1768 = vmatprep.mubr.f32.mxu0 0.0
      %1769 = vmatmul.mubr.f32.gmra.mrb[0].mxu0 %v1628
      %v1770 = vpop.f32.mrb[0].mxu0
      %v1771 = vadd.f32 0.0, %v1770
      %v1772 = vpop.f32.mrb[0].mxu0
      %1773 = vmatprep.mubr.f32.mxu0 0.0
      %1774 = vmatmul.mubr.f32.gmra.mrb[0].mxu0 %v1630
      %v1775 = vpop.f32.mrb[0].mxu0
      %v1776 = vadd.f32 0.0, %v1775
      %v1777 = vpop.f32.mrb[0].mxu0
      %1778 = vmatprep.mubr.f32.mxu0 0.0
      %1779 = vmatmul.mubr.f32.gmra.mrb[0].mxu0 %v1632
      %v1780 = vpop.f32.mrb[0].mxu0
      %v1781 = vadd.f32 0.0, %v1780
      %v1782 = vpop.f32.mrb[0].mxu0
      %1783 = vmatprep.mubr.f32.mxu0 0.0
      %1784 = vmatmul.mubr.f32.gmra.mrb[0].mxu0 %v1634
      %v1785 = vpop.f32.mrb[0].mxu0
      %v1786 = vadd.f32 0.0, %v1785
      %v1787 = vpop.f32.mrb[0].mxu0
      %1788 = vmatprep.mubr.f32.mxu0 0.0
      %1789 = vmatmul.mubr.f32.gmra.mrb[0].mxu0 %v1636
      %v1790 = vpop.f32.mrb[0].mxu0
      %v1791 = vadd.f32 0.0, %v1790
      %v1792 = vpop.f32.mrb[0].mxu0
      %1793 = vmatprep.mubr.f32.mxu0 0.0
      %1794 = vmatmul.mubr.f32.gmra.mrb[0].mxu0 %v1638
      %v1795 = vpop.f32.mrb[0].mxu0
      %v1796 = vadd.f32 0.0, %v1795
      %v1797 = vpop.f32.mrb[0].mxu0
      %1798 = vmatprep.mubr.f32.mxu0 0.0
      %1799 = vmatmul.mubr.f32.gmra.mrb[0].mxu0 %v1640
      %v1800 = vpop.f32.mrb[0].mxu0
      %v1801 = vadd.f32 0.0, %v1800
      %v1802 = vpop.f32.mrb[0].mxu0
      %1803 = vmatprep.mubr.f32.mxu0 0.0
      %1804 = vmatmul.mubr.f32.gmra.mrb[0].mxu0 %v1642
      %v1805 = vpop.f32.mrb[0].mxu0
      %v1806 = vadd.f32 0.0, %v1805
      %v1807 = vpop.f32.mrb[0].mxu0
      %1808 = vmatprep.mubr.f32.mxu0 0.0
      %1809 = vmatmul.mubr.f32.gmra.mrb[0].mxu0 %v1644
      %v1810 = vpop.f32.mrb[0].mxu0
      %v1811 = vadd.f32 0.0, %v1810
      %v1812 = vpop.f32.mrb[0].mxu0
      %1813 = vmatprep.mubr.f32.mxu0 0.0
      %1814 = vmatmul.mubr.f32.gmra.mrb[0].mxu0 %v1646
      %v1815 = vpop.f32.mrb[0].mxu0
      %v1816 = vadd.f32 0.0, %v1815
      %v1817 = vpop.f32.mrb[0].mxu0
      %1818 = vmatprep.mubr.f32.mxu0 0.0
      %1819 = vmatmul.mubr.f32.gmra.mrb[0].mxu0 %v1648
      %v1820 = vpop.f32.mrb[0].mxu0
      %v1821 = vadd.f32 0.0, %v1820
      %v1822 = vpop.f32.mrb[0].mxu0
      %1823 = vmatprep.mubr.f32.mxu0 0.0
      %1824 = vmatmul.mubr.f32.gmra.mrb[0].mxu0 %v1650
      %v1825 = vpop.f32.mrb[0].mxu0
      %v1826 = vadd.f32 0.0, %v1825
      %v1827 = vpop.f32.mrb[0].mxu0
      %1828 = vmatprep.mubr.f32.mxu0 0.0
      %1829 = vmatmul.mubr.f32.gmra.mrb[0].mxu0 %v1652
      %v1830 = vpop.f32.mrb[0].mxu0
      %v1831 = vadd.f32 0.0, %v1830
      %v1832 = vpop.f32.mrb[0].mxu0
      %1833 = vmatprep.mubr.f32.mxu0 0.0
      %1834 = vmatmul.mubr.f32.gmra.mrb[0].mxu0 %v1654
      %v1835 = vpop.f32.mrb[0].mxu0
      %v1836 = vadd.f32 0.0, %v1835
      %v1837 = vpop.f32.mrb[0].mxu0
      %1838 = vmatprep.mubr.f32.mxu0 0.0
      %1839 = vmatmul.mubr.f32.gmra.mrb[0].mxu0 %v1656
      %v1840 = vpop.f32.mrb[0].mxu0
      %v1841 = vadd.f32 0.0, %v1840
      %v1842 = vpop.f32.mrb[0].mxu0
      %1843 = vmatprep.mubr.f32.mxu0 0.0
      %1844 = vmatmul.mubr.f32.gmra.mrb[0].mxu0 %v1658
      %v1845 = vpop.f32.mrb[0].mxu0
      %v1846 = vadd.f32 0.0, %v1845
      %v1847 = vpop.f32.mrb[0].mxu0
      %1848 = vmatprep.mubr.f32.mxu0 0.0
      %1849 = vmatmul.mubr.f32.gmra.mrb[0].mxu0 %v1660
      %v1850 = vpop.f32.mrb[0].mxu0
      %v1851 = vadd.f32 0.0, %v1850
      %v1852 = vpop.f32.mrb[0].mxu0
      %1853 = vmatprep.mubr.f32.mxu0 0.0
      %1854 = vmatmul.mubr.f32.gmra.mrb[0].mxu0 %v1662
      %v1855 = vpop.f32.mrb[0].mxu0
      %v1856 = vadd.f32 0.0, %v1855
      %v1857 = vpop.f32.mrb[0].mxu0
      %1858 = vdwg.mxu0
      %v1859 = vadd.f32 %v1422, %v1731
      %v1860 = vadd.f32 %v1427, %v1736
      %v1861 = vadd.f32 %v1432, %v1741
      %v1862 = vadd.f32 %v1437, %v1746
      %v1863 = vadd.f32 %v1442, %v1751
      %v1864 = vadd.f32 %v1447, %v1756
      %v1865 = vadd.f32 %v1452, %v1761
      %v1866 = vadd.f32 %v1457, %v1766
      %v1867 = vadd.f32 %v1462, %v1771
      %v1868 = vadd.f32 %v1467, %v1776
      %v1869 = vadd.f32 %v1472, %v1781
      %v1870 = vadd.f32 %v1477, %v1786
      %v1871 = vadd.f32 %v1482, %v1791
      %v1872 = vadd.f32 %v1487, %v1796
      %v1873 = vadd.f32 %v1492, %v1801
      %v1874 = vadd.f32 %v1497, %v1806
      %v1875 = vadd.f32 %v1502, %v1811
      %v1876 = vadd.f32 %v1507, %v1816
      %v1877 = vadd.f32 %v1512, %v1821
      %v1878 = vadd.f32 %v1517, %v1826
      %v1879 = vadd.f32 %v1522, %v1831
      %v1880 = vadd.f32 %v1527, %v1836
      %v1881 = vadd.f32 %v1532, %v1841
      %v1882 = vadd.f32 %v1537, %v1846
      %v1883 = vadd.f32 %v1542, %v1851
      %v1884 = vadd.f32 %v1547, %v1856
      %s1885 = scalar_lea.vmem %s6, 128
      %v1886 = vld [vmem:[%s1885] sm:$0xff]
      %v1887 = vld [vmem:[%s1885 + $0x8] sm:$0xff]
      %v1888 = vld [vmem:[%s1885 + $0x10] sm:$0xff]
      %v1889 = vld [vmem:[%s1885 + $0x18] sm:$0xff]
      %v1890 = vld [vmem:[%s1885 + $0x20] sm:$0xff]
      %v1891 = vld [vmem:[%s1885 + $0x28] sm:$0xff]
      %v1892 = vld [vmem:[%s1885 + $0x30] sm:$0xff]
      %v1893 = vld [vmem:[%s1885 + $0x38] sm:$0xff]
      %vm1894 = vcmask 1040384
      %v1895 = vrot.slane 0.0, 7
      %v1896 = vsel %vm1894, %v1895, %v1895
      %v1897 = vrot.slane %v932, 7
      %v1898 = vsel %vm1894, %v1895, %v1897
      %v1899 = vrot.slane %v933, 7
      %v1900 = vsel %vm1894, %v1897, %v1899
      %v1901 = vrot.slane %v934, 7
      %v1902 = vsel %vm1894, %v1899, %v1901
      %v1903 = vrot.slane %v935, 7
      %v1904 = vsel %vm1894, %v1901, %v1903
      %v1905 = vrot.slane %v936, 7
      %v1906 = vsel %vm1894, %v1903, %v1905
      %v1907 = vrot.slane %v937, 7
      %v1908 = vsel %vm1894, %v1905, %v1907
      %v1909 = vrot.slane %v938, 7
      %v1910 = vsel %vm1894, %v1907, %v1909
      %v1911 = vrot.slane %v939, 7
      %v1912 = vsel %vm1894, %v1909, %v1911
      %v1913 = vrot.slane %v940, 7
      %v1914 = vsel %vm1894, %v1911, %v1913
      %v1915 = vrot.slane %v941, 7
      %v1916 = vsel %vm1894, %v1913, %v1915
      %v1917 = vrot.slane %v942, 7
      %v1918 = vsel %vm1894, %v1915, %v1917
      %v1919 = vrot.slane %v943, 7
      %v1920 = vsel %vm1894, %v1917, %v1919
      %v1921 = vrot.slane %v944, 7
      %v1922 = vsel %vm1894, %v1919, %v1921
      %v1923 = vrot.slane %v945, 7
      %v1924 = vsel %vm1894, %v1921, %v1923
      %v1925 = vrot.slane %v946, 7
      %v1926 = vsel %vm1894, %v1923, %v1925
      %v1927 = vrot.slane %v947, 7
      %v1928 = vsel %vm1894, %v1925, %v1927
      %v1929 = vrot.slane %v948, 7
      %v1930 = vsel %vm1894, %v1927, %v1929
      %v1931 = vrot.slane %v949, 7
      %v1932 = vsel %vm1894, %v1929, %v1931
      %v1933 = vrot.slane %v950, 7
      %v1934 = vsel %vm1894, %v1931, %v1933
      %v1935 = vrot.slane %v951, 7
      %v1936 = vsel %vm1894, %v1933, %v1935
      %v1937 = vrot.slane %v952, 7
      %v1938 = vsel %vm1894, %v1935, %v1937
      %v1939 = vrot.slane %v953, 7
      %v1940 = vsel %vm1894, %v1937, %v1939
      %v1941 = vrot.slane %v954, 7
      %v1942 = vsel %vm1894, %v1939, %v1941
      %v1943 = vrot.slane %v955, 7
      %v1944 = vsel %vm1894, %v1941, %v1943
      %v1945 = vrot.slane %v956, 7
      %v1946 = vsel %vm1894, %v1943, %v1945
      %v1947 = vsel %vm1054, %v1896, 0
      %v1949 = vsel %vm1054, %v1898, 0
      %v1951 = vsel %vm1054, %v1900, 0
      %v1953 = vsel %vm1054, %v1902, 0
      %v1955 = vsel %vm1054, %v1904, 0
      %v1957 = vsel %vm1054, %v1906, 0
      %v1959 = vsel %vm1054, %v1908, 0
      %v1961 = vsel %vm1054, %v1910, 0
      %v1963 = vsel %vm1054, %v1912, 0
      %v1965 = vsel %vm1054, %v1914, 0
      %v1967 = vsel %vm1054, %v1916, 0
      %v1969 = vsel %vm1054, %v1918, 0
      %v1971 = vsel %vm1054, %v1920, 0
      %v1973 = vsel %vm1054, %v1922, 0
      %v1975 = vsel %vm1054, %v1924, 0
      %v1977 = vsel %vm1054, %v1926, 0
      %v1979 = vsel %vm1054, %v1928, 0
      %v1981 = vsel %vm1054, %v1930, 0
      %v1983 = vsel %vm1054, %v1932, 0
      %v1985 = vsel %vm1054, %v1934, 0
      %v1987 = vsel %vm1054, %v1936, 0
      %v1989 = vsel %vm1054, %v1938, 0
      %v1991 = vsel %vm1054, %v1940, 0
      %v1993 = vsel %vm1054, %v1942, 0
      %v1995 = vsel %vm1054, %v1944, 0
      %v1997 = vsel %vm1054, %v1946, 0
      %1999 = vmatprep.subr.mxu0 0.0
      %2000 = vmatpush1.msra.mxu0 %v1886
      %2001 = vmatprep.subr.mxu0 0.0
      %2002 = vmatpush1.msra.mxu0 %v1887
      %2003 = vmatprep.subr.mxu0 0.0
      %2004 = vmatpush1.msra.mxu0 %v1888
      %2005 = vmatprep.subr.mxu0 0.0
      %2006 = vmatpush1.msra.mxu0 %v1889
      %2007 = vmatprep.subr.mxu0 0.0
      %2008 = vmatpush1.msra.mxu0 %v1890
      %2009 = vmatprep.subr.mxu0 0.0
      %2010 = vmatpush1.msra.mxu0 %v1891
      %2011 = vmatprep.subr.mxu0 0.0
      %2012 = vmatpush1.msra.mxu0 %v1892
      %2013 = vmatprep.subr.mxu0 0.0
      %2014 = vmatpush1.msra.mxu0 %v1893
      %2015 = vmatprep.subr.mxu0 0.0
      %2016 = vmatpush1.msra.mxu0 0.0
      %2017 = vmatprep.subr.mxu0 0.0
      %2018 = vmatpush1.msra.mxu0 0.0
      %2019 = vmatprep.subr.mxu0 0.0
      %2020 = vmatpush1.msra.mxu0 0.0
      %2021 = vmatprep.subr.mxu0 0.0
      %2022 = vmatpush1.msra.mxu0 0.0
      %2023 = vmatprep.subr.mxu0 0.0
      %2024 = vmatpush1.msra.mxu0 0.0
      %2025 = vmatprep.subr.mxu0 0.0
      %2026 = vmatpush1.msra.mxu0 0.0
      %2027 = vmatprep.subr.mxu0 0.0
      %2028 = vmatpush1.msra.mxu0 0.0
      %2029 = vmatprep.subr.mxu0 0.0
      %2030 = vmatpush1.msra.mxu0 0.0
      %2031 = vmatprep.subr.mxu0 0.0
      %2032 = vmatpush1.msra.mxu0 0.0
      %2033 = vmatprep.subr.mxu0 0.0
      %2034 = vmatpush1.msra.mxu0 0.0
      %2035 = vmatprep.subr.mxu0 0.0
      %2036 = vmatpush1.msra.mxu0 0.0
      %2037 = vmatprep.subr.mxu0 0.0
      %2038 = vmatpush1.msra.mxu0 0.0
      %2039 = vmatprep.subr.mxu0 0.0
      %2040 = vmatpush1.msra.mxu0 0.0
      %2041 = vmatprep.subr.mxu0 0.0
      %2042 = vmatpush1.msra.mxu0 0.0
      %2043 = vmatprep.subr.mxu0 0.0
      %2044 = vmatpush1.msra.mxu0 0.0
      %2045 = vmatprep.subr.mxu0 0.0
      %2046 = vmatpush1.msra.mxu0 0.0
      %2047 = vmatprep.subr.mxu0 0.0
      %2048 = vmatpush1.msra.mxu0 0.0
      %2049 = vmatprep.subr.mxu0 0.0
      %2050 = vmatpush1.msra.mxu0 0.0
      %2051 = vmatprep.subr.mxu0 0.0
      %2052 = vmatpush1.msra.mxu0 0.0
      %2053 = vmatprep.subr.mxu0 0.0
      %2054 = vmatpush1.msra.mxu0 0.0
      %2055 = vmatprep.subr.mxu0 0.0
      %2056 = vmatpush1.msra.mxu0 0.0
      %2057 = vmatprep.subr.mxu0 0.0
      %2058 = vmatpush1.msra.mxu0 0.0
      %2059 = vmatprep.subr.mxu0 0.0
      %2060 = vmatpush1.msra.mxu0 0.0
      %2061 = vmatprep.subr.mxu0 0.0
      %2062 = vmatpush1.msra.mxu0 0.0
      %2063 = vmatprep.mubr.f32.mxu0 0.0
      %2064 = vmatmul.mubr.f32.gmra.mrb[0].mxu0 %v1947
      %v2065 = vpop.f32.mrb[0].mxu0
      %v2066 = vadd.f32 0.0, %v2065
      %v2067 = vpop.f32.mrb[0].mxu0
      %2068 = vmatprep.mubr.f32.mxu0 0.0
      %2069 = vmatmul.mubr.f32.gmra.mrb[0].mxu0 %v1949
      %v2070 = vpop.f32.mrb[0].mxu0
      %v2071 = vadd.f32 0.0, %v2070
      %v2072 = vpop.f32.mrb[0].mxu0
      %2073 = vmatprep.mubr.f32.mxu0 0.0
      %2074 = vmatmul.mubr.f32.gmra.mrb[0].mxu0 %v1951
      %v2075 = vpop.f32.mrb[0].mxu0
      %v2076 = vadd.f32 0.0, %v2075
      %v2077 = vpop.f32.mrb[0].mxu0
      %2078 = vmatprep.mubr.f32.mxu0 0.0
      %2079 = vmatmul.mubr.f32.gmra.mrb[0].mxu0 %v1953
      %v2080 = vpop.f32.mrb[0].mxu0
      %v2081 = vadd.f32 0.0, %v2080
      %v2082 = vpop.f32.mrb[0].mxu0
      %2083 = vmatprep.mubr.f32.mxu0 0.0
      %2084 = vmatmul.mubr.f32.gmra.mrb[0].mxu0 %v1955
      %v2085 = vpop.f32.mrb[0].mxu0
      %v2086 = vadd.f32 0.0, %v2085
      %v2087 = vpop.f32.mrb[0].mxu0
      %2088 = vmatprep.mubr.f32.mxu0 0.0
      %2089 = vmatmul.mubr.f32.gmra.mrb[0].mxu0 %v1957
      %v2090 = vpop.f32.mrb[0].mxu0
      %v2091 = vadd.f32 0.0, %v2090
      %v2092 = vpop.f32.mrb[0].mxu0
      %2093 = vmatprep.mubr.f32.mxu0 0.0
      %2094 = vmatmul.mubr.f32.gmra.mrb[0].mxu0 %v1959
      %v2095 = vpop.f32.mrb[0].mxu0
      %v2096 = vadd.f32 0.0, %v2095
      %v2097 = vpop.f32.mrb[0].mxu0
      %2098 = vmatprep.mubr.f32.mxu0 0.0
      %2099 = vmatmul.mubr.f32.gmra.mrb[0].mxu0 %v1961
      %v2100 = vpop.f32.mrb[0].mxu0
      %v2101 = vadd.f32 0.0, %v2100
      %v2102 = vpop.f32.mrb[0].mxu0
      %2103 = vmatprep.mubr.f32.mxu0 0.0
      %2104 = vmatmul.mubr.f32.gmra.mrb[0].mxu0 %v1963
      %v2105 = vpop.f32.mrb[0].mxu0
      %v2106 = vadd.f32 0.0, %v2105
      %v2107 = vpop.f32.mrb[0].mxu0
      %2108 = vmatprep.mubr.f32.mxu0 0.0
      %2109 = vmatmul.mubr.f32.gmra.mrb[0].mxu0 %v1965
      %v2110 = vpop.f32.mrb[0].mxu0
      %v2111 = vadd.f32 0.0, %v2110
      %v2112 = vpop.f32.mrb[0].mxu0
      %2113 = vmatprep.mubr.f32.mxu0 0.0
      %2114 = vmatmul.mubr.f32.gmra.mrb[0].mxu0 %v1967
      %v2115 = vpop.f32.mrb[0].mxu0
      %v2116 = vadd.f32 0.0, %v2115
      %v2117 = vpop.f32.mrb[0].mxu0
      %2118 = vmatprep.mubr.f32.mxu0 0.0
      %2119 = vmatmul.mubr.f32.gmra.mrb[0].mxu0 %v1969
      %v2120 = vpop.f32.mrb[0].mxu0
      %v2121 = vadd.f32 0.0, %v2120
      %v2122 = vpop.f32.mrb[0].mxu0
      %2123 = vmatprep.mubr.f32.mxu0 0.0
      %2124 = vmatmul.mubr.f32.gmra.mrb[0].mxu0 %v1971
      %v2125 = vpop.f32.mrb[0].mxu0
      %v2126 = vadd.f32 0.0, %v2125
      %v2127 = vpop.f32.mrb[0].mxu0
      %2128 = vmatprep.mubr.f32.mxu0 0.0
      %2129 = vmatmul.mubr.f32.gmra.mrb[0].mxu0 %v1973
      %v2130 = vpop.f32.mrb[0].mxu0
      %v2131 = vadd.f32 0.0, %v2130
      %v2132 = vpop.f32.mrb[0].mxu0
      %2133 = vmatprep.mubr.f32.mxu0 0.0
      %2134 = vmatmul.mubr.f32.gmra.mrb[0].mxu0 %v1975
      %v2135 = vpop.f32.mrb[0].mxu0
      %v2136 = vadd.f32 0.0, %v2135
      %v2137 = vpop.f32.mrb[0].mxu0
      %2138 = vmatprep.mubr.f32.mxu0 0.0
      %2139 = vmatmul.mubr.f32.gmra.mrb[0].mxu0 %v1977
      %v2140 = vpop.f32.mrb[0].mxu0
      %v2141 = vadd.f32 0.0, %v2140
      %v2142 = vpop.f32.mrb[0].mxu0
      %2143 = vmatprep.mubr.f32.mxu0 0.0
      %2144 = vmatmul.mubr.f32.gmra.mrb[0].mxu0 %v1979
      %v2145 = vpop.f32.mrb[0].mxu0
      %v2146 = vadd.f32 0.0, %v2145
      %v2147 = vpop.f32.mrb[0].mxu0
      %2148 = vmatprep.mubr.f32.mxu0 0.0
      %2149 = vmatmul.mubr.f32.gmra.mrb[0].mxu0 %v1981
      %v2150 = vpop.f32.mrb[0].mxu0
      %v2151 = vadd.f32 0.0, %v2150
      %v2152 = vpop.f32.mrb[0].mxu0
      %2153 = vmatprep.mubr.f32.mxu0 0.0
      %2154 = vmatmul.mubr.f32.gmra.mrb[0].mxu0 %v1983
      %v2155 = vpop.f32.mrb[0].mxu0
      %v2156 = vadd.f32 0.0, %v2155
      %v2157 = vpop.f32.mrb[0].mxu0
      %2158 = vmatprep.mubr.f32.mxu0 0.0
      %2159 = vmatmul.mubr.f32.gmra.mrb[0].mxu0 %v1985
      %v2160 = vpop.f32.mrb[0].mxu0
      %v2161 = vadd.f32 0.0, %v2160
      %v2162 = vpop.f32.mrb[0].mxu0
      %2163 = vmatprep.mubr.f32.mxu0 0.0
      %2164 = vmatmul.mubr.f32.gmra.mrb[0].mxu0 %v1987
      %v2165 = vpop.f32.mrb[0].mxu0
      %v2166 = vadd.f32 0.0, %v2165
      %v2167 = vpop.f32.mrb[0].mxu0
      %2168 = vmatprep.mubr.f32.mxu0 0.0
      %2169 = vmatmul.mubr.f32.gmra.mrb[0].mxu0 %v1989
      %v2170 = vpop.f32.mrb[0].mxu0
      %v2171 = vadd.f32 0.0, %v2170
      %v2172 = vpop.f32.mrb[0].mxu0
      %2173 = vmatprep.mubr.f32.mxu0 0.0
      %2174 = vmatmul.mubr.f32.gmra.mrb[0].mxu0 %v1991
      %v2175 = vpop.f32.mrb[0].mxu0
      %v2176 = vadd.f32 0.0, %v2175
      %v2177 = vpop.f32.mrb[0].mxu0
      %2178 = vmatprep.mubr.f32.mxu0 0.0
      %2179 = vmatmul.mubr.f32.gmra.mrb[0].mxu0 %v1993
      %v2180 = vpop.f32.mrb[0].mxu0
      %v2181 = vadd.f32 0.0, %v2180
      %v2182 = vpop.f32.mrb[0].mxu0
      %2183 = vmatprep.mubr.f32.mxu0 0.0
      %2184 = vmatmul.mubr.f32.gmra.mrb[0].mxu0 %v1995
      %v2185 = vpop.f32.mrb[0].mxu0
      %v2186 = vadd.f32 0.0, %v2185
      %v2187 = vpop.f32.mrb[0].mxu0
      %2188 = vmatprep.mubr.f32.mxu0 0.0
      %2189 = vmatmul.mubr.f32.gmra.mrb[0].mxu0 %v1997
      %v2190 = vpop.f32.mrb[0].mxu0
      %v2191 = vadd.f32 0.0, %v2190
      %v2192 = vpop.f32.mrb[0].mxu0
      %2193 = vdwg.mxu0
      %v2194 = vadd.f32 %v1859, %v2066
      %v2195 = vadd.f32 %v1860, %v2071
      %v2196 = vadd.f32 %v1861, %v2076
      %v2197 = vadd.f32 %v1862, %v2081
      %v2198 = vadd.f32 %v1863, %v2086
      %v2199 = vadd.f32 %v1864, %v2091
      %v2200 = vadd.f32 %v1865, %v2096
      %v2201 = vadd.f32 %v1866, %v2101
      %v2202 = vadd.f32 %v1867, %v2106
      %v2203 = vadd.f32 %v1868, %v2111
      %v2204 = vadd.f32 %v1869, %v2116
      %v2205 = vadd.f32 %v1870, %v2121
      %v2206 = vadd.f32 %v1871, %v2126
      %v2207 = vadd.f32 %v1872, %v2131
      %v2208 = vadd.f32 %v1873, %v2136
      %v2209 = vadd.f32 %v1874, %v2141
      %v2210 = vadd.f32 %v1875, %v2146
      %v2211 = vadd.f32 %v1876, %v2151
      %v2212 = vadd.f32 %v1877, %v2156
      %v2213 = vadd.f32 %v1878, %v2161
      %v2214 = vadd.f32 %v1879, %v2166
      %v2215 = vadd.f32 %v1880, %v2171
      %v2216 = vadd.f32 %v1881, %v2176
      %v2217 = vadd.f32 %v1882, %v2181
      %v2218 = vadd.f32 %v1883, %v2186
      %v2219 = vadd.f32 %v1884, %v2191
      %s2220 = scalar_lea.vmem %s6, 192
      %v2221 = vld [vmem:[%s2220] sm:$0xff]
      %v2222 = vld [vmem:[%s2220 + $0x8] sm:$0xff]
      %v2223 = vld [vmem:[%s2220 + $0x10] sm:$0xff]
      %v2224 = vld [vmem:[%s2220 + $0x18] sm:$0xff]
      %v2225 = vld [vmem:[%s2220 + $0x20] sm:$0xff]
      %v2226 = vld [vmem:[%s2220 + $0x28] sm:$0xff]
      %v2227 = vld [vmem:[%s2220 + $0x30] sm:$0xff]
      %v2228 = vld [vmem:[%s2220 + $0x38] sm:$0xff]
      %v2229 = vrot.slane %v957, 7
      %v2230 = vsel %vm1894, %v1945, %v2229
      %v2231 = vsel %vm1054, %v2230, 0
      %2233 = vmatprep.subr.mxu0 0.0
      %2234 = vmatpush1.msra.mxu0 %v2221
      %2235 = vmatprep.subr.mxu0 0.0
      %2236 = vmatpush1.msra.mxu0 %v2222
      %2237 = vmatprep.subr.mxu0 0.0
      %2238 = vmatpush1.msra.mxu0 %v2223
      %2239 = vmatprep.subr.mxu0 0.0
      %2240 = vmatpush1.msra.mxu0 %v2224
      %2241 = vmatprep.subr.mxu0 0.0
      %2242 = vmatpush1.msra.mxu0 %v2225
      %2243 = vmatprep.subr.mxu0 0.0
      %2244 = vmatpush1.msra.mxu0 %v2226
      %2245 = vmatprep.subr.mxu0 0.0
      %2246 = vmatpush1.msra.mxu0 %v2227
      %2247 = vmatprep.subr.mxu0 0.0
      %2248 = vmatpush1.msra.mxu0 %v2228
      %2249 = vmatprep.subr.mxu0 0.0
      %2250 = vmatpush1.msra.mxu0 0.0
      %2251 = vmatprep.subr.mxu0 0.0
      %2252 = vmatpush1.msra.mxu0 0.0
      %2253 = vmatprep.subr.mxu0 0.0
      %2254 = vmatpush1.msra.mxu0 0.0
      %2255 = vmatprep.subr.mxu0 0.0
      %2256 = vmatpush1.msra.mxu0 0.0
      %2257 = vmatprep.subr.mxu0 0.0
      %2258 = vmatpush1.msra.mxu0 0.0
      %2259 = vmatprep.subr.mxu0 0.0
      %2260 = vmatpush1.msra.mxu0 0.0
      %2261 = vmatprep.subr.mxu0 0.0
      %2262 = vmatpush1.msra.mxu0 0.0
      %2263 = vmatprep.subr.mxu0 0.0
      %2264 = vmatpush1.msra.mxu0 0.0
      %2265 = vmatprep.subr.mxu0 0.0
      %2266 = vmatpush1.msra.mxu0 0.0
      %2267 = vmatprep.subr.mxu0 0.0
      %2268 = vmatpush1.msra.mxu0 0.0
      %2269 = vmatprep.subr.mxu0 0.0
      %2270 = vmatpush1.msra.mxu0 0.0
      %2271 = vmatprep.subr.mxu0 0.0
      %2272 = vmatpush1.msra.mxu0 0.0
      %2273 = vmatprep.subr.mxu0 0.0
      %2274 = vmatpush1.msra.mxu0 0.0
      %2275 = vmatprep.subr.mxu0 0.0
      %2276 = vmatpush1.msra.mxu0 0.0
      %2277 = vmatprep.subr.mxu0 0.0
      %2278 = vmatpush1.msra.mxu0 0.0
      %2279 = vmatprep.subr.mxu0 0.0
      %2280 = vmatpush1.msra.mxu0 0.0
      %2281 = vmatprep.subr.mxu0 0.0
      %2282 = vmatpush1.msra.mxu0 0.0
      %2283 = vmatprep.subr.mxu0 0.0
      %2284 = vmatpush1.msra.mxu0 0.0
      %2285 = vmatprep.subr.mxu0 0.0
      %2286 = vmatpush1.msra.mxu0 0.0
      %2287 = vmatprep.subr.mxu0 0.0
      %2288 = vmatpush1.msra.mxu0 0.0
      %2289 = vmatprep.subr.mxu0 0.0
      %2290 = vmatpush1.msra.mxu0 0.0
      %2291 = vmatprep.subr.mxu0 0.0
      %2292 = vmatpush1.msra.mxu0 0.0
      %2293 = vmatprep.subr.mxu0 0.0
      %2294 = vmatpush1.msra.mxu0 0.0
      %2295 = vmatprep.subr.mxu0 0.0
      %2296 = vmatpush1.msra.mxu0 0.0
      %2297 = vmatprep.mubr.f32.mxu0 0.0
      %2298 = vmatmul.mubr.f32.gmra.mrb[0].mxu0 %v1949
      %v2299 = vpop.f32.mrb[0].mxu0
      %v2300 = vadd.f32 0.0, %v2299
      %v2301 = vpop.f32.mrb[0].mxu0
      %2302 = vmatprep.mubr.f32.mxu0 0.0
      %2303 = vmatmul.mubr.f32.gmra.mrb[0].mxu0 %v1951
      %v2304 = vpop.f32.mrb[0].mxu0
      %v2305 = vadd.f32 0.0, %v2304
      %v2306 = vpop.f32.mrb[0].mxu0
      %2307 = vmatprep.mubr.f32.mxu0 0.0
      %2308 = vmatmul.mubr.f32.gmra.mrb[0].mxu0 %v1953
      %v2309 = vpop.f32.mrb[0].mxu0
      %v2310 = vadd.f32 0.0, %v2309
      %v2311 = vpop.f32.mrb[0].mxu0
      %2312 = vmatprep.mubr.f32.mxu0 0.0
      %2313 = vmatmul.mubr.f32.gmra.mrb[0].mxu0 %v1955
      %v2314 = vpop.f32.mrb[0].mxu0
      %v2315 = vadd.f32 0.0, %v2314
      %v2316 = vpop.f32.mrb[0].mxu0
      %2317 = vmatprep.mubr.f32.mxu0 0.0
      %2318 = vmatmul.mubr.f32.gmra.mrb[0].mxu0 %v1957
      %v2319 = vpop.f32.mrb[0].mxu0
      %v2320 = vadd.f32 0.0, %v2319
      %v2321 = vpop.f32.mrb[0].mxu0
      %2322 = vmatprep.mubr.f32.mxu0 0.0
      %2323 = vmatmul.mubr.f32.gmra.mrb[0].mxu0 %v1959
      %v2324 = vpop.f32.mrb[0].mxu0
      %v2325 = vadd.f32 0.0, %v2324
      %v2326 = vpop.f32.mrb[0].mxu0
      %2327 = vmatprep.mubr.f32.mxu0 0.0
      %2328 = vmatmul.mubr.f32.gmra.mrb[0].mxu0 %v1961
      %v2329 = vpop.f32.mrb[0].mxu0
      %v2330 = vadd.f32 0.0, %v2329
      %v2331 = vpop.f32.mrb[0].mxu0
      %2332 = vmatprep.mubr.f32.mxu0 0.0
      %2333 = vmatmul.mubr.f32.gmra.mrb[0].mxu0 %v1963
      %v2334 = vpop.f32.mrb[0].mxu0
      %v2335 = vadd.f32 0.0, %v2334
      %v2336 = vpop.f32.mrb[0].mxu0
      %2337 = vmatprep.mubr.f32.mxu0 0.0
      %2338 = vmatmul.mubr.f32.gmra.mrb[0].mxu0 %v1965
      %v2339 = vpop.f32.mrb[0].mxu0
      %v2340 = vadd.f32 0.0, %v2339
      %v2341 = vpop.f32.mrb[0].mxu0
      %2342 = vmatprep.mubr.f32.mxu0 0.0
      %2343 = vmatmul.mubr.f32.gmra.mrb[0].mxu0 %v1967
      %v2344 = vpop.f32.mrb[0].mxu0
      %v2345 = vadd.f32 0.0, %v2344
      %v2346 = vpop.f32.mrb[0].mxu0
      %2347 = vmatprep.mubr.f32.mxu0 0.0
      %2348 = vmatmul.mubr.f32.gmra.mrb[0].mxu0 %v1969
      %v2349 = vpop.f32.mrb[0].mxu0
      %v2350 = vadd.f32 0.0, %v2349
      %v2351 = vpop.f32.mrb[0].mxu0
      %2352 = vmatprep.mubr.f32.mxu0 0.0
      %2353 = vmatmul.mubr.f32.gmra.mrb[0].mxu0 %v1971
      %v2354 = vpop.f32.mrb[0].mxu0
      %v2355 = vadd.f32 0.0, %v2354
      %v2356 = vpop.f32.mrb[0].mxu0
      %2357 = vmatprep.mubr.f32.mxu0 0.0
      %2358 = vmatmul.mubr.f32.gmra.mrb[0].mxu0 %v1973
      %v2359 = vpop.f32.mrb[0].mxu0
      %v2360 = vadd.f32 0.0, %v2359
      %v2361 = vpop.f32.mrb[0].mxu0
      %2362 = vmatprep.mubr.f32.mxu0 0.0
      %2363 = vmatmul.mubr.f32.gmra.mrb[0].mxu0 %v1975
      %v2364 = vpop.f32.mrb[0].mxu0
      %v2365 = vadd.f32 0.0, %v2364
      %v2366 = vpop.f32.mrb[0].mxu0
      %2367 = vmatprep.mubr.f32.mxu0 0.0
      %2368 = vmatmul.mubr.f32.gmra.mrb[0].mxu0 %v1977
      %v2369 = vpop.f32.mrb[0].mxu0
      %v2370 = vadd.f32 0.0, %v2369
      %v2371 = vpop.f32.mrb[0].mxu0
      %2372 = vmatprep.mubr.f32.mxu0 0.0
      %2373 = vmatmul.mubr.f32.gmra.mrb[0].mxu0 %v1979
      %v2374 = vpop.f32.mrb[0].mxu0
      %v2375 = vadd.f32 0.0, %v2374
      %v2376 = vpop.f32.mrb[0].mxu0
      %2377 = vmatprep.mubr.f32.mxu0 0.0
      %2378 = vmatmul.mubr.f32.gmra.mrb[0].mxu0 %v1981
      %v2379 = vpop.f32.mrb[0].mxu0
      %v2380 = vadd.f32 0.0, %v2379
      %v2381 = vpop.f32.mrb[0].mxu0
      %2382 = vmatprep.mubr.f32.mxu0 0.0
      %2383 = vmatmul.mubr.f32.gmra.mrb[0].mxu0 %v1983
      %v2384 = vpop.f32.mrb[0].mxu0
      %v2385 = vadd.f32 0.0, %v2384
      %v2386 = vpop.f32.mrb[0].mxu0
      %2387 = vmatprep.mubr.f32.mxu0 0.0
      %2388 = vmatmul.mubr.f32.gmra.mrb[0].mxu0 %v1985
      %v2389 = vpop.f32.mrb[0].mxu0
      %v2390 = vadd.f32 0.0, %v2389
      %v2391 = vpop.f32.mrb[0].mxu0
      %2392 = vmatprep.mubr.f32.mxu0 0.0
      %2393 = vmatmul.mubr.f32.gmra.mrb[0].mxu0 %v1987
      %v2394 = vpop.f32.mrb[0].mxu0
      %v2395 = vadd.f32 0.0, %v2394
      %v2396 = vpop.f32.mrb[0].mxu0
      %2397 = vmatprep.mubr.f32.mxu0 0.0
      %2398 = vmatmul.mubr.f32.gmra.mrb[0].mxu0 %v1989
      %v2399 = vpop.f32.mrb[0].mxu0
      %v2400 = vadd.f32 0.0, %v2399
      %v2401 = vpop.f32.mrb[0].mxu0
      %2402 = vmatprep.mubr.f32.mxu0 0.0
      %2403 = vmatmul.mubr.f32.gmra.mrb[0].mxu0 %v1991
      %v2404 = vpop.f32.mrb[0].mxu0
      %v2405 = vadd.f32 0.0, %v2404
      %v2406 = vpop.f32.mrb[0].mxu0
      %2407 = vmatprep.mubr.f32.mxu0 0.0
      %2408 = vmatmul.mubr.f32.gmra.mrb[0].mxu0 %v1993
      %v2409 = vpop.f32.mrb[0].mxu0
      %v2410 = vadd.f32 0.0, %v2409
      %v2411 = vpop.f32.mrb[0].mxu0
      %2412 = vmatprep.mubr.f32.mxu0 0.0
      %2413 = vmatmul.mubr.f32.gmra.mrb[0].mxu0 %v1995
      %v2414 = vpop.f32.mrb[0].mxu0
      %v2415 = vadd.f32 0.0, %v2414
      %v2416 = vpop.f32.mrb[0].mxu0
      %2417 = vmatprep.mubr.f32.mxu0 0.0
      %2418 = vmatmul.mubr.f32.gmra.mrb[0].mxu0 %v1997
      %v2419 = vpop.f32.mrb[0].mxu0
      %v2420 = vadd.f32 0.0, %v2419
      %v2421 = vpop.f32.mrb[0].mxu0
      %2422 = vmatprep.mubr.f32.mxu0 0.0
      %2423 = vmatmul.mubr.f32.gmra.mrb[0].mxu0 %v2231
      %v2424 = vpop.f32.mrb[0].mxu0
      %v2425 = vadd.f32 0.0, %v2424
      %v2426 = vpop.f32.mrb[0].mxu0
      %2427 = vdwg.mxu0
      %v2428 = vadd.f32 %v2194, %v2300
      %v2429 = vadd.f32 %v2195, %v2305
      %v2430 = vadd.f32 %v2196, %v2310
      %v2431 = vadd.f32 %v2197, %v2315
      %v2432 = vadd.f32 %v2198, %v2320
      %v2433 = vadd.f32 %v2199, %v2325
      %v2434 = vadd.f32 %v2200, %v2330
      %v2435 = vadd.f32 %v2201, %v2335
      %v2436 = vadd.f32 %v2202, %v2340
      %v2437 = vadd.f32 %v2203, %v2345
      %v2438 = vadd.f32 %v2204, %v2350
      %v2439 = vadd.f32 %v2205, %v2355
      %v2440 = vadd.f32 %v2206, %v2360
      %v2441 = vadd.f32 %v2207, %v2365
      %v2442 = vadd.f32 %v2208, %v2370
      %v2443 = vadd.f32 %v2209, %v2375
      %v2444 = vadd.f32 %v2210, %v2380
      %v2445 = vadd.f32 %v2211, %v2385
      %v2446 = vadd.f32 %v2212, %v2390
      %v2447 = vadd.f32 %v2213, %v2395
      %v2448 = vadd.f32 %v2214, %v2400
      %v2449 = vadd.f32 %v2215, %v2405
      %v2450 = vadd.f32 %v2216, %v2410
      %v2451 = vadd.f32 %v2217, %v2415
      %v2452 = vadd.f32 %v2218, %v2420
      %v2453 = vadd.f32 %v2219, %v2425
      %s2454 = scalar_lea.vmem %s6, 320
      %v2455 = vld [vmem:[%s2454] sm:$0xff]
      %v2456 = vld [vmem:[%s2454 + $0x8] sm:$0xff]
      %v2457 = vld [vmem:[%s2454 + $0x10] sm:$0xff]
      %v2458 = vld [vmem:[%s2454 + $0x18] sm:$0xff]
      %v2459 = vld [vmem:[%s2454 + $0x20] sm:$0xff]
      %v2460 = vld [vmem:[%s2454 + $0x28] sm:$0xff]
      %v2461 = vld [vmem:[%s2454 + $0x30] sm:$0xff]
      %v2462 = vld [vmem:[%s2454 + $0x38] sm:$0xff]
      %vm2463 = vcmask 1046528
      %v2464 = vrot.slane %v932, 1
      %v2465 = vrot.slane %v933, 1
      %v2466 = vsel %vm2463, %v2464, %v2465
      %v2467 = vrot.slane %v934, 1
      %v2468 = vsel %vm2463, %v2465, %v2467
      %v2469 = vrot.slane %v935, 1
      %v2470 = vsel %vm2463, %v2467, %v2469
      %v2471 = vrot.slane %v936, 1
      %v2472 = vsel %vm2463, %v2469, %v2471
      %v2473 = vrot.slane %v937, 1
      %v2474 = vsel %vm2463, %v2471, %v2473
      %v2475 = vrot.slane %v938, 1
      %v2476 = vsel %vm2463, %v2473, %v2475
      %v2477 = vrot.slane %v939, 1
      %v2478 = vsel %vm2463, %v2475, %v2477
      %v2479 = vrot.slane %v940, 1
      %v2480 = vsel %vm2463, %v2477, %v2479
      %v2481 = vrot.slane %v941, 1
      %v2482 = vsel %vm2463, %v2479, %v2481
      %v2483 = vrot.slane %v942, 1
      %v2484 = vsel %vm2463, %v2481, %v2483
      %v2485 = vrot.slane %v943, 1
      %v2486 = vsel %vm2463, %v2483, %v2485
      %v2487 = vrot.slane %v944, 1
      %v2488 = vsel %vm2463, %v2485, %v2487
      %v2489 = vrot.slane %v945, 1
      %v2490 = vsel %vm2463, %v2487, %v2489
      %v2491 = vrot.slane %v946, 1
      %v2492 = vsel %vm2463, %v2489, %v2491
      %v2493 = vrot.slane %v947, 1
      %v2494 = vsel %vm2463, %v2491, %v2493
      %v2495 = vrot.slane %v948, 1
      %v2496 = vsel %vm2463, %v2493, %v2495
      %v2497 = vrot.slane %v949, 1
      %v2498 = vsel %vm2463, %v2495, %v2497
      %v2499 = vrot.slane %v950, 1
      %v2500 = vsel %vm2463, %v2497, %v2499
      %v2501 = vrot.slane %v951, 1
      %v2502 = vsel %vm2463, %v2499, %v2501
      %v2503 = vrot.slane %v952, 1
      %v2504 = vsel %vm2463, %v2501, %v2503
      %v2505 = vrot.slane %v953, 1
      %v2506 = vsel %vm2463, %v2503, %v2505
      %v2507 = vrot.slane %v954, 1
      %v2508 = vsel %vm2463, %v2505, %v2507
      %v2509 = vrot.slane %v955, 1
      %v2510 = vsel %vm2463, %v2507, %v2509
      %v2511 = vrot.slane %v956, 1
      %v2512 = vsel %vm2463, %v2509, %v2511
      %v2513 = vrot.slane %v957, 1
      %v2514 = vsel %vm2463, %v2511, %v2513
      %v2515 = vrot.slane 0.0, 1
      %v2516 = vsel %vm2463, %v2513, %v2515
      %v2517 = vsel %vm1054, %v2466, 0
      %v2519 = vsel %vm1054, %v2468, 0
      %v2521 = vsel %vm1054, %v2470, 0
      %v2523 = vsel %vm1054, %v2472, 0
      %v2525 = vsel %vm1054, %v2474, 0
      %v2527 = vsel %vm1054, %v2476, 0
      %v2529 = vsel %vm1054, %v2478, 0
      %v2531 = vsel %vm1054, %v2480, 0
      %v2533 = vsel %vm1054, %v2482, 0
      %v2535 = vsel %vm1054, %v2484, 0
      %v2537 = vsel %vm1054, %v2486, 0
      %v2539 = vsel %vm1054, %v2488, 0
      %v2541 = vsel %vm1054, %v2490, 0
      %v2543 = vsel %vm1054, %v2492, 0
      %v2545 = vsel %vm1054, %v2494, 0
      %v2547 = vsel %vm1054, %v2496, 0
      %v2549 = vsel %vm1054, %v2498, 0
      %v2551 = vsel %vm1054, %v2500, 0
      %v2553 = vsel %vm1054, %v2502, 0
      %v2555 = vsel %vm1054, %v2504, 0
      %v2557 = vsel %vm1054, %v2506, 0
      %v2559 = vsel %vm1054, %v2508, 0
      %v2561 = vsel %vm1054, %v2510, 0
      %v2563 = vsel %vm1054, %v2512, 0
      %v2565 = vsel %vm1054, %v2514, 0
      %v2567 = vsel %vm1054, %v2516, 0
      %2569 = vmatprep.subr.mxu0 0.0
      %2570 = vmatpush1.msra.mxu0 %v2455
      %2571 = vmatprep.subr.mxu0 0.0
      %2572 = vmatpush1.msra.mxu0 %v2456
      %2573 = vmatprep.subr.mxu0 0.0
      %2574 = vmatpush1.msra.mxu0 %v2457
      %2575 = vmatprep.subr.mxu0 0.0
      %2576 = vmatpush1.msra.mxu0 %v2458
      %2577 = vmatprep.subr.mxu0 0.0
      %2578 = vmatpush1.msra.mxu0 %v2459
      %2579 = vmatprep.subr.mxu0 0.0
      %2580 = vmatpush1.msra.mxu0 %v2460
      %2581 = vmatprep.subr.mxu0 0.0
      %2582 = vmatpush1.msra.mxu0 %v2461
      %2583 = vmatprep.subr.mxu0 0.0
      %2584 = vmatpush1.msra.mxu0 %v2462
      %2585 = vmatprep.subr.mxu0 0.0
      %2586 = vmatpush1.msra.mxu0 0.0
      %2587 = vmatprep.subr.mxu0 0.0
      %2588 = vmatpush1.msra.mxu0 0.0
      %2589 = vmatprep.subr.mxu0 0.0
      %2590 = vmatpush1.msra.mxu0 0.0
      %2591 = vmatprep.subr.mxu0 0.0
      %2592 = vmatpush1.msra.mxu0 0.0
      %2593 = vmatprep.subr.mxu0 0.0
      %2594 = vmatpush1.msra.mxu0 0.0
      %2595 = vmatprep.subr.mxu0 0.0
      %2596 = vmatpush1.msra.mxu0 0.0
      %2597 = vmatprep.subr.mxu0 0.0
      %2598 = vmatpush1.msra.mxu0 0.0
      %2599 = vmatprep.subr.mxu0 0.0
      %2600 = vmatpush1.msra.mxu0 0.0
      %2601 = vmatprep.subr.mxu0 0.0
      %2602 = vmatpush1.msra.mxu0 0.0
      %2603 = vmatprep.subr.mxu0 0.0
      %2604 = vmatpush1.msra.mxu0 0.0
      %2605 = vmatprep.subr.mxu0 0.0
      %2606 = vmatpush1.msra.mxu0 0.0
      %2607 = vmatprep.subr.mxu0 0.0
      %2608 = vmatpush1.msra.mxu0 0.0
      %2609 = vmatprep.subr.mxu0 0.0
      %2610 = vmatpush1.msra.mxu0 0.0
      %2611 = vmatprep.subr.mxu0 0.0
      %2612 = vmatpush1.msra.mxu0 0.0
      %2613 = vmatprep.subr.mxu0 0.0
      %2614 = vmatpush1.msra.mxu0 0.0
      %2615 = vmatprep.subr.mxu0 0.0
      %2616 = vmatpush1.msra.mxu0 0.0
      %2617 = vmatprep.subr.mxu0 0.0
      %2618 = vmatpush1.msra.mxu0 0.0
      %2619 = vmatprep.subr.mxu0 0.0
      %2620 = vmatpush1.msra.mxu0 0.0
      %2621 = vmatprep.subr.mxu0 0.0
      %2622 = vmatpush1.msra.mxu0 0.0
      %2623 = vmatprep.subr.mxu0 0.0
      %2624 = vmatpush1.msra.mxu0 0.0
      %2625 = vmatprep.subr.mxu0 0.0
      %2626 = vmatpush1.msra.mxu0 0.0
      %2627 = vmatprep.subr.mxu0 0.0
      %2628 = vmatpush1.msra.mxu0 0.0
      %2629 = vmatprep.subr.mxu0 0.0
      %2630 = vmatpush1.msra.mxu0 0.0
      %2631 = vmatprep.subr.mxu0 0.0
      %2632 = vmatpush1.msra.mxu0 0.0
      %2633 = vmatprep.mubr.f32.mxu0 0.0
      %2634 = vmatmul.mubr.f32.gmra.mrb[0].mxu0 %v2517
      %v2635 = vpop.f32.mrb[0].mxu0
      %v2636 = vadd.f32 0.0, %v2635
      %v2637 = vpop.f32.mrb[0].mxu0
      %2638 = vmatprep.mubr.f32.mxu0 0.0
      %2639 = vmatmul.mubr.f32.gmra.mrb[0].mxu0 %v2519
      %v2640 = vpop.f32.mrb[0].mxu0
      %v2641 = vadd.f32 0.0, %v2640
      %v2642 = vpop.f32.mrb[0].mxu0
      %2643 = vmatprep.mubr.f32.mxu0 0.0
      %2644 = vmatmul.mubr.f32.gmra.mrb[0].mxu0 %v2521
      %v2645 = vpop.f32.mrb[0].mxu0
      %v2646 = vadd.f32 0.0, %v2645
      %v2647 = vpop.f32.mrb[0].mxu0
      %2648 = vmatprep.mubr.f32.mxu0 0.0
      %2649 = vmatmul.mubr.f32.gmra.mrb[0].mxu0 %v2523
      %v2650 = vpop.f32.mrb[0].mxu0
      %v2651 = vadd.f32 0.0, %v2650
      %v2652 = vpop.f32.mrb[0].mxu0
      %2653 = vmatprep.mubr.f32.mxu0 0.0
      %2654 = vmatmul.mubr.f32.gmra.mrb[0].mxu0 %v2525
      %v2655 = vpop.f32.mrb[0].mxu0
      %v2656 = vadd.f32 0.0, %v2655
      %v2657 = vpop.f32.mrb[0].mxu0
      %2658 = vmatprep.mubr.f32.mxu0 0.0
      %2659 = vmatmul.mubr.f32.gmra.mrb[0].mxu0 %v2527
      %v2660 = vpop.f32.mrb[0].mxu0
      %v2661 = vadd.f32 0.0, %v2660
      %v2662 = vpop.f32.mrb[0].mxu0
      %2663 = vmatprep.mubr.f32.mxu0 0.0
      %2664 = vmatmul.mubr.f32.gmra.mrb[0].mxu0 %v2529
      %v2665 = vpop.f32.mrb[0].mxu0
      %v2666 = vadd.f32 0.0, %v2665
      %v2667 = vpop.f32.mrb[0].mxu0
      %2668 = vmatprep.mubr.f32.mxu0 0.0
      %2669 = vmatmul.mubr.f32.gmra.mrb[0].mxu0 %v2531
      %v2670 = vpop.f32.mrb[0].mxu0
      %v2671 = vadd.f32 0.0, %v2670
      %v2672 = vpop.f32.mrb[0].mxu0
      %2673 = vmatprep.mubr.f32.mxu0 0.0
      %2674 = vmatmul.mubr.f32.gmra.mrb[0].mxu0 %v2533
      %v2675 = vpop.f32.mrb[0].mxu0
      %v2676 = vadd.f32 0.0, %v2675
      %v2677 = vpop.f32.mrb[0].mxu0
      %2678 = vmatprep.mubr.f32.mxu0 0.0
      %2679 = vmatmul.mubr.f32.gmra.mrb[0].mxu0 %v2535
      %v2680 = vpop.f32.mrb[0].mxu0
      %v2681 = vadd.f32 0.0, %v2680
      %v2682 = vpop.f32.mrb[0].mxu0
      %2683 = vmatprep.mubr.f32.mxu0 0.0
      %2684 = vmatmul.mubr.f32.gmra.mrb[0].mxu0 %v2537
      %v2685 = vpop.f32.mrb[0].mxu0
      %v2686 = vadd.f32 0.0, %v2685
      %v2687 = vpop.f32.mrb[0].mxu0
      %2688 = vmatprep.mubr.f32.mxu0 0.0
      %2689 = vmatmul.mubr.f32.gmra.mrb[0].mxu0 %v2539
      %v2690 = vpop.f32.mrb[0].mxu0
      %v2691 = vadd.f32 0.0, %v2690
      %v2692 = vpop.f32.mrb[0].mxu0
      %2693 = vmatprep.mubr.f32.mxu0 0.0
      %2694 = vmatmul.mubr.f32.gmra.mrb[0].mxu0 %v2541
      %v2695 = vpop.f32.mrb[0].mxu0
      %v2696 = vadd.f32 0.0, %v2695
      %v2697 = vpop.f32.mrb[0].mxu0
      %2698 = vmatprep.mubr.f32.mxu0 0.0
      %2699 = vmatmul.mubr.f32.gmra.mrb[0].mxu0 %v2543
      %v2700 = vpop.f32.mrb[0].mxu0
      %v2701 = vadd.f32 0.0, %v2700
      %v2702 = vpop.f32.mrb[0].mxu0
      %2703 = vmatprep.mubr.f32.mxu0 0.0
      %2704 = vmatmul.mubr.f32.gmra.mrb[0].mxu0 %v2545
      %v2705 = vpop.f32.mrb[0].mxu0
      %v2706 = vadd.f32 0.0, %v2705
      %v2707 = vpop.f32.mrb[0].mxu0
      %2708 = vmatprep.mubr.f32.mxu0 0.0
      %2709 = vmatmul.mubr.f32.gmra.mrb[0].mxu0 %v2547
      %v2710 = vpop.f32.mrb[0].mxu0
      %v2711 = vadd.f32 0.0, %v2710
      %v2712 = vpop.f32.mrb[0].mxu0
      %2713 = vmatprep.mubr.f32.mxu0 0.0
      %2714 = vmatmul.mubr.f32.gmra.mrb[0].mxu0 %v2549
      %v2715 = vpop.f32.mrb[0].mxu0
      %v2716 = vadd.f32 0.0, %v2715
      %v2717 = vpop.f32.mrb[0].mxu0
      %2718 = vmatprep.mubr.f32.mxu0 0.0
      %2719 = vmatmul.mubr.f32.gmra.mrb[0].mxu0 %v2551
      %v2720 = vpop.f32.mrb[0].mxu0
      %v2721 = vadd.f32 0.0, %v2720
      %v2722 = vpop.f32.mrb[0].mxu0
      %2723 = vmatprep.mubr.f32.mxu0 0.0
      %2724 = vmatmul.mubr.f32.gmra.mrb[0].mxu0 %v2553
      %v2725 = vpop.f32.mrb[0].mxu0
      %v2726 = vadd.f32 0.0, %v2725
      %v2727 = vpop.f32.mrb[0].mxu0
      %2728 = vmatprep.mubr.f32.mxu0 0.0
      %2729 = vmatmul.mubr.f32.gmra.mrb[0].mxu0 %v2555
      %v2730 = vpop.f32.mrb[0].mxu0
      %v2731 = vadd.f32 0.0, %v2730
      %v2732 = vpop.f32.mrb[0].mxu0
      %2733 = vmatprep.mubr.f32.mxu0 0.0
      %2734 = vmatmul.mubr.f32.gmra.mrb[0].mxu0 %v2557
      %v2735 = vpop.f32.mrb[0].mxu0
      %v2736 = vadd.f32 0.0, %v2735
      %v2737 = vpop.f32.mrb[0].mxu0
      %2738 = vmatprep.mubr.f32.mxu0 0.0
      %2739 = vmatmul.mubr.f32.gmra.mrb[0].mxu0 %v2559
      %v2740 = vpop.f32.mrb[0].mxu0
      %v2741 = vadd.f32 0.0, %v2740
      %v2742 = vpop.f32.mrb[0].mxu0
      %2743 = vmatprep.mubr.f32.mxu0 0.0
      %2744 = vmatmul.mubr.f32.gmra.mrb[0].mxu0 %v2561
      %v2745 = vpop.f32.mrb[0].mxu0
      %v2746 = vadd.f32 0.0, %v2745
      %v2747 = vpop.f32.mrb[0].mxu0
      %2748 = vmatprep.mubr.f32.mxu0 0.0
      %2749 = vmatmul.mubr.f32.gmra.mrb[0].mxu0 %v2563
      %v2750 = vpop.f32.mrb[0].mxu0
      %v2751 = vadd.f32 0.0, %v2750
      %v2752 = vpop.f32.mrb[0].mxu0
      %2753 = vmatprep.mubr.f32.mxu0 0.0
      %2754 = vmatmul.mubr.f32.gmra.mrb[0].mxu0 %v2565
      %v2755 = vpop.f32.mrb[0].mxu0
      %v2756 = vadd.f32 0.0, %v2755
      %v2757 = vpop.f32.mrb[0].mxu0
      %2758 = vmatprep.mubr.f32.mxu0 0.0
      %2759 = vmatmul.mubr.f32.gmra.mrb[0].mxu0 %v2567
      %v2760 = vpop.f32.mrb[0].mxu0
      %v2761 = vadd.f32 0.0, %v2760
      %v2762 = vpop.f32.mrb[0].mxu0
      %2763 = vdwg.mxu0
      %v2764 = vadd.f32 %v2428, %v2636
      %v2765 = vadd.f32 %v2429, %v2641
      %v2766 = vadd.f32 %v2430, %v2646
      %v2767 = vadd.f32 %v2431, %v2651
      %v2768 = vadd.f32 %v2432, %v2656
      %v2769 = vadd.f32 %v2433, %v2661
      %v2770 = vadd.f32 %v2434, %v2666
      %v2771 = vadd.f32 %v2435, %v2671
      %v2772 = vadd.f32 %v2436, %v2676
      %v2773 = vadd.f32 %v2437, %v2681
      %v2774 = vadd.f32 %v2438, %v2686
      %v2775 = vadd.f32 %v2439, %v2691
      %v2776 = vadd.f32 %v2440, %v2696
      %v2777 = vadd.f32 %v2441, %v2701
      %v2778 = vadd.f32 %v2442, %v2706
      %v2779 = vadd.f32 %v2443, %v2711
      %v2780 = vadd.f32 %v2444, %v2716
      %v2781 = vadd.f32 %v2445, %v2721
      %v2782 = vadd.f32 %v2446, %v2726
      %v2783 = vadd.f32 %v2447, %v2731
      %v2784 = vadd.f32 %v2448, %v2736
      %v2785 = vadd.f32 %v2449, %v2741
      %v2786 = vadd.f32 %v2450, %v2746
      %v2787 = vadd.f32 %v2451, %v2751
      %v2788 = vadd.f32 %v2452, %v2756
      %v2789 = vadd.f32 %v2453, %v2761
      %s2790 = scalar_lea.vmem %s6, 384
      %v2791 = vld [vmem:[%s2790] sm:$0xff]
      %v2792 = vld [vmem:[%s2790 + $0x8] sm:$0xff]
      %v2793 = vld [vmem:[%s2790 + $0x10] sm:$0xff]
      %v2794 = vld [vmem:[%s2790 + $0x18] sm:$0xff]
      %v2795 = vld [vmem:[%s2790 + $0x20] sm:$0xff]
      %v2796 = vld [vmem:[%s2790 + $0x28] sm:$0xff]
      %v2797 = vld [vmem:[%s2790 + $0x30] sm:$0xff]
      %v2798 = vld [vmem:[%s2790 + $0x38] sm:$0xff]
      %v2799 = vsel %vm2463, %v2515, %v2515
      %v2800 = vsel %vm1054, %v2799, 0
      %2802 = vmatprep.subr.mxu0 0.0
      %2803 = vmatpush1.msra.mxu0 %v2791
      %2804 = vmatprep.subr.mxu0 0.0
      %2805 = vmatpush1.msra.mxu0 %v2792
      %2806 = vmatprep.subr.mxu0 0.0
      %2807 = vmatpush1.msra.mxu0 %v2793
      %2808 = vmatprep.subr.mxu0 0.0
      %2809 = vmatpush1.msra.mxu0 %v2794
      %2810 = vmatprep.subr.mxu0 0.0
      %2811 = vmatpush1.msra.mxu0 %v2795
      %2812 = vmatprep.subr.mxu0 0.0
      %2813 = vmatpush1.msra.mxu0 %v2796
      %2814 = vmatprep.subr.mxu0 0.0
      %2815 = vmatpush1.msra.mxu0 %v2797
      %2816 = vmatprep.subr.mxu0 0.0
      %2817 = vmatpush1.msra.mxu0 %v2798
      %2818 = vmatprep.subr.mxu0 0.0
      %2819 = vmatpush1.msra.mxu0 0.0
      %2820 = vmatprep.subr.mxu0 0.0
      %2821 = vmatpush1.msra.mxu0 0.0
      %2822 = vmatprep.subr.mxu0 0.0
      %2823 = vmatpush1.msra.mxu0 0.0
      %2824 = vmatprep.subr.mxu0 0.0
      %2825 = vmatpush1.msra.mxu0 0.0
      %2826 = vmatprep.subr.mxu0 0.0
      %2827 = vmatpush1.msra.mxu0 0.0
      %2828 = vmatprep.subr.mxu0 0.0
      %2829 = vmatpush1.msra.mxu0 0.0
      %2830 = vmatprep.subr.mxu0 0.0
      %2831 = vmatpush1.msra.mxu0 0.0
      %2832 = vmatprep.subr.mxu0 0.0
      %2833 = vmatpush1.msra.mxu0 0.0
      %2834 = vmatprep.subr.mxu0 0.0
      %2835 = vmatpush1.msra.mxu0 0.0
      %2836 = vmatprep.subr.mxu0 0.0
      %2837 = vmatpush1.msra.mxu0 0.0
      %2838 = vmatprep.subr.mxu0 0.0
      %2839 = vmatpush1.msra.mxu0 0.0
      %2840 = vmatprep.subr.mxu0 0.0
      %2841 = vmatpush1.msra.mxu0 0.0
      %2842 = vmatprep.subr.mxu0 0.0
      %2843 = vmatpush1.msra.mxu0 0.0
      %2844 = vmatprep.subr.mxu0 0.0
      %2845 = vmatpush1.msra.mxu0 0.0
      %2846 = vmatprep.subr.mxu0 0.0
      %2847 = vmatpush1.msra.mxu0 0.0
      %2848 = vmatprep.subr.mxu0 0.0
      %2849 = vmatpush1.msra.mxu0 0.0
      %2850 = vmatprep.subr.mxu0 0.0
      %2851 = vmatpush1.msra.mxu0 0.0
      %2852 = vmatprep.subr.mxu0 0.0
      %2853 = vmatpush1.msra.mxu0 0.0
      %2854 = vmatprep.subr.mxu0 0.0
      %2855 = vmatpush1.msra.mxu0 0.0
      %2856 = vmatprep.subr.mxu0 0.0
      %2857 = vmatpush1.msra.mxu0 0.0
      %2858 = vmatprep.subr.mxu0 0.0
      %2859 = vmatpush1.msra.mxu0 0.0
      %2860 = vmatprep.subr.mxu0 0.0
      %2861 = vmatpush1.msra.mxu0 0.0
      %2862 = vmatprep.subr.mxu0 0.0
      %2863 = vmatpush1.msra.mxu0 0.0
      %2864 = vmatprep.subr.mxu0 0.0
      %2865 = vmatpush1.msra.mxu0 0.0
      %2866 = vmatprep.mubr.f32.mxu0 0.0
      %2867 = vmatmul.mubr.f32.gmra.mrb[0].mxu0 %v2519
      %v2868 = vpop.f32.mrb[0].mxu0
      %v2869 = vadd.f32 0.0, %v2868
      %v2870 = vpop.f32.mrb[0].mxu0
      %2871 = vmatprep.mubr.f32.mxu0 0.0
      %2872 = vmatmul.mubr.f32.gmra.mrb[0].mxu0 %v2521
      %v2873 = vpop.f32.mrb[0].mxu0
      %v2874 = vadd.f32 0.0, %v2873
      %v2875 = vpop.f32.mrb[0].mxu0
      %2876 = vmatprep.mubr.f32.mxu0 0.0
      %2877 = vmatmul.mubr.f32.gmra.mrb[0].mxu0 %v2523
      %v2878 = vpop.f32.mrb[0].mxu0
      %v2879 = vadd.f32 0.0, %v2878
      %v2880 = vpop.f32.mrb[0].mxu0
      %2881 = vmatprep.mubr.f32.mxu0 0.0
      %2882 = vmatmul.mubr.f32.gmra.mrb[0].mxu0 %v2525
      %v2883 = vpop.f32.mrb[0].mxu0
      %v2884 = vadd.f32 0.0, %v2883
      %v2885 = vpop.f32.mrb[0].mxu0
      %2886 = vmatprep.mubr.f32.mxu0 0.0
      %2887 = vmatmul.mubr.f32.gmra.mrb[0].mxu0 %v2527
      %v2888 = vpop.f32.mrb[0].mxu0
      %v2889 = vadd.f32 0.0, %v2888
      %v2890 = vpop.f32.mrb[0].mxu0
      %2891 = vmatprep.mubr.f32.mxu0 0.0
      %2892 = vmatmul.mubr.f32.gmra.mrb[0].mxu0 %v2529
      %v2893 = vpop.f32.mrb[0].mxu0
      %v2894 = vadd.f32 0.0, %v2893
      %v2895 = vpop.f32.mrb[0].mxu0
      %2896 = vmatprep.mubr.f32.mxu0 0.0
      %2897 = vmatmul.mubr.f32.gmra.mrb[0].mxu0 %v2531
      %v2898 = vpop.f32.mrb[0].mxu0
      %v2899 = vadd.f32 0.0, %v2898
      %v2900 = vpop.f32.mrb[0].mxu0
      %2901 = vmatprep.mubr.f32.mxu0 0.0
      %2902 = vmatmul.mubr.f32.gmra.mrb[0].mxu0 %v2533
      %v2903 = vpop.f32.mrb[0].mxu0
      %v2904 = vadd.f32 0.0, %v2903
      %v2905 = vpop.f32.mrb[0].mxu0
      %2906 = vmatprep.mubr.f32.mxu0 0.0
      %2907 = vmatmul.mubr.f32.gmra.mrb[0].mxu0 %v2535
      %v2908 = vpop.f32.mrb[0].mxu0
      %v2909 = vadd.f32 0.0, %v2908
      %v2910 = vpop.f32.mrb[0].mxu0
      %2911 = vmatprep.mubr.f32.mxu0 0.0
      %2912 = vmatmul.mubr.f32.gmra.mrb[0].mxu0 %v2537
      %v2913 = vpop.f32.mrb[0].mxu0
      %v2914 = vadd.f32 0.0, %v2913
      %v2915 = vpop.f32.mrb[0].mxu0
      %2916 = vmatprep.mubr.f32.mxu0 0.0
      %2917 = vmatmul.mubr.f32.gmra.mrb[0].mxu0 %v2539
      %v2918 = vpop.f32.mrb[0].mxu0
      %v2919 = vadd.f32 0.0, %v2918
      %v2920 = vpop.f32.mrb[0].mxu0
      %2921 = vmatprep.mubr.f32.mxu0 0.0
      %2922 = vmatmul.mubr.f32.gmra.mrb[0].mxu0 %v2541
      %v2923 = vpop.f32.mrb[0].mxu0
      %v2924 = vadd.f32 0.0, %v2923
      %v2925 = vpop.f32.mrb[0].mxu0
      %2926 = vmatprep.mubr.f32.mxu0 0.0
      %2927 = vmatmul.mubr.f32.gmra.mrb[0].mxu0 %v2543
      %v2928 = vpop.f32.mrb[0].mxu0
      %v2929 = vadd.f32 0.0, %v2928
      %v2930 = vpop.f32.mrb[0].mxu0
      %2931 = vmatprep.mubr.f32.mxu0 0.0
      %2932 = vmatmul.mubr.f32.gmra.mrb[0].mxu0 %v2545
      %v2933 = vpop.f32.mrb[0].mxu0
      %v2934 = vadd.f32 0.0, %v2933
      %v2935 = vpop.f32.mrb[0].mxu0
      %2936 = vmatprep.mubr.f32.mxu0 0.0
      %2937 = vmatmul.mubr.f32.gmra.mrb[0].mxu0 %v2547
      %v2938 = vpop.f32.mrb[0].mxu0
      %v2939 = vadd.f32 0.0, %v2938
      %v2940 = vpop.f32.mrb[0].mxu0
      %2941 = vmatprep.mubr.f32.mxu0 0.0
      %2942 = vmatmul.mubr.f32.gmra.mrb[0].mxu0 %v2549
      %v2943 = vpop.f32.mrb[0].mxu0
      %v2944 = vadd.f32 0.0, %v2943
      %v2945 = vpop.f32.mrb[0].mxu0
      %2946 = vmatprep.mubr.f32.mxu0 0.0
      %2947 = vmatmul.mubr.f32.gmra.mrb[0].mxu0 %v2551
      %v2948 = vpop.f32.mrb[0].mxu0
      %v2949 = vadd.f32 0.0, %v2948
      %v2950 = vpop.f32.mrb[0].mxu0
      %2951 = vmatprep.mubr.f32.mxu0 0.0
      %2952 = vmatmul.mubr.f32.gmra.mrb[0].mxu0 %v2553
      %v2953 = vpop.f32.mrb[0].mxu0
      %v2954 = vadd.f32 0.0, %v2953
      %v2955 = vpop.f32.mrb[0].mxu0
      %2956 = vmatprep.mubr.f32.mxu0 0.0
      %2957 = vmatmul.mubr.f32.gmra.mrb[0].mxu0 %v2555
      %v2958 = vpop.f32.mrb[0].mxu0
      %v2959 = vadd.f32 0.0, %v2958
      %v2960 = vpop.f32.mrb[0].mxu0
      %2961 = vmatprep.mubr.f32.mxu0 0.0
      %2962 = vmatmul.mubr.f32.gmra.mrb[0].mxu0 %v2557
      %v2963 = vpop.f32.mrb[0].mxu0
      %v2964 = vadd.f32 0.0, %v2963
      %v2965 = vpop.f32.mrb[0].mxu0
      %2966 = vmatprep.mubr.f32.mxu0 0.0
      %2967 = vmatmul.mubr.f32.gmra.mrb[0].mxu0 %v2559
      %v2968 = vpop.f32.mrb[0].mxu0
      %v2969 = vadd.f32 0.0, %v2968
      %v2970 = vpop.f32.mrb[0].mxu0
      %2971 = vmatprep.mubr.f32.mxu0 0.0
      %2972 = vmatmul.mubr.f32.gmra.mrb[0].mxu0 %v2561
      %v2973 = vpop.f32.mrb[0].mxu0
      %v2974 = vadd.f32 0.0, %v2973
      %v2975 = vpop.f32.mrb[0].mxu0
      %2976 = vmatprep.mubr.f32.mxu0 0.0
      %2977 = vmatmul.mubr.f32.gmra.mrb[0].mxu0 %v2563
      %v2978 = vpop.f32.mrb[0].mxu0
      %v2979 = vadd.f32 0.0, %v2978
      %v2980 = vpop.f32.mrb[0].mxu0
      %2981 = vmatprep.mubr.f32.mxu0 0.0
      %2982 = vmatmul.mubr.f32.gmra.mrb[0].mxu0 %v2565
      %v2983 = vpop.f32.mrb[0].mxu0
      %v2984 = vadd.f32 0.0, %v2983
      %v2985 = vpop.f32.mrb[0].mxu0
      %2986 = vmatprep.mubr.f32.mxu0 0.0
      %2987 = vmatmul.mubr.f32.gmra.mrb[0].mxu0 %v2567
      %v2988 = vpop.f32.mrb[0].mxu0
      %v2989 = vadd.f32 0.0, %v2988
      %v2990 = vpop.f32.mrb[0].mxu0
      %2991 = vmatprep.mubr.f32.mxu0 0.0
      %2992 = vmatmul.mubr.f32.gmra.mrb[0].mxu0 %v2800
      %v2993 = vpop.f32.mrb[0].mxu0
      %v2994 = vadd.f32 0.0, %v2993
      %v2995 = vpop.f32.mrb[0].mxu0
      %2996 = vdwg.mxu0
      %v2997 = vadd.f32 %v2764, %v2869
      %v2998 = vadd.f32 %v2765, %v2874
      %v2999 = vadd.f32 %v2766, %v2879
      %v3000 = vadd.f32 %v2767, %v2884
      %v3001 = vadd.f32 %v2768, %v2889
      %v3002 = vadd.f32 %v2769, %v2894
      %v3003 = vadd.f32 %v2770, %v2899
      %v3004 = vadd.f32 %v2771, %v2904
      %v3005 = vadd.f32 %v2772, %v2909
      %v3006 = vadd.f32 %v2773, %v2914
      %v3007 = vadd.f32 %v2774, %v2919
      %v3008 = vadd.f32 %v2775, %v2924
      %v3009 = vadd.f32 %v2776, %v2929
      %v3010 = vadd.f32 %v2777, %v2934
      %v3011 = vadd.f32 %v2778, %v2939
      %v3012 = vadd.f32 %v2779, %v2944
      %v3013 = vadd.f32 %v2780, %v2949
      %v3014 = vadd.f32 %v2781, %v2954
      %v3015 = vadd.f32 %v2782, %v2959
      %v3016 = vadd.f32 %v2783, %v2964
      %v3017 = vadd.f32 %v2784, %v2969
      %v3018 = vadd.f32 %v2785, %v2974
      %v3019 = vadd.f32 %v2786, %v2979
      %v3020 = vadd.f32 %v2787, %v2984
      %v3021 = vadd.f32 %v2788, %v2989
      %v3022 = vadd.f32 %v2789, %v2994
      %s3023 = scalar_lea.vmem %s6, 448
      %v3024 = vld [vmem:[%s3023] sm:$0xff]
      %v3025 = vld [vmem:[%s3023 + $0x8] sm:$0xff]
      %v3026 = vld [vmem:[%s3023 + $0x10] sm:$0xff]
      %v3027 = vld [vmem:[%s3023 + $0x18] sm:$0xff]
      %v3028 = vld [vmem:[%s3023 + $0x20] sm:$0xff]
      %v3029 = vld [vmem:[%s3023 + $0x28] sm:$0xff]
      %v3030 = vld [vmem:[%s3023 + $0x30] sm:$0xff]
      %v3031 = vld [vmem:[%s3023 + $0x38] sm:$0xff]
      %vm3032 = vcmask 1045504
      %v3033 = vrot.slane %v933, 2
      %v3034 = vrot.slane %v934, 2
      %v3035 = vsel %vm3032, %v3033, %v3034
      %v3036 = vrot.slane %v935, 2
      %v3037 = vsel %vm3032, %v3034, %v3036
      %v3038 = vrot.slane %v936, 2
      %v3039 = vsel %vm3032, %v3036, %v3038
      %v3040 = vrot.slane %v937, 2
      %v3041 = vsel %vm3032, %v3038, %v3040
      %v3042 = vrot.slane %v938, 2
      %v3043 = vsel %vm3032, %v3040, %v3042
      %v3044 = vrot.slane %v939, 2
      %v3045 = vsel %vm3032, %v3042, %v3044
      %v3046 = vrot.slane %v940, 2
      %v3047 = vsel %vm3032, %v3044, %v3046
      %v3048 = vrot.slane %v941, 2
      %v3049 = vsel %vm3032, %v3046, %v3048
      %v3050 = vrot.slane %v942, 2
      %v3051 = vsel %vm3032, %v3048, %v3050
      %v3052 = vrot.slane %v943, 2
      %v3053 = vsel %vm3032, %v3050, %v3052
      %v3054 = vrot.slane %v944, 2
      %v3055 = vsel %vm3032, %v3052, %v3054
      %v3056 = vrot.slane %v945, 2
      %v3057 = vsel %vm3032, %v3054, %v3056
      %v3058 = vrot.slane %v946, 2
      %v3059 = vsel %vm3032, %v3056, %v3058
      %v3060 = vrot.slane %v947, 2
      %v3061 = vsel %vm3032, %v3058, %v3060
      %v3062 = vrot.slane %v948, 2
      %v3063 = vsel %vm3032, %v3060, %v3062
      %v3064 = vrot.slane %v949, 2
      %v3065 = vsel %vm3032, %v3062, %v3064
      %v3066 = vrot.slane %v950, 2
      %v3067 = vsel %vm3032, %v3064, %v3066
      %v3068 = vrot.slane %v951, 2
      %v3069 = vsel %vm3032, %v3066, %v3068
      %v3070 = vrot.slane %v952, 2
      %v3071 = vsel %vm3032, %v3068, %v3070
      %v3072 = vrot.slane %v953, 2
      %v3073 = vsel %vm3032, %v3070, %v3072
      %v3074 = vrot.slane %v954, 2
      %v3075 = vsel %vm3032, %v3072, %v3074
      %v3076 = vrot.slane %v955, 2
      %v3077 = vsel %vm3032, %v3074, %v3076
      %v3078 = vrot.slane %v956, 2
      %v3079 = vsel %vm3032, %v3076, %v3078
      %v3080 = vrot.slane %v957, 2
      %v3081 = vsel %vm3032, %v3078, %v3080
      %v3082 = vrot.slane 0.0, 2
      %v3083 = vsel %vm3032, %v3080, %v3082
      %v3084 = vsel %vm3032, %v3082, %v3082
      %v3085 = vsel %vm1054, %v3035, 0
      %v3087 = vsel %vm1054, %v3037, 0
      %v3089 = vsel %vm1054, %v3039, 0
      %v3091 = vsel %vm1054, %v3041, 0
      %v3093 = vsel %vm1054, %v3043, 0
      %v3095 = vsel %vm1054, %v3045, 0
      %v3097 = vsel %vm1054, %v3047, 0
      %v3099 = vsel %vm1054, %v3049, 0
      %v3101 = vsel %vm1054, %v3051, 0
      %v3103 = vsel %vm1054, %v3053, 0
      %v3105 = vsel %vm1054, %v3055, 0
      %v3107 = vsel %vm1054, %v3057, 0
      %v3109 = vsel %vm1054, %v3059, 0
      %v3111 = vsel %vm1054, %v3061, 0
      %v3113 = vsel %vm1054, %v3063, 0
      %v3115 = vsel %vm1054, %v3065, 0
      %v3117 = vsel %vm1054, %v3067, 0
      %v3119 = vsel %vm1054, %v3069, 0
      %v3121 = vsel %vm1054, %v3071, 0
      %v3123 = vsel %vm1054, %v3073, 0
      %v3125 = vsel %vm1054, %v3075, 0
      %v3127 = vsel %vm1054, %v3077, 0
      %v3129 = vsel %vm1054, %v3079, 0
      %v3131 = vsel %vm1054, %v3081, 0
      %v3133 = vsel %vm1054, %v3083, 0
      %v3135 = vsel %vm1054, %v3084, 0
      %3137 = vmatprep.subr.mxu0 0.0
      %3138 = vmatpush1.msra.mxu0 %v3024
      %3139 = vmatprep.subr.mxu0 0.0
      %3140 = vmatpush1.msra.mxu0 %v3025
      %3141 = vmatprep.subr.mxu0 0.0
      %3142 = vmatpush1.msra.mxu0 %v3026
      %3143 = vmatprep.subr.mxu0 0.0
      %3144 = vmatpush1.msra.mxu0 %v3027
      %3145 = vmatprep.subr.mxu0 0.0
      %3146 = vmatpush1.msra.mxu0 %v3028
      %3147 = vmatprep.subr.mxu0 0.0
      %3148 = vmatpush1.msra.mxu0 %v3029
      %3149 = vmatprep.subr.mxu0 0.0
      %3150 = vmatpush1.msra.mxu0 %v3030
      %3151 = vmatprep.subr.mxu0 0.0
      %3152 = vmatpush1.msra.mxu0 %v3031
      %3153 = vmatprep.subr.mxu0 0.0
      %3154 = vmatpush1.msra.mxu0 0.0
      %3155 = vmatprep.subr.mxu0 0.0
      %3156 = vmatpush1.msra.mxu0 0.0
      %3157 = vmatprep.subr.mxu0 0.0
      %3158 = vmatpush1.msra.mxu0 0.0
      %3159 = vmatprep.subr.mxu0 0.0
      %3160 = vmatpush1.msra.mxu0 0.0
      %3161 = vmatprep.subr.mxu0 0.0
      %3162 = vmatpush1.msra.mxu0 0.0
      %3163 = vmatprep.subr.mxu0 0.0
      %3164 = vmatpush1.msra.mxu0 0.0
      %3165 = vmatprep.subr.mxu0 0.0
      %3166 = vmatpush1.msra.mxu0 0.0
      %3167 = vmatprep.subr.mxu0 0.0
      %3168 = vmatpush1.msra.mxu0 0.0
      %3169 = vmatprep.subr.mxu0 0.0
      %3170 = vmatpush1.msra.mxu0 0.0
      %3171 = vmatprep.subr.mxu0 0.0
      %3172 = vmatpush1.msra.mxu0 0.0
      %3173 = vmatprep.subr.mxu0 0.0
      %3174 = vmatpush1.msra.mxu0 0.0
      %3175 = vmatprep.subr.mxu0 0.0
      %3176 = vmatpush1.msra.mxu0 0.0
      %3177 = vmatprep.subr.mxu0 0.0
      %3178 = vmatpush1.msra.mxu0 0.0
      %3179 = vmatprep.subr.mxu0 0.0
      %3180 = vmatpush1.msra.mxu0 0.0
      %3181 = vmatprep.subr.mxu0 0.0
      %3182 = vmatpush1.msra.mxu0 0.0
      %3183 = vmatprep.subr.mxu0 0.0
      %3184 = vmatpush1.msra.mxu0 0.0
      %3185 = vmatprep.subr.mxu0 0.0
      %3186 = vmatpush1.msra.mxu0 0.0
      %3187 = vmatprep.subr.mxu0 0.0
      %3188 = vmatpush1.msra.mxu0 0.0
      %3189 = vmatprep.subr.mxu0 0.0
      %3190 = vmatpush1.msra.mxu0 0.0
      %3191 = vmatprep.subr.mxu0 0.0
      %3192 = vmatpush1.msra.mxu0 0.0
      %3193 = vmatprep.subr.mxu0 0.0
      %3194 = vmatpush1.msra.mxu0 0.0
      %3195 = vmatprep.subr.mxu0 0.0
      %3196 = vmatpush1.msra.mxu0 0.0
      %3197 = vmatprep.subr.mxu0 0.0
      %3198 = vmatpush1.msra.mxu0 0.0
      %3199 = vmatprep.subr.mxu0 0.0
      %3200 = vmatpush1.msra.mxu0 0.0
      %3201 = vmatprep.mubr.f32.mxu0 0.0
      %3202 = vmatmul.mubr.f32.gmra.mrb[0].mxu0 %v3085
      %v3203 = vpop.f32.mrb[0].mxu0
      %v3204 = vadd.f32 0.0, %v3203
      %v3205 = vpop.f32.mrb[0].mxu0
      %3206 = vmatprep.mubr.f32.mxu0 0.0
      %3207 = vmatmul.mubr.f32.gmra.mrb[0].mxu0 %v3087
      %v3208 = vpop.f32.mrb[0].mxu0
      %v3209 = vadd.f32 0.0, %v3208
      %v3210 = vpop.f32.mrb[0].mxu0
      %3211 = vmatprep.mubr.f32.mxu0 0.0
      %3212 = vmatmul.mubr.f32.gmra.mrb[0].mxu0 %v3089
      %v3213 = vpop.f32.mrb[0].mxu0
      %v3214 = vadd.f32 0.0, %v3213
      %v3215 = vpop.f32.mrb[0].mxu0
      %3216 = vmatprep.mubr.f32.mxu0 0.0
      %3217 = vmatmul.mubr.f32.gmra.mrb[0].mxu0 %v3091
      %v3218 = vpop.f32.mrb[0].mxu0
      %v3219 = vadd.f32 0.0, %v3218
      %v3220 = vpop.f32.mrb[0].mxu0
      %3221 = vmatprep.mubr.f32.mxu0 0.0
      %3222 = vmatmul.mubr.f32.gmra.mrb[0].mxu0 %v3093
      %v3223 = vpop.f32.mrb[0].mxu0
      %v3224 = vadd.f32 0.0, %v3223
      %v3225 = vpop.f32.mrb[0].mxu0
      %3226 = vmatprep.mubr.f32.mxu0 0.0
      %3227 = vmatmul.mubr.f32.gmra.mrb[0].mxu0 %v3095
      %v3228 = vpop.f32.mrb[0].mxu0
      %v3229 = vadd.f32 0.0, %v3228
      %v3230 = vpop.f32.mrb[0].mxu0
      %3231 = vmatprep.mubr.f32.mxu0 0.0
      %3232 = vmatmul.mubr.f32.gmra.mrb[0].mxu0 %v3097
      %v3233 = vpop.f32.mrb[0].mxu0
      %v3234 = vadd.f32 0.0, %v3233
      %v3235 = vpop.f32.mrb[0].mxu0
      %3236 = vmatprep.mubr.f32.mxu0 0.0
      %3237 = vmatmul.mubr.f32.gmra.mrb[0].mxu0 %v3099
      %v3238 = vpop.f32.mrb[0].mxu0
      %v3239 = vadd.f32 0.0, %v3238
      %v3240 = vpop.f32.mrb[0].mxu0
      %3241 = vmatprep.mubr.f32.mxu0 0.0
      %3242 = vmatmul.mubr.f32.gmra.mrb[0].mxu0 %v3101
      %v3243 = vpop.f32.mrb[0].mxu0
      %v3244 = vadd.f32 0.0, %v3243
      %v3245 = vpop.f32.mrb[0].mxu0
      %3246 = vmatprep.mubr.f32.mxu0 0.0
      %3247 = vmatmul.mubr.f32.gmra.mrb[0].mxu0 %v3103
      %v3248 = vpop.f32.mrb[0].mxu0
      %v3249 = vadd.f32 0.0, %v3248
      %v3250 = vpop.f32.mrb[0].mxu0
      %3251 = vmatprep.mubr.f32.mxu0 0.0
      %3252 = vmatmul.mubr.f32.gmra.mrb[0].mxu0 %v3105
      %v3253 = vpop.f32.mrb[0].mxu0
      %v3254 = vadd.f32 0.0, %v3253
      %v3255 = vpop.f32.mrb[0].mxu0
      %3256 = vmatprep.mubr.f32.mxu0 0.0
      %3257 = vmatmul.mubr.f32.gmra.mrb[0].mxu0 %v3107
      %v3258 = vpop.f32.mrb[0].mxu0
      %v3259 = vadd.f32 0.0, %v3258
      %v3260 = vpop.f32.mrb[0].mxu0
      %3261 = vmatprep.mubr.f32.mxu0 0.0
      %3262 = vmatmul.mubr.f32.gmra.mrb[0].mxu0 %v3109
      %v3263 = vpop.f32.mrb[0].mxu0
      %v3264 = vadd.f32 0.0, %v3263
      %v3265 = vpop.f32.mrb[0].mxu0
      %3266 = vmatprep.mubr.f32.mxu0 0.0
      %3267 = vmatmul.mubr.f32.gmra.mrb[0].mxu0 %v3111
      %v3268 = vpop.f32.mrb[0].mxu0
      %v3269 = vadd.f32 0.0, %v3268
      %v3270 = vpop.f32.mrb[0].mxu0
      %3271 = vmatprep.mubr.f32.mxu0 0.0
      %3272 = vmatmul.mubr.f32.gmra.mrb[0].mxu0 %v3113
      %v3273 = vpop.f32.mrb[0].mxu0
      %v3274 = vadd.f32 0.0, %v3273
      %v3275 = vpop.f32.mrb[0].mxu0
      %3276 = vmatprep.mubr.f32.mxu0 0.0
      %3277 = vmatmul.mubr.f32.gmra.mrb[0].mxu0 %v3115
      %v3278 = vpop.f32.mrb[0].mxu0
      %v3279 = vadd.f32 0.0, %v3278
      %v3280 = vpop.f32.mrb[0].mxu0
      %3281 = vmatprep.mubr.f32.mxu0 0.0
      %3282 = vmatmul.mubr.f32.gmra.mrb[0].mxu0 %v3117
      %v3283 = vpop.f32.mrb[0].mxu0
      %v3284 = vadd.f32 0.0, %v3283
      %v3285 = vpop.f32.mrb[0].mxu0
      %3286 = vmatprep.mubr.f32.mxu0 0.0
      %3287 = vmatmul.mubr.f32.gmra.mrb[0].mxu0 %v3119
      %v3288 = vpop.f32.mrb[0].mxu0
      %v3289 = vadd.f32 0.0, %v3288
      %v3290 = vpop.f32.mrb[0].mxu0
      %3291 = vmatprep.mubr.f32.mxu0 0.0
      %3292 = vmatmul.mubr.f32.gmra.mrb[0].mxu0 %v3121
      %v3293 = vpop.f32.mrb[0].mxu0
      %v3294 = vadd.f32 0.0, %v3293
      %v3295 = vpop.f32.mrb[0].mxu0
      %3296 = vmatprep.mubr.f32.mxu0 0.0
      %3297 = vmatmul.mubr.f32.gmra.mrb[0].mxu0 %v3123
      %v3298 = vpop.f32.mrb[0].mxu0
      %v3299 = vadd.f32 0.0, %v3298
      %v3300 = vpop.f32.mrb[0].mxu0
      %3301 = vmatprep.mubr.f32.mxu0 0.0
      %3302 = vmatmul.mubr.f32.gmra.mrb[0].mxu0 %v3125
      %v3303 = vpop.f32.mrb[0].mxu0
      %v3304 = vadd.f32 0.0, %v3303
      %v3305 = vpop.f32.mrb[0].mxu0
      %3306 = vmatprep.mubr.f32.mxu0 0.0
      %3307 = vmatmul.mubr.f32.gmra.mrb[0].mxu0 %v3127
      %v3308 = vpop.f32.mrb[0].mxu0
      %v3309 = vadd.f32 0.0, %v3308
      %v3310 = vpop.f32.mrb[0].mxu0
      %3311 = vmatprep.mubr.f32.mxu0 0.0
      %3312 = vmatmul.mubr.f32.gmra.mrb[0].mxu0 %v3129
      %v3313 = vpop.f32.mrb[0].mxu0
      %v3314 = vadd.f32 0.0, %v3313
      %v3315 = vpop.f32.mrb[0].mxu0
      %3316 = vmatprep.mubr.f32.mxu0 0.0
      %3317 = vmatmul.mubr.f32.gmra.mrb[0].mxu0 %v3131
      %v3318 = vpop.f32.mrb[0].mxu0
      %v3319 = vadd.f32 0.0, %v3318
      %v3320 = vpop.f32.mrb[0].mxu0
      %3321 = vmatprep.mubr.f32.mxu0 0.0
      %3322 = vmatmul.mubr.f32.gmra.mrb[0].mxu0 %v3133
      %v3323 = vpop.f32.mrb[0].mxu0
      %v3324 = vadd.f32 0.0, %v3323
      %v3325 = vpop.f32.mrb[0].mxu0
      %3326 = vmatprep.mubr.f32.mxu0 0.0
      %3327 = vmatmul.mubr.f32.gmra.mrb[0].mxu0 %v3135
      %v3328 = vpop.f32.mrb[0].mxu0
      %v3329 = vadd.f32 0.0, %v3328
      %v3330 = vpop.f32.mrb[0].mxu0
      %3331 = vdwg.mxu0
      %v3332 = vadd.f32 %v2997, %v3204
      %v3333 = vadd.f32 %v2998, %v3209
      %v3334 = vadd.f32 %v2999, %v3214
      %v3335 = vadd.f32 %v3000, %v3219
      %v3336 = vadd.f32 %v3001, %v3224
      %v3337 = vadd.f32 %v3002, %v3229
      %v3338 = vadd.f32 %v3003, %v3234
      %v3339 = vadd.f32 %v3004, %v3239
      %v3340 = vadd.f32 %v3005, %v3244
      %v3341 = vadd.f32 %v3006, %v3249
      %v3342 = vadd.f32 %v3007, %v3254
      %v3343 = vadd.f32 %v3008, %v3259
      %v3344 = vadd.f32 %v3009, %v3264
      %v3345 = vadd.f32 %v3010, %v3269
      %v3346 = vadd.f32 %v3011, %v3274
      %v3347 = vadd.f32 %v3012, %v3279
      %v3348 = vadd.f32 %v3013, %v3284
      %v3349 = vadd.f32 %v3014, %v3289
      %v3350 = vadd.f32 %v3015, %v3294
      %v3351 = vadd.f32 %v3016, %v3299
      %v3352 = vadd.f32 %v3017, %v3304
      %v3353 = vadd.f32 %v3018, %v3309
      %v3354 = vadd.f32 %v3019, %v3314
      %v3355 = vadd.f32 %v3020, %v3319
      %v3356 = vadd.f32 %v3021, %v3324
      %v3357 = vadd.f32 %v3022, %v3329
      %s3358 = scalar_lea.vmem %s6, 512
      %v3359 = vld [vmem:[%s3358] sm:$0xff]
      %v3360 = vld [vmem:[%s3358 + $0x8] sm:$0xff]
      %v3361 = vld [vmem:[%s3358 + $0x10] sm:$0xff]
      %v3362 = vld [vmem:[%s3358 + $0x18] sm:$0xff]
      %v3363 = vld [vmem:[%s3358 + $0x20] sm:$0xff]
      %v3364 = vld [vmem:[%s3358 + $0x28] sm:$0xff]
      %v3365 = vld [vmem:[%s3358 + $0x30] sm:$0xff]
      %v3366 = vld [vmem:[%s3358 + $0x38] sm:$0xff]
      %vm3367 = vcmask 1044480
      %v3368 = vrot.slane %v933, 3
      %v3369 = vrot.slane %v934, 3
      %v3370 = vsel %vm3367, %v3368, %v3369
      %v3371 = vrot.slane %v935, 3
      %v3372 = vsel %vm3367, %v3369, %v3371
      %v3373 = vrot.slane %v936, 3
      %v3374 = vsel %vm3367, %v3371, %v3373
      %v3375 = vrot.slane %v937, 3
      %v3376 = vsel %vm3367, %v3373, %v3375
      %v3377 = vrot.slane %v938, 3
      %v3378 = vsel %vm3367, %v3375, %v3377
      %v3379 = vrot.slane %v939, 3
      %v3380 = vsel %vm3367, %v3377, %v3379
      %v3381 = vrot.slane %v940, 3
      %v3382 = vsel %vm3367, %v3379, %v3381
      %v3383 = vrot.slane %v941, 3
      %v3384 = vsel %vm3367, %v3381, %v3383
      %v3385 = vrot.slane %v942, 3
      %v3386 = vsel %vm3367, %v3383, %v3385
      %v3387 = vrot.slane %v943, 3
      %v3388 = vsel %vm3367, %v3385, %v3387
      %v3389 = vrot.slane %v944, 3
      %v3390 = vsel %vm3367, %v3387, %v3389
      %v3391 = vrot.slane %v945, 3
      %v3392 = vsel %vm3367, %v3389, %v3391
      %v3393 = vrot.slane %v946, 3
      %v3394 = vsel %vm3367, %v3391, %v3393
      %v3395 = vrot.slane %v947, 3
      %v3396 = vsel %vm3367, %v3393, %v3395
      %v3397 = vrot.slane %v948, 3
      %v3398 = vsel %vm3367, %v3395, %v3397
      %v3399 = vrot.slane %v949, 3
      %v3400 = vsel %vm3367, %v3397, %v3399
      %v3401 = vrot.slane %v950, 3
      %v3402 = vsel %vm3367, %v3399, %v3401
      %v3403 = vrot.slane %v951, 3
      %v3404 = vsel %vm3367, %v3401, %v3403
      %v3405 = vrot.slane %v952, 3
      %v3406 = vsel %vm3367, %v3403, %v3405
      %v3407 = vrot.slane %v953, 3
      %v3408 = vsel %vm3367, %v3405, %v3407
      %v3409 = vrot.slane %v954, 3
      %v3410 = vsel %vm3367, %v3407, %v3409
      %v3411 = vrot.slane %v955, 3
      %v3412 = vsel %vm3367, %v3409, %v3411
      %v3413 = vrot.slane %v956, 3
      %v3414 = vsel %vm3367, %v3411, %v3413
      %v3415 = vrot.slane %v957, 3
      %v3416 = vsel %vm3367, %v3413, %v3415
      %v3417 = vrot.slane 0.0, 3
      %v3418 = vsel %vm3367, %v3415, %v3417
      %v3419 = vsel %vm3367, %v3417, %v3417
      %v3420 = vsel %vm1054, %v3370, 0
      %v3422 = vsel %vm1054, %v3372, 0
      %v3424 = vsel %vm1054, %v3374, 0
      %v3426 = vsel %vm1054, %v3376, 0
      %v3428 = vsel %vm1054, %v3378, 0
      %v3430 = vsel %vm1054, %v3380, 0
      %v3432 = vsel %vm1054, %v3382, 0
      %v3434 = vsel %vm1054, %v3384, 0
      %v3436 = vsel %vm1054, %v3386, 0
      %v3438 = vsel %vm1054, %v3388, 0
      %v3440 = vsel %vm1054, %v3390, 0
      %v3442 = vsel %vm1054, %v3392, 0
      %v3444 = vsel %vm1054, %v3394, 0
      %v3446 = vsel %vm1054, %v3396, 0
      %v3448 = vsel %vm1054, %v3398, 0
      %v3450 = vsel %vm1054, %v3400, 0
      %v3452 = vsel %vm1054, %v3402, 0
      %v3454 = vsel %vm1054, %v3404, 0
      %v3456 = vsel %vm1054, %v3406, 0
      %v3458 = vsel %vm1054, %v3408, 0
      %v3460 = vsel %vm1054, %v3410, 0
      %v3462 = vsel %vm1054, %v3412, 0
      %v3464 = vsel %vm1054, %v3414, 0
      %v3466 = vsel %vm1054, %v3416, 0
      %v3468 = vsel %vm1054, %v3418, 0
      %v3470 = vsel %vm1054, %v3419, 0
      %3472 = vmatprep.subr.mxu0 0.0
      %3473 = vmatpush1.msra.mxu0 %v3359
      %3474 = vmatprep.subr.mxu0 0.0
      %3475 = vmatpush1.msra.mxu0 %v3360
      %3476 = vmatprep.subr.mxu0 0.0
      %3477 = vmatpush1.msra.mxu0 %v3361
      %3478 = vmatprep.subr.mxu0 0.0
      %3479 = vmatpush1.msra.mxu0 %v3362
      %3480 = vmatprep.subr.mxu0 0.0
      %3481 = vmatpush1.msra.mxu0 %v3363
      %3482 = vmatprep.subr.mxu0 0.0
      %3483 = vmatpush1.msra.mxu0 %v3364
      %3484 = vmatprep.subr.mxu0 0.0
      %3485 = vmatpush1.msra.mxu0 %v3365
      %3486 = vmatprep.subr.mxu0 0.0
      %3487 = vmatpush1.msra.mxu0 %v3366
      %3488 = vmatprep.subr.mxu0 0.0
      %3489 = vmatpush1.msra.mxu0 0.0
      %3490 = vmatprep.subr.mxu0 0.0
      %3491 = vmatpush1.msra.mxu0 0.0
      %3492 = vmatprep.subr.mxu0 0.0
      %3493 = vmatpush1.msra.mxu0 0.0
      %3494 = vmatprep.subr.mxu0 0.0
      %3495 = vmatpush1.msra.mxu0 0.0
      %3496 = vmatprep.subr.mxu0 0.0
      %3497 = vmatpush1.msra.mxu0 0.0
      %3498 = vmatprep.subr.mxu0 0.0
      %3499 = vmatpush1.msra.mxu0 0.0
      %3500 = vmatprep.subr.mxu0 0.0
      %3501 = vmatpush1.msra.mxu0 0.0
      %3502 = vmatprep.subr.mxu0 0.0
      %3503 = vmatpush1.msra.mxu0 0.0
      %3504 = vmatprep.subr.mxu0 0.0
      %3505 = vmatpush1.msra.mxu0 0.0
      %3506 = vmatprep.subr.mxu0 0.0
      %3507 = vmatpush1.msra.mxu0 0.0
      %3508 = vmatprep.subr.mxu0 0.0
      %3509 = vmatpush1.msra.mxu0 0.0
      %3510 = vmatprep.subr.mxu0 0.0
      %3511 = vmatpush1.msra.mxu0 0.0
      %3512 = vmatprep.subr.mxu0 0.0
      %3513 = vmatpush1.msra.mxu0 0.0
      %3514 = vmatprep.subr.mxu0 0.0
      %3515 = vmatpush1.msra.mxu0 0.0
      %3516 = vmatprep.subr.mxu0 0.0
      %3517 = vmatpush1.msra.mxu0 0.0
      %3518 = vmatprep.subr.mxu0 0.0
      %3519 = vmatpush1.msra.mxu0 0.0
      %3520 = vmatprep.subr.mxu0 0.0
      %3521 = vmatpush1.msra.mxu0 0.0
      %3522 = vmatprep.subr.mxu0 0.0
      %3523 = vmatpush1.msra.mxu0 0.0
      %3524 = vmatprep.subr.mxu0 0.0
      %3525 = vmatpush1.msra.mxu0 0.0
      %3526 = vmatprep.subr.mxu0 0.0
      %3527 = vmatpush1.msra.mxu0 0.0
      %3528 = vmatprep.subr.mxu0 0.0
      %3529 = vmatpush1.msra.mxu0 0.0
      %3530 = vmatprep.subr.mxu0 0.0
      %3531 = vmatpush1.msra.mxu0 0.0
      %3532 = vmatprep.subr.mxu0 0.0
      %3533 = vmatpush1.msra.mxu0 0.0
      %3534 = vmatprep.subr.mxu0 0.0
      %3535 = vmatpush1.msra.mxu0 0.0
      %3536 = vmatprep.mubr.f32.mxu0 0.0
      %3537 = vmatmul.mubr.f32.gmra.mrb[0].mxu0 %v3420
      %v3538 = vpop.f32.mrb[0].mxu0
      %v3539 = vadd.f32 0.0, %v3538
      %v3540 = vpop.f32.mrb[0].mxu0
      %3541 = vmatprep.mubr.f32.mxu0 0.0
      %3542 = vmatmul.mubr.f32.gmra.mrb[0].mxu0 %v3422
      %v3543 = vpop.f32.mrb[0].mxu0
      %v3544 = vadd.f32 0.0, %v3543
      %v3545 = vpop.f32.mrb[0].mxu0
      %3546 = vmatprep.mubr.f32.mxu0 0.0
      %3547 = vmatmul.mubr.f32.gmra.mrb[0].mxu0 %v3424
      %v3548 = vpop.f32.mrb[0].mxu0
      %v3549 = vadd.f32 0.0, %v3548
      %v3550 = vpop.f32.mrb[0].mxu0
      %3551 = vmatprep.mubr.f32.mxu0 0.0
      %3552 = vmatmul.mubr.f32.gmra.mrb[0].mxu0 %v3426
      %v3553 = vpop.f32.mrb[0].mxu0
      %v3554 = vadd.f32 0.0, %v3553
      %v3555 = vpop.f32.mrb[0].mxu0
      %3556 = vmatprep.mubr.f32.mxu0 0.0
      %3557 = vmatmul.mubr.f32.gmra.mrb[0].mxu0 %v3428
      %v3558 = vpop.f32.mrb[0].mxu0
      %v3559 = vadd.f32 0.0, %v3558
      %v3560 = vpop.f32.mrb[0].mxu0
      %3561 = vmatprep.mubr.f32.mxu0 0.0
      %3562 = vmatmul.mubr.f32.gmra.mrb[0].mxu0 %v3430
      %v3563 = vpop.f32.mrb[0].mxu0
      %v3564 = vadd.f32 0.0, %v3563
      %v3565 = vpop.f32.mrb[0].mxu0
      %3566 = vmatprep.mubr.f32.mxu0 0.0
      %3567 = vmatmul.mubr.f32.gmra.mrb[0].mxu0 %v3432
      %v3568 = vpop.f32.mrb[0].mxu0
      %v3569 = vadd.f32 0.0, %v3568
      %v3570 = vpop.f32.mrb[0].mxu0
      %3571 = vmatprep.mubr.f32.mxu0 0.0
      %3572 = vmatmul.mubr.f32.gmra.mrb[0].mxu0 %v3434
      %v3573 = vpop.f32.mrb[0].mxu0
      %v3574 = vadd.f32 0.0, %v3573
      %v3575 = vpop.f32.mrb[0].mxu0
      %3576 = vmatprep.mubr.f32.mxu0 0.0
      %3577 = vmatmul.mubr.f32.gmra.mrb[0].mxu0 %v3436
      %v3578 = vpop.f32.mrb[0].mxu0
      %v3579 = vadd.f32 0.0, %v3578
      %v3580 = vpop.f32.mrb[0].mxu0
      %3581 = vmatprep.mubr.f32.mxu0 0.0
      %3582 = vmatmul.mubr.f32.gmra.mrb[0].mxu0 %v3438
      %v3583 = vpop.f32.mrb[0].mxu0
      %v3584 = vadd.f32 0.0, %v3583
      %v3585 = vpop.f32.mrb[0].mxu0
      %3586 = vmatprep.mubr.f32.mxu0 0.0
      %3587 = vmatmul.mubr.f32.gmra.mrb[0].mxu0 %v3440
      %v3588 = vpop.f32.mrb[0].mxu0
      %v3589 = vadd.f32 0.0, %v3588
      %v3590 = vpop.f32.mrb[0].mxu0
      %3591 = vmatprep.mubr.f32.mxu0 0.0
      %3592 = vmatmul.mubr.f32.gmra.mrb[0].mxu0 %v3442
      %v3593 = vpop.f32.mrb[0].mxu0
      %v3594 = vadd.f32 0.0, %v3593
      %v3595 = vpop.f32.mrb[0].mxu0
      %3596 = vmatprep.mubr.f32.mxu0 0.0
      %3597 = vmatmul.mubr.f32.gmra.mrb[0].mxu0 %v3444
      %v3598 = vpop.f32.mrb[0].mxu0
      %v3599 = vadd.f32 0.0, %v3598
      %v3600 = vpop.f32.mrb[0].mxu0
      %3601 = vmatprep.mubr.f32.mxu0 0.0
      %3602 = vmatmul.mubr.f32.gmra.mrb[0].mxu0 %v3446
      %v3603 = vpop.f32.mrb[0].mxu0
      %v3604 = vadd.f32 0.0, %v3603
      %v3605 = vpop.f32.mrb[0].mxu0
      %3606 = vmatprep.mubr.f32.mxu0 0.0
      %3607 = vmatmul.mubr.f32.gmra.mrb[0].mxu0 %v3448
      %v3608 = vpop.f32.mrb[0].mxu0
      %v3609 = vadd.f32 0.0, %v3608
      %v3610 = vpop.f32.mrb[0].mxu0
      %3611 = vmatprep.mubr.f32.mxu0 0.0
      %3612 = vmatmul.mubr.f32.gmra.mrb[0].mxu0 %v3450
      %v3613 = vpop.f32.mrb[0].mxu0
      %v3614 = vadd.f32 0.0, %v3613
      %v3615 = vpop.f32.mrb[0].mxu0
      %3616 = vmatprep.mubr.f32.mxu0 0.0
      %3617 = vmatmul.mubr.f32.gmra.mrb[0].mxu0 %v3452
      %v3618 = vpop.f32.mrb[0].mxu0
      %v3619 = vadd.f32 0.0, %v3618
      %v3620 = vpop.f32.mrb[0].mxu0
      %3621 = vmatprep.mubr.f32.mxu0 0.0
      %3622 = vmatmul.mubr.f32.gmra.mrb[0].mxu0 %v3454
      %v3623 = vpop.f32.mrb[0].mxu0
      %v3624 = vadd.f32 0.0, %v3623
      %v3625 = vpop.f32.mrb[0].mxu0
      %3626 = vmatprep.mubr.f32.mxu0 0.0
      %3627 = vmatmul.mubr.f32.gmra.mrb[0].mxu0 %v3456
      %v3628 = vpop.f32.mrb[0].mxu0
      %v3629 = vadd.f32 0.0, %v3628
      %v3630 = vpop.f32.mrb[0].mxu0
      %3631 = vmatprep.mubr.f32.mxu0 0.0
      %3632 = vmatmul.mubr.f32.gmra.mrb[0].mxu0 %v3458
      %v3633 = vpop.f32.mrb[0].mxu0
      %v3634 = vadd.f32 0.0, %v3633
      %v3635 = vpop.f32.mrb[0].mxu0
      %3636 = vmatprep.mubr.f32.mxu0 0.0
      %3637 = vmatmul.mubr.f32.gmra.mrb[0].mxu0 %v3460
      %v3638 = vpop.f32.mrb[0].mxu0
      %v3639 = vadd.f32 0.0, %v3638
      %v3640 = vpop.f32.mrb[0].mxu0
      %3641 = vmatprep.mubr.f32.mxu0 0.0
      %3642 = vmatmul.mubr.f32.gmra.mrb[0].mxu0 %v3462
      %v3643 = vpop.f32.mrb[0].mxu0
      %v3644 = vadd.f32 0.0, %v3643
      %v3645 = vpop.f32.mrb[0].mxu0
      %3646 = vmatprep.mubr.f32.mxu0 0.0
      %3647 = vmatmul.mubr.f32.gmra.mrb[0].mxu0 %v3464
      %v3648 = vpop.f32.mrb[0].mxu0
      %v3649 = vadd.f32 0.0, %v3648
      %v3650 = vpop.f32.mrb[0].mxu0
      %3651 = vmatprep.mubr.f32.mxu0 0.0
      %3652 = vmatmul.mubr.f32.gmra.mrb[0].mxu0 %v3466
      %v3653 = vpop.f32.mrb[0].mxu0
      %v3654 = vadd.f32 0.0, %v3653
      %v3655 = vpop.f32.mrb[0].mxu0
      %3656 = vmatprep.mubr.f32.mxu0 0.0
      %3657 = vmatmul.mubr.f32.gmra.mrb[0].mxu0 %v3468
      %v3658 = vpop.f32.mrb[0].mxu0
      %v3659 = vadd.f32 0.0, %v3658
      %v3660 = vpop.f32.mrb[0].mxu0
      %3661 = vmatprep.mubr.f32.mxu0 0.0
      %3662 = vmatmul.mubr.f32.gmra.mrb[0].mxu0 %v3470
      %v3663 = vpop.f32.mrb[0].mxu0
      %v3664 = vadd.f32 0.0, %v3663
      %v3665 = vpop.f32.mrb[0].mxu0
      %3666 = vdwg.mxu0
      %v3667 = vadd.f32 %v3332, %v3539
      %v3668 = vadd.f32 %v3333, %v3544
      %v3669 = vadd.f32 %v3334, %v3549
      %v3670 = vadd.f32 %v3335, %v3554
      %v3671 = vadd.f32 %v3336, %v3559
      %v3672 = vadd.f32 %v3337, %v3564
      %v3673 = vadd.f32 %v3338, %v3569
      %v3674 = vadd.f32 %v3339, %v3574
      %v3675 = vadd.f32 %v3340, %v3579
      %v3676 = vadd.f32 %v3341, %v3584
      %v3677 = vadd.f32 %v3342, %v3589
      %v3678 = vadd.f32 %v3343, %v3594
      %v3679 = vadd.f32 %v3344, %v3599
      %v3680 = vadd.f32 %v3345, %v3604
      %v3681 = vadd.f32 %v3346, %v3609
      %v3682 = vadd.f32 %v3347, %v3614
      %v3683 = vadd.f32 %v3348, %v3619
      %v3684 = vadd.f32 %v3349, %v3624
      %v3685 = vadd.f32 %v3350, %v3629
      %v3686 = vadd.f32 %v3351, %v3634
      %v3687 = vadd.f32 %v3352, %v3639
      %v3688 = vadd.f32 %v3353, %v3644
      %v3689 = vadd.f32 %v3354, %v3649
      %v3690 = vadd.f32 %v3355, %v3654
      %v3691 = vadd.f32 %v3356, %v3659
      %v3692 = vadd.f32 %v3357, %v3664
      %v3693 = vld [vmem:[%s7] sm:$0x1]
      %v3695 = vlaneseq
      %v3696 = vshrl.u32 %v3695, 7
      %v3697 = vsub.s32 0, %v3696
      %v3698 = vrot.slane %v3693, %v3697
      %v3700 = vadd.f32 %v3667, %v3698
      %v3701 = vadd.f32 %v3668, %v3698
      %v3702 = vadd.f32 %v3669, %v3698
      %v3703 = vadd.f32 %v3670, %v3698
      %v3704 = vadd.f32 %v3671, %v3698
      %v3705 = vadd.f32 %v3672, %v3698
      %v3706 = vadd.f32 %v3673, %v3698
      %v3707 = vadd.f32 %v3674, %v3698
      %v3708 = vadd.f32 %v3675, %v3698
      %v3709 = vadd.f32 %v3676, %v3698
      %v3710 = vadd.f32 %v3677, %v3698
      %v3711 = vadd.f32 %v3678, %v3698
      %v3712 = vadd.f32 %v3679, %v3698
      %v3713 = vadd.f32 %v3680, %v3698
      %v3714 = vadd.f32 %v3681, %v3698
      %v3715 = vadd.f32 %v3682, %v3698
      %v3716 = vadd.f32 %v3683, %v3698
      %v3717 = vadd.f32 %v3684, %v3698
      %v3718 = vadd.f32 %v3685, %v3698
      %v3719 = vadd.f32 %v3686, %v3698
      %v3720 = vadd.f32 %v3687, %v3698
      %v3721 = vadd.f32 %v3688, %v3698
      %v3722 = vadd.f32 %v3689, %v3698
      %v3723 = vadd.f32 %v3690, %v3698
      %v3724 = vadd.f32 %v3691, %v3698
      %v3725 = vadd.f32 %v3692, %v3698
      %v3726 = vmax.f32 %v3700, 0.0
      %v3727 = vmax.f32 %v3701, 0.0
      %v3728 = vmax.f32 %v3702, 0.0
      %v3729 = vmax.f32 %v3703, 0.0
      %v3730 = vmax.f32 %v3704, 0.0
      %v3731 = vmax.f32 %v3705, 0.0
      %v3732 = vmax.f32 %v3706, 0.0
      %v3733 = vmax.f32 %v3707, 0.0
      %v3734 = vmax.f32 %v3708, 0.0
      %v3735 = vmax.f32 %v3709, 0.0
      %v3736 = vmax.f32 %v3710, 0.0
      %v3737 = vmax.f32 %v3711, 0.0
      %v3738 = vmax.f32 %v3712, 0.0
      %v3739 = vmax.f32 %v3713, 0.0
      %v3740 = vmax.f32 %v3714, 0.0
      %v3741 = vmax.f32 %v3715, 0.0
      %v3742 = vmax.f32 %v3716, 0.0
      %v3743 = vmax.f32 %v3717, 0.0
      %v3744 = vmax.f32 %v3718, 0.0
      %v3745 = vmax.f32 %v3719, 0.0
      %v3746 = vmax.f32 %v3720, 0.0
      %v3747 = vmax.f32 %v3721, 0.0
      %v3748 = vmax.f32 %v3722, 0.0
      %v3749 = vmax.f32 %v3723, 0.0
      %v3750 = vmax.f32 %v3724, 0.0
      %v3751 = vmax.f32 %v3725, 0.0
      %v3752 = vmul.f32 %v3726, %v805
      %v3753 = vmul.f32 %v3727, %v810
      %v3754 = vmul.f32 %v3728, %v815
      %v3755 = vmul.f32 %v3729, %v820
      %v3756 = vmul.f32 %v3730, %v825
      %v3757 = vmul.f32 %v3731, %v830
      %v3758 = vmul.f32 %v3732, %v835
      %v3759 = vmul.f32 %v3733, %v840
      %v3760 = vmul.f32 %v3734, %v845
      %v3761 = vmul.f32 %v3735, %v850
      %v3762 = vmul.f32 %v3736, %v855
      %v3763 = vmul.f32 %v3737, %v860
      %v3764 = vmul.f32 %v3738, %v865
      %v3765 = vmul.f32 %v3739, %v870
      %v3766 = vmul.f32 %v3740, %v875
      %v3767 = vmul.f32 %v3741, %v880
      %v3768 = vmul.f32 %v3742, %v885
      %v3769 = vmul.f32 %v3743, %v890
      %v3770 = vmul.f32 %v3744, %v895
      %v3771 = vmul.f32 %v3745, %v900
      %v3772 = vmul.f32 %v3746, %v905
      %v3773 = vmul.f32 %v3747, %v910
      %v3774 = vmul.f32 %v3748, %v915
      %v3775 = vmul.f32 %v3749, %v920
      %v3776 = vmul.f32 %v3750, %v925
      %v3777 = vmul.f32 %v3751, %v930
      %v3778 = vld [vmem:[%s8] sm:$0xff]
      %v3779 = vld [vmem:[%s8 + $0x8] sm:$0xff]
      %v3780 = vld [vmem:[%s8 + $0x10] sm:$0xff]
      %v3781 = vld [vmem:[%s8 + $0x18] sm:$0xff]
      %s3782 = scalar_lea.vmem %s8, 32
      %v3783 = vld [vmem:[%s3782] sm:$0xff]
      %v3784 = vld [vmem:[%s3782 + $0x8] sm:$0xff]
      %v3785 = vld [vmem:[%s3782 + $0x10] sm:$0xff]
      %v3786 = vld [vmem:[%s3782 + $0x18] sm:$0xff]
      %v3813 = vrot.slane %v3752, 7
      %v3814 = vsel %vm1894, %v1895, %v3813
      %v3815 = vrot.slane %v3753, 7
      %v3816 = vsel %vm1894, %v3813, %v3815
      %v3817 = vrot.slane %v3754, 7
      %v3818 = vsel %vm1894, %v3815, %v3817
      %v3819 = vrot.slane %v3755, 7
      %v3820 = vsel %vm1894, %v3817, %v3819
      %v3821 = vrot.slane %v3756, 7
      %v3822 = vsel %vm1894, %v3819, %v3821
      %v3823 = vrot.slane %v3757, 7
      %v3824 = vsel %vm1894, %v3821, %v3823
      %v3825 = vrot.slane %v3758, 7
      %v3826 = vsel %vm1894, %v3823, %v3825
      %v3827 = vrot.slane %v3759, 7
      %v3828 = vsel %vm1894, %v3825, %v3827
      %v3829 = vrot.slane %v3760, 7
      %v3830 = vsel %vm1894, %v3827, %v3829
      %v3831 = vrot.slane %v3761, 7
      %v3832 = vsel %vm1894, %v3829, %v3831
      %v3833 = vrot.slane %v3762, 7
      %v3834 = vsel %vm1894, %v3831, %v3833
      %v3835 = vrot.slane %v3763, 7
      %v3836 = vsel %vm1894, %v3833, %v3835
      %v3837 = vrot.slane %v3764, 7
      %v3838 = vsel %vm1894, %v3835, %v3837
      %v3839 = vrot.slane %v3765, 7
      %v3840 = vsel %vm1894, %v3837, %v3839
      %v3841 = vrot.slane %v3766, 7
      %v3842 = vsel %vm1894, %v3839, %v3841
      %v3843 = vrot.slane %v3767, 7
      %v3844 = vsel %vm1894, %v3841, %v3843
      %v3845 = vrot.slane %v3768, 7
      %v3846 = vsel %vm1894, %v3843, %v3845
      %v3847 = vrot.slane %v3769, 7
      %v3848 = vsel %vm1894, %v3845, %v3847
      %v3849 = vrot.slane %v3770, 7
      %v3850 = vsel %vm1894, %v3847, %v3849
      %v3851 = vrot.slane %v3771, 7
      %v3852 = vsel %vm1894, %v3849, %v3851
      %v3853 = vrot.slane %v3772, 7
      %v3854 = vsel %vm1894, %v3851, %v3853
      %v3855 = vrot.slane %v3773, 7
      %v3856 = vsel %vm1894, %v3853, %v3855
      %v3857 = vrot.slane %v3774, 7
      %v3858 = vsel %vm1894, %v3855, %v3857
      %v3859 = vrot.slane %v3775, 7
      %v3860 = vsel %vm1894, %v3857, %v3859
      %v3861 = vrot.slane %v3776, 7
      %v3862 = vsel %vm1894, %v3859, %v3861
      %v3863 = vrot.slane %v3777, 7
      %v3864 = vsel %vm1894, %v3861, %v3863
      %vm3865 = vcmask 261120
      %v3866 = vsel %vm3865, %v3814, 0
      %v3868 = vsel %vm3865, %v3816, 0
      %v3870 = vsel %vm3865, %v3818, 0
      %v3872 = vsel %vm3865, %v3820, 0
      %v3874 = vsel %vm3865, %v3822, 0
      %v3876 = vsel %vm3865, %v3824, 0
      %v3878 = vsel %vm3865, %v3826, 0
      %v3880 = vsel %vm3865, %v3828, 0
      %v3882 = vsel %vm3865, %v3830, 0
      %v3884 = vsel %vm3865, %v3832, 0
      %v3886 = vsel %vm3865, %v3834, 0
      %v3888 = vsel %vm3865, %v3836, 0
      %v3890 = vsel %vm3865, %v3838, 0
      %v3892 = vsel %vm3865, %v3840, 0
      %v3894 = vsel %vm3865, %v3842, 0
      %v3896 = vsel %vm3865, %v3844, 0
      %v3898 = vsel %vm3865, %v3846, 0
      %v3900 = vsel %vm3865, %v3848, 0
      %v3902 = vsel %vm3865, %v3850, 0
      %v3904 = vsel %vm3865, %v3852, 0
      %v3906 = vsel %vm3865, %v3854, 0
      %v3908 = vsel %vm3865, %v3856, 0
      %v3910 = vsel %vm3865, %v3858, 0
      %v3912 = vsel %vm3865, %v3860, 0
      %v3914 = vsel %vm3865, %v3862, 0
      %v3916 = vsel %vm3865, %v3864, 0
      %3918 = vmatprep.subr.mxu0 0.0
      %3919 = vmatpush1.msra.mxu0 %v3783
      %3920 = vmatprep.subr.mxu0 0.0
      %3921 = vmatpush1.msra.mxu0 %v3784
      %3922 = vmatprep.subr.mxu0 0.0
      %3923 = vmatpush1.msra.mxu0 %v3785
      %3924 = vmatprep.subr.mxu0 0.0
      %3925 = vmatpush1.msra.mxu0 %v3786
      %3926 = vmatprep.subr.mxu0 0.0
      %3927 = vmatpush1.msra.mxu0 0.0
      %3928 = vmatprep.subr.mxu0 0.0
      %3929 = vmatpush1.msra.mxu0 0.0
      %3930 = vmatprep.subr.mxu0 0.0
      %3931 = vmatpush1.msra.mxu0 0.0
      %3932 = vmatprep.subr.mxu0 0.0
      %3933 = vmatpush1.msra.mxu0 0.0
      %3934 = vmatprep.subr.mxu0 0.0
      %3935 = vmatpush1.msra.mxu0 0.0
      %3936 = vmatprep.subr.mxu0 0.0
      %3937 = vmatpush1.msra.mxu0 0.0
      %3938 = vmatprep.subr.mxu0 0.0
      %3939 = vmatpush1.msra.mxu0 0.0
      %3940 = vmatprep.subr.mxu0 0.0
      %3941 = vmatpush1.msra.mxu0 0.0
      %3942 = vmatprep.subr.mxu0 0.0
      %3943 = vmatpush1.msra.mxu0 0.0
      %3944 = vmatprep.subr.mxu0 0.0
      %3945 = vmatpush1.msra.mxu0 0.0
      %3946 = vmatprep.subr.mxu0 0.0
      %3947 = vmatpush1.msra.mxu0 0.0
      %3948 = vmatprep.subr.mxu0 0.0
      %3949 = vmatpush1.msra.mxu0 0.0
      %3950 = vmatprep.subr.mxu0 0.0
      %3951 = vmatpush1.msra.mxu0 0.0
      %3952 = vmatprep.subr.mxu0 0.0
      %3953 = vmatpush1.msra.mxu0 0.0
      %3954 = vmatprep.subr.mxu0 0.0
      %3955 = vmatpush1.msra.mxu0 0.0
      %3956 = vmatprep.subr.mxu0 0.0
      %3957 = vmatpush1.msra.mxu0 0.0
      %3958 = vmatprep.subr.mxu0 0.0
      %3959 = vmatpush1.msra.mxu0 0.0
      %3960 = vmatprep.subr.mxu0 0.0
      %3961 = vmatpush1.msra.mxu0 0.0
      %3962 = vmatprep.subr.mxu0 0.0
      %3963 = vmatpush1.msra.mxu0 0.0
      %3964 = vmatprep.subr.mxu0 0.0
      %3965 = vmatpush1.msra.mxu0 0.0
      %3966 = vmatprep.subr.mxu0 0.0
      %3967 = vmatpush1.msra.mxu0 0.0
      %3968 = vmatprep.subr.mxu0 0.0
      %3969 = vmatpush1.msra.mxu0 0.0
      %3970 = vmatprep.subr.mxu0 0.0
      %3971 = vmatpush1.msra.mxu0 0.0
      %3972 = vmatprep.subr.mxu0 0.0
      %3973 = vmatpush1.msra.mxu0 0.0
      %3974 = vmatprep.subr.mxu0 0.0
      %3975 = vmatpush1.msra.mxu0 0.0
      %3976 = vmatprep.subr.mxu0 0.0
      %3977 = vmatpush1.msra.mxu0 0.0
      %3978 = vmatprep.subr.mxu0 0.0
      %3979 = vmatpush1.msra.mxu0 0.0
      %3980 = vmatprep.subr.mxu0 0.0
      %3981 = vmatpush1.msra.mxu0 0.0
      %3982 = vmatprep.mubr.f32.mxu0 0.0
      %3983 = vmatmul.mubr.f32.gmra.mrb[0].mxu0 %v3866
      %v3984 = vpop.f32.mrb[0].mxu0
      %v3985 = vadd.f32 0.0, %v3984
      %v3986 = vpop.f32.mrb[0].mxu0
      %3987 = vmatprep.mubr.f32.mxu0 0.0
      %3988 = vmatmul.mubr.f32.gmra.mrb[0].mxu0 %v3868
      %v3989 = vpop.f32.mrb[0].mxu0
      %v3990 = vadd.f32 0.0, %v3989
      %v3991 = vpop.f32.mrb[0].mxu0
      %3992 = vmatprep.mubr.f32.mxu0 0.0
      %3993 = vmatmul.mubr.f32.gmra.mrb[0].mxu0 %v3870
      %v3994 = vpop.f32.mrb[0].mxu0
      %v3995 = vadd.f32 0.0, %v3994
      %v3996 = vpop.f32.mrb[0].mxu0
      %3997 = vmatprep.mubr.f32.mxu0 0.0
      %3998 = vmatmul.mubr.f32.gmra.mrb[0].mxu0 %v3872
      %v3999 = vpop.f32.mrb[0].mxu0
      %v4000 = vadd.f32 0.0, %v3999
      %v4001 = vpop.f32.mrb[0].mxu0
      %4002 = vmatprep.mubr.f32.mxu0 0.0
      %4003 = vmatmul.mubr.f32.gmra.mrb[0].mxu0 %v3874
      %v4004 = vpop.f32.mrb[0].mxu0
      %v4005 = vadd.f32 0.0, %v4004
      %v4006 = vpop.f32.mrb[0].mxu0
      %4007 = vmatprep.mubr.f32.mxu0 0.0
      %4008 = vmatmul.mubr.f32.gmra.mrb[0].mxu0 %v3876
      %v4009 = vpop.f32.mrb[0].mxu0
      %v4010 = vadd.f32 0.0, %v4009
      %v4011 = vpop.f32.mrb[0].mxu0
      %4012 = vmatprep.mubr.f32.mxu0 0.0
      %4013 = vmatmul.mubr.f32.gmra.mrb[0].mxu0 %v3878
      %v4014 = vpop.f32.mrb[0].mxu0
      %v4015 = vadd.f32 0.0, %v4014
      %v4016 = vpop.f32.mrb[0].mxu0
      %4017 = vmatprep.mubr.f32.mxu0 0.0
      %4018 = vmatmul.mubr.f32.gmra.mrb[0].mxu0 %v3880
      %v4019 = vpop.f32.mrb[0].mxu0
      %v4020 = vadd.f32 0.0, %v4019
      %v4021 = vpop.f32.mrb[0].mxu0
      %4022 = vmatprep.mubr.f32.mxu0 0.0
      %4023 = vmatmul.mubr.f32.gmra.mrb[0].mxu0 %v3882
      %v4024 = vpop.f32.mrb[0].mxu0
      %v4025 = vadd.f32 0.0, %v4024
      %v4026 = vpop.f32.mrb[0].mxu0
      %4027 = vmatprep.mubr.f32.mxu0 0.0
      %4028 = vmatmul.mubr.f32.gmra.mrb[0].mxu0 %v3884
      %v4029 = vpop.f32.mrb[0].mxu0
      %v4030 = vadd.f32 0.0, %v4029
      %v4031 = vpop.f32.mrb[0].mxu0
      %4032 = vmatprep.mubr.f32.mxu0 0.0
      %4033 = vmatmul.mubr.f32.gmra.mrb[0].mxu0 %v3886
      %v4034 = vpop.f32.mrb[0].mxu0
      %v4035 = vadd.f32 0.0, %v4034
      %v4036 = vpop.f32.mrb[0].mxu0
      %4037 = vmatprep.mubr.f32.mxu0 0.0
      %4038 = vmatmul.mubr.f32.gmra.mrb[0].mxu0 %v3888
      %v4039 = vpop.f32.mrb[0].mxu0
      %v4040 = vadd.f32 0.0, %v4039
      %v4041 = vpop.f32.mrb[0].mxu0
      %4042 = vmatprep.mubr.f32.mxu0 0.0
      %4043 = vmatmul.mubr.f32.gmra.mrb[0].mxu0 %v3890
      %v4044 = vpop.f32.mrb[0].mxu0
      %v4045 = vadd.f32 0.0, %v4044
      %v4046 = vpop.f32.mrb[0].mxu0
      %4047 = vmatprep.mubr.f32.mxu0 0.0
      %4048 = vmatmul.mubr.f32.gmra.mrb[0].mxu0 %v3892
      %v4049 = vpop.f32.mrb[0].mxu0
      %v4050 = vadd.f32 0.0, %v4049
      %v4051 = vpop.f32.mrb[0].mxu0
      %4052 = vmatprep.mubr.f32.mxu0 0.0
      %4053 = vmatmul.mubr.f32.gmra.mrb[0].mxu0 %v3894
      %v4054 = vpop.f32.mrb[0].mxu0
      %v4055 = vadd.f32 0.0, %v4054
      %v4056 = vpop.f32.mrb[0].mxu0
      %4057 = vmatprep.mubr.f32.mxu0 0.0
      %4058 = vmatmul.mubr.f32.gmra.mrb[0].mxu0 %v3896
      %v4059 = vpop.f32.mrb[0].mxu0
      %v4060 = vadd.f32 0.0, %v4059
      %v4061 = vpop.f32.mrb[0].mxu0
      %4062 = vmatprep.mubr.f32.mxu0 0.0
      %4063 = vmatmul.mubr.f32.gmra.mrb[0].mxu0 %v3898
      %v4064 = vpop.f32.mrb[0].mxu0
      %v4065 = vadd.f32 0.0, %v4064
      %v4066 = vpop.f32.mrb[0].mxu0
      %4067 = vmatprep.mubr.f32.mxu0 0.0
      %4068 = vmatmul.mubr.f32.gmra.mrb[0].mxu0 %v3900
      %v4069 = vpop.f32.mrb[0].mxu0
      %v4070 = vadd.f32 0.0, %v4069
      %v4071 = vpop.f32.mrb[0].mxu0
      %4072 = vmatprep.mubr.f32.mxu0 0.0
      %4073 = vmatmul.mubr.f32.gmra.mrb[0].mxu0 %v3902
      %v4074 = vpop.f32.mrb[0].mxu0
      %v4075 = vadd.f32 0.0, %v4074
      %v4076 = vpop.f32.mrb[0].mxu0
      %4077 = vmatprep.mubr.f32.mxu0 0.0
      %4078 = vmatmul.mubr.f32.gmra.mrb[0].mxu0 %v3904
      %v4079 = vpop.f32.mrb[0].mxu0
      %v4080 = vadd.f32 0.0, %v4079
      %v4081 = vpop.f32.mrb[0].mxu0
      %4082 = vmatprep.mubr.f32.mxu0 0.0
      %4083 = vmatmul.mubr.f32.gmra.mrb[0].mxu0 %v3906
      %v4084 = vpop.f32.mrb[0].mxu0
      %v4085 = vadd.f32 0.0, %v4084
      %v4086 = vpop.f32.mrb[0].mxu0
      %4087 = vmatprep.mubr.f32.mxu0 0.0
      %4088 = vmatmul.mubr.f32.gmra.mrb[0].mxu0 %v3908
      %v4089 = vpop.f32.mrb[0].mxu0
      %v4090 = vadd.f32 0.0, %v4089
      %v4091 = vpop.f32.mrb[0].mxu0
      %4092 = vmatprep.mubr.f32.mxu0 0.0
      %4093 = vmatmul.mubr.f32.gmra.mrb[0].mxu0 %v3910
      %v4094 = vpop.f32.mrb[0].mxu0
      %v4095 = vadd.f32 0.0, %v4094
      %v4096 = vpop.f32.mrb[0].mxu0
      %4097 = vmatprep.mubr.f32.mxu0 0.0
      %4098 = vmatmul.mubr.f32.gmra.mrb[0].mxu0 %v3912
      %v4099 = vpop.f32.mrb[0].mxu0
      %v4100 = vadd.f32 0.0, %v4099
      %v4101 = vpop.f32.mrb[0].mxu0
      %4102 = vmatprep.mubr.f32.mxu0 0.0
      %4103 = vmatmul.mubr.f32.gmra.mrb[0].mxu0 %v3914
      %v4104 = vpop.f32.mrb[0].mxu0
      %v4105 = vadd.f32 0.0, %v4104
      %v4106 = vpop.f32.mrb[0].mxu0
      %4107 = vmatprep.mubr.f32.mxu0 0.0
      %4108 = vmatmul.mubr.f32.gmra.mrb[0].mxu0 %v3916
      %v4109 = vpop.f32.mrb[0].mxu0
      %v4110 = vadd.f32 0.0, %v4109
      %v4111 = vpop.f32.mrb[0].mxu0
      %4112 = vdwg.mxu0
      %v4113 = vsel %vm3865, %v3752, 0
      %v4115 = vsel %vm3865, %v3753, 0
      %v4117 = vsel %vm3865, %v3754, 0
      %v4119 = vsel %vm3865, %v3755, 0
      %v4121 = vsel %vm3865, %v3756, 0
      %v4123 = vsel %vm3865, %v3757, 0
      %v4125 = vsel %vm3865, %v3758, 0
      %v4127 = vsel %vm3865, %v3759, 0
      %v4129 = vsel %vm3865, %v3760, 0
      %v4131 = vsel %vm3865, %v3761, 0
      %v4133 = vsel %vm3865, %v3762, 0
      %v4135 = vsel %vm3865, %v3763, 0
      %v4137 = vsel %vm3865, %v3764, 0
      %v4139 = vsel %vm3865, %v3765, 0
      %v4141 = vsel %vm3865, %v3766, 0
      %v4143 = vsel %vm3865, %v3767, 0
      %v4145 = vsel %vm3865, %v3768, 0
      %v4147 = vsel %vm3865, %v3769, 0
      %v4149 = vsel %vm3865, %v3770, 0
      %v4151 = vsel %vm3865, %v3771, 0
      %v4153 = vsel %vm3865, %v3772, 0
      %v4155 = vsel %vm3865, %v3773, 0
      %v4157 = vsel %vm3865, %v3774, 0
      %v4159 = vsel %vm3865, %v3775, 0
      %v4161 = vsel %vm3865, %v3776, 0
      %v4163 = vsel %vm3865, %v3777, 0
      %4165 = vmatprep.subr.mxu0 0.0
      %4166 = vmatpush1.msra.mxu0 %v3778
      %4167 = vmatprep.subr.mxu0 0.0
      %4168 = vmatpush1.msra.mxu0 %v3779
      %4169 = vmatprep.subr.mxu0 0.0
      %4170 = vmatpush1.msra.mxu0 %v3780
      %4171 = vmatprep.subr.mxu0 0.0
      %4172 = vmatpush1.msra.mxu0 %v3781
      %4173 = vmatprep.subr.mxu0 0.0
      %4174 = vmatpush1.msra.mxu0 0.0
      %4175 = vmatprep.subr.mxu0 0.0
      %4176 = vmatpush1.msra.mxu0 0.0
      %4177 = vmatprep.subr.mxu0 0.0
      %4178 = vmatpush1.msra.mxu0 0.0
      %4179 = vmatprep.subr.mxu0 0.0
      %4180 = vmatpush1.msra.mxu0 0.0
      %4181 = vmatprep.subr.mxu0 0.0
      %4182 = vmatpush1.msra.mxu0 0.0
      %4183 = vmatprep.subr.mxu0 0.0
      %4184 = vmatpush1.msra.mxu0 0.0
      %4185 = vmatprep.subr.mxu0 0.0
      %4186 = vmatpush1.msra.mxu0 0.0
      %4187 = vmatprep.subr.mxu0 0.0
      %4188 = vmatpush1.msra.mxu0 0.0
      %4189 = vmatprep.subr.mxu0 0.0
      %4190 = vmatpush1.msra.mxu0 0.0
      %4191 = vmatprep.subr.mxu0 0.0
      %4192 = vmatpush1.msra.mxu0 0.0
      %4193 = vmatprep.subr.mxu0 0.0
      %4194 = vmatpush1.msra.mxu0 0.0
      %4195 = vmatprep.subr.mxu0 0.0
      %4196 = vmatpush1.msra.mxu0 0.0
      %4197 = vmatprep.subr.mxu0 0.0
      %4198 = vmatpush1.msra.mxu0 0.0
      %4199 = vmatprep.subr.mxu0 0.0
      %4200 = vmatpush1.msra.mxu0 0.0
      %4201 = vmatprep.subr.mxu0 0.0
      %4202 = vmatpush1.msra.mxu0 0.0
      %4203 = vmatprep.subr.mxu0 0.0
      %4204 = vmatpush1.msra.mxu0 0.0
      %4205 = vmatprep.subr.mxu0 0.0
      %4206 = vmatpush1.msra.mxu0 0.0
      %4207 = vmatprep.subr.mxu0 0.0
      %4208 = vmatpush1.msra.mxu0 0.0
      %4209 = vmatprep.subr.mxu0 0.0
      %4210 = vmatpush1.msra.mxu0 0.0
      %4211 = vmatprep.subr.mxu0 0.0
      %4212 = vmatpush1.msra.mxu0 0.0
      %4213 = vmatprep.subr.mxu0 0.0
      %4214 = vmatpush1.msra.mxu0 0.0
      %4215 = vmatprep.subr.mxu0 0.0
      %4216 = vmatpush1.msra.mxu0 0.0
      %4217 = vmatprep.subr.mxu0 0.0
      %4218 = vmatpush1.msra.mxu0 0.0
      %4219 = vmatprep.subr.mxu0 0.0
      %4220 = vmatpush1.msra.mxu0 0.0
      %4221 = vmatprep.subr.mxu0 0.0
      %4222 = vmatpush1.msra.mxu0 0.0
      %4223 = vmatprep.subr.mxu0 0.0
      %4224 = vmatpush1.msra.mxu0 0.0
      %4225 = vmatprep.subr.mxu0 0.0
      %4226 = vmatpush1.msra.mxu0 0.0
      %4227 = vmatprep.subr.mxu0 0.0
      %4228 = vmatpush1.msra.mxu0 0.0
      %4229 = vmatprep.mubr.f32.mxu0 0.0
      %4230 = vmatmul.mubr.f32.gmra.mrb[0].mxu0 %v4113
      %v4231 = vpop.f32.mrb[0].mxu0
      %v4232 = vadd.f32 %v3985, %v4231
      %v4233 = vpop.f32.mrb[0].mxu0
      %4234 = vmatprep.mubr.f32.mxu0 0.0
      %4235 = vmatmul.mubr.f32.gmra.mrb[0].mxu0 %v4115
      %v4236 = vpop.f32.mrb[0].mxu0
      %v4237 = vadd.f32 %v3990, %v4236
      %v4238 = vpop.f32.mrb[0].mxu0
      %4239 = vmatprep.mubr.f32.mxu0 0.0
      %4240 = vmatmul.mubr.f32.gmra.mrb[0].mxu0 %v4117
      %v4241 = vpop.f32.mrb[0].mxu0
      %v4242 = vadd.f32 %v3995, %v4241
      %v4243 = vpop.f32.mrb[0].mxu0
      %4244 = vmatprep.mubr.f32.mxu0 0.0
      %4245 = vmatmul.mubr.f32.gmra.mrb[0].mxu0 %v4119
      %v4246 = vpop.f32.mrb[0].mxu0
      %v4247 = vadd.f32 %v4000, %v4246
      %v4248 = vpop.f32.mrb[0].mxu0
      %4249 = vmatprep.mubr.f32.mxu0 0.0
      %4250 = vmatmul.mubr.f32.gmra.mrb[0].mxu0 %v4121
      %v4251 = vpop.f32.mrb[0].mxu0
      %v4252 = vadd.f32 %v4005, %v4251
      %v4253 = vpop.f32.mrb[0].mxu0
      %4254 = vmatprep.mubr.f32.mxu0 0.0
      %4255 = vmatmul.mubr.f32.gmra.mrb[0].mxu0 %v4123
      %v4256 = vpop.f32.mrb[0].mxu0
      %v4257 = vadd.f32 %v4010, %v4256
      %v4258 = vpop.f32.mrb[0].mxu0
      %4259 = vmatprep.mubr.f32.mxu0 0.0
      %4260 = vmatmul.mubr.f32.gmra.mrb[0].mxu0 %v4125
      %v4261 = vpop.f32.mrb[0].mxu0
      %v4262 = vadd.f32 %v4015, %v4261
      %v4263 = vpop.f32.mrb[0].mxu0
      %4264 = vmatprep.mubr.f32.mxu0 0.0
      %4265 = vmatmul.mubr.f32.gmra.mrb[0].mxu0 %v4127
      %v4266 = vpop.f32.mrb[0].mxu0
      %v4267 = vadd.f32 %v4020, %v4266
      %v4268 = vpop.f32.mrb[0].mxu0
      %4269 = vmatprep.mubr.f32.mxu0 0.0
      %4270 = vmatmul.mubr.f32.gmra.mrb[0].mxu0 %v4129
      %v4271 = vpop.f32.mrb[0].mxu0
      %v4272 = vadd.f32 %v4025, %v4271
      %v4273 = vpop.f32.mrb[0].mxu0
      %4274 = vmatprep.mubr.f32.mxu0 0.0
      %4275 = vmatmul.mubr.f32.gmra.mrb[0].mxu0 %v4131
      %v4276 = vpop.f32.mrb[0].mxu0
      %v4277 = vadd.f32 %v4030, %v4276
      %v4278 = vpop.f32.mrb[0].mxu0
      %4279 = vmatprep.mubr.f32.mxu0 0.0
      %4280 = vmatmul.mubr.f32.gmra.mrb[0].mxu0 %v4133
      %v4281 = vpop.f32.mrb[0].mxu0
      %v4282 = vadd.f32 %v4035, %v4281
      %v4283 = vpop.f32.mrb[0].mxu0
      %4284 = vmatprep.mubr.f32.mxu0 0.0
      %4285 = vmatmul.mubr.f32.gmra.mrb[0].mxu0 %v4135
      %v4286 = vpop.f32.mrb[0].mxu0
      %v4287 = vadd.f32 %v4040, %v4286
      %v4288 = vpop.f32.mrb[0].mxu0
      %4289 = vmatprep.mubr.f32.mxu0 0.0
      %4290 = vmatmul.mubr.f32.gmra.mrb[0].mxu0 %v4137
      %v4291 = vpop.f32.mrb[0].mxu0
      %v4292 = vadd.f32 %v4045, %v4291
      %v4293 = vpop.f32.mrb[0].mxu0
      %4294 = vmatprep.mubr.f32.mxu0 0.0
      %4295 = vmatmul.mubr.f32.gmra.mrb[0].mxu0 %v4139
      %v4296 = vpop.f32.mrb[0].mxu0
      %v4297 = vadd.f32 %v4050, %v4296
      %v4298 = vpop.f32.mrb[0].mxu0
      %4299 = vmatprep.mubr.f32.mxu0 0.0
      %4300 = vmatmul.mubr.f32.gmra.mrb[0].mxu0 %v4141
      %v4301 = vpop.f32.mrb[0].mxu0
      %v4302 = vadd.f32 %v4055, %v4301
      %v4303 = vpop.f32.mrb[0].mxu0
      %4304 = vmatprep.mubr.f32.mxu0 0.0
      %4305 = vmatmul.mubr.f32.gmra.mrb[0].mxu0 %v4143
      %v4306 = vpop.f32.mrb[0].mxu0
      %v4307 = vadd.f32 %v4060, %v4306
      %v4308 = vpop.f32.mrb[0].mxu0
      %4309 = vmatprep.mubr.f32.mxu0 0.0
      %4310 = vmatmul.mubr.f32.gmra.mrb[0].mxu0 %v4145
      %v4311 = vpop.f32.mrb[0].mxu0
      %v4312 = vadd.f32 %v4065, %v4311
      %v4313 = vpop.f32.mrb[0].mxu0
      %4314 = vmatprep.mubr.f32.mxu0 0.0
      %4315 = vmatmul.mubr.f32.gmra.mrb[0].mxu0 %v4147
      %v4316 = vpop.f32.mrb[0].mxu0
      %v4317 = vadd.f32 %v4070, %v4316
      %v4318 = vpop.f32.mrb[0].mxu0
      %4319 = vmatprep.mubr.f32.mxu0 0.0
      %4320 = vmatmul.mubr.f32.gmra.mrb[0].mxu0 %v4149
      %v4321 = vpop.f32.mrb[0].mxu0
      %v4322 = vadd.f32 %v4075, %v4321
      %v4323 = vpop.f32.mrb[0].mxu0
      %4324 = vmatprep.mubr.f32.mxu0 0.0
      %4325 = vmatmul.mubr.f32.gmra.mrb[0].mxu0 %v4151
      %v4326 = vpop.f32.mrb[0].mxu0
      %v4327 = vadd.f32 %v4080, %v4326
      %v4328 = vpop.f32.mrb[0].mxu0
      %4329 = vmatprep.mubr.f32.mxu0 0.0
      %4330 = vmatmul.mubr.f32.gmra.mrb[0].mxu0 %v4153
      %v4331 = vpop.f32.mrb[0].mxu0
      %v4332 = vadd.f32 %v4085, %v4331
      %v4333 = vpop.f32.mrb[0].mxu0
      %4334 = vmatprep.mubr.f32.mxu0 0.0
      %4335 = vmatmul.mubr.f32.gmra.mrb[0].mxu0 %v4155
      %v4336 = vpop.f32.mrb[0].mxu0
      %v4337 = vadd.f32 %v4090, %v4336
      %v4338 = vpop.f32.mrb[0].mxu0
      %4339 = vmatprep.mubr.f32.mxu0 0.0
      %4340 = vmatmul.mubr.f32.gmra.mrb[0].mxu0 %v4157
      %v4341 = vpop.f32.mrb[0].mxu0
      %v4342 = vadd.f32 %v4095, %v4341
      %v4343 = vpop.f32.mrb[0].mxu0
      %4344 = vmatprep.mubr.f32.mxu0 0.0
      %4345 = vmatmul.mubr.f32.gmra.mrb[0].mxu0 %v4159
      %v4346 = vpop.f32.mrb[0].mxu0
      %v4347 = vadd.f32 %v4100, %v4346
      %v4348 = vpop.f32.mrb[0].mxu0
      %4349 = vmatprep.mubr.f32.mxu0 0.0
      %4350 = vmatmul.mubr.f32.gmra.mrb[0].mxu0 %v4161
      %v4351 = vpop.f32.mrb[0].mxu0
      %v4352 = vadd.f32 %v4105, %v4351
      %v4353 = vpop.f32.mrb[0].mxu0
      %4354 = vmatprep.mubr.f32.mxu0 0.0
      %4355 = vmatmul.mubr.f32.gmra.mrb[0].mxu0 %v4163
      %v4356 = vpop.f32.mrb[0].mxu0
      %v4357 = vadd.f32 %v4110, %v4356
      %v4358 = vpop.f32.mrb[0].mxu0
      %4359 = vdwg.mxu0
      %s4360 = scalar_lea.vmem %s8, 64
      %v4361 = vld [vmem:[%s4360] sm:$0xff]
      %v4362 = vld [vmem:[%s4360 + $0x8] sm:$0xff]
      %v4363 = vld [vmem:[%s4360 + $0x10] sm:$0xff]
      %v4364 = vld [vmem:[%s4360 + $0x18] sm:$0xff]
      %v4365 = vrot.slane %v3752, 6
      %v4366 = vsel %vm1559, %v1560, %v4365
      %v4367 = vrot.slane %v3753, 6
      %v4368 = vsel %vm1559, %v4365, %v4367
      %v4369 = vrot.slane %v3754, 6
      %v4370 = vsel %vm1559, %v4367, %v4369
      %v4371 = vrot.slane %v3755, 6
      %v4372 = vsel %vm1559, %v4369, %v4371
      %v4373 = vrot.slane %v3756, 6
      %v4374 = vsel %vm1559, %v4371, %v4373
      %v4375 = vrot.slane %v3757, 6
      %v4376 = vsel %vm1559, %v4373, %v4375
      %v4377 = vrot.slane %v3758, 6
      %v4378 = vsel %vm1559, %v4375, %v4377
      %v4379 = vrot.slane %v3759, 6
      %v4380 = vsel %vm1559, %v4377, %v4379
      %v4381 = vrot.slane %v3760, 6
      %v4382 = vsel %vm1559, %v4379, %v4381
      %v4383 = vrot.slane %v3761, 6
      %v4384 = vsel %vm1559, %v4381, %v4383
      %v4385 = vrot.slane %v3762, 6
      %v4386 = vsel %vm1559, %v4383, %v4385
      %v4387 = vrot.slane %v3763, 6
      %v4388 = vsel %vm1559, %v4385, %v4387
      %v4389 = vrot.slane %v3764, 6
      %v4390 = vsel %vm1559, %v4387, %v4389
      %v4391 = vrot.slane %v3765, 6
      %v4392 = vsel %vm1559, %v4389, %v4391
      %v4393 = vrot.slane %v3766, 6
      %v4394 = vsel %vm1559, %v4391, %v4393
      %v4395 = vrot.slane %v3767, 6
      %v4396 = vsel %vm1559, %v4393, %v4395
      %v4397 = vrot.slane %v3768, 6
      %v4398 = vsel %vm1559, %v4395, %v4397
      %v4399 = vrot.slane %v3769, 6
      %v4400 = vsel %vm1559, %v4397, %v4399
      %v4401 = vrot.slane %v3770, 6
      %v4402 = vsel %vm1559, %v4399, %v4401
      %v4403 = vrot.slane %v3771, 6
      %v4404 = vsel %vm1559, %v4401, %v4403
      %v4405 = vrot.slane %v3772, 6
      %v4406 = vsel %vm1559, %v4403, %v4405
      %v4407 = vrot.slane %v3773, 6
      %v4408 = vsel %vm1559, %v4405, %v4407
      %v4409 = vrot.slane %v3774, 6
      %v4410 = vsel %vm1559, %v4407, %v4409
      %v4411 = vrot.slane %v3775, 6
      %v4412 = vsel %vm1559, %v4409, %v4411
      %v4413 = vrot.slane %v3776, 6
      %v4414 = vsel %vm1559, %v4411, %v4413
      %v4415 = vsel %vm3865, %v1561, 0
      %v4417 = vsel %vm3865, %v4366, 0
      %v4419 = vsel %vm3865, %v4368, 0
      %v4421 = vsel %vm3865, %v4370, 0
      %v4423 = vsel %vm3865, %v4372, 0
      %v4425 = vsel %vm3865, %v4374, 0
      %v4427 = vsel %vm3865, %v4376, 0
      %v4429 = vsel %vm3865, %v4378, 0
      %v4431 = vsel %vm3865, %v4380, 0
      %v4433 = vsel %vm3865, %v4382, 0
      %v4435 = vsel %vm3865, %v4384, 0
      %v4437 = vsel %vm3865, %v4386, 0
      %v4439 = vsel %vm3865, %v4388, 0
      %v4441 = vsel %vm3865, %v4390, 0
      %v4443 = vsel %vm3865, %v4392, 0
      %v4445 = vsel %vm3865, %v4394, 0
      %v4447 = vsel %vm3865, %v4396, 0
      %v4449 = vsel %vm3865, %v4398, 0
      %v4451 = vsel %vm3865, %v4400, 0
      %v4453 = vsel %vm3865, %v4402, 0
      %v4455 = vsel %vm3865, %v4404, 0
      %v4457 = vsel %vm3865, %v4406, 0
      %v4459 = vsel %vm3865, %v4408, 0
      %v4461 = vsel %vm3865, %v4410, 0
      %v4463 = vsel %vm3865, %v4412, 0
      %v4465 = vsel %vm3865, %v4414, 0
      %4467 = vmatprep.subr.mxu0 0.0
      %4468 = vmatpush1.msra.mxu0 %v4361
      %4469 = vmatprep.subr.mxu0 0.0
      %4470 = vmatpush1.msra.mxu0 %v4362
      %4471 = vmatprep.subr.mxu0 0.0
      %4472 = vmatpush1.msra.mxu0 %v4363
      %4473 = vmatprep.subr.mxu0 0.0
      %4474 = vmatpush1.msra.mxu0 %v4364
      %4475 = vmatprep.subr.mxu0 0.0
      %4476 = vmatpush1.msra.mxu0 0.0
      %4477 = vmatprep.subr.mxu0 0.0
      %4478 = vmatpush1.msra.mxu0 0.0
      %4479 = vmatprep.subr.mxu0 0.0
      %4480 = vmatpush1.msra.mxu0 0.0
      %4481 = vmatprep.subr.mxu0 0.0
      %4482 = vmatpush1.msra.mxu0 0.0
      %4483 = vmatprep.subr.mxu0 0.0
      %4484 = vmatpush1.msra.mxu0 0.0
      %4485 = vmatprep.subr.mxu0 0.0
      %4486 = vmatpush1.msra.mxu0 0.0
      %4487 = vmatprep.subr.mxu0 0.0
      %4488 = vmatpush1.msra.mxu0 0.0
      %4489 = vmatprep.subr.mxu0 0.0
      %4490 = vmatpush1.msra.mxu0 0.0
      %4491 = vmatprep.subr.mxu0 0.0
      %4492 = vmatpush1.msra.mxu0 0.0
      %4493 = vmatprep.subr.mxu0 0.0
      %4494 = vmatpush1.msra.mxu0 0.0
      %4495 = vmatprep.subr.mxu0 0.0
      %4496 = vmatpush1.msra.mxu0 0.0
      %4497 = vmatprep.subr.mxu0 0.0
      %4498 = vmatpush1.msra.mxu0 0.0
      %4499 = vmatprep.subr.mxu0 0.0
      %4500 = vmatpush1.msra.mxu0 0.0
      %4501 = vmatprep.subr.mxu0 0.0
      %4502 = vmatpush1.msra.mxu0 0.0
      %4503 = vmatprep.subr.mxu0 0.0
      %4504 = vmatpush1.msra.mxu0 0.0
      %4505 = vmatprep.subr.mxu0 0.0
      %4506 = vmatpush1.msra.mxu0 0.0
      %4507 = vmatprep.subr.mxu0 0.0
      %4508 = vmatpush1.msra.mxu0 0.0
      %4509 = vmatprep.subr.mxu0 0.0
      %4510 = vmatpush1.msra.mxu0 0.0
      %4511 = vmatprep.subr.mxu0 0.0
      %4512 = vmatpush1.msra.mxu0 0.0
      %4513 = vmatprep.subr.mxu0 0.0
      %4514 = vmatpush1.msra.mxu0 0.0
      %4515 = vmatprep.subr.mxu0 0.0
      %4516 = vmatpush1.msra.mxu0 0.0
      %4517 = vmatprep.subr.mxu0 0.0
      %4518 = vmatpush1.msra.mxu0 0.0
      %4519 = vmatprep.subr.mxu0 0.0
      %4520 = vmatpush1.msra.mxu0 0.0
      %4521 = vmatprep.subr.mxu0 0.0
      %4522 = vmatpush1.msra.mxu0 0.0
      %4523 = vmatprep.subr.mxu0 0.0
      %4524 = vmatpush1.msra.mxu0 0.0
      %4525 = vmatprep.subr.mxu0 0.0
      %4526 = vmatpush1.msra.mxu0 0.0
      %4527 = vmatprep.subr.mxu0 0.0
      %4528 = vmatpush1.msra.mxu0 0.0
      %4529 = vmatprep.subr.mxu0 0.0
      %4530 = vmatpush1.msra.mxu0 0.0
      %4531 = vmatprep.mubr.f32.mxu0 0.0
      %4532 = vmatmul.mubr.f32.gmra.mrb[0].mxu0 %v4415
      %v4533 = vpop.f32.mrb[0].mxu0
      %v4534 = vadd.f32 0.0, %v4533
      %v4535 = vpop.f32.mrb[0].mxu0
      %4536 = vmatprep.mubr.f32.mxu0 0.0
      %4537 = vmatmul.mubr.f32.gmra.mrb[0].mxu0 %v4417
      %v4538 = vpop.f32.mrb[0].mxu0
      %v4539 = vadd.f32 0.0, %v4538
      %v4540 = vpop.f32.mrb[0].mxu0
      %4541 = vmatprep.mubr.f32.mxu0 0.0
      %4542 = vmatmul.mubr.f32.gmra.mrb[0].mxu0 %v4419
      %v4543 = vpop.f32.mrb[0].mxu0
      %v4544 = vadd.f32 0.0, %v4543
      %v4545 = vpop.f32.mrb[0].mxu0
      %4546 = vmatprep.mubr.f32.mxu0 0.0
      %4547 = vmatmul.mubr.f32.gmra.mrb[0].mxu0 %v4421
      %v4548 = vpop.f32.mrb[0].mxu0
      %v4549 = vadd.f32 0.0, %v4548
      %v4550 = vpop.f32.mrb[0].mxu0
      %4551 = vmatprep.mubr.f32.mxu0 0.0
      %4552 = vmatmul.mubr.f32.gmra.mrb[0].mxu0 %v4423
      %v4553 = vpop.f32.mrb[0].mxu0
      %v4554 = vadd.f32 0.0, %v4553
      %v4555 = vpop.f32.mrb[0].mxu0
      %4556 = vmatprep.mubr.f32.mxu0 0.0
      %4557 = vmatmul.mubr.f32.gmra.mrb[0].mxu0 %v4425
      %v4558 = vpop.f32.mrb[0].mxu0
      %v4559 = vadd.f32 0.0, %v4558
      %v4560 = vpop.f32.mrb[0].mxu0
      %4561 = vmatprep.mubr.f32.mxu0 0.0
      %4562 = vmatmul.mubr.f32.gmra.mrb[0].mxu0 %v4427
      %v4563 = vpop.f32.mrb[0].mxu0
      %v4564 = vadd.f32 0.0, %v4563
      %v4565 = vpop.f32.mrb[0].mxu0
      %4566 = vmatprep.mubr.f32.mxu0 0.0
      %4567 = vmatmul.mubr.f32.gmra.mrb[0].mxu0 %v4429
      %v4568 = vpop.f32.mrb[0].mxu0
      %v4569 = vadd.f32 0.0, %v4568
      %v4570 = vpop.f32.mrb[0].mxu0
      %4571 = vmatprep.mubr.f32.mxu0 0.0
      %4572 = vmatmul.mubr.f32.gmra.mrb[0].mxu0 %v4431
      %v4573 = vpop.f32.mrb[0].mxu0
      %v4574 = vadd.f32 0.0, %v4573
      %v4575 = vpop.f32.mrb[0].mxu0
      %4576 = vmatprep.mubr.f32.mxu0 0.0
      %4577 = vmatmul.mubr.f32.gmra.mrb[0].mxu0 %v4433
      %v4578 = vpop.f32.mrb[0].mxu0
      %v4579 = vadd.f32 0.0, %v4578
      %v4580 = vpop.f32.mrb[0].mxu0
      %4581 = vmatprep.mubr.f32.mxu0 0.0
      %4582 = vmatmul.mubr.f32.gmra.mrb[0].mxu0 %v4435
      %v4583 = vpop.f32.mrb[0].mxu0
      %v4584 = vadd.f32 0.0, %v4583
      %v4585 = vpop.f32.mrb[0].mxu0
      %4586 = vmatprep.mubr.f32.mxu0 0.0
      %4587 = vmatmul.mubr.f32.gmra.mrb[0].mxu0 %v4437
      %v4588 = vpop.f32.mrb[0].mxu0
      %v4589 = vadd.f32 0.0, %v4588
      %v4590 = vpop.f32.mrb[0].mxu0
      %4591 = vmatprep.mubr.f32.mxu0 0.0
      %4592 = vmatmul.mubr.f32.gmra.mrb[0].mxu0 %v4439
      %v4593 = vpop.f32.mrb[0].mxu0
      %v4594 = vadd.f32 0.0, %v4593
      %v4595 = vpop.f32.mrb[0].mxu0
      %4596 = vmatprep.mubr.f32.mxu0 0.0
      %4597 = vmatmul.mubr.f32.gmra.mrb[0].mxu0 %v4441
      %v4598 = vpop.f32.mrb[0].mxu0
      %v4599 = vadd.f32 0.0, %v4598
      %v4600 = vpop.f32.mrb[0].mxu0
      %4601 = vmatprep.mubr.f32.mxu0 0.0
      %4602 = vmatmul.mubr.f32.gmra.mrb[0].mxu0 %v4443
      %v4603 = vpop.f32.mrb[0].mxu0
      %v4604 = vadd.f32 0.0, %v4603
      %v4605 = vpop.f32.mrb[0].mxu0
      %4606 = vmatprep.mubr.f32.mxu0 0.0
      %4607 = vmatmul.mubr.f32.gmra.mrb[0].mxu0 %v4445
      %v4608 = vpop.f32.mrb[0].mxu0
      %v4609 = vadd.f32 0.0, %v4608
      %v4610 = vpop.f32.mrb[0].mxu0
      %4611 = vmatprep.mubr.f32.mxu0 0.0
      %4612 = vmatmul.mubr.f32.gmra.mrb[0].mxu0 %v4447
      %v4613 = vpop.f32.mrb[0].mxu0
      %v4614 = vadd.f32 0.0, %v4613
      %v4615 = vpop.f32.mrb[0].mxu0
      %4616 = vmatprep.mubr.f32.mxu0 0.0
      %4617 = vmatmul.mubr.f32.gmra.mrb[0].mxu0 %v4449
      %v4618 = vpop.f32.mrb[0].mxu0
      %v4619 = vadd.f32 0.0, %v4618
      %v4620 = vpop.f32.mrb[0].mxu0
      %4621 = vmatprep.mubr.f32.mxu0 0.0
      %4622 = vmatmul.mubr.f32.gmra.mrb[0].mxu0 %v4451
      %v4623 = vpop.f32.mrb[0].mxu0
      %v4624 = vadd.f32 0.0, %v4623
      %v4625 = vpop.f32.mrb[0].mxu0
      %4626 = vmatprep.mubr.f32.mxu0 0.0
      %4627 = vmatmul.mubr.f32.gmra.mrb[0].mxu0 %v4453
      %v4628 = vpop.f32.mrb[0].mxu0
      %v4629 = vadd.f32 0.0, %v4628
      %v4630 = vpop.f32.mrb[0].mxu0
      %4631 = vmatprep.mubr.f32.mxu0 0.0
      %4632 = vmatmul.mubr.f32.gmra.mrb[0].mxu0 %v4455
      %v4633 = vpop.f32.mrb[0].mxu0
      %v4634 = vadd.f32 0.0, %v4633
      %v4635 = vpop.f32.mrb[0].mxu0
      %4636 = vmatprep.mubr.f32.mxu0 0.0
      %4637 = vmatmul.mubr.f32.gmra.mrb[0].mxu0 %v4457
      %v4638 = vpop.f32.mrb[0].mxu0
      %v4639 = vadd.f32 0.0, %v4638
      %v4640 = vpop.f32.mrb[0].mxu0
      %4641 = vmatprep.mubr.f32.mxu0 0.0
      %4642 = vmatmul.mubr.f32.gmra.mrb[0].mxu0 %v4459
      %v4643 = vpop.f32.mrb[0].mxu0
      %v4644 = vadd.f32 0.0, %v4643
      %v4645 = vpop.f32.mrb[0].mxu0
      %4646 = vmatprep.mubr.f32.mxu0 0.0
      %4647 = vmatmul.mubr.f32.gmra.mrb[0].mxu0 %v4461
      %v4648 = vpop.f32.mrb[0].mxu0
      %v4649 = vadd.f32 0.0, %v4648
      %v4650 = vpop.f32.mrb[0].mxu0
      %4651 = vmatprep.mubr.f32.mxu0 0.0
      %4652 = vmatmul.mubr.f32.gmra.mrb[0].mxu0 %v4463
      %v4653 = vpop.f32.mrb[0].mxu0
      %v4654 = vadd.f32 0.0, %v4653
      %v4655 = vpop.f32.mrb[0].mxu0
      %4656 = vmatprep.mubr.f32.mxu0 0.0
      %4657 = vmatmul.mubr.f32.gmra.mrb[0].mxu0 %v4465
      %v4658 = vpop.f32.mrb[0].mxu0
      %v4659 = vadd.f32 0.0, %v4658
      %v4660 = vpop.f32.mrb[0].mxu0
      %4661 = vdwg.mxu0
      %v4662 = vadd.f32 %v4232, %v4534
      %v4663 = vadd.f32 %v4237, %v4539
      %v4664 = vadd.f32 %v4242, %v4544
      %v4665 = vadd.f32 %v4247, %v4549
      %v4666 = vadd.f32 %v4252, %v4554
      %v4667 = vadd.f32 %v4257, %v4559
      %v4668 = vadd.f32 %v4262, %v4564
      %v4669 = vadd.f32 %v4267, %v4569
      %v4670 = vadd.f32 %v4272, %v4574
      %v4671 = vadd.f32 %v4277, %v4579
      %v4672 = vadd.f32 %v4282, %v4584
      %v4673 = vadd.f32 %v4287, %v4589
      %v4674 = vadd.f32 %v4292, %v4594
      %v4675 = vadd.f32 %v4297, %v4599
      %v4676 = vadd.f32 %v4302, %v4604
      %v4677 = vadd.f32 %v4307, %v4609
      %v4678 = vadd.f32 %v4312, %v4614
      %v4679 = vadd.f32 %v4317, %v4619
      %v4680 = vadd.f32 %v4322, %v4624
      %v4681 = vadd.f32 %v4327, %v4629
      %v4682 = vadd.f32 %v4332, %v4634
      %v4683 = vadd.f32 %v4337, %v4639
      %v4684 = vadd.f32 %v4342, %v4644
      %v4685 = vadd.f32 %v4347, %v4649
      %v4686 = vadd.f32 %v4352, %v4654
      %v4687 = vadd.f32 %v4357, %v4659
      %s4688 = scalar_lea.vmem %s8, 96
      %v4689 = vld [vmem:[%s4688] sm:$0xff]
      %v4690 = vld [vmem:[%s4688 + $0x8] sm:$0xff]
      %v4691 = vld [vmem:[%s4688 + $0x10] sm:$0xff]
      %v4692 = vld [vmem:[%s4688 + $0x18] sm:$0xff]
      %v4693 = vrot.slane %v3752, 5
      %v4694 = vsel %vm1001, %v1002, %v4693
      %v4695 = vrot.slane %v3753, 5
      %v4696 = vsel %vm1001, %v4693, %v4695
      %v4697 = vrot.slane %v3754, 5
      %v4698 = vsel %vm1001, %v4695, %v4697
      %v4699 = vrot.slane %v3755, 5
      %v4700 = vsel %vm1001, %v4697, %v4699
      %v4701 = vrot.slane %v3756, 5
      %v4702 = vsel %vm1001, %v4699, %v4701
      %v4703 = vrot.slane %v3757, 5
      %v4704 = vsel %vm1001, %v4701, %v4703
      %v4705 = vrot.slane %v3758, 5
      %v4706 = vsel %vm1001, %v4703, %v4705
      %v4707 = vrot.slane %v3759, 5
      %v4708 = vsel %vm1001, %v4705, %v4707
      %v4709 = vrot.slane %v3760, 5
      %v4710 = vsel %vm1001, %v4707, %v4709
      %v4711 = vrot.slane %v3761, 5
      %v4712 = vsel %vm1001, %v4709, %v4711
      %v4713 = vrot.slane %v3762, 5
      %v4714 = vsel %vm1001, %v4711, %v4713
      %v4715 = vrot.slane %v3763, 5
      %v4716 = vsel %vm1001, %v4713, %v4715
      %v4717 = vrot.slane %v3764, 5
      %v4718 = vsel %vm1001, %v4715, %v4717
      %v4719 = vrot.slane %v3765, 5
      %v4720 = vsel %vm1001, %v4717, %v4719
      %v4721 = vrot.slane %v3766, 5
      %v4722 = vsel %vm1001, %v4719, %v4721
      %v4723 = vrot.slane %v3767, 5
      %v4724 = vsel %vm1001, %v4721, %v4723
      %v4725 = vrot.slane %v3768, 5
      %v4726 = vsel %vm1001, %v4723, %v4725
      %v4727 = vrot.slane %v3769, 5
      %v4728 = vsel %vm1001, %v4725, %v4727
      %v4729 = vrot.slane %v3770, 5
      %v4730 = vsel %vm1001, %v4727, %v4729
      %v4731 = vrot.slane %v3771, 5
      %v4732 = vsel %vm1001, %v4729, %v4731
      %v4733 = vrot.slane %v3772, 5
      %v4734 = vsel %vm1001, %v4731, %v4733
      %v4735 = vrot.slane %v3773, 5
      %v4736 = vsel %vm1001, %v4733, %v4735
      %v4737 = vrot.slane %v3774, 5
      %v4738 = vsel %vm1001, %v4735, %v4737
      %v4739 = vrot.slane %v3775, 5
      %v4740 = vsel %vm1001, %v4737, %v4739
      %v4741 = vrot.slane %v3776, 5
      %v4742 = vsel %vm1001, %v4739, %v4741
      %v4743 = vsel %vm3865, %v1003, 0
      %v4745 = vsel %vm3865, %v4694, 0
      %v4747 = vsel %vm3865, %v4696, 0
      %v4749 = vsel %vm3865, %v4698, 0
      %v4751 = vsel %vm3865, %v4700, 0
      %v4753 = vsel %vm3865, %v4702, 0
      %v4755 = vsel %vm3865, %v4704, 0
      %v4757 = vsel %vm3865, %v4706, 0
      %v4759 = vsel %vm3865, %v4708, 0
      %v4761 = vsel %vm3865, %v4710, 0
      %v4763 = vsel %vm3865, %v4712, 0
      %v4765 = vsel %vm3865, %v4714, 0
      %v4767 = vsel %vm3865, %v4716, 0
      %v4769 = vsel %vm3865, %v4718, 0
      %v4771 = vsel %vm3865, %v4720, 0
      %v4773 = vsel %vm3865, %v4722, 0
      %v4775 = vsel %vm3865, %v4724, 0
      %v4777 = vsel %vm3865, %v4726, 0
      %v4779 = vsel %vm3865, %v4728, 0
      %v4781 = vsel %vm3865, %v4730, 0
      %v4783 = vsel %vm3865, %v4732, 0
      %v4785 = vsel %vm3865, %v4734, 0
      %v4787 = vsel %vm3865, %v4736, 0
      %v4789 = vsel %vm3865, %v4738, 0
      %v4791 = vsel %vm3865, %v4740, 0
      %v4793 = vsel %vm3865, %v4742, 0
      %4795 = vmatprep.subr.mxu0 0.0
      %4796 = vmatpush1.msra.mxu0 %v4689
      %4797 = vmatprep.subr.mxu0 0.0
      %4798 = vmatpush1.msra.mxu0 %v4690
      %4799 = vmatprep.subr.mxu0 0.0
      %4800 = vmatpush1.msra.mxu0 %v4691
      %4801 = vmatprep.subr.mxu0 0.0
      %4802 = vmatpush1.msra.mxu0 %v4692
      %4803 = vmatprep.subr.mxu0 0.0
      %4804 = vmatpush1.msra.mxu0 0.0
      %4805 = vmatprep.subr.mxu0 0.0
      %4806 = vmatpush1.msra.mxu0 0.0
      %4807 = vmatprep.subr.mxu0 0.0
      %4808 = vmatpush1.msra.mxu0 0.0
      %4809 = vmatprep.subr.mxu0 0.0
      %4810 = vmatpush1.msra.mxu0 0.0
      %4811 = vmatprep.subr.mxu0 0.0
      %4812 = vmatpush1.msra.mxu0 0.0
      %4813 = vmatprep.subr.mxu0 0.0
      %4814 = vmatpush1.msra.mxu0 0.0
      %4815 = vmatprep.subr.mxu0 0.0
      %4816 = vmatpush1.msra.mxu0 0.0
      %4817 = vmatprep.subr.mxu0 0.0
      %4818 = vmatpush1.msra.mxu0 0.0
      %4819 = vmatprep.subr.mxu0 0.0
      %4820 = vmatpush1.msra.mxu0 0.0
      %4821 = vmatprep.subr.mxu0 0.0
      %4822 = vmatpush1.msra.mxu0 0.0
      %4823 = vmatprep.subr.mxu0 0.0
      %4824 = vmatpush1.msra.mxu0 0.0
      %4825 = vmatprep.subr.mxu0 0.0
      %4826 = vmatpush1.msra.mxu0 0.0
      %4827 = vmatprep.subr.mxu0 0.0
      %4828 = vmatpush1.msra.mxu0 0.0
      %4829 = vmatprep.subr.mxu0 0.0
      %4830 = vmatpush1.msra.mxu0 0.0
      %4831 = vmatprep.subr.mxu0 0.0
      %4832 = vmatpush1.msra.mxu0 0.0
      %4833 = vmatprep.subr.mxu0 0.0
      %4834 = vmatpush1.msra.mxu0 0.0
      %4835 = vmatprep.subr.mxu0 0.0
      %4836 = vmatpush1.msra.mxu0 0.0
      %4837 = vmatprep.subr.mxu0 0.0
      %4838 = vmatpush1.msra.mxu0 0.0
      %4839 = vmatprep.subr.mxu0 0.0
      %4840 = vmatpush1.msra.mxu0 0.0
      %4841 = vmatprep.subr.mxu0 0.0
      %4842 = vmatpush1.msra.mxu0 0.0
      %4843 = vmatprep.subr.mxu0 0.0
      %4844 = vmatpush1.msra.mxu0 0.0
      %4845 = vmatprep.subr.mxu0 0.0
      %4846 = vmatpush1.msra.mxu0 0.0
      %4847 = vmatprep.subr.mxu0 0.0
      %4848 = vmatpush1.msra.mxu0 0.0
      %4849 = vmatprep.subr.mxu0 0.0
      %4850 = vmatpush1.msra.mxu0 0.0
      %4851 = vmatprep.subr.mxu0 0.0
      %4852 = vmatpush1.msra.mxu0 0.0
      %4853 = vmatprep.subr.mxu0 0.0
      %4854 = vmatpush1.msra.mxu0 0.0
      %4855 = vmatprep.subr.mxu0 0.0
      %4856 = vmatpush1.msra.mxu0 0.0
      %4857 = vmatprep.subr.mxu0 0.0
      %4858 = vmatpush1.msra.mxu0 0.0
      %4859 = vmatprep.mubr.f32.mxu0 0.0
      %4860 = vmatmul.mubr.f32.gmra.mrb[0].mxu0 %v4743
      %v4861 = vpop.f32.mrb[0].mxu0
      %v4862 = vadd.f32 0.0, %v4861
      %v4863 = vpop.f32.mrb[0].mxu0
      %4864 = vmatprep.mubr.f32.mxu0 0.0
      %4865 = vmatmul.mubr.f32.gmra.mrb[0].mxu0 %v4745
      %v4866 = vpop.f32.mrb[0].mxu0
      %v4867 = vadd.f32 0.0, %v4866
      %v4868 = vpop.f32.mrb[0].mxu0
      %4869 = vmatprep.mubr.f32.mxu0 0.0
      %4870 = vmatmul.mubr.f32.gmra.mrb[0].mxu0 %v4747
      %v4871 = vpop.f32.mrb[0].mxu0
      %v4872 = vadd.f32 0.0, %v4871
      %v4873 = vpop.f32.mrb[0].mxu0
      %4874 = vmatprep.mubr.f32.mxu0 0.0
      %4875 = vmatmul.mubr.f32.gmra.mrb[0].mxu0 %v4749
      %v4876 = vpop.f32.mrb[0].mxu0
      %v4877 = vadd.f32 0.0, %v4876
      %v4878 = vpop.f32.mrb[0].mxu0
      %4879 = vmatprep.mubr.f32.mxu0 0.0
      %4880 = vmatmul.mubr.f32.gmra.mrb[0].mxu0 %v4751
      %v4881 = vpop.f32.mrb[0].mxu0
      %v4882 = vadd.f32 0.0, %v4881
      %v4883 = vpop.f32.mrb[0].mxu0
      %4884 = vmatprep.mubr.f32.mxu0 0.0
      %4885 = vmatmul.mubr.f32.gmra.mrb[0].mxu0 %v4753
      %v4886 = vpop.f32.mrb[0].mxu0
      %v4887 = vadd.f32 0.0, %v4886
      %v4888 = vpop.f32.mrb[0].mxu0
      %4889 = vmatprep.mubr.f32.mxu0 0.0
      %4890 = vmatmul.mubr.f32.gmra.mrb[0].mxu0 %v4755
      %v4891 = vpop.f32.mrb[0].mxu0
      %v4892 = vadd.f32 0.0, %v4891
      %v4893 = vpop.f32.mrb[0].mxu0
      %4894 = vmatprep.mubr.f32.mxu0 0.0
      %4895 = vmatmul.mubr.f32.gmra.mrb[0].mxu0 %v4757
      %v4896 = vpop.f32.mrb[0].mxu0
      %v4897 = vadd.f32 0.0, %v4896
      %v4898 = vpop.f32.mrb[0].mxu0
      %4899 = vmatprep.mubr.f32.mxu0 0.0
      %4900 = vmatmul.mubr.f32.gmra.mrb[0].mxu0 %v4759
      %v4901 = vpop.f32.mrb[0].mxu0
      %v4902 = vadd.f32 0.0, %v4901
      %v4903 = vpop.f32.mrb[0].mxu0
      %4904 = vmatprep.mubr.f32.mxu0 0.0
      %4905 = vmatmul.mubr.f32.gmra.mrb[0].mxu0 %v4761
      %v4906 = vpop.f32.mrb[0].mxu0
      %v4907 = vadd.f32 0.0, %v4906
      %v4908 = vpop.f32.mrb[0].mxu0
      %4909 = vmatprep.mubr.f32.mxu0 0.0
      %4910 = vmatmul.mubr.f32.gmra.mrb[0].mxu0 %v4763
      %v4911 = vpop.f32.mrb[0].mxu0
      %v4912 = vadd.f32 0.0, %v4911
      %v4913 = vpop.f32.mrb[0].mxu0
      %4914 = vmatprep.mubr.f32.mxu0 0.0
      %4915 = vmatmul.mubr.f32.gmra.mrb[0].mxu0 %v4765
      %v4916 = vpop.f32.mrb[0].mxu0
      %v4917 = vadd.f32 0.0, %v4916
      %v4918 = vpop.f32.mrb[0].mxu0
      %4919 = vmatprep.mubr.f32.mxu0 0.0
      %4920 = vmatmul.mubr.f32.gmra.mrb[0].mxu0 %v4767
      %v4921 = vpop.f32.mrb[0].mxu0
      %v4922 = vadd.f32 0.0, %v4921
      %v4923 = vpop.f32.mrb[0].mxu0
      %4924 = vmatprep.mubr.f32.mxu0 0.0
      %4925 = vmatmul.mubr.f32.gmra.mrb[0].mxu0 %v4769
      %v4926 = vpop.f32.mrb[0].mxu0
      %v4927 = vadd.f32 0.0, %v4926
      %v4928 = vpop.f32.mrb[0].mxu0
      %4929 = vmatprep.mubr.f32.mxu0 0.0
      %4930 = vmatmul.mubr.f32.gmra.mrb[0].mxu0 %v4771
      %v4931 = vpop.f32.mrb[0].mxu0
      %v4932 = vadd.f32 0.0, %v4931
      %v4933 = vpop.f32.mrb[0].mxu0
      %4934 = vmatprep.mubr.f32.mxu0 0.0
      %4935 = vmatmul.mubr.f32.gmra.mrb[0].mxu0 %v4773
      %v4936 = vpop.f32.mrb[0].mxu0
      %v4937 = vadd.f32 0.0, %v4936
      %v4938 = vpop.f32.mrb[0].mxu0
      %4939 = vmatprep.mubr.f32.mxu0 0.0
      %4940 = vmatmul.mubr.f32.gmra.mrb[0].mxu0 %v4775
      %v4941 = vpop.f32.mrb[0].mxu0
      %v4942 = vadd.f32 0.0, %v4941
      %v4943 = vpop.f32.mrb[0].mxu0
      %4944 = vmatprep.mubr.f32.mxu0 0.0
      %4945 = vmatmul.mubr.f32.gmra.mrb[0].mxu0 %v4777
      %v4946 = vpop.f32.mrb[0].mxu0
      %v4947 = vadd.f32 0.0, %v4946
      %v4948 = vpop.f32.mrb[0].mxu0
      %4949 = vmatprep.mubr.f32.mxu0 0.0
      %4950 = vmatmul.mubr.f32.gmra.mrb[0].mxu0 %v4779
      %v4951 = vpop.f32.mrb[0].mxu0
      %v4952 = vadd.f32 0.0, %v4951
      %v4953 = vpop.f32.mrb[0].mxu0
      %4954 = vmatprep.mubr.f32.mxu0 0.0
      %4955 = vmatmul.mubr.f32.gmra.mrb[0].mxu0 %v4781
      %v4956 = vpop.f32.mrb[0].mxu0
      %v4957 = vadd.f32 0.0, %v4956
      %v4958 = vpop.f32.mrb[0].mxu0
      %4959 = vmatprep.mubr.f32.mxu0 0.0
      %4960 = vmatmul.mubr.f32.gmra.mrb[0].mxu0 %v4783
      %v4961 = vpop.f32.mrb[0].mxu0
      %v4962 = vadd.f32 0.0, %v4961
      %v4963 = vpop.f32.mrb[0].mxu0
      %4964 = vmatprep.mubr.f32.mxu0 0.0
      %4965 = vmatmul.mubr.f32.gmra.mrb[0].mxu0 %v4785
      %v4966 = vpop.f32.mrb[0].mxu0
      %v4967 = vadd.f32 0.0, %v4966
      %v4968 = vpop.f32.mrb[0].mxu0
      %4969 = vmatprep.mubr.f32.mxu0 0.0
      %4970 = vmatmul.mubr.f32.gmra.mrb[0].mxu0 %v4787
      %v4971 = vpop.f32.mrb[0].mxu0
      %v4972 = vadd.f32 0.0, %v4971
      %v4973 = vpop.f32.mrb[0].mxu0
      %4974 = vmatprep.mubr.f32.mxu0 0.0
      %4975 = vmatmul.mubr.f32.gmra.mrb[0].mxu0 %v4789
      %v4976 = vpop.f32.mrb[0].mxu0
      %v4977 = vadd.f32 0.0, %v4976
      %v4978 = vpop.f32.mrb[0].mxu0
      %4979 = vmatprep.mubr.f32.mxu0 0.0
      %4980 = vmatmul.mubr.f32.gmra.mrb[0].mxu0 %v4791
      %v4981 = vpop.f32.mrb[0].mxu0
      %v4982 = vadd.f32 0.0, %v4981
      %v4983 = vpop.f32.mrb[0].mxu0
      %4984 = vmatprep.mubr.f32.mxu0 0.0
      %4985 = vmatmul.mubr.f32.gmra.mrb[0].mxu0 %v4793
      %v4986 = vpop.f32.mrb[0].mxu0
      %v4987 = vadd.f32 0.0, %v4986
      %v4988 = vpop.f32.mrb[0].mxu0
      %4989 = vdwg.mxu0
      %v4990 = vadd.f32 %v4662, %v4862
      %v4991 = vadd.f32 %v4663, %v4867
      %v4992 = vadd.f32 %v4664, %v4872
      %v4993 = vadd.f32 %v4665, %v4877
      %v4994 = vadd.f32 %v4666, %v4882
      %v4995 = vadd.f32 %v4667, %v4887
      %v4996 = vadd.f32 %v4668, %v4892
      %v4997 = vadd.f32 %v4669, %v4897
      %v4998 = vadd.f32 %v4670, %v4902
      %v4999 = vadd.f32 %v4671, %v4907
      %v5000 = vadd.f32 %v4672, %v4912
      %v5001 = vadd.f32 %v4673, %v4917
      %v5002 = vadd.f32 %v4674, %v4922
      %v5003 = vadd.f32 %v4675, %v4927
      %v5004 = vadd.f32 %v4676, %v4932
      %v5005 = vadd.f32 %v4677, %v4937
      %v5006 = vadd.f32 %v4678, %v4942
      %v5007 = vadd.f32 %v4679, %v4947
      %v5008 = vadd.f32 %v4680, %v4952
      %v5009 = vadd.f32 %v4681, %v4957
      %v5010 = vadd.f32 %v4682, %v4962
      %v5011 = vadd.f32 %v4683, %v4967
      %v5012 = vadd.f32 %v4684, %v4972
      %v5013 = vadd.f32 %v4685, %v4977
      %v5014 = vadd.f32 %v4686, %v4982
      %v5015 = vadd.f32 %v4687, %v4987
      %v5016 = vld [vmem:[%s9] sm:$0x1]
      %v5018 = vlaneseq
      %v5019 = vshrl.u32 %v5018, 7
      %v5020 = vsub.s32 0, %v5019
      %v5021 = vrot.slane %v5016, %v5020
      %v5023 = vadd.f32 %v4990, %v5021
      %v5024 = vadd.f32 %v4991, %v5021
      %v5025 = vadd.f32 %v4992, %v5021
      %v5026 = vadd.f32 %v4993, %v5021
      %v5027 = vadd.f32 %v4994, %v5021
      %v5028 = vadd.f32 %v4995, %v5021
      %v5029 = vadd.f32 %v4996, %v5021
      %v5030 = vadd.f32 %v4997, %v5021
      %v5031 = vadd.f32 %v4998, %v5021
      %v5032 = vadd.f32 %v4999, %v5021
      %v5033 = vadd.f32 %v5000, %v5021
      %v5034 = vadd.f32 %v5001, %v5021
      %v5035 = vadd.f32 %v5002, %v5021
      %v5036 = vadd.f32 %v5003, %v5021
      %v5037 = vadd.f32 %v5004, %v5021
      %v5038 = vadd.f32 %v5005, %v5021
      %v5039 = vadd.f32 %v5006, %v5021
      %v5040 = vadd.f32 %v5007, %v5021
      %v5041 = vadd.f32 %v5008, %v5021
      %v5042 = vadd.f32 %v5009, %v5021
      %v5043 = vadd.f32 %v5010, %v5021
      %v5044 = vadd.f32 %v5011, %v5021
      %v5045 = vadd.f32 %v5012, %v5021
      %v5046 = vadd.f32 %v5013, %v5021
      %v5047 = vadd.f32 %v5014, %v5021
      %v5048 = vadd.f32 %v5015, %v5021
      %v5049 = vmax.f32 %v5023, 0.0
      %v5050 = vmax.f32 %v5024, 0.0
      %v5051 = vmax.f32 %v5025, 0.0
      %v5052 = vmax.f32 %v5026, 0.0
      %v5053 = vmax.f32 %v5027, 0.0
      %v5054 = vmax.f32 %v5028, 0.0
      %v5055 = vmax.f32 %v5029, 0.0
      %v5056 = vmax.f32 %v5030, 0.0
      %v5057 = vmax.f32 %v5031, 0.0
      %v5058 = vmax.f32 %v5032, 0.0
      %v5059 = vmax.f32 %v5033, 0.0
      %v5060 = vmax.f32 %v5034, 0.0
      %v5061 = vmax.f32 %v5035, 0.0
      %v5062 = vmax.f32 %v5036, 0.0
      %v5063 = vmax.f32 %v5037, 0.0
      %v5064 = vmax.f32 %v5038, 0.0
      %v5065 = vmax.f32 %v5039, 0.0
      %v5066 = vmax.f32 %v5040, 0.0
      %v5067 = vmax.f32 %v5041, 0.0
      %v5068 = vmax.f32 %v5042, 0.0
      %v5069 = vmax.f32 %v5043, 0.0
      %v5070 = vmax.f32 %v5044, 0.0
      %v5071 = vmax.f32 %v5045, 0.0
      %v5072 = vmax.f32 %v5046, 0.0
      %v5073 = vmax.f32 %v5047, 0.0
      %v5074 = vmax.f32 %v5048, 0.0
      %5076 = vset.pattern.permute.xlu0 0
      %5077 = vperm.xlu0 %5076, %v442
      %v5078 = vpop.permute.xlu0 %5077
      %5081 = vset.pattern.permute.xlu0 0
      %5082 = vperm.xlu0 %5081, %v443
      %v5083 = vpop.permute.xlu0 %5082
      %5086 = vset.pattern.permute.xlu0 0
      %5087 = vperm.xlu0 %5086, %v444
      %v5088 = vpop.permute.xlu0 %5087
      %5091 = vset.pattern.permute.xlu0 0
      %5092 = vperm.xlu0 %5091, %v445
      %v5093 = vpop.permute.xlu0 %5092
      %5096 = vset.pattern.permute.xlu0 0
      %5097 = vperm.xlu0 %5096, %v446
      %v5098 = vpop.permute.xlu0 %5097
      %5101 = vset.pattern.permute.xlu0 0
      %5102 = vperm.xlu0 %5101, %v447
      %v5103 = vpop.permute.xlu0 %5102
      %5106 = vset.pattern.permute.xlu0 0
      %5107 = vperm.xlu0 %5106, %v448
      %v5108 = vpop.permute.xlu0 %5107
      %5111 = vset.pattern.permute.xlu0 0
      %5112 = vperm.xlu0 %5111, %v449
      %v5113 = vpop.permute.xlu0 %5112
      %5116 = vset.pattern.permute.xlu0 0
      %5117 = vperm.xlu0 %5116, %v450
      %v5118 = vpop.permute.xlu0 %5117
      %5121 = vset.pattern.permute.xlu0 0
      %5122 = vperm.xlu0 %5121, %v451
      %v5123 = vpop.permute.xlu0 %5122
      %5126 = vset.pattern.permute.xlu0 0
      %5127 = vperm.xlu0 %5126, %v452
      %v5128 = vpop.permute.xlu0 %5127
      %5131 = vset.pattern.permute.xlu0 0
      %5132 = vperm.xlu0 %5131, %v453
      %v5133 = vpop.permute.xlu0 %5132
      %5136 = vset.pattern.permute.xlu0 0
      %5137 = vperm.xlu0 %5136, %v454
      %v5138 = vpop.permute.xlu0 %5137
      %5141 = vset.pattern.permute.xlu0 0
      %5142 = vperm.xlu0 %5141, %v455
      %v5143 = vpop.permute.xlu0 %5142
      %5146 = vset.pattern.permute.xlu0 0
      %5147 = vperm.xlu0 %5146, %v456
      %v5148 = vpop.permute.xlu0 %5147
      %5151 = vset.pattern.permute.xlu0 0
      %5152 = vperm.xlu0 %5151, %v457
      %v5153 = vpop.permute.xlu0 %5152
      %5156 = vset.pattern.permute.xlu0 0
      %5157 = vperm.xlu0 %5156, %v458
      %v5158 = vpop.permute.xlu0 %5157
      %5161 = vset.pattern.permute.xlu0 0
      %5162 = vperm.xlu0 %5161, %v459
      %v5163 = vpop.permute.xlu0 %5162
      %5166 = vset.pattern.permute.xlu0 0
      %5167 = vperm.xlu0 %5166, %v460
      %v5168 = vpop.permute.xlu0 %5167
      %5171 = vset.pattern.permute.xlu0 0
      %5172 = vperm.xlu0 %5171, %v461
      %v5173 = vpop.permute.xlu0 %5172
      %5176 = vset.pattern.permute.xlu0 0
      %5177 = vperm.xlu0 %5176, %v462
      %v5178 = vpop.permute.xlu0 %5177
      %5181 = vset.pattern.permute.xlu0 0
      %5182 = vperm.xlu0 %5181, %v463
      %v5183 = vpop.permute.xlu0 %5182
      %5186 = vset.pattern.permute.xlu0 0
      %5187 = vperm.xlu0 %5186, %v464
      %v5188 = vpop.permute.xlu0 %5187
      %5191 = vset.pattern.permute.xlu0 0
      %5192 = vperm.xlu0 %5191, %v465
      %v5193 = vpop.permute.xlu0 %5192
      %5196 = vset.pattern.permute.xlu0 0
      %5197 = vperm.xlu0 %5196, %v466
      %v5198 = vpop.permute.xlu0 %5197
      %5201 = vset.pattern.permute.xlu0 0
      %5202 = vperm.xlu0 %5201, %v467
      %v5203 = vpop.permute.xlu0 %5202
      %v5205 = vmul.f32 %v5049, %v5078
      %v5206 = vmul.f32 %v5050, %v5083
      %v5207 = vmul.f32 %v5051, %v5088
      %v5208 = vmul.f32 %v5052, %v5093
      %v5209 = vmul.f32 %v5053, %v5098
      %v5210 = vmul.f32 %v5054, %v5103
      %v5211 = vmul.f32 %v5055, %v5108
      %v5212 = vmul.f32 %v5056, %v5113
      %v5213 = vmul.f32 %v5057, %v5118
      %v5214 = vmul.f32 %v5058, %v5123
      %v5215 = vmul.f32 %v5059, %v5128
      %v5216 = vmul.f32 %v5060, %v5133
      %v5217 = vmul.f32 %v5061, %v5138
      %v5218 = vmul.f32 %v5062, %v5143
      %v5219 = vmul.f32 %v5063, %v5148
      %v5220 = vmul.f32 %v5064, %v5153
      %v5221 = vmul.f32 %v5065, %v5158
      %v5222 = vmul.f32 %v5066, %v5163
      %v5223 = vmul.f32 %v5067, %v5168
      %v5224 = vmul.f32 %v5068, %v5173
      %v5225 = vmul.f32 %v5069, %v5178
      %v5226 = vmul.f32 %v5070, %v5183
      %v5227 = vmul.f32 %v5071, %v5188
      %v5228 = vmul.f32 %v5072, %v5193
      %v5229 = vmul.f32 %v5073, %v5198
      %v5230 = vmul.f32 %v5074, %v5203
      %v5231 = vld [vmem:[%s10] sm:$0xff]
      %v5232 = vld [vmem:[%s10 + $0x8] sm:$0xff]
      %v5233 = vld [vmem:[%s10 + $0x10] sm:$0xff]
      %v5234 = vld [vmem:[%s10 + $0x18] sm:$0xff]
      %v5235 = vld [vmem:[%s10 + $0x20] sm:$0xff]
      %v5236 = vld [vmem:[%s10 + $0x28] sm:$0xff]
      %v5237 = vld [vmem:[%s10 + $0x30] sm:$0xff]
      %v5238 = vld [vmem:[%s10 + $0x38] sm:$0xff]
      %s5239 = scalar_lea.vmem %s10, 64
      %v5240 = vld [vmem:[%s5239] sm:$0xff]
      %v5241 = vld [vmem:[%s5239 + $0x8] sm:$0xff]
      %v5242 = vld [vmem:[%s5239 + $0x10] sm:$0xff]
      %v5243 = vld [vmem:[%s5239 + $0x18] sm:$0xff]
      %v5244 = vld [vmem:[%s5239 + $0x20] sm:$0xff]
      %v5245 = vld [vmem:[%s5239 + $0x28] sm:$0xff]
      %v5246 = vld [vmem:[%s5239 + $0x30] sm:$0xff]
      %v5247 = vld [vmem:[%s5239 + $0x38] sm:$0xff]
      %v5274 = vrot.slane %v5205, 7
      %v5275 = vsel %vm1894, %v1895, %v5274
      %v5276 = vrot.slane %v5206, 7
      %v5277 = vsel %vm1894, %v5274, %v5276
      %v5278 = vrot.slane %v5207, 7
      %v5279 = vsel %vm1894, %v5276, %v5278
      %v5280 = vrot.slane %v5208, 7
      %v5281 = vsel %vm1894, %v5278, %v5280
      %v5282 = vrot.slane %v5209, 7
      %v5283 = vsel %vm1894, %v5280, %v5282
      %v5284 = vrot.slane %v5210, 7
      %v5285 = vsel %vm1894, %v5282, %v5284
      %v5286 = vrot.slane %v5211, 7
      %v5287 = vsel %vm1894, %v5284, %v5286
      %v5288 = vrot.slane %v5212, 7
      %v5289 = vsel %vm1894, %v5286, %v5288
      %v5290 = vrot.slane %v5213, 7
      %v5291 = vsel %vm1894, %v5288, %v5290
      %v5292 = vrot.slane %v5214, 7
      %v5293 = vsel %vm1894, %v5290, %v5292
      %v5294 = vrot.slane %v5215, 7
      %v5295 = vsel %vm1894, %v5292, %v5294
      %v5296 = vrot.slane %v5216, 7
      %v5297 = vsel %vm1894, %v5294, %v5296
      %v5298 = vrot.slane %v5217, 7
      %v5299 = vsel %vm1894, %v5296, %v5298
      %v5300 = vrot.slane %v5218, 7
      %v5301 = vsel %vm1894, %v5298, %v5300
      %v5302 = vrot.slane %v5219, 7
      %v5303 = vsel %vm1894, %v5300, %v5302
      %v5304 = vrot.slane %v5220, 7
      %v5305 = vsel %vm1894, %v5302, %v5304
      %v5306 = vrot.slane %v5221, 7
      %v5307 = vsel %vm1894, %v5304, %v5306
      %v5308 = vrot.slane %v5222, 7
      %v5309 = vsel %vm1894, %v5306, %v5308
      %v5310 = vrot.slane %v5223, 7
      %v5311 = vsel %vm1894, %v5308, %v5310
      %v5312 = vrot.slane %v5224, 7
      %v5313 = vsel %vm1894, %v5310, %v5312
      %v5314 = vrot.slane %v5225, 7
      %v5315 = vsel %vm1894, %v5312, %v5314
      %v5316 = vrot.slane %v5226, 7
      %v5317 = vsel %vm1894, %v5314, %v5316
      %v5318 = vrot.slane %v5227, 7
      %v5319 = vsel %vm1894, %v5316, %v5318
      %v5320 = vrot.slane %v5228, 7
      %v5321 = vsel %vm1894, %v5318, %v5320
      %v5322 = vrot.slane %v5229, 7
      %v5323 = vsel %vm1894, %v5320, %v5322
      %v5324 = vrot.slane %v5230, 7
      %v5325 = vsel %vm1894, %v5322, %v5324
      %v5326 = vsel %vm1054, %v5275, 0
      %v5328 = vsel %vm1054, %v5277, 0
      %v5330 = vsel %vm1054, %v5279, 0
      %v5332 = vsel %vm1054, %v5281, 0
      %v5334 = vsel %vm1054, %v5283, 0
      %v5336 = vsel %vm1054, %v5285, 0
      %v5338 = vsel %vm1054, %v5287, 0
      %v5340 = vsel %vm1054, %v5289, 0
      %v5342 = vsel %vm1054, %v5291, 0
      %v5344 = vsel %vm1054, %v5293, 0
      %v5346 = vsel %vm1054, %v5295, 0
      %v5348 = vsel %vm1054, %v5297, 0
      %v5350 = vsel %vm1054, %v5299, 0
      %v5352 = vsel %vm1054, %v5301, 0
      %v5354 = vsel %vm1054, %v5303, 0
      %v5356 = vsel %vm1054, %v5305, 0
      %v5358 = vsel %vm1054, %v5307, 0
      %v5360 = vsel %vm1054, %v5309, 0
      %v5362 = vsel %vm1054, %v5311, 0
      %v5364 = vsel %vm1054, %v5313, 0
      %v5366 = vsel %vm1054, %v5315, 0
      %v5368 = vsel %vm1054, %v5317, 0
      %v5370 = vsel %vm1054, %v5319, 0
      %v5372 = vsel %vm1054, %v5321, 0
      %v5374 = vsel %vm1054, %v5323, 0
      %v5376 = vsel %vm1054, %v5325, 0
      %5378 = vmatprep.subr.mxu0 0.0
      %5379 = vmatpush1.msra.mxu0 %v5240
      %5380 = vmatprep.subr.mxu0 0.0
      %5381 = vmatpush1.msra.mxu0 %v5241
      %5382 = vmatprep.subr.mxu0 0.0
      %5383 = vmatpush1.msra.mxu0 %v5242
      %5384 = vmatprep.subr.mxu0 0.0
      %5385 = vmatpush1.msra.mxu0 %v5243
      %5386 = vmatprep.subr.mxu0 0.0
      %5387 = vmatpush1.msra.mxu0 %v5244
      %5388 = vmatprep.subr.mxu0 0.0
      %5389 = vmatpush1.msra.mxu0 %v5245
      %5390 = vmatprep.subr.mxu0 0.0
      %5391 = vmatpush1.msra.mxu0 %v5246
      %5392 = vmatprep.subr.mxu0 0.0
      %5393 = vmatpush1.msra.mxu0 %v5247
      %5394 = vmatprep.subr.mxu0 0.0
      %5395 = vmatpush1.msra.mxu0 0.0
      %5396 = vmatprep.subr.mxu0 0.0
      %5397 = vmatpush1.msra.mxu0 0.0
      %5398 = vmatprep.subr.mxu0 0.0
      %5399 = vmatpush1.msra.mxu0 0.0
      %5400 = vmatprep.subr.mxu0 0.0
      %5401 = vmatpush1.msra.mxu0 0.0
      %5402 = vmatprep.subr.mxu0 0.0
      %5403 = vmatpush1.msra.mxu0 0.0
      %5404 = vmatprep.subr.mxu0 0.0
      %5405 = vmatpush1.msra.mxu0 0.0
      %5406 = vmatprep.subr.mxu0 0.0
      %5407 = vmatpush1.msra.mxu0 0.0
      %5408 = vmatprep.subr.mxu0 0.0
      %5409 = vmatpush1.msra.mxu0 0.0
      %5410 = vmatprep.subr.mxu0 0.0
      %5411 = vmatpush1.msra.mxu0 0.0
      %5412 = vmatprep.subr.mxu0 0.0
      %5413 = vmatpush1.msra.mxu0 0.0
      %5414 = vmatprep.subr.mxu0 0.0
      %5415 = vmatpush1.msra.mxu0 0.0
      %5416 = vmatprep.subr.mxu0 0.0
      %5417 = vmatpush1.msra.mxu0 0.0
      %5418 = vmatprep.subr.mxu0 0.0
      %5419 = vmatpush1.msra.mxu0 0.0
      %5420 = vmatprep.subr.mxu0 0.0
      %5421 = vmatpush1.msra.mxu0 0.0
      %5422 = vmatprep.subr.mxu0 0.0
      %5423 = vmatpush1.msra.mxu0 0.0
      %5424 = vmatprep.subr.mxu0 0.0
      %5425 = vmatpush1.msra.mxu0 0.0
      %5426 = vmatprep.subr.mxu0 0.0
      %5427 = vmatpush1.msra.mxu0 0.0
      %5428 = vmatprep.subr.mxu0 0.0
      %5429 = vmatpush1.msra.mxu0 0.0
      %5430 = vmatprep.subr.mxu0 0.0
      %5431 = vmatpush1.msra.mxu0 0.0
      %5432 = vmatprep.subr.mxu0 0.0
      %5433 = vmatpush1.msra.mxu0 0.0
      %5434 = vmatprep.subr.mxu0 0.0
      %5435 = vmatpush1.msra.mxu0 0.0
      %5436 = vmatprep.subr.mxu0 0.0
      %5437 = vmatpush1.msra.mxu0 0.0
      %5438 = vmatprep.subr.mxu0 0.0
      %5439 = vmatpush1.msra.mxu0 0.0
      %5440 = vmatprep.subr.mxu0 0.0
      %5441 = vmatpush1.msra.mxu0 0.0
      %5442 = vmatprep.mubr.f32.mxu0 0.0
      %5443 = vmatmul.mubr.f32.gmra.mrb[0].mxu0 %v5326
      %v5444 = vpop.f32.mrb[0].mxu0
      %v5445 = vadd.f32 0.0, %v5444
      %v5446 = vpop.f32.mrb[0].mxu0
      %5447 = vmatprep.mubr.f32.mxu0 0.0
      %5448 = vmatmul.mubr.f32.gmra.mrb[0].mxu0 %v5328
      %v5449 = vpop.f32.mrb[0].mxu0
      %v5450 = vadd.f32 0.0, %v5449
      %v5451 = vpop.f32.mrb[0].mxu0
      %5452 = vmatprep.mubr.f32.mxu0 0.0
      %5453 = vmatmul.mubr.f32.gmra.mrb[0].mxu0 %v5330
      %v5454 = vpop.f32.mrb[0].mxu0
      %v5455 = vadd.f32 0.0, %v5454
      %v5456 = vpop.f32.mrb[0].mxu0
      %5457 = vmatprep.mubr.f32.mxu0 0.0
      %5458 = vmatmul.mubr.f32.gmra.mrb[0].mxu0 %v5332
      %v5459 = vpop.f32.mrb[0].mxu0
      %v5460 = vadd.f32 0.0, %v5459
      %v5461 = vpop.f32.mrb[0].mxu0
      %5462 = vmatprep.mubr.f32.mxu0 0.0
      %5463 = vmatmul.mubr.f32.gmra.mrb[0].mxu0 %v5334
      %v5464 = vpop.f32.mrb[0].mxu0
      %v5465 = vadd.f32 0.0, %v5464
      %v5466 = vpop.f32.mrb[0].mxu0
      %5467 = vmatprep.mubr.f32.mxu0 0.0
      %5468 = vmatmul.mubr.f32.gmra.mrb[0].mxu0 %v5336
      %v5469 = vpop.f32.mrb[0].mxu0
      %v5470 = vadd.f32 0.0, %v5469
      %v5471 = vpop.f32.mrb[0].mxu0
      %5472 = vmatprep.mubr.f32.mxu0 0.0
      %5473 = vmatmul.mubr.f32.gmra.mrb[0].mxu0 %v5338
      %v5474 = vpop.f32.mrb[0].mxu0
      %v5475 = vadd.f32 0.0, %v5474
      %v5476 = vpop.f32.mrb[0].mxu0
      %5477 = vmatprep.mubr.f32.mxu0 0.0
      %5478 = vmatmul.mubr.f32.gmra.mrb[0].mxu0 %v5340
      %v5479 = vpop.f32.mrb[0].mxu0
      %v5480 = vadd.f32 0.0, %v5479
      %v5481 = vpop.f32.mrb[0].mxu0
      %5482 = vmatprep.mubr.f32.mxu0 0.0
      %5483 = vmatmul.mubr.f32.gmra.mrb[0].mxu0 %v5342
      %v5484 = vpop.f32.mrb[0].mxu0
      %v5485 = vadd.f32 0.0, %v5484
      %v5486 = vpop.f32.mrb[0].mxu0
      %5487 = vmatprep.mubr.f32.mxu0 0.0
      %5488 = vmatmul.mubr.f32.gmra.mrb[0].mxu0 %v5344
      %v5489 = vpop.f32.mrb[0].mxu0
      %v5490 = vadd.f32 0.0, %v5489
      %v5491 = vpop.f32.mrb[0].mxu0
      %5492 = vmatprep.mubr.f32.mxu0 0.0
      %5493 = vmatmul.mubr.f32.gmra.mrb[0].mxu0 %v5346
      %v5494 = vpop.f32.mrb[0].mxu0
      %v5495 = vadd.f32 0.0, %v5494
      %v5496 = vpop.f32.mrb[0].mxu0
      %5497 = vmatprep.mubr.f32.mxu0 0.0
      %5498 = vmatmul.mubr.f32.gmra.mrb[0].mxu0 %v5348
      %v5499 = vpop.f32.mrb[0].mxu0
      %v5500 = vadd.f32 0.0, %v5499
      %v5501 = vpop.f32.mrb[0].mxu0
      %5502 = vmatprep.mubr.f32.mxu0 0.0
      %5503 = vmatmul.mubr.f32.gmra.mrb[0].mxu0 %v5350
      %v5504 = vpop.f32.mrb[0].mxu0
      %v5505 = vadd.f32 0.0, %v5504
      %v5506 = vpop.f32.mrb[0].mxu0
      %5507 = vmatprep.mubr.f32.mxu0 0.0
      %5508 = vmatmul.mubr.f32.gmra.mrb[0].mxu0 %v5352
      %v5509 = vpop.f32.mrb[0].mxu0
      %v5510 = vadd.f32 0.0, %v5509
      %v5511 = vpop.f32.mrb[0].mxu0
      %5512 = vmatprep.mubr.f32.mxu0 0.0
      %5513 = vmatmul.mubr.f32.gmra.mrb[0].mxu0 %v5354
      %v5514 = vpop.f32.mrb[0].mxu0
      %v5515 = vadd.f32 0.0, %v5514
      %v5516 = vpop.f32.mrb[0].mxu0
      %5517 = vmatprep.mubr.f32.mxu0 0.0
      %5518 = vmatmul.mubr.f32.gmra.mrb[0].mxu0 %v5356
      %v5519 = vpop.f32.mrb[0].mxu0
      %v5520 = vadd.f32 0.0, %v5519
      %v5521 = vpop.f32.mrb[0].mxu0
      %5522 = vmatprep.mubr.f32.mxu0 0.0
      %5523 = vmatmul.mubr.f32.gmra.mrb[0].mxu0 %v5358
      %v5524 = vpop.f32.mrb[0].mxu0
      %v5525 = vadd.f32 0.0, %v5524
      %v5526 = vpop.f32.mrb[0].mxu0
      %5527 = vmatprep.mubr.f32.mxu0 0.0
      %5528 = vmatmul.mubr.f32.gmra.mrb[0].mxu0 %v5360
      %v5529 = vpop.f32.mrb[0].mxu0
      %v5530 = vadd.f32 0.0, %v5529
      %v5531 = vpop.f32.mrb[0].mxu0
      %5532 = vmatprep.mubr.f32.mxu0 0.0
      %5533 = vmatmul.mubr.f32.gmra.mrb[0].mxu0 %v5362
      %v5534 = vpop.f32.mrb[0].mxu0
      %v5535 = vadd.f32 0.0, %v5534
      %v5536 = vpop.f32.mrb[0].mxu0
      %5537 = vmatprep.mubr.f32.mxu0 0.0
      %5538 = vmatmul.mubr.f32.gmra.mrb[0].mxu0 %v5364
      %v5539 = vpop.f32.mrb[0].mxu0
      %v5540 = vadd.f32 0.0, %v5539
      %v5541 = vpop.f32.mrb[0].mxu0
      %5542 = vmatprep.mubr.f32.mxu0 0.0
      %5543 = vmatmul.mubr.f32.gmra.mrb[0].mxu0 %v5366
      %v5544 = vpop.f32.mrb[0].mxu0
      %v5545 = vadd.f32 0.0, %v5544
      %v5546 = vpop.f32.mrb[0].mxu0
      %5547 = vmatprep.mubr.f32.mxu0 0.0
      %5548 = vmatmul.mubr.f32.gmra.mrb[0].mxu0 %v5368
      %v5549 = vpop.f32.mrb[0].mxu0
      %v5550 = vadd.f32 0.0, %v5549
      %v5551 = vpop.f32.mrb[0].mxu0
      %5552 = vmatprep.mubr.f32.mxu0 0.0
      %5553 = vmatmul.mubr.f32.gmra.mrb[0].mxu0 %v5370
      %v5554 = vpop.f32.mrb[0].mxu0
      %v5555 = vadd.f32 0.0, %v5554
      %v5556 = vpop.f32.mrb[0].mxu0
      %5557 = vmatprep.mubr.f32.mxu0 0.0
      %5558 = vmatmul.mubr.f32.gmra.mrb[0].mxu0 %v5372
      %v5559 = vpop.f32.mrb[0].mxu0
      %v5560 = vadd.f32 0.0, %v5559
      %v5561 = vpop.f32.mrb[0].mxu0
      %5562 = vmatprep.mubr.f32.mxu0 0.0
      %5563 = vmatmul.mubr.f32.gmra.mrb[0].mxu0 %v5374
      %v5564 = vpop.f32.mrb[0].mxu0
      %v5565 = vadd.f32 0.0, %v5564
      %v5566 = vpop.f32.mrb[0].mxu0
      %5567 = vmatprep.mubr.f32.mxu0 0.0
      %5568 = vmatmul.mubr.f32.gmra.mrb[0].mxu0 %v5376
      %v5569 = vpop.f32.mrb[0].mxu0
      %v5570 = vadd.f32 0.0, %v5569
      %v5571 = vpop.f32.mrb[0].mxu0
      %5572 = vdwg.mxu0
      %v5573 = vsel %vm1054, %v5205, 0
      %v5575 = vsel %vm1054, %v5206, 0
      %v5577 = vsel %vm1054, %v5207, 0
      %v5579 = vsel %vm1054, %v5208, 0
      %v5581 = vsel %vm1054, %v5209, 0
      %v5583 = vsel %vm1054, %v5210, 0
      %v5585 = vsel %vm1054, %v5211, 0
      %v5587 = vsel %vm1054, %v5212, 0
      %v5589 = vsel %vm1054, %v5213, 0
      %v5591 = vsel %vm1054, %v5214, 0
      %v5593 = vsel %vm1054, %v5215, 0
      %v5595 = vsel %vm1054, %v5216, 0
      %v5597 = vsel %vm1054, %v5217, 0
      %v5599 = vsel %vm1054, %v5218, 0
      %v5601 = vsel %vm1054, %v5219, 0
      %v5603 = vsel %vm1054, %v5220, 0
      %v5605 = vsel %vm1054, %v5221, 0
      %v5607 = vsel %vm1054, %v5222, 0
      %v5609 = vsel %vm1054, %v5223, 0
      %v5611 = vsel %vm1054, %v5224, 0
      %v5613 = vsel %vm1054, %v5225, 0
      %v5615 = vsel %vm1054, %v5226, 0
      %v5617 = vsel %vm1054, %v5227, 0
      %v5619 = vsel %vm1054, %v5228, 0
      %v5621 = vsel %vm1054, %v5229, 0
      %v5623 = vsel %vm1054, %v5230, 0
      %5625 = vmatprep.subr.mxu0 0.0
      %5626 = vmatpush1.msra.mxu0 %v5231
      %5627 = vmatprep.subr.mxu0 0.0
      %5628 = vmatpush1.msra.mxu0 %v5232
      %5629 = vmatprep.subr.mxu0 0.0
      %5630 = vmatpush1.msra.mxu0 %v5233
      %5631 = vmatprep.subr.mxu0 0.0
      %5632 = vmatpush1.msra.mxu0 %v5234
      %5633 = vmatprep.subr.mxu0 0.0
      %5634 = vmatpush1.msra.mxu0 %v5235
      %5635 = vmatprep.subr.mxu0 0.0
      %5636 = vmatpush1.msra.mxu0 %v5236
      %5637 = vmatprep.subr.mxu0 0.0
      %5638 = vmatpush1.msra.mxu0 %v5237
      %5639 = vmatprep.subr.mxu0 0.0
      %5640 = vmatpush1.msra.mxu0 %v5238
      %5641 = vmatprep.subr.mxu0 0.0
      %5642 = vmatpush1.msra.mxu0 0.0
      %5643 = vmatprep.subr.mxu0 0.0
      %5644 = vmatpush1.msra.mxu0 0.0
      %5645 = vmatprep.subr.mxu0 0.0
      %5646 = vmatpush1.msra.mxu0 0.0
      %5647 = vmatprep.subr.mxu0 0.0
      %5648 = vmatpush1.msra.mxu0 0.0
      %5649 = vmatprep.subr.mxu0 0.0
      %5650 = vmatpush1.msra.mxu0 0.0
      %5651 = vmatprep.subr.mxu0 0.0
      %5652 = vmatpush1.msra.mxu0 0.0
      %5653 = vmatprep.subr.mxu0 0.0
      %5654 = vmatpush1.msra.mxu0 0.0
      %5655 = vmatprep.subr.mxu0 0.0
      %5656 = vmatpush1.msra.mxu0 0.0
      %5657 = vmatprep.subr.mxu0 0.0
      %5658 = vmatpush1.msra.mxu0 0.0
      %5659 = vmatprep.subr.mxu0 0.0
      %5660 = vmatpush1.msra.mxu0 0.0
      %5661 = vmatprep.subr.mxu0 0.0
      %5662 = vmatpush1.msra.mxu0 0.0
      %5663 = vmatprep.subr.mxu0 0.0
      %5664 = vmatpush1.msra.mxu0 0.0
      %5665 = vmatprep.subr.mxu0 0.0
      %5666 = vmatpush1.msra.mxu0 0.0
      %5667 = vmatprep.subr.mxu0 0.0
      %5668 = vmatpush1.msra.mxu0 0.0
      %5669 = vmatprep.subr.mxu0 0.0
      %5670 = vmatpush1.msra.mxu0 0.0
      %5671 = vmatprep.subr.mxu0 0.0
      %5672 = vmatpush1.msra.mxu0 0.0
      %5673 = vmatprep.subr.mxu0 0.0
      %5674 = vmatpush1.msra.mxu0 0.0
      %5675 = vmatprep.subr.mxu0 0.0
      %5676 = vmatpush1.msra.mxu0 0.0
      %5677 = vmatprep.subr.mxu0 0.0
      %5678 = vmatpush1.msra.mxu0 0.0
      %5679 = vmatprep.subr.mxu0 0.0
      %5680 = vmatpush1.msra.mxu0 0.0
      %5681 = vmatprep.subr.mxu0 0.0
      %5682 = vmatpush1.msra.mxu0 0.0
      %5683 = vmatprep.subr.mxu0 0.0
      %5684 = vmatpush1.msra.mxu0 0.0
      %5685 = vmatprep.subr.mxu0 0.0
      %5686 = vmatpush1.msra.mxu0 0.0
      %5687 = vmatprep.subr.mxu0 0.0
      %5688 = vmatpush1.msra.mxu0 0.0
      %5689 = vmatprep.mubr.f32.mxu0 0.0
      %5690 = vmatmul.mubr.f32.gmra.mrb[0].mxu0 %v5573
      %v5691 = vpop.f32.mrb[0].mxu0
      %v5692 = vadd.f32 %v5445, %v5691
      %v5693 = vpop.f32.mrb[0].mxu0
      %5694 = vmatprep.mubr.f32.mxu0 0.0
      %5695 = vmatmul.mubr.f32.gmra.mrb[0].mxu0 %v5575
      %v5696 = vpop.f32.mrb[0].mxu0
      %v5697 = vadd.f32 %v5450, %v5696
      %v5698 = vpop.f32.mrb[0].mxu0
      %5699 = vmatprep.mubr.f32.mxu0 0.0
      %5700 = vmatmul.mubr.f32.gmra.mrb[0].mxu0 %v5577
      %v5701 = vpop.f32.mrb[0].mxu0
      %v5702 = vadd.f32 %v5455, %v5701
      %v5703 = vpop.f32.mrb[0].mxu0
      %5704 = vmatprep.mubr.f32.mxu0 0.0
      %5705 = vmatmul.mubr.f32.gmra.mrb[0].mxu0 %v5579
      %v5706 = vpop.f32.mrb[0].mxu0
      %v5707 = vadd.f32 %v5460, %v5706
      %v5708 = vpop.f32.mrb[0].mxu0
      %5709 = vmatprep.mubr.f32.mxu0 0.0
      %5710 = vmatmul.mubr.f32.gmra.mrb[0].mxu0 %v5581
      %v5711 = vpop.f32.mrb[0].mxu0
      %v5712 = vadd.f32 %v5465, %v5711
      %v5713 = vpop.f32.mrb[0].mxu0
      %5714 = vmatprep.mubr.f32.mxu0 0.0
      %5715 = vmatmul.mubr.f32.gmra.mrb[0].mxu0 %v5583
      %v5716 = vpop.f32.mrb[0].mxu0
      %v5717 = vadd.f32 %v5470, %v5716
      %v5718 = vpop.f32.mrb[0].mxu0
      %5719 = vmatprep.mubr.f32.mxu0 0.0
      %5720 = vmatmul.mubr.f32.gmra.mrb[0].mxu0 %v5585
      %v5721 = vpop.f32.mrb[0].mxu0
      %v5722 = vadd.f32 %v5475, %v5721
      %v5723 = vpop.f32.mrb[0].mxu0
      %5724 = vmatprep.mubr.f32.mxu0 0.0
      %5725 = vmatmul.mubr.f32.gmra.mrb[0].mxu0 %v5587
      %v5726 = vpop.f32.mrb[0].mxu0
      %v5727 = vadd.f32 %v5480, %v5726
      %v5728 = vpop.f32.mrb[0].mxu0
      %5729 = vmatprep.mubr.f32.mxu0 0.0
      %5730 = vmatmul.mubr.f32.gmra.mrb[0].mxu0 %v5589
      %v5731 = vpop.f32.mrb[0].mxu0
      %v5732 = vadd.f32 %v5485, %v5731
      %v5733 = vpop.f32.mrb[0].mxu0
      %5734 = vmatprep.mubr.f32.mxu0 0.0
      %5735 = vmatmul.mubr.f32.gmra.mrb[0].mxu0 %v5591
      %v5736 = vpop.f32.mrb[0].mxu0
      %v5737 = vadd.f32 %v5490, %v5736
      %v5738 = vpop.f32.mrb[0].mxu0
      %5739 = vmatprep.mubr.f32.mxu0 0.0
      %5740 = vmatmul.mubr.f32.gmra.mrb[0].mxu0 %v5593
      %v5741 = vpop.f32.mrb[0].mxu0
      %v5742 = vadd.f32 %v5495, %v5741
      %v5743 = vpop.f32.mrb[0].mxu0
      %5744 = vmatprep.mubr.f32.mxu0 0.0
      %5745 = vmatmul.mubr.f32.gmra.mrb[0].mxu0 %v5595
      %v5746 = vpop.f32.mrb[0].mxu0
      %v5747 = vadd.f32 %v5500, %v5746
      %v5748 = vpop.f32.mrb[0].mxu0
      %5749 = vmatprep.mubr.f32.mxu0 0.0
      %5750 = vmatmul.mubr.f32.gmra.mrb[0].mxu0 %v5597
      %v5751 = vpop.f32.mrb[0].mxu0
      %v5752 = vadd.f32 %v5505, %v5751
      %v5753 = vpop.f32.mrb[0].mxu0
      %5754 = vmatprep.mubr.f32.mxu0 0.0
      %5755 = vmatmul.mubr.f32.gmra.mrb[0].mxu0 %v5599
      %v5756 = vpop.f32.mrb[0].mxu0
      %v5757 = vadd.f32 %v5510, %v5756
      %v5758 = vpop.f32.mrb[0].mxu0
      %5759 = vmatprep.mubr.f32.mxu0 0.0
      %5760 = vmatmul.mubr.f32.gmra.mrb[0].mxu0 %v5601
      %v5761 = vpop.f32.mrb[0].mxu0
      %v5762 = vadd.f32 %v5515, %v5761
      %v5763 = vpop.f32.mrb[0].mxu0
      %5764 = vmatprep.mubr.f32.mxu0 0.0
      %5765 = vmatmul.mubr.f32.gmra.mrb[0].mxu0 %v5603
      %v5766 = vpop.f32.mrb[0].mxu0
      %v5767 = vadd.f32 %v5520, %v5766
      %v5768 = vpop.f32.mrb[0].mxu0
      %5769 = vmatprep.mubr.f32.mxu0 0.0
      %5770 = vmatmul.mubr.f32.gmra.mrb[0].mxu0 %v5605
      %v5771 = vpop.f32.mrb[0].mxu0
      %v5772 = vadd.f32 %v5525, %v5771
      %v5773 = vpop.f32.mrb[0].mxu0
      %5774 = vmatprep.mubr.f32.mxu0 0.0
      %5775 = vmatmul.mubr.f32.gmra.mrb[0].mxu0 %v5607
      %v5776 = vpop.f32.mrb[0].mxu0
      %v5777 = vadd.f32 %v5530, %v5776
      %v5778 = vpop.f32.mrb[0].mxu0
      %5779 = vmatprep.mubr.f32.mxu0 0.0
      %5780 = vmatmul.mubr.f32.gmra.mrb[0].mxu0 %v5609
      %v5781 = vpop.f32.mrb[0].mxu0
      %v5782 = vadd.f32 %v5535, %v5781
      %v5783 = vpop.f32.mrb[0].mxu0
      %5784 = vmatprep.mubr.f32.mxu0 0.0
      %5785 = vmatmul.mubr.f32.gmra.mrb[0].mxu0 %v5611
      %v5786 = vpop.f32.mrb[0].mxu0
      %v5787 = vadd.f32 %v5540, %v5786
      %v5788 = vpop.f32.mrb[0].mxu0
      %5789 = vmatprep.mubr.f32.mxu0 0.0
      %5790 = vmatmul.mubr.f32.gmra.mrb[0].mxu0 %v5613
      %v5791 = vpop.f32.mrb[0].mxu0
      %v5792 = vadd.f32 %v5545, %v5791
      %v5793 = vpop.f32.mrb[0].mxu0
      %5794 = vmatprep.mubr.f32.mxu0 0.0
      %5795 = vmatmul.mubr.f32.gmra.mrb[0].mxu0 %v5615
      %v5796 = vpop.f32.mrb[0].mxu0
      %v5797 = vadd.f32 %v5550, %v5796
      %v5798 = vpop.f32.mrb[0].mxu0
      %5799 = vmatprep.mubr.f32.mxu0 0.0
      %5800 = vmatmul.mubr.f32.gmra.mrb[0].mxu0 %v5617
      %v5801 = vpop.f32.mrb[0].mxu0
      %v5802 = vadd.f32 %v5555, %v5801
      %v5803 = vpop.f32.mrb[0].mxu0
      %5804 = vmatprep.mubr.f32.mxu0 0.0
      %5805 = vmatmul.mubr.f32.gmra.mrb[0].mxu0 %v5619
      %v5806 = vpop.f32.mrb[0].mxu0
      %v5807 = vadd.f32 %v5560, %v5806
      %v5808 = vpop.f32.mrb[0].mxu0
      %5809 = vmatprep.mubr.f32.mxu0 0.0
      %5810 = vmatmul.mubr.f32.gmra.mrb[0].mxu0 %v5621
      %v5811 = vpop.f32.mrb[0].mxu0
      %v5812 = vadd.f32 %v5565, %v5811
      %v5813 = vpop.f32.mrb[0].mxu0
      %5814 = vmatprep.mubr.f32.mxu0 0.0
      %5815 = vmatmul.mubr.f32.gmra.mrb[0].mxu0 %v5623
      %v5816 = vpop.f32.mrb[0].mxu0
      %v5817 = vadd.f32 %v5570, %v5816
      %v5818 = vpop.f32.mrb[0].mxu0
      %5819 = vdwg.mxu0
      %s5820 = scalar_lea.vmem %s10, 128
      %v5821 = vld [vmem:[%s5820] sm:$0xff]
      %v5822 = vld [vmem:[%s5820 + $0x8] sm:$0xff]
      %v5823 = vld [vmem:[%s5820 + $0x10] sm:$0xff]
      %v5824 = vld [vmem:[%s5820 + $0x18] sm:$0xff]
      %v5825 = vld [vmem:[%s5820 + $0x20] sm:$0xff]
      %v5826 = vld [vmem:[%s5820 + $0x28] sm:$0xff]
      %v5827 = vld [vmem:[%s5820 + $0x30] sm:$0xff]
      %v5828 = vld [vmem:[%s5820 + $0x38] sm:$0xff]
      %v5829 = vrot.slane %v5205, 6
      %v5830 = vsel %vm1559, %v1560, %v5829
      %v5831 = vrot.slane %v5206, 6
      %v5832 = vsel %vm1559, %v5829, %v5831
      %v5833 = vrot.slane %v5207, 6
      %v5834 = vsel %vm1559, %v5831, %v5833
      %v5835 = vrot.slane %v5208, 6
      %v5836 = vsel %vm1559, %v5833, %v5835
      %v5837 = vrot.slane %v5209, 6
      %v5838 = vsel %vm1559, %v5835, %v5837
      %v5839 = vrot.slane %v5210, 6
      %v5840 = vsel %vm1559, %v5837, %v5839
      %v5841 = vrot.slane %v5211, 6
      %v5842 = vsel %vm1559, %v5839, %v5841
      %v5843 = vrot.slane %v5212, 6
      %v5844 = vsel %vm1559, %v5841, %v5843
      %v5845 = vrot.slane %v5213, 6
      %v5846 = vsel %vm1559, %v5843, %v5845
      %v5847 = vrot.slane %v5214, 6
      %v5848 = vsel %vm1559, %v5845, %v5847
      %v5849 = vrot.slane %v5215, 6
      %v5850 = vsel %vm1559, %v5847, %v5849
      %v5851 = vrot.slane %v5216, 6
      %v5852 = vsel %vm1559, %v5849, %v5851
      %v5853 = vrot.slane %v5217, 6
      %v5854 = vsel %vm1559, %v5851, %v5853
      %v5855 = vrot.slane %v5218, 6
      %v5856 = vsel %vm1559, %v5853, %v5855
      %v5857 = vrot.slane %v5219, 6
      %v5858 = vsel %vm1559, %v5855, %v5857
      %v5859 = vrot.slane %v5220, 6
      %v5860 = vsel %vm1559, %v5857, %v5859
      %v5861 = vrot.slane %v5221, 6
      %v5862 = vsel %vm1559, %v5859, %v5861
      %v5863 = vrot.slane %v5222, 6
      %v5864 = vsel %vm1559, %v5861, %v5863
      %v5865 = vrot.slane %v5223, 6
      %v5866 = vsel %vm1559, %v5863, %v5865
      %v5867 = vrot.slane %v5224, 6
      %v5868 = vsel %vm1559, %v5865, %v5867
      %v5869 = vrot.slane %v5225, 6
      %v5870 = vsel %vm1559, %v5867, %v5869
      %v5871 = vrot.slane %v5226, 6
      %v5872 = vsel %vm1559, %v5869, %v5871
      %v5873 = vrot.slane %v5227, 6
      %v5874 = vsel %vm1559, %v5871, %v5873
      %v5875 = vrot.slane %v5228, 6
      %v5876 = vsel %vm1559, %v5873, %v5875
      %v5877 = vrot.slane %v5229, 6
      %v5878 = vsel %vm1559, %v5875, %v5877
      %v5879 = vsel %vm1054, %v5830, 0
      %v5881 = vsel %vm1054, %v5832, 0
      %v5883 = vsel %vm1054, %v5834, 0
      %v5885 = vsel %vm1054, %v5836, 0
      %v5887 = vsel %vm1054, %v5838, 0
      %v5889 = vsel %vm1054, %v5840, 0
      %v5891 = vsel %vm1054, %v5842, 0
      %v5893 = vsel %vm1054, %v5844, 0
      %v5895 = vsel %vm1054, %v5846, 0
      %v5897 = vsel %vm1054, %v5848, 0
      %v5899 = vsel %vm1054, %v5850, 0
      %v5901 = vsel %vm1054, %v5852, 0
      %v5903 = vsel %vm1054, %v5854, 0
      %v5905 = vsel %vm1054, %v5856, 0
      %v5907 = vsel %vm1054, %v5858, 0
      %v5909 = vsel %vm1054, %v5860, 0
      %v5911 = vsel %vm1054, %v5862, 0
      %v5913 = vsel %vm1054, %v5864, 0
      %v5915 = vsel %vm1054, %v5866, 0
      %v5917 = vsel %vm1054, %v5868, 0
      %v5919 = vsel %vm1054, %v5870, 0
      %v5921 = vsel %vm1054, %v5872, 0
      %v5923 = vsel %vm1054, %v5874, 0
      %v5925 = vsel %vm1054, %v5876, 0
      %v5927 = vsel %vm1054, %v5878, 0
      %5929 = vmatprep.subr.mxu0 0.0
      %5930 = vmatpush1.msra.mxu0 %v5821
      %5931 = vmatprep.subr.mxu0 0.0
      %5932 = vmatpush1.msra.mxu0 %v5822
      %5933 = vmatprep.subr.mxu0 0.0
      %5934 = vmatpush1.msra.mxu0 %v5823
      %5935 = vmatprep.subr.mxu0 0.0
      %5936 = vmatpush1.msra.mxu0 %v5824
      %5937 = vmatprep.subr.mxu0 0.0
      %5938 = vmatpush1.msra.mxu0 %v5825
      %5939 = vmatprep.subr.mxu0 0.0
      %5940 = vmatpush1.msra.mxu0 %v5826
      %5941 = vmatprep.subr.mxu0 0.0
      %5942 = vmatpush1.msra.mxu0 %v5827
      %5943 = vmatprep.subr.mxu0 0.0
      %5944 = vmatpush1.msra.mxu0 %v5828
      %5945 = vmatprep.subr.mxu0 0.0
      %5946 = vmatpush1.msra.mxu0 0.0
      %5947 = vmatprep.subr.mxu0 0.0
      %5948 = vmatpush1.msra.mxu0 0.0
      %5949 = vmatprep.subr.mxu0 0.0
      %5950 = vmatpush1.msra.mxu0 0.0
      %5951 = vmatprep.subr.mxu0 0.0
      %5952 = vmatpush1.msra.mxu0 0.0
      %5953 = vmatprep.subr.mxu0 0.0
      %5954 = vmatpush1.msra.mxu0 0.0
      %5955 = vmatprep.subr.mxu0 0.0
      %5956 = vmatpush1.msra.mxu0 0.0
      %5957 = vmatprep.subr.mxu0 0.0
      %5958 = vmatpush1.msra.mxu0 0.0
      %5959 = vmatprep.subr.mxu0 0.0
      %5960 = vmatpush1.msra.mxu0 0.0
      %5961 = vmatprep.subr.mxu0 0.0
      %5962 = vmatpush1.msra.mxu0 0.0
      %5963 = vmatprep.subr.mxu0 0.0
      %5964 = vmatpush1.msra.mxu0 0.0
      %5965 = vmatprep.subr.mxu0 0.0
      %5966 = vmatpush1.msra.mxu0 0.0
      %5967 = vmatprep.subr.mxu0 0.0
      %5968 = vmatpush1.msra.mxu0 0.0
      %5969 = vmatprep.subr.mxu0 0.0
      %5970 = vmatpush1.msra.mxu0 0.0
      %5971 = vmatprep.subr.mxu0 0.0
      %5972 = vmatpush1.msra.mxu0 0.0
      %5973 = vmatprep.subr.mxu0 0.0
      %5974 = vmatpush1.msra.mxu0 0.0
      %5975 = vmatprep.subr.mxu0 0.0
      %5976 = vmatpush1.msra.mxu0 0.0
      %5977 = vmatprep.subr.mxu0 0.0
      %5978 = vmatpush1.msra.mxu0 0.0
      %5979 = vmatprep.subr.mxu0 0.0
      %5980 = vmatpush1.msra.mxu0 0.0
      %5981 = vmatprep.subr.mxu0 0.0
      %5982 = vmatpush1.msra.mxu0 0.0
      %5983 = vmatprep.subr.mxu0 0.0
      %5984 = vmatpush1.msra.mxu0 0.0
      %5985 = vmatprep.subr.mxu0 0.0
      %5986 = vmatpush1.msra.mxu0 0.0
      %5987 = vmatprep.subr.mxu0 0.0
      %5988 = vmatpush1.msra.mxu0 0.0
      %5989 = vmatprep.subr.mxu0 0.0
      %5990 = vmatpush1.msra.mxu0 0.0
      %5991 = vmatprep.subr.mxu0 0.0
      %5992 = vmatpush1.msra.mxu0 0.0
      %5993 = vmatprep.mubr.f32.mxu0 0.0
      %5994 = vmatmul.mubr.f32.gmra.mrb[0].mxu0 %v1612
      %v5995 = vpop.f32.mrb[0].mxu0
      %v5996 = vadd.f32 0.0, %v5995
      %v5997 = vpop.f32.mrb[0].mxu0
      %5998 = vmatprep.mubr.f32.mxu0 0.0
      %5999 = vmatmul.mubr.f32.gmra.mrb[0].mxu0 %v5879
      %v6000 = vpop.f32.mrb[0].mxu0
      %v6001 = vadd.f32 0.0, %v6000
      %v6002 = vpop.f32.mrb[0].mxu0
      %6003 = vmatprep.mubr.f32.mxu0 0.0
      %6004 = vmatmul.mubr.f32.gmra.mrb[0].mxu0 %v5881
      %v6005 = vpop.f32.mrb[0].mxu0
      %v6006 = vadd.f32 0.0, %v6005
      %v6007 = vpop.f32.mrb[0].mxu0
      %6008 = vmatprep.mubr.f32.mxu0 0.0
      %6009 = vmatmul.mubr.f32.gmra.mrb[0].mxu0 %v5883
      %v6010 = vpop.f32.mrb[0].mxu0
      %v6011 = vadd.f32 0.0, %v6010
      %v6012 = vpop.f32.mrb[0].mxu0
      %6013 = vmatprep.mubr.f32.mxu0 0.0
      %6014 = vmatmul.mubr.f32.gmra.mrb[0].mxu0 %v5885
      %v6015 = vpop.f32.mrb[0].mxu0
      %v6016 = vadd.f32 0.0, %v6015
      %v6017 = vpop.f32.mrb[0].mxu0
      %6018 = vmatprep.mubr.f32.mxu0 0.0
      %6019 = vmatmul.mubr.f32.gmra.mrb[0].mxu0 %v5887
      %v6020 = vpop.f32.mrb[0].mxu0
      %v6021 = vadd.f32 0.0, %v6020
      %v6022 = vpop.f32.mrb[0].mxu0
      %6023 = vmatprep.mubr.f32.mxu0 0.0
      %6024 = vmatmul.mubr.f32.gmra.mrb[0].mxu0 %v5889
      %v6025 = vpop.f32.mrb[0].mxu0
      %v6026 = vadd.f32 0.0, %v6025
      %v6027 = vpop.f32.mrb[0].mxu0
      %6028 = vmatprep.mubr.f32.mxu0 0.0
      %6029 = vmatmul.mubr.f32.gmra.mrb[0].mxu0 %v5891
      %v6030 = vpop.f32.mrb[0].mxu0
      %v6031 = vadd.f32 0.0, %v6030
      %v6032 = vpop.f32.mrb[0].mxu0
      %6033 = vmatprep.mubr.f32.mxu0 0.0
      %6034 = vmatmul.mubr.f32.gmra.mrb[0].mxu0 %v5893
      %v6035 = vpop.f32.mrb[0].mxu0
      %v6036 = vadd.f32 0.0, %v6035
      %v6037 = vpop.f32.mrb[0].mxu0
      %6038 = vmatprep.mubr.f32.mxu0 0.0
      %6039 = vmatmul.mubr.f32.gmra.mrb[0].mxu0 %v5895
      %v6040 = vpop.f32.mrb[0].mxu0
      %v6041 = vadd.f32 0.0, %v6040
      %v6042 = vpop.f32.mrb[0].mxu0
      %6043 = vmatprep.mubr.f32.mxu0 0.0
      %6044 = vmatmul.mubr.f32.gmra.mrb[0].mxu0 %v5897
      %v6045 = vpop.f32.mrb[0].mxu0
      %v6046 = vadd.f32 0.0, %v6045
      %v6047 = vpop.f32.mrb[0].mxu0
      %6048 = vmatprep.mubr.f32.mxu0 0.0
      %6049 = vmatmul.mubr.f32.gmra.mrb[0].mxu0 %v5899
      %v6050 = vpop.f32.mrb[0].mxu0
      %v6051 = vadd.f32 0.0, %v6050
      %v6052 = vpop.f32.mrb[0].mxu0
      %6053 = vmatprep.mubr.f32.mxu0 0.0
      %6054 = vmatmul.mubr.f32.gmra.mrb[0].mxu0 %v5901
      %v6055 = vpop.f32.mrb[0].mxu0
      %v6056 = vadd.f32 0.0, %v6055
      %v6057 = vpop.f32.mrb[0].mxu0
      %6058 = vmatprep.mubr.f32.mxu0 0.0
      %6059 = vmatmul.mubr.f32.gmra.mrb[0].mxu0 %v5903
      %v6060 = vpop.f32.mrb[0].mxu0
      %v6061 = vadd.f32 0.0, %v6060
      %v6062 = vpop.f32.mrb[0].mxu0
      %6063 = vmatprep.mubr.f32.mxu0 0.0
      %6064 = vmatmul.mubr.f32.gmra.mrb[0].mxu0 %v5905
      %v6065 = vpop.f32.mrb[0].mxu0
      %v6066 = vadd.f32 0.0, %v6065
      %v6067 = vpop.f32.mrb[0].mxu0
      %6068 = vmatprep.mubr.f32.mxu0 0.0
      %6069 = vmatmul.mubr.f32.gmra.mrb[0].mxu0 %v5907
      %v6070 = vpop.f32.mrb[0].mxu0
      %v6071 = vadd.f32 0.0, %v6070
      %v6072 = vpop.f32.mrb[0].mxu0
      %6073 = vmatprep.mubr.f32.mxu0 0.0
      %6074 = vmatmul.mubr.f32.gmra.mrb[0].mxu0 %v5909
      %v6075 = vpop.f32.mrb[0].mxu0
      %v6076 = vadd.f32 0.0, %v6075
      %v6077 = vpop.f32.mrb[0].mxu0
      %6078 = vmatprep.mubr.f32.mxu0 0.0
      %6079 = vmatmul.mubr.f32.gmra.mrb[0].mxu0 %v5911
      %v6080 = vpop.f32.mrb[0].mxu0
      %v6081 = vadd.f32 0.0, %v6080
      %v6082 = vpop.f32.mrb[0].mxu0
      %6083 = vmatprep.mubr.f32.mxu0 0.0
      %6084 = vmatmul.mubr.f32.gmra.mrb[0].mxu0 %v5913
      %v6085 = vpop.f32.mrb[0].mxu0
      %v6086 = vadd.f32 0.0, %v6085
      %v6087 = vpop.f32.mrb[0].mxu0
      %6088 = vmatprep.mubr.f32.mxu0 0.0
      %6089 = vmatmul.mubr.f32.gmra.mrb[0].mxu0 %v5915
      %v6090 = vpop.f32.mrb[0].mxu0
      %v6091 = vadd.f32 0.0, %v6090
      %v6092 = vpop.f32.mrb[0].mxu0
      %6093 = vmatprep.mubr.f32.mxu0 0.0
      %6094 = vmatmul.mubr.f32.gmra.mrb[0].mxu0 %v5917
      %v6095 = vpop.f32.mrb[0].mxu0
      %v6096 = vadd.f32 0.0, %v6095
      %v6097 = vpop.f32.mrb[0].mxu0
      %6098 = vmatprep.mubr.f32.mxu0 0.0
      %6099 = vmatmul.mubr.f32.gmra.mrb[0].mxu0 %v5919
      %v6100 = vpop.f32.mrb[0].mxu0
      %v6101 = vadd.f32 0.0, %v6100
      %v6102 = vpop.f32.mrb[0].mxu0
      %6103 = vmatprep.mubr.f32.mxu0 0.0
      %6104 = vmatmul.mubr.f32.gmra.mrb[0].mxu0 %v5921
      %v6105 = vpop.f32.mrb[0].mxu0
      %v6106 = vadd.f32 0.0, %v6105
      %v6107 = vpop.f32.mrb[0].mxu0
      %6108 = vmatprep.mubr.f32.mxu0 0.0
      %6109 = vmatmul.mubr.f32.gmra.mrb[0].mxu0 %v5923
      %v6110 = vpop.f32.mrb[0].mxu0
      %v6111 = vadd.f32 0.0, %v6110
      %v6112 = vpop.f32.mrb[0].mxu0
      %6113 = vmatprep.mubr.f32.mxu0 0.0
      %6114 = vmatmul.mubr.f32.gmra.mrb[0].mxu0 %v5925
      %v6115 = vpop.f32.mrb[0].mxu0
      %v6116 = vadd.f32 0.0, %v6115
      %v6117 = vpop.f32.mrb[0].mxu0
      %6118 = vmatprep.mubr.f32.mxu0 0.0
      %6119 = vmatmul.mubr.f32.gmra.mrb[0].mxu0 %v5927
      %v6120 = vpop.f32.mrb[0].mxu0
      %v6121 = vadd.f32 0.0, %v6120
      %v6122 = vpop.f32.mrb[0].mxu0
      %6123 = vdwg.mxu0
      %v6124 = vadd.f32 %v5692, %v5996
      %v6125 = vadd.f32 %v5697, %v6001
      %v6126 = vadd.f32 %v5702, %v6006
      %v6127 = vadd.f32 %v5707, %v6011
      %v6128 = vadd.f32 %v5712, %v6016
      %v6129 = vadd.f32 %v5717, %v6021
      %v6130 = vadd.f32 %v5722, %v6026
      %v6131 = vadd.f32 %v5727, %v6031
      %v6132 = vadd.f32 %v5732, %v6036
      %v6133 = vadd.f32 %v5737, %v6041
      %v6134 = vadd.f32 %v5742, %v6046
      %v6135 = vadd.f32 %v5747, %v6051
      %v6136 = vadd.f32 %v5752, %v6056
      %v6137 = vadd.f32 %v5757, %v6061
      %v6138 = vadd.f32 %v5762, %v6066
      %v6139 = vadd.f32 %v5767, %v6071
      %v6140 = vadd.f32 %v5772, %v6076
      %v6141 = vadd.f32 %v5777, %v6081
      %v6142 = vadd.f32 %v5782, %v6086
      %v6143 = vadd.f32 %v5787, %v6091
      %v6144 = vadd.f32 %v5792, %v6096
      %v6145 = vadd.f32 %v5797, %v6101
      %v6146 = vadd.f32 %v5802, %v6106
      %v6147 = vadd.f32 %v5807, %v6111
      %v6148 = vadd.f32 %v5812, %v6116
      %v6149 = vadd.f32 %v5817, %v6121
      %s6150 = scalar_lea.vmem %s10, 192
      %v6151 = vld [vmem:[%s6150] sm:$0xff]
      %v6152 = vld [vmem:[%s6150 + $0x8] sm:$0xff]
      %v6153 = vld [vmem:[%s6150 + $0x10] sm:$0xff]
      %v6154 = vld [vmem:[%s6150 + $0x18] sm:$0xff]
      %v6155 = vld [vmem:[%s6150 + $0x20] sm:$0xff]
      %v6156 = vld [vmem:[%s6150 + $0x28] sm:$0xff]
      %v6157 = vld [vmem:[%s6150 + $0x30] sm:$0xff]
      %v6158 = vld [vmem:[%s6150 + $0x38] sm:$0xff]
      %v6159 = vrot.slane %v5205, 5
      %v6160 = vsel %vm1001, %v1002, %v6159
      %v6161 = vrot.slane %v5206, 5
      %v6162 = vsel %vm1001, %v6159, %v6161
      %v6163 = vrot.slane %v5207, 5
      %v6164 = vsel %vm1001, %v6161, %v6163
      %v6165 = vrot.slane %v5208, 5
      %v6166 = vsel %vm1001, %v6163, %v6165
      %v6167 = vrot.slane %v5209, 5
      %v6168 = vsel %vm1001, %v6165, %v6167
      %v6169 = vrot.slane %v5210, 5
      %v6170 = vsel %vm1001, %v6167, %v6169
      %v6171 = vrot.slane %v5211, 5
      %v6172 = vsel %vm1001, %v6169, %v6171
      %v6173 = vrot.slane %v5212, 5
      %v6174 = vsel %vm1001, %v6171, %v6173
      %v6175 = vrot.slane %v5213, 5
      %v6176 = vsel %vm1001, %v6173, %v6175
      %v6177 = vrot.slane %v5214, 5
      %v6178 = vsel %vm1001, %v6175, %v6177
      %v6179 = vrot.slane %v5215, 5
      %v6180 = vsel %vm1001, %v6177, %v6179
      %v6181 = vrot.slane %v5216, 5
      %v6182 = vsel %vm1001, %v6179, %v6181
      %v6183 = vrot.slane %v5217, 5
      %v6184 = vsel %vm1001, %v6181, %v6183
      %v6185 = vrot.slane %v5218, 5
      %v6186 = vsel %vm1001, %v6183, %v6185
      %v6187 = vrot.slane %v5219, 5
      %v6188 = vsel %vm1001, %v6185, %v6187
      %v6189 = vrot.slane %v5220, 5
      %v6190 = vsel %vm1001, %v6187, %v6189
      %v6191 = vrot.slane %v5221, 5
      %v6192 = vsel %vm1001, %v6189, %v6191
      %v6193 = vrot.slane %v5222, 5
      %v6194 = vsel %vm1001, %v6191, %v6193
      %v6195 = vrot.slane %v5223, 5
      %v6196 = vsel %vm1001, %v6193, %v6195
      %v6197 = vrot.slane %v5224, 5
      %v6198 = vsel %vm1001, %v6195, %v6197
      %v6199 = vrot.slane %v5225, 5
      %v6200 = vsel %vm1001, %v6197, %v6199
      %v6201 = vrot.slane %v5226, 5
      %v6202 = vsel %vm1001, %v6199, %v6201
      %v6203 = vrot.slane %v5227, 5
      %v6204 = vsel %vm1001, %v6201, %v6203
      %v6205 = vrot.slane %v5228, 5
      %v6206 = vsel %vm1001, %v6203, %v6205
      %v6207 = vrot.slane %v5229, 5
      %v6208 = vsel %vm1001, %v6205, %v6207
      %v6209 = vsel %vm1054, %v6160, 0
      %v6211 = vsel %vm1054, %v6162, 0
      %v6213 = vsel %vm1054, %v6164, 0
      %v6215 = vsel %vm1054, %v6166, 0
      %v6217 = vsel %vm1054, %v6168, 0
      %v6219 = vsel %vm1054, %v6170, 0
      %v6221 = vsel %vm1054, %v6172, 0
      %v6223 = vsel %vm1054, %v6174, 0
      %v6225 = vsel %vm1054, %v6176, 0
      %v6227 = vsel %vm1054, %v6178, 0
      %v6229 = vsel %vm1054, %v6180, 0
      %v6231 = vsel %vm1054, %v6182, 0
      %v6233 = vsel %vm1054, %v6184, 0
      %v6235 = vsel %vm1054, %v6186, 0
      %v6237 = vsel %vm1054, %v6188, 0
      %v6239 = vsel %vm1054, %v6190, 0
      %v6241 = vsel %vm1054, %v6192, 0
      %v6243 = vsel %vm1054, %v6194, 0
      %v6245 = vsel %vm1054, %v6196, 0
      %v6247 = vsel %vm1054, %v6198, 0
      %v6249 = vsel %vm1054, %v6200, 0
      %v6251 = vsel %vm1054, %v6202, 0
      %v6253 = vsel %vm1054, %v6204, 0
      %v6255 = vsel %vm1054, %v6206, 0
      %v6257 = vsel %vm1054, %v6208, 0
      %6259 = vmatprep.subr.mxu0 0.0
      %6260 = vmatpush1.msra.mxu0 %v6151
      %6261 = vmatprep.subr.mxu0 0.0
      %6262 = vmatpush1.msra.mxu0 %v6152
      %6263 = vmatprep.subr.mxu0 0.0
      %6264 = vmatpush1.msra.mxu0 %v6153
      %6265 = vmatprep.subr.mxu0 0.0
      %6266 = vmatpush1.msra.mxu0 %v6154
      %6267 = vmatprep.subr.mxu0 0.0
      %6268 = vmatpush1.msra.mxu0 %v6155
      %6269 = vmatprep.subr.mxu0 0.0
      %6270 = vmatpush1.msra.mxu0 %v6156
      %6271 = vmatprep.subr.mxu0 0.0
      %6272 = vmatpush1.msra.mxu0 %v6157
      %6273 = vmatprep.subr.mxu0 0.0
      %6274 = vmatpush1.msra.mxu0 %v6158
      %6275 = vmatprep.subr.mxu0 0.0
      %6276 = vmatpush1.msra.mxu0 0.0
      %6277 = vmatprep.subr.mxu0 0.0
      %6278 = vmatpush1.msra.mxu0 0.0
      %6279 = vmatprep.subr.mxu0 0.0
      %6280 = vmatpush1.msra.mxu0 0.0
      %6281 = vmatprep.subr.mxu0 0.0
      %6282 = vmatpush1.msra.mxu0 0.0
      %6283 = vmatprep.subr.mxu0 0.0
      %6284 = vmatpush1.msra.mxu0 0.0
      %6285 = vmatprep.subr.mxu0 0.0
      %6286 = vmatpush1.msra.mxu0 0.0
      %6287 = vmatprep.subr.mxu0 0.0
      %6288 = vmatpush1.msra.mxu0 0.0
      %6289 = vmatprep.subr.mxu0 0.0
      %6290 = vmatpush1.msra.mxu0 0.0
      %6291 = vmatprep.subr.mxu0 0.0
      %6292 = vmatpush1.msra.mxu0 0.0
      %6293 = vmatprep.subr.mxu0 0.0
      %6294 = vmatpush1.msra.mxu0 0.0
      %6295 = vmatprep.subr.mxu0 0.0
      %6296 = vmatpush1.msra.mxu0 0.0
      %6297 = vmatprep.subr.mxu0 0.0
      %6298 = vmatpush1.msra.mxu0 0.0
      %6299 = vmatprep.subr.mxu0 0.0
      %6300 = vmatpush1.msra.mxu0 0.0
      %6301 = vmatprep.subr.mxu0 0.0
      %6302 = vmatpush1.msra.mxu0 0.0
      %6303 = vmatprep.subr.mxu0 0.0
      %6304 = vmatpush1.msra.mxu0 0.0
      %6305 = vmatprep.subr.mxu0 0.0
      %6306 = vmatpush1.msra.mxu0 0.0
      %6307 = vmatprep.subr.mxu0 0.0
      %6308 = vmatpush1.msra.mxu0 0.0
      %6309 = vmatprep.subr.mxu0 0.0
      %6310 = vmatpush1.msra.mxu0 0.0
      %6311 = vmatprep.subr.mxu0 0.0
      %6312 = vmatpush1.msra.mxu0 0.0
      %6313 = vmatprep.subr.mxu0 0.0
      %6314 = vmatpush1.msra.mxu0 0.0
      %6315 = vmatprep.subr.mxu0 0.0
      %6316 = vmatpush1.msra.mxu0 0.0
      %6317 = vmatprep.subr.mxu0 0.0
      %6318 = vmatpush1.msra.mxu0 0.0
      %6319 = vmatprep.subr.mxu0 0.0
      %6320 = vmatpush1.msra.mxu0 0.0
      %6321 = vmatprep.subr.mxu0 0.0
      %6322 = vmatpush1.msra.mxu0 0.0
      %6323 = vmatprep.mubr.f32.mxu0 0.0
      %6324 = vmatmul.mubr.f32.gmra.mrb[0].mxu0 %v1055
      %v6325 = vpop.f32.mrb[0].mxu0
      %v6326 = vadd.f32 0.0, %v6325
      %v6327 = vpop.f32.mrb[0].mxu0
      %6328 = vmatprep.mubr.f32.mxu0 0.0
      %6329 = vmatmul.mubr.f32.gmra.mrb[0].mxu0 %v6209
      %v6330 = vpop.f32.mrb[0].mxu0
      %v6331 = vadd.f32 0.0, %v6330
      %v6332 = vpop.f32.mrb[0].mxu0
      %6333 = vmatprep.mubr.f32.mxu0 0.0
      %6334 = vmatmul.mubr.f32.gmra.mrb[0].mxu0 %v6211
      %v6335 = vpop.f32.mrb[0].mxu0
      %v6336 = vadd.f32 0.0, %v6335
      %v6337 = vpop.f32.mrb[0].mxu0
      %6338 = vmatprep.mubr.f32.mxu0 0.0
      %6339 = vmatmul.mubr.f32.gmra.mrb[0].mxu0 %v6213
      %v6340 = vpop.f32.mrb[0].mxu0
      %v6341 = vadd.f32 0.0, %v6340
      %v6342 = vpop.f32.mrb[0].mxu0
      %6343 = vmatprep.mubr.f32.mxu0 0.0
      %6344 = vmatmul.mubr.f32.gmra.mrb[0].mxu0 %v6215
      %v6345 = vpop.f32.mrb[0].mxu0
      %v6346 = vadd.f32 0.0, %v6345
      %v6347 = vpop.f32.mrb[0].mxu0
      %6348 = vmatprep.mubr.f32.mxu0 0.0
      %6349 = vmatmul.mubr.f32.gmra.mrb[0].mxu0 %v6217
      %v6350 = vpop.f32.mrb[0].mxu0
      %v6351 = vadd.f32 0.0, %v6350
      %v6352 = vpop.f32.mrb[0].mxu0
      %6353 = vmatprep.mubr.f32.mxu0 0.0
      %6354 = vmatmul.mubr.f32.gmra.mrb[0].mxu0 %v6219
      %v6355 = vpop.f32.mrb[0].mxu0
      %v6356 = vadd.f32 0.0, %v6355
      %v6357 = vpop.f32.mrb[0].mxu0
      %6358 = vmatprep.mubr.f32.mxu0 0.0
      %6359 = vmatmul.mubr.f32.gmra.mrb[0].mxu0 %v6221
      %v6360 = vpop.f32.mrb[0].mxu0
      %v6361 = vadd.f32 0.0, %v6360
      %v6362 = vpop.f32.mrb[0].mxu0
      %6363 = vmatprep.mubr.f32.mxu0 0.0
      %6364 = vmatmul.mubr.f32.gmra.mrb[0].mxu0 %v6223
      %v6365 = vpop.f32.mrb[0].mxu0
      %v6366 = vadd.f32 0.0, %v6365
      %v6367 = vpop.f32.mrb[0].mxu0
      %6368 = vmatprep.mubr.f32.mxu0 0.0
      %6369 = vmatmul.mubr.f32.gmra.mrb[0].mxu0 %v6225
      %v6370 = vpop.f32.mrb[0].mxu0
      %v6371 = vadd.f32 0.0, %v6370
      %v6372 = vpop.f32.mrb[0].mxu0
      %6373 = vmatprep.mubr.f32.mxu0 0.0
      %6374 = vmatmul.mubr.f32.gmra.mrb[0].mxu0 %v6227
      %v6375 = vpop.f32.mrb[0].mxu0
      %v6376 = vadd.f32 0.0, %v6375
      %v6377 = vpop.f32.mrb[0].mxu0
      %6378 = vmatprep.mubr.f32.mxu0 0.0
      %6379 = vmatmul.mubr.f32.gmra.mrb[0].mxu0 %v6229
      %v6380 = vpop.f32.mrb[0].mxu0
      %v6381 = vadd.f32 0.0, %v6380
      %v6382 = vpop.f32.mrb[0].mxu0
      %6383 = vmatprep.mubr.f32.mxu0 0.0
      %6384 = vmatmul.mubr.f32.gmra.mrb[0].mxu0 %v6231
      %v6385 = vpop.f32.mrb[0].mxu0
      %v6386 = vadd.f32 0.0, %v6385
      %v6387 = vpop.f32.mrb[0].mxu0
      %6388 = vmatprep.mubr.f32.mxu0 0.0
      %6389 = vmatmul.mubr.f32.gmra.mrb[0].mxu0 %v6233
      %v6390 = vpop.f32.mrb[0].mxu0
      %v6391 = vadd.f32 0.0, %v6390
      %v6392 = vpop.f32.mrb[0].mxu0
      %6393 = vmatprep.mubr.f32.mxu0 0.0
      %6394 = vmatmul.mubr.f32.gmra.mrb[0].mxu0 %v6235
      %v6395 = vpop.f32.mrb[0].mxu0
      %v6396 = vadd.f32 0.0, %v6395
      %v6397 = vpop.f32.mrb[0].mxu0
      %6398 = vmatprep.mubr.f32.mxu0 0.0
      %6399 = vmatmul.mubr.f32.gmra.mrb[0].mxu0 %v6237
      %v6400 = vpop.f32.mrb[0].mxu0
      %v6401 = vadd.f32 0.0, %v6400
      %v6402 = vpop.f32.mrb[0].mxu0
      %6403 = vmatprep.mubr.f32.mxu0 0.0
      %6404 = vmatmul.mubr.f32.gmra.mrb[0].mxu0 %v6239
      %v6405 = vpop.f32.mrb[0].mxu0
      %v6406 = vadd.f32 0.0, %v6405
      %v6407 = vpop.f32.mrb[0].mxu0
      %6408 = vmatprep.mubr.f32.mxu0 0.0
      %6409 = vmatmul.mubr.f32.gmra.mrb[0].mxu0 %v6241
      %v6410 = vpop.f32.mrb[0].mxu0
      %v6411 = vadd.f32 0.0, %v6410
      %v6412 = vpop.f32.mrb[0].mxu0
      %6413 = vmatprep.mubr.f32.mxu0 0.0
      %6414 = vmatmul.mubr.f32.gmra.mrb[0].mxu0 %v6243
      %v6415 = vpop.f32.mrb[0].mxu0
      %v6416 = vadd.f32 0.0, %v6415
      %v6417 = vpop.f32.mrb[0].mxu0
      %6418 = vmatprep.mubr.f32.mxu0 0.0
      %6419 = vmatmul.mubr.f32.gmra.mrb[0].mxu0 %v6245
      %v6420 = vpop.f32.mrb[0].mxu0
      %v6421 = vadd.f32 0.0, %v6420
      %v6422 = vpop.f32.mrb[0].mxu0
      %6423 = vmatprep.mubr.f32.mxu0 0.0
      %6424 = vmatmul.mubr.f32.gmra.mrb[0].mxu0 %v6247
      %v6425 = vpop.f32.mrb[0].mxu0
      %v6426 = vadd.f32 0.0, %v6425
      %v6427 = vpop.f32.mrb[0].mxu0
      %6428 = vmatprep.mubr.f32.mxu0 0.0
      %6429 = vmatmul.mubr.f32.gmra.mrb[0].mxu0 %v6249
      %v6430 = vpop.f32.mrb[0].mxu0
      %v6431 = vadd.f32 0.0, %v6430
      %v6432 = vpop.f32.mrb[0].mxu0
      %6433 = vmatprep.mubr.f32.mxu0 0.0
      %6434 = vmatmul.mubr.f32.gmra.mrb[0].mxu0 %v6251
      %v6435 = vpop.f32.mrb[0].mxu0
      %v6436 = vadd.f32 0.0, %v6435
      %v6437 = vpop.f32.mrb[0].mxu0
      %6438 = vmatprep.mubr.f32.mxu0 0.0
      %6439 = vmatmul.mubr.f32.gmra.mrb[0].mxu0 %v6253
      %v6440 = vpop.f32.mrb[0].mxu0
      %v6441 = vadd.f32 0.0, %v6440
      %v6442 = vpop.f32.mrb[0].mxu0
      %6443 = vmatprep.mubr.f32.mxu0 0.0
      %6444 = vmatmul.mubr.f32.gmra.mrb[0].mxu0 %v6255
      %v6445 = vpop.f32.mrb[0].mxu0
      %v6446 = vadd.f32 0.0, %v6445
      %v6447 = vpop.f32.mrb[0].mxu0
      %6448 = vmatprep.mubr.f32.mxu0 0.0
      %6449 = vmatmul.mubr.f32.gmra.mrb[0].mxu0 %v6257
      %v6450 = vpop.f32.mrb[0].mxu0
      %v6451 = vadd.f32 0.0, %v6450
      %v6452 = vpop.f32.mrb[0].mxu0
      %6453 = vdwg.mxu0
      %v6454 = vadd.f32 %v6124, %v6326
      %v6455 = vadd.f32 %v6125, %v6331
      %v6456 = vadd.f32 %v6126, %v6336
      %v6457 = vadd.f32 %v6127, %v6341
      %v6458 = vadd.f32 %v6128, %v6346
      %v6459 = vadd.f32 %v6129, %v6351
      %v6460 = vadd.f32 %v6130, %v6356
      %v6461 = vadd.f32 %v6131, %v6361
      %v6462 = vadd.f32 %v6132, %v6366
      %v6463 = vadd.f32 %v6133, %v6371
      %v6464 = vadd.f32 %v6134, %v6376
      %v6465 = vadd.f32 %v6135, %v6381
      %v6466 = vadd.f32 %v6136, %v6386
      %v6467 = vadd.f32 %v6137, %v6391
      %v6468 = vadd.f32 %v6138, %v6396
      %v6469 = vadd.f32 %v6139, %v6401
      %v6470 = vadd.f32 %v6140, %v6406
      %v6471 = vadd.f32 %v6141, %v6411
      %v6472 = vadd.f32 %v6142, %v6416
      %v6473 = vadd.f32 %v6143, %v6421
      %v6474 = vadd.f32 %v6144, %v6426
      %v6475 = vadd.f32 %v6145, %v6431
      %v6476 = vadd.f32 %v6146, %v6436
      %v6477 = vadd.f32 %v6147, %v6441
      %v6478 = vadd.f32 %v6148, %v6446
      %v6479 = vadd.f32 %v6149, %v6451
      %v6480 = vld [vmem:[#allocation2] sm:$0x1]
      %v6482 = vlaneseq
      %v6483 = vshrl.u32 %v6482, 7
      %v6484 = vsub.s32 0, %v6483
      %v6485 = vrot.slane %v6480, %v6484
      %6486 = vset.pattern.permute.xlu0 0
      %6487 = vperm.xlu0 %6486, %v6485
      %v6488 = vpop.permute.xlu0 %6487
      %v6490 = vadd.f32 %v6454, %v6488
      %v6491 = vadd.f32 %v6455, %v6488
      %v6492 = vadd.f32 %v6456, %v6488
      %v6493 = vadd.f32 %v6457, %v6488
      %v6494 = vadd.f32 %v6458, %v6488
      %v6495 = vadd.f32 %v6459, %v6488
      %v6496 = vadd.f32 %v6460, %v6488
      %v6497 = vadd.f32 %v6461, %v6488
      %v6498 = vadd.f32 %v6462, %v6488
      %v6499 = vadd.f32 %v6463, %v6488
      %v6500 = vadd.f32 %v6464, %v6488
      %v6501 = vadd.f32 %v6465, %v6488
      %v6502 = vadd.f32 %v6466, %v6488
      %v6503 = vadd.f32 %v6467, %v6488
      %v6504 = vadd.f32 %v6468, %v6488
      %v6505 = vadd.f32 %v6469, %v6488
      %v6506 = vadd.f32 %v6470, %v6488
      %v6507 = vadd.f32 %v6471, %v6488
      %v6508 = vadd.f32 %v6472, %v6488
      %v6509 = vadd.f32 %v6473, %v6488
      %v6510 = vadd.f32 %v6474, %v6488
      %v6511 = vadd.f32 %v6475, %v6488
      %v6512 = vadd.f32 %v6476, %v6488
      %v6513 = vadd.f32 %v6477, %v6488
      %v6514 = vadd.f32 %v6478, %v6488
      %v6515 = vadd.f32 %v6479, %v6488
      %v6516 = vld [vmem:[%s3] sm:$0xff]
      %v6517 = vld [vmem:[%s3 + $0x8] sm:$0xff]
      %v6518 = vld [vmem:[%s3 + $0x10] sm:$0xff]
      %v6519 = vld [vmem:[%s3 + $0x18] sm:$0xff]
      %v6520 = vld [vmem:[%s3 + $0x20] sm:$0xff]
      %v6521 = vld [vmem:[%s3 + $0x28] sm:$0xff]
      %v6522 = vld [vmem:[%s3 + $0x30] sm:$0xff]
      %v6523 = vld [vmem:[%s3 + $0x38] sm:$0xff]
      %v6524 = vld [vmem:[%s3 + $0x40] sm:$0xff]
      %v6525 = vld [vmem:[%s3 + $0x48] sm:$0xff]
      %v6526 = vld [vmem:[%s3 + $0x50] sm:$0xff]
      %v6527 = vld [vmem:[%s3 + $0x58] sm:$0xff]
      %v6528 = vld [vmem:[%s3 + $0x60] sm:$0xff]
      %v6529 = vld [vmem:[%s3 + $0x68] sm:$0xff]
      %v6530 = vld [vmem:[%s3 + $0x70] sm:$0xff]
      %v6531 = vld [vmem:[%s3 + $0x78] sm:$0xff]
      %v6532 = vld [vmem:[%s3 + $0x80] sm:$0xff]
      %v6533 = vld [vmem:[%s3 + $0x88] sm:$0xff]
      %v6534 = vld [vmem:[%s3 + $0x90] sm:$0xff]
      %v6535 = vld [vmem:[%s3 + $0x98] sm:$0xff]
      %v6536 = vld [vmem:[%s3 + $0xa0] sm:$0xff]
      %v6537 = vld [vmem:[%s3 + $0xa8] sm:$0xff]
      %v6538 = vld [vmem:[%s3 + $0xb0] sm:$0xff]
      %v6539 = vld [vmem:[%s3 + $0xb8] sm:$0xff]
      %v6540 = vld [vmem:[%s3 + $0xc0] sm:$0xff]
      %v6541 = vld [vmem:[%s3 + $0xc8] sm:$0xff]
      %vm6542 = vcmp.gt.f32.partialorder %v6516, 0.0
      %vm6543 = vcmp.gt.f32.partialorder %v6517, 0.0
      %vm6544 = vcmp.gt.f32.partialorder %v6518, 0.0
      %vm6545 = vcmp.gt.f32.partialorder %v6519, 0.0
      %vm6546 = vcmp.gt.f32.partialorder %v6520, 0.0
      %vm6547 = vcmp.gt.f32.partialorder %v6521, 0.0
      %vm6548 = vcmp.gt.f32.partialorder %v6522, 0.0
      %vm6549 = vcmp.gt.f32.partialorder %v6523, 0.0
      %vm6550 = vcmp.gt.f32.partialorder %v6524, 0.0
      %vm6551 = vcmp.gt.f32.partialorder %v6525, 0.0
      %vm6552 = vcmp.gt.f32.partialorder %v6526, 0.0
      %vm6553 = vcmp.gt.f32.partialorder %v6527, 0.0
      %vm6554 = vcmp.gt.f32.partialorder %v6528, 0.0
      %vm6555 = vcmp.gt.f32.partialorder %v6529, 0.0
      %vm6556 = vcmp.gt.f32.partialorder %v6530, 0.0
      %vm6557 = vcmp.gt.f32.partialorder %v6531, 0.0
      %vm6558 = vcmp.gt.f32.partialorder %v6532, 0.0
      %vm6559 = vcmp.gt.f32.partialorder %v6533, 0.0
      %vm6560 = vcmp.gt.f32.partialorder %v6534, 0.0
      %vm6561 = vcmp.gt.f32.partialorder %v6535, 0.0
      %vm6562 = vcmp.gt.f32.partialorder %v6536, 0.0
      %vm6563 = vcmp.gt.f32.partialorder %v6537, 0.0
      %vm6564 = vcmp.gt.f32.partialorder %v6538, 0.0
      %vm6565 = vcmp.gt.f32.partialorder %v6539, 0.0
      %vm6566 = vcmp.gt.f32.partialorder %v6540, 0.0
      %vm6567 = vcmp.gt.f32.partialorder %v6541, 0.0
      %v6568 = vsel %vm6542, %v6490, -1e+30
      %v6569 = vsel %vm6543, %v6491, -1e+30
      %v6570 = vsel %vm6544, %v6492, -1e+30
      %v6571 = vsel %vm6545, %v6493, -1e+30
      %v6572 = vsel %vm6546, %v6494, -1e+30
      %v6573 = vsel %vm6547, %v6495, -1e+30
      %v6574 = vsel %vm6548, %v6496, -1e+30
      %v6575 = vsel %vm6549, %v6497, -1e+30
      %v6576 = vsel %vm6550, %v6498, -1e+30
      %v6577 = vsel %vm6551, %v6499, -1e+30
      %v6578 = vsel %vm6552, %v6500, -1e+30
      %v6579 = vsel %vm6553, %v6501, -1e+30
      %v6580 = vsel %vm6554, %v6502, -1e+30
      %v6581 = vsel %vm6555, %v6503, -1e+30
      %v6582 = vsel %vm6556, %v6504, -1e+30
      %v6583 = vsel %vm6557, %v6505, -1e+30
      %v6584 = vsel %vm6558, %v6506, -1e+30
      %v6585 = vsel %vm6559, %v6507, -1e+30
      %v6586 = vsel %vm6560, %v6508, -1e+30
      %v6587 = vsel %vm6561, %v6509, -1e+30
      %v6588 = vsel %vm6562, %v6510, -1e+30
      %v6589 = vsel %vm6563, %v6511, -1e+30
      %v6590 = vsel %vm6564, %v6512, -1e+30
      %v6591 = vsel %vm6565, %v6513, -1e+30
      %v6592 = vsel %vm6566, %v6514, -1e+30
      %v6593 = vsel %vm6567, %v6515, -1e+30
      %vm6594 = vcmask 130048
      %v6595 = vsel %vm6594, %v6568, -inf
      %6596 = vmax.xlane.f32.xlu0 %v6595
      %v6597 = vpop.xlane.xlu0 %6596
      %v6598 = vsel %vm6594, %v6569, -inf
      %6599 = vmax.xlane.f32.xlu0 %v6598
      %v6600 = vpop.xlane.xlu0 %6599
      %v6601 = vsel %vm6594, %v6570, -inf
      %6602 = vmax.xlane.f32.xlu0 %v6601
      %v6603 = vpop.xlane.xlu0 %6602
      %v6604 = vsel %vm6594, %v6571, -inf
      %6605 = vmax.xlane.f32.xlu0 %v6604
      %v6606 = vpop.xlane.xlu0 %6605
      %v6607 = vsel %vm6594, %v6572, -inf
      %6608 = vmax.xlane.f32.xlu0 %v6607
      %v6609 = vpop.xlane.xlu0 %6608
      %v6610 = vsel %vm6594, %v6573, -inf
      %6611 = vmax.xlane.f32.xlu0 %v6610
      %v6612 = vpop.xlane.xlu0 %6611
      %v6613 = vsel %vm6594, %v6574, -inf
      %6614 = vmax.xlane.f32.xlu0 %v6613
      %v6615 = vpop.xlane.xlu0 %6614
      %v6616 = vsel %vm6594, %v6575, -inf
      %6617 = vmax.xlane.f32.xlu0 %v6616
      %v6618 = vpop.xlane.xlu0 %6617
      %v6619 = vsel %vm6594, %v6576, -inf
      %6620 = vmax.xlane.f32.xlu0 %v6619
      %v6621 = vpop.xlane.xlu0 %6620
      %v6622 = vsel %vm6594, %v6577, -inf
      %6623 = vmax.xlane.f32.xlu0 %v6622
      %v6624 = vpop.xlane.xlu0 %6623
      %v6625 = vsel %vm6594, %v6578, -inf
      %6626 = vmax.xlane.f32.xlu0 %v6625
      %v6627 = vpop.xlane.xlu0 %6626
      %v6628 = vsel %vm6594, %v6579, -inf
      %6629 = vmax.xlane.f32.xlu0 %v6628
      %v6630 = vpop.xlane.xlu0 %6629
      %v6631 = vsel %vm6594, %v6580, -inf
      %6632 = vmax.xlane.f32.xlu0 %v6631
      %v6633 = vpop.xlane.xlu0 %6632
      %v6634 = vsel %vm6594, %v6581, -inf
      %6635 = vmax.xlane.f32.xlu0 %v6634
      %v6636 = vpop.xlane.xlu0 %6635
      %v6637 = vsel %vm6594, %v6582, -inf
      %6638 = vmax.xlane.f32.xlu0 %v6637
      %v6639 = vpop.xlane.xlu0 %6638
      %v6640 = vsel %vm6594, %v6583, -inf
      %6641 = vmax.xlane.f32.xlu0 %v6640
      %v6642 = vpop.xlane.xlu0 %6641
      %v6643 = vsel %vm6594, %v6584, -inf
      %6644 = vmax.xlane.f32.xlu0 %v6643
      %v6645 = vpop.xlane.xlu0 %6644
      %v6646 = vsel %vm6594, %v6585, -inf
      %6647 = vmax.xlane.f32.xlu0 %v6646
      %v6648 = vpop.xlane.xlu0 %6647
      %v6649 = vsel %vm6594, %v6586, -inf
      %6650 = vmax.xlane.f32.xlu0 %v6649
      %v6651 = vpop.xlane.xlu0 %6650
      %v6652 = vsel %vm6594, %v6587, -inf
      %6653 = vmax.xlane.f32.xlu0 %v6652
      %v6654 = vpop.xlane.xlu0 %6653
      %v6655 = vsel %vm6594, %v6588, -inf
      %6656 = vmax.xlane.f32.xlu0 %v6655
      %v6657 = vpop.xlane.xlu0 %6656
      %v6658 = vsel %vm6594, %v6589, -inf
      %6659 = vmax.xlane.f32.xlu0 %v6658
      %v6660 = vpop.xlane.xlu0 %6659
      %v6661 = vsel %vm6594, %v6590, -inf
      %6662 = vmax.xlane.f32.xlu0 %v6661
      %v6663 = vpop.xlane.xlu0 %6662
      %v6664 = vsel %vm6594, %v6591, -inf
      %6665 = vmax.xlane.f32.xlu0 %v6664
      %v6666 = vpop.xlane.xlu0 %6665
      %v6667 = vsel %vm6594, %v6592, -inf
      %6668 = vmax.xlane.f32.xlu0 %v6667
      %v6669 = vpop.xlane.xlu0 %6668
      %v6670 = vsel %vm6594, %v6593, -inf
      %6671 = vmax.xlane.f32.xlu0 %v6670
      %v6672 = vpop.xlane.xlu0 %6671
      %v6673 = vmax.f32 %v6597, %v6603
      %v6674 = vmax.f32 %v6600, %v6606
      %v6675 = vmax.f32 %v6673, %v6609
      %v6676 = vmax.f32 %v6674, %v6612
      %v6677 = vmax.f32 %v6675, %v6615
      %v6678 = vmax.f32 %v6676, %v6618
      %v6679 = vmax.f32 %v6677, %v6621
      %v6680 = vmax.f32 %v6678, %v6624
      %v6681 = vmax.f32 %v6679, %v6627
      %v6682 = vmax.f32 %v6680, %v6630
      %v6683 = vmax.f32 %v6681, %v6633
      %v6684 = vmax.f32 %v6683, %v6682
      %v6685 = vrot.slane %v6684, 4
      %v6686 = vmax.f32 %v6684, %v6685
      %v6687 = vrot.slane %v6686, 2
      %v6688 = vmax.f32 %v6686, %v6687
      %v6689 = vrot.slane %v6688, 1
      %v6690 = vmax.f32 %v6688, %v6689
      %v6691 = vmax.f32 %v6636, %v6642
      %v6692 = vmax.f32 %v6639, %v6645
      %v6693 = vmax.f32 %v6691, %v6648
      %v6694 = vmax.f32 %v6692, %v6651
      %v6695 = vmax.f32 %v6693, %v6654
      %v6696 = vmax.f32 %v6694, %v6657
      %v6697 = vmax.f32 %v6695, %v6660
      %v6698 = vmax.f32 %v6696, %v6663
      %v6699 = vmax.f32 %v6697, %v6666
      %v6700 = vmax.f32 %v6698, %v6669
      %v6701 = vmax.f32 %v6699, %v6672
      %v6702 = vmax.f32 %v6701, %v6700
      %v6703 = vrot.slane %v6702, 4
      %v6704 = vmax.f32 %v6702, %v6703
      %v6705 = vrot.slane %v6704, 2
      %v6706 = vmax.f32 %v6704, %v6705
      %v6707 = vrot.slane %v6706, 1
      %v6708 = vmax.f32 %v6706, %v6707
      %v6709 = vsub.f32 %v6568, %v6690
      %v6710 = vsub.f32 %v6569, %v6690
      %v6711 = vsub.f32 %v6570, %v6690
      %v6712 = vsub.f32 %v6571, %v6690
      %v6713 = vsub.f32 %v6572, %v6690
      %v6714 = vsub.f32 %v6573, %v6690
      %v6715 = vsub.f32 %v6574, %v6690
      %v6716 = vsub.f32 %v6575, %v6690
      %v6717 = vsub.f32 %v6576, %v6690
      %v6718 = vsub.f32 %v6577, %v6690
      %v6719 = vsub.f32 %v6578, %v6690
      %v6720 = vsub.f32 %v6579, %v6690
      %v6721 = vsub.f32 %v6580, %v6690
      %v6722 = vsub.f32 %v6581, %v6708
      %v6723 = vsub.f32 %v6582, %v6708
      %v6724 = vsub.f32 %v6583, %v6708
      %v6725 = vsub.f32 %v6584, %v6708
      %v6726 = vsub.f32 %v6585, %v6708
      %v6727 = vsub.f32 %v6586, %v6708
      %v6728 = vsub.f32 %v6587, %v6708
      %v6729 = vsub.f32 %v6588, %v6708
      %v6730 = vsub.f32 %v6589, %v6708
      %v6731 = vsub.f32 %v6590, %v6708
      %v6732 = vsub.f32 %v6591, %v6708
      %v6733 = vsub.f32 %v6592, %v6708
      %v6734 = vsub.f32 %v6593, %v6708
      %v6735 = vmul.f32 %v6709, 1.442695
      %v6736 = vpow.pop %v6735
      %v6737 = vmul.f32 %v6710, 1.442695
      %v6738 = vpow.pop %v6737
      %v6739 = vmul.f32 %v6711, 1.442695
      %v6740 = vpow.pop %v6739
      %v6741 = vmul.f32 %v6712, 1.442695
      %v6742 = vpow.pop %v6741
      %v6743 = vmul.f32 %v6713, 1.442695
      %v6744 = vpow.pop %v6743
      %v6745 = vmul.f32 %v6714, 1.442695
      %v6746 = vpow.pop %v6745
      %v6747 = vmul.f32 %v6715, 1.442695
      %v6748 = vpow.pop %v6747
      %v6749 = vmul.f32 %v6716, 1.442695
      %v6750 = vpow.pop %v6749
      %v6751 = vmul.f32 %v6717, 1.442695
      %v6752 = vpow.pop %v6751
      %v6753 = vmul.f32 %v6718, 1.442695
      %v6754 = vpow.pop %v6753
      %v6755 = vmul.f32 %v6719, 1.442695
      %v6756 = vpow.pop %v6755
      %v6757 = vmul.f32 %v6720, 1.442695
      %v6758 = vpow.pop %v6757
      %v6759 = vmul.f32 %v6721, 1.442695
      %v6760 = vpow.pop %v6759
      %v6761 = vmul.f32 %v6722, 1.442695
      %v6762 = vpow.pop %v6761
      %v6763 = vmul.f32 %v6723, 1.442695
      %v6764 = vpow.pop %v6763
      %v6765 = vmul.f32 %v6724, 1.442695
      %v6766 = vpow.pop %v6765
      %v6767 = vmul.f32 %v6725, 1.442695
      %v6768 = vpow.pop %v6767
      %v6769 = vmul.f32 %v6726, 1.442695
      %v6770 = vpow.pop %v6769
      %v6771 = vmul.f32 %v6727, 1.442695
      %v6772 = vpow.pop %v6771
      %v6773 = vmul.f32 %v6728, 1.442695
      %v6774 = vpow.pop %v6773
      %v6775 = vmul.f32 %v6729, 1.442695
      %v6776 = vpow.pop %v6775
      %v6777 = vmul.f32 %v6730, 1.442695
      %v6778 = vpow.pop %v6777
      %v6779 = vmul.f32 %v6731, 1.442695
      %v6780 = vpow.pop %v6779
      %v6781 = vmul.f32 %v6732, 1.442695
      %v6782 = vpow.pop %v6781
      %v6783 = vmul.f32 %v6733, 1.442695
      %v6784 = vpow.pop %v6783
      %v6785 = vmul.f32 %v6734, 1.442695
      %v6786 = vpow.pop %v6785
      %v6787 = vmul.f32 %v6736, %v6516
      %v6788 = vmul.f32 %v6738, %v6517
      %v6789 = vmul.f32 %v6740, %v6518
      %v6790 = vmul.f32 %v6742, %v6519
      %v6791 = vmul.f32 %v6744, %v6520
      %v6792 = vmul.f32 %v6746, %v6521
      %v6793 = vmul.f32 %v6748, %v6522
      %v6794 = vmul.f32 %v6750, %v6523
      %v6795 = vmul.f32 %v6752, %v6524
      %v6796 = vmul.f32 %v6754, %v6525
      %v6797 = vmul.f32 %v6756, %v6526
      %v6798 = vmul.f32 %v6758, %v6527
      %v6799 = vmul.f32 %v6760, %v6528
      %v6800 = vmul.f32 %v6762, %v6529
      %v6801 = vmul.f32 %v6764, %v6530
      %v6802 = vmul.f32 %v6766, %v6531
      %v6803 = vmul.f32 %v6768, %v6532
      %v6804 = vmul.f32 %v6770, %v6533
      %v6805 = vmul.f32 %v6772, %v6534
      %v6806 = vmul.f32 %v6774, %v6535
      %v6807 = vmul.f32 %v6776, %v6536
      %v6808 = vmul.f32 %v6778, %v6537
      %v6809 = vmul.f32 %v6780, %v6538
      %v6810 = vmul.f32 %v6782, %v6539
      %v6811 = vmul.f32 %v6784, %v6540
      %v6812 = vmul.f32 %v6786, %v6541
      %v6813 = vsel %vm6594, %v6787, 0.0
      %6814 = vadd.xlane.f32.xlu0 %v6813
      %v6815 = vpop.xlane.xlu0 %6814
      %v6816 = vsel %vm6594, %v6788, 0.0
      %6817 = vadd.xlane.f32.xlu0 %v6816
      %v6818 = vpop.xlane.xlu0 %6817
      %v6819 = vsel %vm6594, %v6789, 0.0
      %6820 = vadd.xlane.f32.xlu0 %v6819
      %v6821 = vpop.xlane.xlu0 %6820
      %v6822 = vsel %vm6594, %v6790, 0.0
      %6823 = vadd.xlane.f32.xlu0 %v6822
      %v6824 = vpop.xlane.xlu0 %6823
      %v6825 = vsel %vm6594, %v6791, 0.0
      %6826 = vadd.xlane.f32.xlu0 %v6825
      %v6827 = vpop.xlane.xlu0 %6826
      %v6828 = vsel %vm6594, %v6792, 0.0
      %6829 = vadd.xlane.f32.xlu0 %v6828
      %v6830 = vpop.xlane.xlu0 %6829
      %v6831 = vsel %vm6594, %v6793, 0.0
      %6832 = vadd.xlane.f32.xlu0 %v6831
      %v6833 = vpop.xlane.xlu0 %6832
      %v6834 = vsel %vm6594, %v6794, 0.0
      %6835 = vadd.xlane.f32.xlu0 %v6834
      %v6836 = vpop.xlane.xlu0 %6835
      %v6837 = vsel %vm6594, %v6795, 0.0
      %6838 = vadd.xlane.f32.xlu0 %v6837
      %v6839 = vpop.xlane.xlu0 %6838
      %v6840 = vsel %vm6594, %v6796, 0.0
      %6841 = vadd.xlane.f32.xlu0 %v6840
      %v6842 = vpop.xlane.xlu0 %6841
      %v6843 = vsel %vm6594, %v6797, 0.0
      %6844 = vadd.xlane.f32.xlu0 %v6843
      %v6845 = vpop.xlane.xlu0 %6844
      %v6846 = vsel %vm6594, %v6798, 0.0
      %6847 = vadd.xlane.f32.xlu0 %v6846
      %v6848 = vpop.xlane.xlu0 %6847
      %v6849 = vsel %vm6594, %v6799, 0.0
      %6850 = vadd.xlane.f32.xlu0 %v6849
      %v6851 = vpop.xlane.xlu0 %6850
      %v6852 = vsel %vm6594, %v6800, 0.0
      %6853 = vadd.xlane.f32.xlu0 %v6852
      %v6854 = vpop.xlane.xlu0 %6853
      %v6855 = vsel %vm6594, %v6801, 0.0
      %6856 = vadd.xlane.f32.xlu0 %v6855
      %v6857 = vpop.xlane.xlu0 %6856
      %v6858 = vsel %vm6594, %v6802, 0.0
      %6859 = vadd.xlane.f32.xlu0 %v6858
      %v6860 = vpop.xlane.xlu0 %6859
      %v6861 = vsel %vm6594, %v6803, 0.0
      %6862 = vadd.xlane.f32.xlu0 %v6861
      %v6863 = vpop.xlane.xlu0 %6862
      %v6864 = vsel %vm6594, %v6804, 0.0
      %6865 = vadd.xlane.f32.xlu0 %v6864
      %v6866 = vpop.xlane.xlu0 %6865
      %v6867 = vsel %vm6594, %v6805, 0.0
      %6868 = vadd.xlane.f32.xlu0 %v6867
      %v6869 = vpop.xlane.xlu0 %6868
      %v6870 = vsel %vm6594, %v6806, 0.0
      %6871 = vadd.xlane.f32.xlu0 %v6870
      %v6872 = vpop.xlane.xlu0 %6871
      %v6873 = vsel %vm6594, %v6807, 0.0
      %6874 = vadd.xlane.f32.xlu0 %v6873
      %v6875 = vpop.xlane.xlu0 %6874
      %v6876 = vsel %vm6594, %v6808, 0.0
      %6877 = vadd.xlane.f32.xlu0 %v6876
      %v6878 = vpop.xlane.xlu0 %6877
      %v6879 = vsel %vm6594, %v6809, 0.0
      %6880 = vadd.xlane.f32.xlu0 %v6879
      %v6881 = vpop.xlane.xlu0 %6880
      %v6882 = vsel %vm6594, %v6810, 0.0
      %6883 = vadd.xlane.f32.xlu0 %v6882
      %v6884 = vpop.xlane.xlu0 %6883
      %v6885 = vsel %vm6594, %v6811, 0.0
      %6886 = vadd.xlane.f32.xlu0 %v6885
      %v6887 = vpop.xlane.xlu0 %6886
      %v6888 = vsel %vm6594, %v6812, 0.0
      %6889 = vadd.xlane.f32.xlu0 %v6888
      %v6890 = vpop.xlane.xlu0 %6889
      %v6891 = vadd.f32 %v6815, %v6818
      %v6892 = vadd.f32 %v6891, %v6821
      %v6893 = vadd.f32 %v6892, %v6824
      %v6894 = vadd.f32 %v6893, %v6827
      %v6895 = vadd.f32 %v6894, %v6830
      %v6896 = vadd.f32 %v6895, %v6833
      %v6897 = vadd.f32 %v6896, %v6836
      %v6898 = vadd.f32 %v6897, %v6839
      %v6899 = vadd.f32 %v6898, %v6842
      %v6900 = vadd.f32 %v6899, %v6845
      %v6901 = vadd.f32 %v6900, %v6848
      %v6902 = vadd.f32 %v6901, %v6851
      %v6903 = vrot.slane %v6902, 4
      %v6904 = vadd.f32 %v6902, %v6903
      %v6905 = vrot.slane %v6904, 2
      %v6906 = vadd.f32 %v6904, %v6905
      %v6907 = vrot.slane %v6906, 1
      %v6908 = vadd.f32 %v6906, %v6907
      %v6909 = vadd.f32 %v6854, %v6857
      %v6910 = vadd.f32 %v6909, %v6860
      %v6911 = vadd.f32 %v6910, %v6863
      %v6912 = vadd.f32 %v6911, %v6866
      %v6913 = vadd.f32 %v6912, %v6869
      %v6914 = vadd.f32 %v6913, %v6872
      %v6915 = vadd.f32 %v6914, %v6875
      %v6916 = vadd.f32 %v6915, %v6878
      %v6917 = vadd.f32 %v6916, %v6881
      %v6918 = vadd.f32 %v6917, %v6884
      %v6919 = vadd.f32 %v6918, %v6887
      %v6920 = vadd.f32 %v6919, %v6890
      %v6921 = vrot.slane %v6920, 4
      %v6922 = vadd.f32 %v6920, %v6921
      %v6923 = vrot.slane %v6922, 2
      %v6924 = vadd.f32 %v6922, %v6923
      %v6925 = vrot.slane %v6924, 1
      %v6926 = vadd.f32 %v6924, %v6925
      %v6927 = vrcp.pop %v6908
      %v6928 = vmul.f32 1.0, %v6927
      %v6929 = vrcp.pop %v6926
      %v6930 = vmul.f32 1.0, %v6929
      %v6931 = vmul.f32 %v6787, %v6928
      %v6932 = vmul.f32 %v6788, %v6928
      %v6933 = vmul.f32 %v6789, %v6928
      %v6934 = vmul.f32 %v6790, %v6928
      %v6935 = vmul.f32 %v6791, %v6928
      %v6936 = vmul.f32 %v6792, %v6928
      %v6937 = vmul.f32 %v6793, %v6928
      %v6938 = vmul.f32 %v6794, %v6928
      %v6939 = vmul.f32 %v6795, %v6928
      %v6940 = vmul.f32 %v6796, %v6928
      %v6941 = vmul.f32 %v6797, %v6928
      %v6942 = vmul.f32 %v6798, %v6928
      %v6943 = vmul.f32 %v6799, %v6928
      %v6944 = vmul.f32 %v6800, %v6930
      %v6945 = vmul.f32 %v6801, %v6930
      %v6946 = vmul.f32 %v6802, %v6930
      %v6947 = vmul.f32 %v6803, %v6930
      %v6948 = vmul.f32 %v6804, %v6930
      %v6949 = vmul.f32 %v6805, %v6930
      %v6950 = vmul.f32 %v6806, %v6930
      %v6951 = vmul.f32 %v6807, %v6930
      %v6952 = vmul.f32 %v6808, %v6930
      %v6953 = vmul.f32 %v6809, %v6930
      %v6954 = vmul.f32 %v6810, %v6930
      %v6955 = vmul.f32 %v6811, %v6930
      %v6956 = vmul.f32 %v6812, %v6930
      %6957 = vst.msk [vmem:[%s415] sm:$0xff] %vm6594, %v6931
      %6958 = vst.msk [vmem:[%s415 + $0x8] sm:$0xff] %vm6594, %v6932
      %6959 = vst.msk [vmem:[%s415 + $0x10] sm:$0xff] %vm6594, %v6933
      %6960 = vst.msk [vmem:[%s415 + $0x18] sm:$0xff] %vm6594, %v6934
      %6961 = vst.msk [vmem:[%s415 + $0x20] sm:$0xff] %vm6594, %v6935
      %6962 = vst.msk [vmem:[%s415 + $0x28] sm:$0xff] %vm6594, %v6936
      %6963 = vst.msk [vmem:[%s415 + $0x30] sm:$0xff] %vm6594, %v6937
      %6964 = vst.msk [vmem:[%s415 + $0x38] sm:$0xff] %vm6594, %v6938
      %6965 = vst.msk [vmem:[%s415 + $0x40] sm:$0xff] %vm6594, %v6939
      %6966 = vst.msk [vmem:[%s415 + $0x48] sm:$0xff] %vm6594, %v6940
      %6967 = vst.msk [vmem:[%s415 + $0x50] sm:$0xff] %vm6594, %v6941
      %6968 = vst.msk [vmem:[%s415 + $0x58] sm:$0xff] %vm6594, %v6942
      %6969 = vst.msk [vmem:[%s415 + $0x60] sm:$0xff] %vm6594, %v6943
      %6970 = vst.msk [vmem:[%s415 + $0x68] sm:$0xff] %vm6594, %v6944
      %6971 = vst.msk [vmem:[%s415 + $0x70] sm:$0xff] %vm6594, %v6945
      %6972 = vst.msk [vmem:[%s415 + $0x78] sm:$0xff] %vm6594, %v6946
      %6973 = vst.msk [vmem:[%s415 + $0x80] sm:$0xff] %vm6594, %v6947
      %6974 = vst.msk [vmem:[%s415 + $0x88] sm:$0xff] %vm6594, %v6948
      %6975 = vst.msk [vmem:[%s415 + $0x90] sm:$0xff] %vm6594, %v6949
      %6976 = vst.msk [vmem:[%s415 + $0x98] sm:$0xff] %vm6594, %v6950
      %6977 = vst.msk [vmem:[%s415 + $0xa0] sm:$0xff] %vm6594, %v6951
      %6978 = vst.msk [vmem:[%s415 + $0xa8] sm:$0xff] %vm6594, %v6952
      %6979 = vst.msk [vmem:[%s415 + $0xb0] sm:$0xff] %vm6594, %v6953
      %6980 = vst.msk [vmem:[%s415 + $0xb8] sm:$0xff] %vm6594, %v6954
      %6981 = vst.msk [vmem:[%s415 + $0xc0] sm:$0xff] %vm6594, %v6955
      %6982 = vst.msk [vmem:[%s415 + $0xc8] sm:$0xff] %vm6594, %v6956
      %p6983 = scmp.lt.s32.totalorder %s25, 1
      %s6984 = scalar_select %p6983, %s25, 1
      %s6985 = smul.addr %s6984, 26
      %s6986 = smul.addr %s6985, 8
      %s6987 = scalar_lea.vmem %s12, %s6986
      // Predicated region
      $region69: #{location_head_forward.1} parent=67 // pred_check
        %p6988 = pneg %p300
      $region70: #{location_head_forward.1} parent=67 // pred_check_branch
        %6990 = sbr.rel (%p6988) target = $region72
      $region71: #{location_head_forward.1} parent=67 // pred_region
        _
      $region72: #{location_head_forward.1} parent=67 // pred_fallthru
        _
    $region68: #{location_head_forward.1} parent=5 // pred_fallthru
      _
    %p6991 = scmp.le.s32.totalorder 2, %s20
    // Predicated region
    $region73: #{location_head_forward.1} parent=5 // pred_check
      %p6992 = pneg %p6991
    $region74: #{location_head_forward.1} parent=5 // pred_check_branch
      %6994 = sbr.rel (%p6992) target = $region76
    $region75: #{location_head_forward.1} parent=5 // pred_region
      %s6995 = ssub.s32 %s20, 2
      // Predicated region
      $region77: #{location_head_forward.1} parent=75 // pred_check
        %p6996 = pneg %p306
      $region78: #{location_head_forward.1} parent=75 // pred_check_branch
        %6998 = sbr.rel (%p6996) target = $region80
      $region79: #{location_head_forward.1} parent=75 // pred_region
        %p6999 = scmp.lt.s32.totalorder %s26, 1
        %s7000 = scalar_select %p6999, %s26, 1
        %s7001 = smul.addr %s7000, 26
        %s7002 = smul.addr %s7001, 8
        %s7003 = scalar_lea.vmem %s12, %s7002
      $region80: #{location_head_forward.1} parent=75 // pred_fallthru
        _
    $region76: #{location_head_forward.1} parent=5 // pred_fallthru
      _
  $region6: #{location_head_forward.1} parent=0 // loop_footer
    %s24 = sadd.s32 1, %s20
  $region7: #{location_head_forward.1} parent=0 // loop_footer_branch
    %19 = sbr.rel target = $region3
  $region8: #{location_head_forward.1} parent=0 // loop_exit
    _

</llo_original>
